<compile_context>
chip_gen: v7x
topology: tpu7x:2x2x1
jax: 0.10.0
libtpu: 0.0.40
codegen_flags: <defaults>
</compile_context>

<pallas_src>
import functools

import jax
import jax.numpy as jnp
from jax.experimental import pallas as pl
from jax.experimental.pallas import tpu as pltpu

EXPANSION = 4
BN_EPS = 1e-5


# --------------------------------------------------------------------------
# Generation-aware VMEM budgets
# --------------------------------------------------------------------------
@functools.lru_cache(maxsize=None)
def _vmem_budgets():
    """Returns (vmem_limit_bytes, per-call block budget bytes)."""
    try:
        phys = int(pltpu.get_tpu_info().vmem_capacity_bytes)
    except Exception:
        phys = 64 * 1024 * 1024
    if phys >= 128 * 1024 * 1024:                 # v5e / v6e
        return 100 * 1024 * 1024, 64 * 1024 * 1024
    return 48 * 1024 * 1024, 28 * 1024 * 1024     # v7x (64 MiB physical)


# --------------------------------------------------------------------------
# Tile selection helpers
# --------------------------------------------------------------------------
def _pick_lane_tile(Cout, K, budget):
    """Full Cout (gn == 1, weights resident) whenever the weight block fits."""
    if Cout <= 512 or 2 * K * Cout * 4 <= budget // 3:
        return Cout
    for t in (1024, 512, 256, 128):
        if Cout % t == 0:
            return t
    return Cout


def _pick_k_tile(K, tn, budget):
    """Full K unless the double-buffered weight block would blow the budget."""
    if K <= 512 or 2 * K * tn * 4 <= budget // 3:
        return K
    for t in (2048, 1024, 512, 256, 128):
        if K % t == 0 and 2 * t * tn * 4 <= budget // 3:
            return t
    return K


def _pick_row_tile(M, per_row_bytes, budget):
    """Largest row tile dividing M (multiple of 8) under the VMEM budget."""
    max_tm = max(8, budget // max(per_row_bytes, 1))
    for tm in (8192, 4096, 2048, 1024, 512, 256, 128, 64, 32, 16, 8):
        if tm <= M and M % tm == 0 and tm <= max_tm:
            return tm
    # Fallback: single block.  Fine at small/odd M (see review note).
    return M


def _pick_mm_tiles(M, K, Cout, budget):
    tn = _pick_lane_tile(Cout, K, budget)
    tk = _pick_k_tile(K, tn, budget)
    w_bytes = 2 * tk * tn * 4                       # double-buffered weight block
    per_row = 2 * (tk + tn) * 4 + tn * 4            # dbuf x/y rows + f32 acc row
    room = max(budget - w_bytes, per_row * 8)
    tm = _pick_row_tile(M, per_row, room)
    return tm, tk, tn


# --------------------------------------------------------------------------
# Pallas kernels
# --------------------------------------------------------------------------
def _mm_stats_kernel(*refs, mxu_dtype, fuse_in_bn, n_k):
    """(tm, tk) @ (tk, tn) matmul (optionally K-tiled with a VMEM accumulator)
    with optional fused input BN+ReLU prologue; emits per-tile (sum, sumsq)."""
    if fuse_in_bn:
        x_ref, w_ref, sc_ref, sh_ref, *rest = refs
    else:
        x_ref, w_ref, *rest = refs
        sc_ref = sh_ref = None
    if n_k > 1:
        y_ref, st_ref, acc_ref = rest
    else:
        y_ref, st_ref = rest
        acc_ref = None

    x = x_ref[...]
    if fuse_in_bn:
        # relu(bn_prev(x)) applied to the loaded tile, before the dot.
        x = jnp.maximum(x.astype(jnp.float32) * sc_ref[...] + sh_ref[...], 0.0)
    part = jnp.dot(x.astype(mxu_dtype), w_ref[...].astype(mxu_dtype),
                   preferred_element_type=jnp.float32)

    def _emit(y):
        y_ref[...] = y.astype(y_ref.dtype)
        # Direct row stores (no concat / relayout).
        st_ref[0, 0:1, :] = jnp.sum(y, axis=0, keepdims=True)
        st_ref[0, 1:2, :] = jnp.sum(y * y, axis=0, keepdims=True)

    if n_k == 1:
        _emit(part)
    else:
        k = pl.program_id(2)

        @pl.when(k == 0)
        def _():
            acc_ref[...] = jnp.zeros_like(acc_ref)

        acc_ref[...] += part

        @pl.when(k == n_k - 1)
        def _():
            _emit(acc_ref[...])


def _conv3x3_stats_kernel(x_ref, w_ref, sc_ref, sh_ref, y_ref, st_ref,
                          xp_ref, acc_ref, *, H, W, C, Cout, mxu_dtype):
    """Stride-1 3x3 conv for one image with bn1+ReLU fused into the prologue.

    x_ref  : (1, H, W, C)    raw conv1 output (pre-BN), NHWC
    w_ref  : (3, 3*C, Cout)  per-ky weights, K folded over (kx, cin)
    sc/sh  : (1, C)          bn1 scale / shift rows
    y_ref  : (1, H, W, Cout)
    st_ref : (1, 2, Cout)    per-image (sum, sumsq) partials
    xp_ref : VMEM (H+2, W+2, C) padded, BN+ReLU-applied activation (scratch)
    acc_ref: VMEM (H*W, Cout) f32 accumulator (avoids vreg spills)
    """
    # In-kernel padding: zero the scratch, write relu(bn1(x)) into the
    # interior.  (PyTorch pads the *post*-BN activation with zeros.)
    xp_ref[...] = jnp.zeros_like(xp_ref)
    a = x_ref[0].astype(jnp.float32) * sc_ref[...] + sh_ref[...]
    xp_ref[pl.ds(1, H), pl.ds(1, W), :] = jnp.maximum(a, 0.0).astype(xp_ref.dtype)

    # 3 dots of K = 3*C (kx taps folded into K) instead of 9 dots of K = C.
    for ky in range(3):
        rows = xp_ref[pl.ds(ky, H), :, :]                       # (H, W+2, C)
        win = jnp.concatenate([rows[:, kx:kx + W, :] for kx in range(3)],
                              axis=-1)                          # (H, W, 3C)
        part = jnp.dot(win.reshape(H * W, 3 * C).astype(mxu_dtype),
                       w_ref[ky].astype(mxu_dtype),
                       preferred_element_type=jnp.float32)
        if ky == 0:
            acc_ref[...] = part
        else:
            acc_ref[...] += part

    y = acc_ref[...]
    y_ref[...] = y.reshape(1, H, W, Cout).astype(y_ref.dtype)
    st_ref[0, 0:1, :] = jnp.sum(y, axis=0, keepdims=True)
    st_ref[0, 1:2, :] = jnp.sum(y * y, axis=0, keepdims=True)


def _bn_kernel(y_ref, sc_ref, sh_ref, o_ref, *, relu):
    v = y_ref[...].astype(jnp.float32) * sc_ref[...] + sh_ref[...]
    if relu:
        v = jnp.maximum(v, 0.0)
    o_ref[...] = v.astype(o_ref.dtype)


def _bn_res_kernel(y_ref, sc_ref, sh_ref, r_ref, o_ref, *, relu):
    # Identity shortcut: no residual-BN math (saves VALU/store on v5e).
    v = y_ref[...].astype(jnp.float32) * sc_ref[...] + sh_ref[...]
    v = v + r_ref[...].astype(jnp.float32)
    if relu:
        v = jnp.maximum(v, 0.0)
    o_ref[...] = v.astype(o_ref.dtype)


def _bn_res_bn_kernel(y_ref, sc_ref, sh_ref, r_ref, rsc_ref, rsh_ref, o_ref,
                      *, relu):
    v = y_ref[...].astype(jnp.float32) * sc_ref[...] + sh_ref[...]
    v = v + (r_ref[...].astype(jnp.float32) * rsc_ref[...] + rsh_ref[...])
    if relu:
        v = jnp.maximum(v, 0.0)
    o_ref[...] = v.astype(o_ref.dtype)


# --------------------------------------------------------------------------
# Pallas wrappers
# --------------------------------------------------------------------------
def conv1x1_stats(x, w, *, in_scale=None, in_shift=None,
                  mxu_dtype=jnp.float32, out_dtype=jnp.float32):
    """x: (M, K), w: (K, Cout) -> (y (M, Cout) out_dtype, stats (gm, 2, Cout)).

    If in_scale/in_shift are given, relu(x*scale+shift) (the previous layer's
    BN+ReLU) is fused into the matmul prologue.
    """
    M, K = x.shape
    Kw, Cout = w.shape
    assert K == Kw
    limit, budget = _vmem_budgets()
    tm, tk, tn = _pick_mm_tiles(M, K, Cout, budget)
    gm, gn, gk = M // tm, Cout // tn, K // tk
    fuse = in_scale is not None

    w = w.astype(mxu_dtype)     # pre-cast weights once (halves weight traffic)

    in_specs = [pl.BlockSpec((tm, tk), lambda i, j, k: (i, k)),
                pl.BlockSpec((tk, tn), lambda i, j, k: (k, j))]
    args = [x, w]
    if fuse:
        in_specs += [pl.BlockSpec((1, tk), lambda i, j, k: (0, k)),
                     pl.BlockSpec((1, tk), lambda i, j, k: (0, k))]
        args += [in_scale, in_shift]

    scratch = [pltpu.VMEM((tm, tn), jnp.float32)] if gk > 1 else []

    cost = pl.CostEstimate(
        flops=int(2 * M * K * Cout),
        transcendentals=0,
        bytes_accessed=int(x.dtype.itemsize * M * K
                           + jnp.dtype(mxu_dtype).itemsize * K * Cout
                           + jnp.dtype(out_dtype).itemsize * M * Cout))

    return pl.pallas_call(
        functools.partial(_mm_stats_kernel, mxu_dtype=mxu_dtype,
                          fuse_in_bn=fuse, n_k=gk),
        out_shape=(jax.ShapeDtypeStruct((M, Cout), out_dtype),
                   jax.ShapeDtypeStruct((gm, 2, Cout), jnp.float32)),
        grid_spec=pltpu.PrefetchScalarGridSpec(
            num_scalar_prefetch=0,
            grid=(gm, gn, gk),
            in_specs=in_specs,
            out_specs=[pl.BlockSpec((tm, tn), lambda i, j, k: (i, j)),
                       pl.BlockSpec((1, 2, tn), lambda i, j, k: (i, 0, j))],
            scratch_shapes=scratch),
        compiler_params=pltpu.CompilerParams(
            dimension_semantics=("parallel", "parallel", "arbitrary"),
            vmem_limit_bytes=limit),
        cost_estimate=cost,
    )(*args)


def conv3x3_stats_s1(y1_nhwc, w_hwio, in_scale, in_shift, *,
                     mxu_dtype=jnp.float32, out_dtype=jnp.float32):
    """3x3 conv, stride 1, pad 1; bn1+ReLU fused into the prologue; padding
    done in-kernel (no host-side jnp.pad)."""
    N, H, W, C = y1_nhwc.shape
    Cout = w_hwio.shape[-1]
    limit, _ = _vmem_budgets()
    w3 = w_hwio.reshape(3, 3 * C, Cout).astype(mxu_dtype)   # (ky, (kx,cin), cout)

    y, stats = pl.pallas_call(
        functools.partial(_conv3x3_stats_kernel, H=H, W=W, C=C, Cout=Cout,
                          mxu_dtype=mxu_dtype),
        out_shape=(jax.ShapeDtypeStruct((N, H, W, Cout), out_dtype),
                   jax.ShapeDtypeStruct((N, 2, Cout), jnp.float32)),
        grid_spec=pltpu.PrefetchScalarGridSpec(
            num_scalar_prefetch=0,
            grid=(N,),
            in_specs=[
                pl.BlockSpec((1, H, W, C), lambda n: (n, 0, 0, 0)),
                pl.BlockSpec((3, 3 * C, Cout), lambda n: (0, 0, 0)),
                pl.BlockSpec((1, C), lambda n: (0, 0)),
                pl.BlockSpec((1, C), lambda n: (0, 0)),
            ],
            out_specs=[
                pl.BlockSpec((1, H, W, Cout), lambda n: (n, 0, 0, 0)),
                pl.BlockSpec((1, 2, Cout), lambda n: (n, 0, 0)),
            ],
            scratch_shapes=[
                pltpu.VMEM((H + 2, W + 2, C), mxu_dtype),
                pltpu.VMEM((H * W, Cout), jnp.float32),
            ]),
        compiler_params=pltpu.CompilerParams(
            dimension_semantics=("parallel",),
            vmem_limit_bytes=limit),
    )(y1_nhwc, w3, in_scale, in_shift)
    return y.reshape(N * H * W, Cout), stats


def bn_apply(y, scale, shift, *, relu, residual=None, res_scale=None,
             res_shift=None, out_dtype=jnp.float32):
    """Tiled BN scale/shift (+ optional residual with optional residual-BN)."""
    M, C = y.shape
    limit, budget = _vmem_budgets()
    nbytes = y.dtype.itemsize + jnp.dtype(out_dtype).itemsize
    if residual is not None:
        nbytes += residual.dtype.itemsize
    tm = _pick_row_tile(M, 2 * nbytes * C, budget)
    tile = pl.BlockSpec((tm, C), lambda i: (i, 0))
    row = pl.BlockSpec((1, C), lambda i: (0, 0))

    if residual is None:
        kern = functools.partial(_bn_kernel, relu=relu)
        in_specs = [tile, row, row]
        args = (y, scale, shift)
    elif res_scale is None:
        kern = functools.partial(_bn_res_kernel, relu=relu)
        in_specs = [tile, row, row, tile]
        args = (y, scale, shift, residual)
    else:
        kern = functools.partial(_bn_res_bn_kernel, relu=relu)
        in_specs = [tile, row, row, tile, row, row]
        args = (y, scale, shift, residual, res_scale, res_shift)

    return pl.pallas_call(
        kern,
        out_shape=jax.ShapeDtypeStruct((M, C), out_dtype),
        grid_spec=pltpu.PrefetchScalarGridSpec(
            num_scalar_prefetch=0,
            grid=(M // tm,),
            in_specs=in_specs,
            out_specs=tile),
        compiler_params=pltpu.CompilerParams(
            dimension_semantics=("parallel",),
            vmem_limit_bytes=limit),
    )(*args)


# --------------------------------------------------------------------------
# BatchNorm statistics combine (tiny, per-channel) — plain jnp
# --------------------------------------------------------------------------
def _finalize_stats(stats, M):
    """stats: (T, 2, C) partial (sum, sumsq) -> (mean, biased var)."""
    s = jnp.sum(stats, axis=0)                       # (2, C)
    mean = s[0] / M
    var = jnp.maximum(s[1] / M - mean * mean, 0.0)   # clamp: single-pass guard
    return mean, var


def _bn_scale_shift(mean, var, gamma, beta):
    scale = gamma * jax.lax.rsqrt(var + BN_EPS)
    shift = beta - mean * scale
    return (scale.reshape(1, -1).astype(jnp.float32),
            shift.reshape(1, -1).astype(jnp.float32))


# --------------------------------------------------------------------------
# Parameter init, im2col fallback, forward
# --------------------------------------------------------------------------
def init_bottleneck_params(key, in_planes, planes, stride=1):
    ks = jax.random.split(key, 4)

    def conv_init(k, shape, fan_in):
        return jax.random.normal(k, shape, jnp.float32) / jnp.sqrt(float(fan_in))

    p = {
        "w1": conv_init(ks[0], (in_planes, planes), in_planes),        # 1x1
        "g1": jnp.ones((planes,), jnp.float32),
        "b1": jnp.zeros((planes,), jnp.float32),
        "w2": conv_init(ks[1], (3, 3, planes, planes), 9 * planes),    # 3x3 HWIO
        "g2": jnp.ones((planes,), jnp.float32),
        "b2": jnp.zeros((planes,), jnp.float32),
        "w3": conv_init(ks[2], (planes, EXPANSION * planes), planes),  # 1x1
        "g3": jnp.ones((EXPANSION * planes,), jnp.float32),
        "b3": jnp.zeros((EXPANSION * planes,), jnp.float32),
    }
    if stride != 1 or in_planes != EXPANSION * planes:
        p["ws"] = conv_init(ks[3], (in_planes, EXPANSION * planes), in_planes)
        p["gs"] = jnp.ones((EXPANSION * planes,), jnp.float32)
        p["bs"] = jnp.zeros((EXPANSION * planes,), jnp.float32)
    return p


def _im2col_3x3(x_nhwc, stride):
    """Unfold 3x3 patches (pad=1) -> (N*Ho*Wo, 9*C) in (ky, kx, cin) order."""
    N, H, W, C = x_nhwc.shape
    xp = jnp.pad(x_nhwc, ((0, 0), (1, 1), (1, 1), (0, 0)))
    Ho = (H + 2 - 3) // stride + 1
    Wo = (W + 2 - 3) // stride + 1
    cols = []
    for ky in range(3):
        for kx in range(3):
            cols.append(
                xp[:, ky:ky + (Ho - 1) * stride + 1:stride,
                      kx:kx + (Wo - 1) * stride + 1:stride, :])
    patches = jnp.concatenate(cols, axis=-1)        # (N, Ho, Wo, 9*C)
    return patches.reshape(N * Ho * Wo, 9 * C), (N, Ho, Wo)


def bottleneck_forward(params, x_nchw, stride=1,
                       mxu_dtype=jnp.bfloat16, act_dtype=jnp.bfloat16):
    """Pallas implementation of Bottleneck.forward.  Input/output: NCHW f32.

    BatchNorm uses training-mode batch statistics (like the PyTorch module in
    train mode; there is no running-mean/var state).
    """
    N, Cin, H, W = x_nchw.shape
    x_nhwc = jnp.transpose(x_nchw, (0, 2, 3, 1)).astype(jnp.float32)
    M_in = N * H * W
    x2d = x_nhwc.reshape(M_in, Cin)

    planes = params["w1"].shape[1]
    Cexp = EXPANSION * planes

    # ---- conv1 (1x1) with fused bn1 partial stats ------------------------
    y1, st1 = conv1x1_stats(x2d, params["w1"],
                            mxu_dtype=mxu_dtype, out_dtype=act_dtype)
    m1, v1 = _finalize_stats(st1, M_in)
    sc1, sh1 = _bn_scale_shift(m1, v1, params["g1"], params["b1"])

    # ---- conv2 (3x3) with bn1+ReLU fused into its prologue ---------------
    y1_nhwc = y1.reshape(N, H, W, planes)
    if stride == 1:
        y2, st2 = conv3x3_stats_s1(y1_nhwc, params["w2"], sc1, sh1,
                                   mxu_dtype=mxu_dtype, out_dtype=act_dtype)
        Ho, Wo = H, W
    else:
        # TODO(synk): strided 3x3 falls back to host-side im2col (9x HBM
        # inflation); bn1+ReLU is applied in a standalone tiled pass first
        # because the zero padding must apply to the *post*-BN activation.
        a1 = bn_apply(y1, sc1, sh1, relu=True, out_dtype=act_dtype)
        patches, (_, Ho, Wo) = _im2col_3x3(a1.reshape(N, H, W, planes), stride)
        w2m = params["w2"].reshape(-1, planes)
        y2, st2 = conv1x1_stats(patches, w2m,
                                mxu_dtype=mxu_dtype, out_dtype=act_dtype)
    M_out = N * Ho * Wo
    m2, v2 = _finalize_stats(st2, M_out)
    sc2, sh2 = _bn_scale_shift(m2, v2, params["g2"], params["b2"])

    # ---- conv3 (1x1) with bn2+ReLU fused into its prologue ---------------
    y3, st3 = conv1x1_stats(y2, params["w3"], in_scale=sc2, in_shift=sh2,
                            mxu_dtype=mxu_dtype, out_dtype=act_dtype)
    m3, v3 = _finalize_stats(st3, M_out)
    sc3, sh3 = _bn_scale_shift(m3, v3, params["g3"], params["b3"])

    # ---- shortcut + fused bn3 (+shortcut-BN) + residual + ReLU -----------
    if "ws" in params:
        xs = x_nhwc[:, ::stride, ::stride, :].reshape(M_out, Cin)
        s_raw, sts = conv1x1_stats(xs, params["ws"],
                                   mxu_dtype=mxu_dtype, out_dtype=act_dtype)
        ms_, vs_ = _finalize_stats(sts, M_out)
        scs, shs = _bn_scale_shift(ms_, vs_, params["gs"], params["bs"])
        out = bn_apply(y3, sc3, sh3, relu=True, residual=s_raw,
                       res_scale=scs, res_shift=shs, out_dtype=jnp.float32)
    else:
        # Identity shortcut: no residual-BN math.
        out = bn_apply(y3, sc3, sh3, relu=True, residual=x2d,
                       out_dtype=jnp.float32)

    out = out.reshape(N, Ho, Wo, Cexp)
    return jnp.transpose(out, (0, 3, 1, 2))          # back to NCHW


# --------------------------------------------------------------------------
# Pure-JAX reference (lax.conv based) for the correctness check
# --------------------------------------------------------------------------
def _ref_bn(x, gamma, beta):
    mean = jnp.mean(x, axis=(0, 2, 3), keepdims=True)
    var = jnp.mean((x - mean) ** 2, axis=(0, 2, 3), keepdims=True)
    return (x - mean) * jax.lax.rsqrt(var + BN_EPS) * gamma[None, :, None, None] \
        + beta[None, :, None, None]


def ref_forward(params, x, stride=1):
    dn = ("NCHW", "OIHW", "NCHW")

    def c1x1(x, w, s=1):
        return jax.lax.conv_general_dilated(
            x, jnp.transpose(w, (1, 0))[:, :, None, None], (s, s), "VALID",
            dimension_numbers=dn)

    def c3x3(x, w, s):
        return jax.lax.conv_general_dilated(
            x, jnp.transpose(w, (3, 2, 0, 1)), (s, s), ((1, 1), (1, 1)),
            dimension_numbers=dn)

    out = jax.nn.relu(_ref_bn(c1x1(x, params["w1"]), params["g1"], params["b1"]))
    out = jax.nn.relu(_ref_bn(c3x3(out, params["w2"], stride), params["g2"], params["b2"]))
    out = _ref_bn(c1x1(out, params["w3"]), params["g3"], params["b3"])
    if "ws" in params:
        sc = _ref_bn(c1x1(x, params["ws"], stride), params["gs"], params["bs"])
    else:
        sc = x
    return jax.nn.relu(out + sc)


# --------------------------------------------------------------------------
if __name__ == "__main__":
    key = jax.random.PRNGKey(0)
    kp, kx = jax.random.split(key)

    in_planes, planes_, stride = 4, 8, 1          # shortcut is a conv (4 != 32)
    params = init_bottleneck_params(kp, in_planes, planes_, stride)
    x = jax.random.normal(kx, (2, in_planes, 16, 16), jnp.float32)

    # f32 path — tight correctness check against the lax.conv reference.
    fwd = jax.jit(functools.partial(bottleneck_forward, stride=stride,
                                    mxu_dtype=jnp.float32,
                                    act_dtype=jnp.float32))
    out = jax.block_until_ready(fwd(params, x))
    assert out.shape == (2, EXPANSION * planes_, 16, 16), out.shape
    ref = jax.block_until_ready(ref_forward(params, x, stride=stride))
    assert jnp.allclose(out, ref, rtol=1e-3, atol=1e-3), \
        float(jnp.max(jnp.abs(out - ref)))

    # Downsampling variant (stride=2): exercises im2col fallback + conv shortcut.
    params2 = init_bottleneck_params(kp, in_planes, planes_, 2)
    fwd2 = jax.jit(functools.partial(bottleneck_forward, stride=2,
                                     mxu_dtype=jnp.float32,
                                     act_dtype=jnp.float32))
    out2 = jax.block_until_ready(fwd2(params2, x))
    assert out2.shape == (2, EXPANSION * planes_, 8, 8), out2.shape
    ref2 = jax.block_until_ready(ref_forward(params2, x, stride=2))
    assert jnp.allclose(out2, ref2, rtol=1e-3, atol=1e-3), \
        float(jnp.max(jnp.abs(out2 - ref2)))

    # Default fast path (bf16 MXU operands + bf16 intermediates) — loose check.
    fwd_bf16 = jax.jit(functools.partial(bottleneck_forward, stride=stride))
    out_bf = jax.block_until_ready(fwd_bf16(params, x))
    assert out_bf.shape == (2, EXPANSION * planes_, 16, 16), out_bf.shape
    assert bool(jnp.all(jnp.isfinite(out_bf)))
    assert float(jnp.max(jnp.abs(out_bf.astype(jnp.float32) - ref))) < 0.25

    print("KERNEL_OK")
</pallas_src>

<mosaic_0001>
module attributes {stable_mosaic.version = 11 : i64} {
  func.func @_conv3x3_stats_kernel(%arg0: i32, %arg1: memref<1x16x16x8xf32, #tpu.memory_space<vmem>>, %arg2: memref<3x24x8xf32, #tpu.memory_space<vmem>>, %arg3: memref<1x8xf32, #tpu.memory_space<vmem>>, %arg4: memref<1x8xf32, #tpu.memory_space<vmem>>, %arg5: memref<1x16x16x8xf32, #tpu.memory_space<vmem>>, %arg6: memref<1x2x8xf32, #tpu.memory_space<vmem>>, %arg7: memref<18x18x8xf32, #tpu.memory_space<vmem>>, %arg8: memref<256x8xf32, #tpu.memory_space<vmem>>) attributes {dimension_semantics = [#tpu.dimension_semantics<parallel>], iteration_bounds = array<i64: 2>, scalar_prefetch = 0 : i64, scratch_operands = 2 : i64, tpu.core_type = #tpu.core_type<tc>, window_params = [{transform_indices = @transform_0, window_bounds = array<i64: 1, 16, 16, 8>}, {pipeline_mode = #tpu.pipeline_mode<synchronous>, transform_indices = @transform_1, window_bounds = array<i64: 3, 24, 8>}, {pipeline_mode = #tpu.pipeline_mode<synchronous>, transform_indices = @transform_2, window_bounds = array<i64: 1, 8>}, {pipeline_mode = #tpu.pipeline_mode<synchronous>, transform_indices = @transform_3, window_bounds = array<i64: 1, 8>}, {transform_indices = @transform_4, window_bounds = array<i64: 1, 16, 16, 8>}, {transform_indices = @transform_5, window_bounds = array<i64: 1, 2, 8>}]} {
    %cst = arith.constant 0.000000e+00 : f32
    %0 = vector.broadcast %cst : f32 to vector<18x18x8xf32>
    %c0 = arith.constant 0 : index
    %c0_0 = arith.constant 0 : index
    %c0_1 = arith.constant 0 : index
    %1 = vector.load %arg7[%c0, %c0_0, %c0_1] : memref<18x18x8xf32, #tpu.memory_space<vmem>>, vector<18x18x8xf32>
    tpu.vector_store %arg7[%c0, %c0_0, %c0_1], %0 {strides = array<i32>} : memref<18x18x8xf32, #tpu.memory_space<vmem>>, vector<18x18x8xf32>,
    %c0_2 = arith.constant 0 : index
    %c0_3 = arith.constant 0 : index
    %c0_4 = arith.constant 0 : index
    %c0_5 = arith.constant 0 : index
    %2 = vector.load %arg1[%c0_2, %c0_3, %c0_4, %c0_5] : memref<1x16x16x8xf32, #tpu.memory_space<vmem>>, vector<1x16x16x8xf32>
    %3 = vector.shape_cast %2 : vector<1x16x16x8xf32> to vector<16x16x8xf32>
    %c0_6 = arith.constant 0 : index
    %c0_7 = arith.constant 0 : index
    %4 = vector.load %arg3[%c0_6, %c0_7] : memref<1x8xf32, #tpu.memory_space<vmem>>, vector<1x8xf32>
    %5 = vector.shape_cast %4 : vector<1x8xf32> to vector<1x1x8xf32>
    %6 = vector.broadcast %5 : vector<1x1x8xf32> to vector<16x16x8xf32>
    %7 = arith.mulf %3, %6 : vector<16x16x8xf32>
    %c0_8 = arith.constant 0 : index
    %c0_9 = arith.constant 0 : index
    %8 = vector.load %arg4[%c0_8, %c0_9] : memref<1x8xf32, #tpu.memory_space<vmem>>, vector<1x8xf32>
    %9 = vector.shape_cast %8 : vector<1x8xf32> to vector<1x1x8xf32>
    %10 = vector.broadcast %9 : vector<1x1x8xf32> to vector<16x16x8xf32>
    %11 = arith.addf %7, %10 : vector<16x16x8xf32>
    %cst_10 = arith.constant 0.000000e+00 : f32
    %12 = vector.broadcast %cst_10 : f32 to vector<16x16x8xf32>
    %13 = arith.maximumf %11, %12 : vector<16x16x8xf32>
    %c1 = arith.constant 1 : index
    %c1_11 = arith.constant 1 : index
    %c0_12 = arith.constant 0 : index
    %14 = vector.load %arg7[%c1, %c1_11, %c0_12] : memref<18x18x8xf32, #tpu.memory_space<vmem>>, vector<16x16x8xf32>
    tpu.vector_store %arg7[%c1, %c1_11, %c0_12], %13 {strides = array<i32>} : memref<18x18x8xf32, #tpu.memory_space<vmem>>, vector<16x16x8xf32>,
    %c0_13 = arith.constant 0 : index
    %c0_14 = arith.constant 0 : index
    %c0_15 = arith.constant 0 : index
    %15 = vector.load %arg7[%c0_13, %c0_14, %c0_15] : memref<18x18x8xf32, #tpu.memory_space<vmem>>, vector<16x18x8xf32>
    %16 = vector.extract_strided_slice %15 {offsets = [0, 0, 0], sizes = [16, 16, 8], strides = [1, 1, 1]} : vector<16x18x8xf32> to vector<16x16x8xf32>
    %17 = vector.extract_strided_slice %15 {offsets = [0, 1, 0], sizes = [16, 16, 8], strides = [1, 1, 1]} : vector<16x18x8xf32> to vector<16x16x8xf32>
    %18 = vector.extract_strided_slice %15 {offsets = [0, 2, 0], sizes = [16, 16, 8], strides = [1, 1, 1]} : vector<16x18x8xf32> to vector<16x16x8xf32>
    %19 = tpu.concatenate %16, %17, %18 in 2 : vector<16x16x8xf32>, vector<16x16x8xf32>, vector<16x16x8xf32> -> vector<16x16x24xf32>
    %20 = vector.shape_cast %19 : vector<16x16x24xf32> to vector<256x24xf32>
    %c0_16 = arith.constant 0 : index
    %c0_17 = arith.constant 0 : index
    %c0_18 = arith.constant 0 : index
    %21 = vector.load %arg2[%c0_16, %c0_17, %c0_18] : memref<3x24x8xf32, #tpu.memory_space<vmem>>, vector<1x24x8xf32>
    %22 = vector.shape_cast %21 : vector<1x24x8xf32> to vector<24x8xf32>
    %cst_19 = arith.constant dense<0.000000e+00> : vector<256x8xf32>
    %23 = tpu.matmul %20, %22, %cst_19 {dimension_numbers = #tpu.dot_dimension_numbers<[1], [0], [0], [1], [0, 0, 1, 1], [], []>} : vector<256x24xf32>, vector<24x8xf32>, vector<256x8xf32> -> vector<256x8xf32>
    %c0_20 = arith.constant 0 : index
    %c0_21 = arith.constant 0 : index
    %24 = vector.load %arg8[%c0_20, %c0_21] : memref<256x8xf32, #tpu.memory_space<vmem>>, vector<256x8xf32>
    tpu.vector_store %arg8[%c0_20, %c0_21], %23 {strides = array<i32>} : memref<256x8xf32, #tpu.memory_space<vmem>>, vector<256x8xf32>,
    %c1_22 = arith.constant 1 : index
    %c0_23 = arith.constant 0 : index
    %c0_24 = arith.constant 0 : index
    %25 = vector.load %arg7[%c1_22, %c0_23, %c0_24] : memref<18x18x8xf32, #tpu.memory_space<vmem>>, vector<16x18x8xf32>
    %26 = vector.extract_strided_slice %25 {offsets = [0, 0, 0], sizes = [16, 16, 8], strides = [1, 1, 1]} : vector<16x18x8xf32> to vector<16x16x8xf32>
    %27 = vector.extract_strided_slice %25 {offsets = [0, 1, 0], sizes = [16, 16, 8], strides = [1, 1, 1]} : vector<16x18x8xf32> to vector<16x16x8xf32>
    %28 = vector.extract_strided_slice %25 {offsets = [0, 2, 0], sizes = [16, 16, 8], strides = [1, 1, 1]} : vector<16x18x8xf32> to vector<16x16x8xf32>
    %29 = tpu.concatenate %26, %27, %28 in 2 : vector<16x16x8xf32>, vector<16x16x8xf32>, vector<16x16x8xf32> -> vector<16x16x24xf32>
    %30 = vector.shape_cast %29 : vector<16x16x24xf32> to vector<256x24xf32>
    %c1_25 = arith.constant 1 : index
    %c0_26 = arith.constant 0 : index
    %c0_27 = arith.constant 0 : index
    %31 = vector.load %arg2[%c1_25, %c0_26, %c0_27] : memref<3x24x8xf32, #tpu.memory_space<vmem>>, vector<1x24x8xf32>
    %32 = vector.shape_cast %31 : vector<1x24x8xf32> to vector<24x8xf32>
    %cst_28 = arith.constant dense<0.000000e+00> : vector<256x8xf32>
    %33 = tpu.matmul %30, %32, %cst_28 {dimension_numbers = #tpu.dot_dimension_numbers<[1], [0], [0], [1], [0, 0, 1, 1], [], []>} : vector<256x24xf32>, vector<24x8xf32>, vector<256x8xf32> -> vector<256x8xf32>
    %c0_29 = arith.constant 0 : index
    %c0_30 = arith.constant 0 : index
    %34 = vector.load %arg8[%c0_29, %c0_30] : memref<256x8xf32, #tpu.memory_space<vmem>>, vector<256x8xf32>
    %35 = arith.addf %34, %33 : vector<256x8xf32>
    %c0_31 = arith.constant 0 : index
    %c0_32 = arith.constant 0 : index
    %36 = vector.load %arg8[%c0_31, %c0_32] : memref<256x8xf32, #tpu.memory_space<vmem>>, vector<256x8xf32>
    tpu.vector_store %arg8[%c0_31, %c0_32], %35 {strides = array<i32>} : memref<256x8xf32, #tpu.memory_space<vmem>>, vector<256x8xf32>,
    %c2 = arith.constant 2 : index
    %c0_33 = arith.constant 0 : index
    %c0_34 = arith.constant 0 : index
    %37 = vector.load %arg7[%c2, %c0_33, %c0_34] : memref<18x18x8xf32, #tpu.memory_space<vmem>>, vector<16x18x8xf32>
    %38 = vector.extract_strided_slice %37 {offsets = [0, 0, 0], sizes = [16, 16, 8], strides = [1, 1, 1]} : vector<16x18x8xf32> to vector<16x16x8xf32>
    %39 = vector.extract_strided_slice %37 {offsets = [0, 1, 0], sizes = [16, 16, 8], strides = [1, 1, 1]} : vector<16x18x8xf32> to vector<16x16x8xf32>
    %40 = vector.extract_strided_slice %37 {offsets = [0, 2, 0], sizes = [16, 16, 8], strides = [1, 1, 1]} : vector<16x18x8xf32> to vector<16x16x8xf32>
    %41 = tpu.concatenate %38, %39, %40 in 2 : vector<16x16x8xf32>, vector<16x16x8xf32>, vector<16x16x8xf32> -> vector<16x16x24xf32>
    %42 = vector.shape_cast %41 : vector<16x16x24xf32> to vector<256x24xf32>
    %c2_35 = arith.constant 2 : index
    %c0_36 = arith.constant 0 : index
    %c0_37 = arith.constant 0 : index
    %43 = vector.load %arg2[%c2_35, %c0_36, %c0_37] : memref<3x24x8xf32, #tpu.memory_space<vmem>>, vector<1x24x8xf32>
    %44 = vector.shape_cast %43 : vector<1x24x8xf32> to vector<24x8xf32>
    %cst_38 = arith.constant dense<0.000000e+00> : vector<256x8xf32>
    %45 = tpu.matmul %42, %44, %cst_38 {dimension_numbers = #tpu.dot_dimension_numbers<[1], [0], [0], [1], [0, 0, 1, 1], [], []>} : vector<256x24xf32>, vector<24x8xf32>, vector<256x8xf32> -> vector<256x8xf32>
    %c0_39 = arith.constant 0 : index
    %c0_40 = arith.constant 0 : index
    %46 = vector.load %arg8[%c0_39, %c0_40] : memref<256x8xf32, #tpu.memory_space<vmem>>, vector<256x8xf32>
    %47 = arith.addf %46, %45 : vector<256x8xf32>
    %c0_41 = arith.constant 0 : index
    %c0_42 = arith.constant 0 : index
    %48 = vector.load %arg8[%c0_41, %c0_42] : memref<256x8xf32, #tpu.memory_space<vmem>>, vector<256x8xf32>
    tpu.vector_store %arg8[%c0_41, %c0_42], %47 {strides = array<i32>} : memref<256x8xf32, #tpu.memory_space<vmem>>, vector<256x8xf32>,
    %c0_43 = arith.constant 0 : index
    %c0_44 = arith.constant 0 : index
    %49 = vector.load %arg8[%c0_43, %c0_44] : memref<256x8xf32, #tpu.memory_space<vmem>>, vector<256x8xf32>
    %50 = vector.shape_cast %49 : vector<256x8xf32> to vector<1x16x16x8xf32>
    %c0_45 = arith.constant 0 : index
    %c0_46 = arith.constant 0 : index
    %c0_47 = arith.constant 0 : index
    %c0_48 = arith.constant 0 : index
    %51 = vector.load %arg5[%c0_45, %c0_46, %c0_47, %c0_48] : memref<1x16x16x8xf32, #tpu.memory_space<vmem>>, vector<1x16x16x8xf32>
    tpu.vector_store %arg5[%c0_45, %c0_46, %c0_47, %c0_48], %50 {strides = array<i32>} : memref<1x16x16x8xf32, #tpu.memory_space<vmem>>, vector<1x16x16x8xf32>,
    %cst_49 = arith.constant dense<0.000000e+00> : vector<8xf32>
    %52 = vector.multi_reduction <add>, %49, %cst_49 [0] : vector<256x8xf32> to vector<8xf32>
    %53 = vector.shape_cast %52 : vector<8xf32> to vector<1x8xf32>
    %c0_50 = arith.constant 0 : index
    %c0_51 = arith.constant 0 : index
    %c0_52 = arith.constant 0 : index
    %54 = vector.load %arg6[%c0_50, %c0_51, %c0_52] : memref<1x2x8xf32, #tpu.memory_space<vmem>>, vector<1x1x8xf32>
    %55 = vector.shape_cast %54 : vector<1x1x8xf32> to vector<1x8xf32>
    %56 = vector.shape_cast %53 : vector<1x8xf32> to vector<1x1x8xf32>
    tpu.vector_store %arg6[%c0_50, %c0_51, %c0_52], %56 {strides = array<i32>} : memref<1x2x8xf32, #tpu.memory_space<vmem>>, vector<1x1x8xf32>,
    %57 = arith.mulf %49, %49 : vector<256x8xf32>
    %cst_53 = arith.constant dense<0.000000e+00> : vector<8xf32>
    %58 = vector.multi_reduction <add>, %57, %cst_53 [0] : vector<256x8xf32> to vector<8xf32>
    %59 = vector.shape_cast %58 : vector<8xf32> to vector<1x8xf32>
    %c0_54 = arith.constant 0 : index
    %c1_55 = arith.constant 1 : index
    %c0_56 = arith.constant 0 : index
    %60 = vector.load %arg6[%c0_54, %c1_55, %c0_56] : memref<1x2x8xf32, #tpu.memory_space<vmem>>, vector<1x1x8xf32>
    %61 = vector.shape_cast %60 : vector<1x1x8xf32> to vector<1x8xf32>
    %62 = vector.shape_cast %59 : vector<1x8xf32> to vector<1x1x8xf32>
    tpu.vector_store %arg6[%c0_54, %c1_55, %c0_56], %62 {strides = array<i32>} : memref<1x2x8xf32, #tpu.memory_space<vmem>>, vector<1x1x8xf32>,
    return
  }
  func.func @transform_0(%arg0: i32) -> (i32, i32, i32, i32) {
    %c0_i32 = arith.constant 0 : i32
    %c0_i32_0 = arith.constant 0 : i32
    %c0_i32_1 = arith.constant 0 : i32
    %c0_i32_2 = arith.constant 0 : i32
    return %arg0, %c0_i32, %c0_i32_0, %c0_i32_1 : i32, i32, i32, i32
  }
  func.func @transform_1(%arg0: i32) -> (i32, i32, i32) {
    %c0_i32 = arith.constant 0 : i32
    %c0_i32_0 = arith.constant 0 : i32
    %c0_i32_1 = arith.constant 0 : i32
    %c0_i32_2 = arith.constant 0 : i32
    return %c0_i32, %c0_i32_0, %c0_i32_1 : i32, i32, i32
  }
  func.func @transform_2(%arg0: i32) -> (i32, i32) {
    %c0_i32 = arith.constant 0 : i32
    %c0_i32_0 = arith.constant 0 : i32
    %c0_i32_1 = arith.constant 0 : i32
    return %c0_i32, %c0_i32_0 : i32, i32
  }
  func.func @transform_3(%arg0: i32) -> (i32, i32) {
    %c0_i32 = arith.constant 0 : i32
    %c0_i32_0 = arith.constant 0 : i32
    %c0_i32_1 = arith.constant 0 : i32
    return %c0_i32, %c0_i32_0 : i32, i32
  }
  func.func @transform_4(%arg0: i32) -> (i32, i32, i32, i32) {
    %c0_i32 = arith.constant 0 : i32
    %c0_i32_0 = arith.constant 0 : i32
    %c0_i32_1 = arith.constant 0 : i32
    %c0_i32_2 = arith.constant 0 : i32
    return %arg0, %c0_i32, %c0_i32_0, %c0_i32_1 : i32, i32, i32, i32
  }
  func.func @transform_5(%arg0: i32) -> (i32, i32, i32) {
    %c0_i32 = arith.constant 0 : i32
    %c0_i32_0 = arith.constant 0 : i32
    %c0_i32_1 = arith.constant 0 : i32
    return %arg0, %c0_i32, %c0_i32_0 : i32, i32, i32
  }
}

module attributes {stable_mosaic.version = 11 : i64} {
  func.func @_mm_stats_kernel(%arg0: i32, %arg1: i32, %arg2: i32, %arg3: memref<512x4xf32, #tpu.memory_space<vmem>>, %arg4: memref<4x8xf32, #tpu.memory_space<vmem>>, %arg5: memref<512x8xf32, #tpu.memory_space<vmem>>, %arg6: memref<1x2x8xf32, #tpu.memory_space<vmem>>) attributes {dimension_semantics = [#tpu.dimension_semantics<parallel>, #tpu.dimension_semantics<parallel>, #tpu.dimension_semantics<arbitrary>], iteration_bounds = array<i64: 1, 1, 1>, scalar_prefetch = 0 : i64, scratch_operands = 0 : i64, tpu.core_type = #tpu.core_type<tc>, window_params = [{transform_indices = @transform_0, window_bounds = array<i64: 512, 4>}, {transform_indices = @transform_1, window_bounds = array<i64: 4, 8>}, {transform_indices = @transform_2, window_bounds = array<i64: 512, 8>}, {transform_indices = @transform_3, window_bounds = array<i64: 1, 2, 8>}]} {
    %c0 = arith.constant 0 : index
    %c0_0 = arith.constant 0 : index
    %0 = vector.load %arg3[%c0, %c0_0] : memref<512x4xf32, #tpu.memory_space<vmem>>, vector<512x4xf32>
    %c0_1 = arith.constant 0 : index
    %c0_2 = arith.constant 0 : index
    %1 = vector.load %arg4[%c0_1, %c0_2] : memref<4x8xf32, #tpu.memory_space<vmem>>, vector<4x8xf32>
    %cst = arith.constant dense<0.000000e+00> : vector<512x8xf32>
    %2 = tpu.matmul %0, %1, %cst {dimension_numbers = #tpu.dot_dimension_numbers<[1], [0], [0], [1], [0, 0, 1, 1], [], []>} : vector<512x4xf32>, vector<4x8xf32>, vector<512x8xf32> -> vector<512x8xf32>
    %c0_3 = arith.constant 0 : index
    %c0_4 = arith.constant 0 : index
    %3 = vector.load %arg5[%c0_3, %c0_4] : memref<512x8xf32, #tpu.memory_space<vmem>>, vector<512x8xf32>
    tpu.vector_store %arg5[%c0_3, %c0_4], %2 {strides = array<i32>} : memref<512x8xf32, #tpu.memory_space<vmem>>, vector<512x8xf32>,
    %cst_5 = arith.constant dense<0.000000e+00> : vector<8xf32>
    %4 = vector.multi_reduction <add>, %2, %cst_5 [0] : vector<512x8xf32> to vector<8xf32>
    %5 = vector.shape_cast %4 : vector<8xf32> to vector<1x8xf32>
    %c0_6 = arith.constant 0 : index
    %c0_7 = arith.constant 0 : index
    %c0_8 = arith.constant 0 : index
    %6 = vector.load %arg6[%c0_6, %c0_7, %c0_8] : memref<1x2x8xf32, #tpu.memory_space<vmem>>, vector<1x1x8xf32>
    %7 = vector.shape_cast %6 : vector<1x1x8xf32> to vector<1x8xf32>
    %8 = vector.shape_cast %5 : vector<1x8xf32> to vector<1x1x8xf32>
    tpu.vector_store %arg6[%c0_6, %c0_7, %c0_8], %8 {strides = array<i32>} : memref<1x2x8xf32, #tpu.memory_space<vmem>>, vector<1x1x8xf32>,
    %9 = arith.mulf %2, %2 : vector<512x8xf32>
    %cst_9 = arith.constant dense<0.000000e+00> : vector<8xf32>
    %10 = vector.multi_reduction <add>, %9, %cst_9 [0] : vector<512x8xf32> to vector<8xf32>
    %11 = vector.shape_cast %10 : vector<8xf32> to vector<1x8xf32>
    %c0_10 = arith.constant 0 : index
    %c1 = arith.constant 1 : index
    %c0_11 = arith.constant 0 : index
    %12 = vector.load %arg6[%c0_10, %c1, %c0_11] : memref<1x2x8xf32, #tpu.memory_space<vmem>>, vector<1x1x8xf32>
    %13 = vector.shape_cast %12 : vector<1x1x8xf32> to vector<1x8xf32>
    %14 = vector.shape_cast %11 : vector<1x8xf32> to vector<1x1x8xf32>
    tpu.vector_store %arg6[%c0_10, %c1, %c0_11], %14 {strides = array<i32>} : memref<1x2x8xf32, #tpu.memory_space<vmem>>, vector<1x1x8xf32>,
    return
  }
  func.func @transform_0(%arg0: i32, %arg1: i32, %arg2: i32) -> (i32, i32) {
    %c0_i32 = arith.constant 0 : i32
    return %arg0, %arg2 : i32, i32
  }
  func.func @transform_1(%arg0: i32, %arg1: i32, %arg2: i32) -> (i32, i32) {
    %c0_i32 = arith.constant 0 : i32
    return %arg2, %arg1 : i32, i32
  }
  func.func @transform_2(%arg0: i32, %arg1: i32, %arg2: i32) -> (i32, i32) {
    %c0_i32 = arith.constant 0 : i32
    return %arg0, %arg1 : i32, i32
  }
  func.func @transform_3(%arg0: i32, %arg1: i32, %arg2: i32) -> (i32, i32, i32) {
    %c0_i32 = arith.constant 0 : i32
    %c0_i32_0 = arith.constant 0 : i32
    return %arg0, %c0_i32, %arg1 : i32, i32, i32
  }
}

module attributes {stable_mosaic.version = 11 : i64} {
  func.func @_mm_stats_kernel(%arg0: i32, %arg1: i32, %arg2: i32, %arg3: memref<512x8xf32, #tpu.memory_space<vmem>>, %arg4: memref<8x32xf32, #tpu.memory_space<vmem>>, %arg5: memref<1x8xf32, #tpu.memory_space<vmem>>, %arg6: memref<1x8xf32, #tpu.memory_space<vmem>>, %arg7: memref<512x32xf32, #tpu.memory_space<vmem>>, %arg8: memref<1x2x32xf32, #tpu.memory_space<vmem>>) attributes {dimension_semantics = [#tpu.dimension_semantics<parallel>, #tpu.dimension_semantics<parallel>, #tpu.dimension_semantics<arbitrary>], iteration_bounds = array<i64: 1, 1, 1>, scalar_prefetch = 0 : i64, scratch_operands = 0 : i64, tpu.core_type = #tpu.core_type<tc>, window_params = [{transform_indices = @transform_0, window_bounds = array<i64: 512, 8>}, {transform_indices = @transform_1, window_bounds = array<i64: 8, 32>}, {transform_indices = @transform_2, window_bounds = array<i64: 1, 8>}, {transform_indices = @transform_3, window_bounds = array<i64: 1, 8>}, {transform_indices = @transform_4, window_bounds = array<i64: 512, 32>}, {transform_indices = @transform_5, window_bounds = array<i64: 1, 2, 32>}]} {
    %c0 = arith.constant 0 : index
    %c0_0 = arith.constant 0 : index
    %0 = vector.load %arg3[%c0, %c0_0] : memref<512x8xf32, #tpu.memory_space<vmem>>, vector<512x8xf32>
    %c0_1 = arith.constant 0 : index
    %c0_2 = arith.constant 0 : index
    %1 = vector.load %arg5[%c0_1, %c0_2] : memref<1x8xf32, #tpu.memory_space<vmem>>, vector<1x8xf32>
    %2 = vector.broadcast %1 : vector<1x8xf32> to vector<512x8xf32>
    %3 = arith.mulf %0, %2 : vector<512x8xf32>
    %c0_3 = arith.constant 0 : index
    %c0_4 = arith.constant 0 : index
    %4 = vector.load %arg6[%c0_3, %c0_4] : memref<1x8xf32, #tpu.memory_space<vmem>>, vector<1x8xf32>
    %5 = vector.broadcast %4 : vector<1x8xf32> to vector<512x8xf32>
    %6 = arith.addf %3, %5 : vector<512x8xf32>
    %cst = arith.constant 0.000000e+00 : f32
    %7 = vector.broadcast %cst : f32 to vector<512x8xf32>
    %8 = arith.maximumf %6, %7 : vector<512x8xf32>
    %c0_5 = arith.constant 0 : index
    %c0_6 = arith.constant 0 : index
    %9 = vector.load %arg4[%c0_5, %c0_6] : memref<8x32xf32, #tpu.memory_space<vmem>>, vector<8x32xf32>
    %cst_7 = arith.constant dense<0.000000e+00> : vector<512x32xf32>
    %10 = tpu.matmul %8, %9, %cst_7 {dimension_numbers = #tpu.dot_dimension_numbers<[1], [0], [0], [1], [0, 0, 1, 1], [], []>} : vector<512x8xf32>, vector<8x32xf32>, vector<512x32xf32> -> vector<512x32xf32>
    %c0_8 = arith.constant 0 : index
    %c0_9 = arith.constant 0 : index
    %11 = vector.load %arg7[%c0_8, %c0_9] : memref<512x32xf32, #tpu.memory_space<vmem>>, vector<512x32xf32>
    tpu.vector_store %arg7[%c0_8, %c0_9], %10 {strides = array<i32>} : memref<512x32xf32, #tpu.memory_space<vmem>>, vector<512x32xf32>,
    %cst_10 = arith.constant dense<0.000000e+00> : vector<32xf32>
    %12 = vector.multi_reduction <add>, %10, %cst_10 [0] : vector<512x32xf32> to vector<32xf32>
    %13 = vector.shape_cast %12 : vector<32xf32> to vector<1x32xf32>
    %c0_11 = arith.constant 0 : index
    %c0_12 = arith.constant 0 : index
    %c0_13 = arith.constant 0 : index
    %14 = vector.load %arg8[%c0_11, %c0_12, %c0_13] : memref<1x2x32xf32, #tpu.memory_space<vmem>>, vector<1x1x32xf32>
    %15 = vector.shape_cast %14 : vector<1x1x32xf32> to vector<1x32xf32>
    %16 = vector.shape_cast %13 : vector<1x32xf32> to vector<1x1x32xf32>
    tpu.vector_store %arg8[%c0_11, %c0_12, %c0_13], %16 {strides = array<i32>} : memref<1x2x32xf32, #tpu.memory_space<vmem>>, vector<1x1x32xf32>,
    %17 = arith.mulf %10, %10 : vector<512x32xf32>
    %cst_14 = arith.constant dense<0.000000e+00> : vector<32xf32>
    %18 = vector.multi_reduction <add>, %17, %cst_14 [0] : vector<512x32xf32> to vector<32xf32>
    %19 = vector.shape_cast %18 : vector<32xf32> to vector<1x32xf32>
    %c0_15 = arith.constant 0 : index
    %c1 = arith.constant 1 : index
    %c0_16 = arith.constant 0 : index
    %20 = vector.load %arg8[%c0_15, %c1, %c0_16] : memref<1x2x32xf32, #tpu.memory_space<vmem>>, vector<1x1x32xf32>
    %21 = vector.shape_cast %20 : vector<1x1x32xf32> to vector<1x32xf32>
    %22 = vector.shape_cast %19 : vector<1x32xf32> to vector<1x1x32xf32>
    tpu.vector_store %arg8[%c0_15, %c1, %c0_16], %22 {strides = array<i32>} : memref<1x2x32xf32, #tpu.memory_space<vmem>>, vector<1x1x32xf32>,
    return
  }
  func.func @transform_0(%arg0: i32, %arg1: i32, %arg2: i32) -> (i32, i32) {
    %c0_i32 = arith.constant 0 : i32
    return %arg0, %arg2 : i32, i32
  }
  func.func @transform_1(%arg0: i32, %arg1: i32, %arg2: i32) -> (i32, i32) {
    %c0_i32 = arith.constant 0 : i32
    return %arg2, %arg1 : i32, i32
  }
  func.func @transform_2(%arg0: i32, %arg1: i32, %arg2: i32) -> (i32, i32) {
    %c0_i32 = arith.constant 0 : i32
    %c0_i32_0 = arith.constant 0 : i32
    return %c0_i32, %arg2 : i32, i32
  }
  func.func @transform_3(%arg0: i32, %arg1: i32, %arg2: i32) -> (i32, i32) {
    %c0_i32 = arith.constant 0 : i32
    %c0_i32_0 = arith.constant 0 : i32
    return %c0_i32, %arg2 : i32, i32
  }
  func.func @transform_4(%arg0: i32, %arg1: i32, %arg2: i32) -> (i32, i32) {
    %c0_i32 = arith.constant 0 : i32
    return %arg0, %arg1 : i32, i32
  }
  func.func @transform_5(%arg0: i32, %arg1: i32, %arg2: i32) -> (i32, i32, i32) {
    %c0_i32 = arith.constant 0 : i32
    %c0_i32_0 = arith.constant 0 : i32
    return %arg0, %c0_i32, %arg1 : i32, i32, i32
  }
}

module attributes {stable_mosaic.version = 11 : i64} {
  func.func @_mm_stats_kernel(%arg0: i32, %arg1: i32, %arg2: i32, %arg3: memref<512x4xf32, #tpu.memory_space<vmem>>, %arg4: memref<4x32xf32, #tpu.memory_space<vmem>>, %arg5: memref<512x32xf32, #tpu.memory_space<vmem>>, %arg6: memref<1x2x32xf32, #tpu.memory_space<vmem>>) attributes {dimension_semantics = [#tpu.dimension_semantics<parallel>, #tpu.dimension_semantics<parallel>, #tpu.dimension_semantics<arbitrary>], iteration_bounds = array<i64: 1, 1, 1>, scalar_prefetch = 0 : i64, scratch_operands = 0 : i64, tpu.core_type = #tpu.core_type<tc>, window_params = [{transform_indices = @transform_0, window_bounds = array<i64: 512, 4>}, {transform_indices = @transform_1, window_bounds = array<i64: 4, 32>}, {transform_indices = @transform_2, window_bounds = array<i64: 512, 32>}, {transform_indices = @transform_3, window_bounds = array<i64: 1, 2, 32>}]} {
    %c0 = arith.constant 0 : index
    %c0_0 = arith.constant 0 : index
    %0 = vector.load %arg3[%c0, %c0_0] : memref<512x4xf32, #tpu.memory_space<vmem>>, vector<512x4xf32>
    %c0_1 = arith.constant 0 : index
    %c0_2 = arith.constant 0 : index
    %1 = vector.load %arg4[%c0_1, %c0_2] : memref<4x32xf32, #tpu.memory_space<vmem>>, vector<4x32xf32>
    %cst = arith.constant dense<0.000000e+00> : vector<512x32xf32>
    %2 = tpu.matmul %0, %1, %cst {dimension_numbers = #tpu.dot_dimension_numbers<[1], [0], [0], [1], [0, 0, 1, 1], [], []>} : vector<512x4xf32>, vector<4x32xf32>, vector<512x32xf32> -> vector<512x32xf32>
    %c0_3 = arith.constant 0 : index
    %c0_4 = arith.constant 0 : index
    %3 = vector.load %arg5[%c0_3, %c0_4] : memref<512x32xf32, #tpu.memory_space<vmem>>, vector<512x32xf32>
    tpu.vector_store %arg5[%c0_3, %c0_4], %2 {strides = array<i32>} : memref<512x32xf32, #tpu.memory_space<vmem>>, vector<512x32xf32>,
    %cst_5 = arith.constant dense<0.000000e+00> : vector<32xf32>
    %4 = vector.multi_reduction <add>, %2, %cst_5 [0] : vector<512x32xf32> to vector<32xf32>
    %5 = vector.shape_cast %4 : vector<32xf32> to vector<1x32xf32>
    %c0_6 = arith.constant 0 : index
    %c0_7 = arith.constant 0 : index
    %c0_8 = arith.constant 0 : index
    %6 = vector.load %arg6[%c0_6, %c0_7, %c0_8] : memref<1x2x32xf32, #tpu.memory_space<vmem>>, vector<1x1x32xf32>
    %7 = vector.shape_cast %6 : vector<1x1x32xf32> to vector<1x32xf32>
    %8 = vector.shape_cast %5 : vector<1x32xf32> to vector<1x1x32xf32>
    tpu.vector_store %arg6[%c0_6, %c0_7, %c0_8], %8 {strides = array<i32>} : memref<1x2x32xf32, #tpu.memory_space<vmem>>, vector<1x1x32xf32>,
    %9 = arith.mulf %2, %2 : vector<512x32xf32>
    %cst_9 = arith.constant dense<0.000000e+00> : vector<32xf32>
    %10 = vector.multi_reduction <add>, %9, %cst_9 [0] : vector<512x32xf32> to vector<32xf32>
    %11 = vector.shape_cast %10 : vector<32xf32> to vector<1x32xf32>
    %c0_10 = arith.constant 0 : index
    %c1 = arith.constant 1 : index
    %c0_11 = arith.constant 0 : index
    %12 = vector.load %arg6[%c0_10, %c1, %c0_11] : memref<1x2x32xf32, #tpu.memory_space<vmem>>, vector<1x1x32xf32>
    %13 = vector.shape_cast %12 : vector<1x1x32xf32> to vector<1x32xf32>
    %14 = vector.shape_cast %11 : vector<1x32xf32> to vector<1x1x32xf32>
    tpu.vector_store %arg6[%c0_10, %c1, %c0_11], %14 {strides = array<i32>} : memref<1x2x32xf32, #tpu.memory_space<vmem>>, vector<1x1x32xf32>,
    return
  }
  func.func @transform_0(%arg0: i32, %arg1: i32, %arg2: i32) -> (i32, i32) {
    %c0_i32 = arith.constant 0 : i32
    return %arg0, %arg2 : i32, i32
  }
  func.func @transform_1(%arg0: i32, %arg1: i32, %arg2: i32) -> (i32, i32) {
    %c0_i32 = arith.constant 0 : i32
    return %arg2, %arg1 : i32, i32
  }
  func.func @transform_2(%arg0: i32, %arg1: i32, %arg2: i32) -> (i32, i32) {
    %c0_i32 = arith.constant 0 : i32
    return %arg0, %arg1 : i32, i32
  }
  func.func @transform_3(%arg0: i32, %arg1: i32, %arg2: i32) -> (i32, i32, i32) {
    %c0_i32 = arith.constant 0 : i32
    %c0_i32_0 = arith.constant 0 : i32
    return %arg0, %c0_i32, %arg1 : i32, i32, i32
  }
}

module attributes {stable_mosaic.version = 11 : i64} {
  func.func @_bn_res_bn_kernel(%arg0: i32, %arg1: memref<512x32xf32, #tpu.memory_space<vmem>>, %arg2: memref<1x32xf32, #tpu.memory_space<vmem>>, %arg3: memref<1x32xf32, #tpu.memory_space<vmem>>, %arg4: memref<512x32xf32, #tpu.memory_space<vmem>>, %arg5: memref<1x32xf32, #tpu.memory_space<vmem>>, %arg6: memref<1x32xf32, #tpu.memory_space<vmem>>, %arg7: memref<512x32xf32, #tpu.memory_space<vmem>>) attributes {dimension_semantics = [#tpu.dimension_semantics<parallel>], iteration_bounds = array<i64: 1>, scalar_prefetch = 0 : i64, scratch_operands = 0 : i64, tpu.core_type = #tpu.core_type<tc>, window_params = [{transform_indices = @transform_0, window_bounds = array<i64: 512, 32>}, {pipeline_mode = #tpu.pipeline_mode<synchronous>, transform_indices = @transform_1, window_bounds = array<i64: 1, 32>}, {pipeline_mode = #tpu.pipeline_mode<synchronous>, transform_indices = @transform_2, window_bounds = array<i64: 1, 32>}, {transform_indices = @transform_3, window_bounds = array<i64: 512, 32>}, {pipeline_mode = #tpu.pipeline_mode<synchronous>, transform_indices = @transform_4, window_bounds = array<i64: 1, 32>}, {pipeline_mode = #tpu.pipeline_mode<synchronous>, transform_indices = @transform_5, window_bounds = array<i64: 1, 32>}, {transform_indices = @transform_6, window_bounds = array<i64: 512, 32>}]} {
    %c0 = arith.constant 0 : index
    %c0_0 = arith.constant 0 : index
    %0 = vector.load %arg1[%c0, %c0_0] : memref<512x32xf32, #tpu.memory_space<vmem>>, vector<512x32xf32>
    %c0_1 = arith.constant 0 : index
    %c0_2 = arith.constant 0 : index
    %1 = vector.load %arg2[%c0_1, %c0_2] : memref<1x32xf32, #tpu.memory_space<vmem>>, vector<1x32xf32>
    %2 = vector.broadcast %1 : vector<1x32xf32> to vector<512x32xf32>
    %3 = arith.mulf %0, %2 : vector<512x32xf32>
    %c0_3 = arith.constant 0 : index
    %c0_4 = arith.constant 0 : index
    %4 = vector.load %arg3[%c0_3, %c0_4] : memref<1x32xf32, #tpu.memory_space<vmem>>, vector<1x32xf32>
    %5 = vector.broadcast %4 : vector<1x32xf32> to vector<512x32xf32>
    %6 = arith.addf %3, %5 : vector<512x32xf32>
    %c0_5 = arith.constant 0 : index
    %c0_6 = arith.constant 0 : index
    %7 = vector.load %arg4[%c0_5, %c0_6] : memref<512x32xf32, #tpu.memory_space<vmem>>, vector<512x32xf32>
    %c0_7 = arith.constant 0 : index
    %c0_8 = arith.constant 0 : index
    %8 = vector.load %arg5[%c0_7, %c0_8] : memref<1x32xf32, #tpu.memory_space<vmem>>, vector<1x32xf32>
    %9 = vector.broadcast %8 : vector<1x32xf32> to vector<512x32xf32>
    %10 = arith.mulf %7, %9 : vector<512x32xf32>
    %c0_9 = arith.constant 0 : index
    %c0_10 = arith.constant 0 : index
    %11 = vector.load %arg6[%c0_9, %c0_10] : memref<1x32xf32, #tpu.memory_space<vmem>>, vector<1x32xf32>
    %12 = vector.broadcast %11 : vector<1x32xf32> to vector<512x32xf32>
    %13 = arith.addf %10, %12 : vector<512x32xf32>
    %14 = arith.addf %6, %13 : vector<512x32xf32>
    %cst = arith.constant 0.000000e+00 : f32
    %15 = vector.broadcast %cst : f32 to vector<512x32xf32>
    %16 = arith.maximumf %14, %15 : vector<512x32xf32>
    %c0_11 = arith.constant 0 : index
    %c0_12 = arith.constant 0 : index
    %17 = vector.load %arg7[%c0_11, %c0_12] : memref<512x32xf32, #tpu.memory_space<vmem>>, vector<512x32xf32>
    tpu.vector_store %arg7[%c0_11, %c0_12], %16 {strides = array<i32>} : memref<512x32xf32, #tpu.memory_space<vmem>>, vector<512x32xf32>,
    return
  }
  func.func @transform_0(%arg0: i32) -> (i32, i32) {
    %c0_i32 = arith.constant 0 : i32
    %c0_i32_0 = arith.constant 0 : i32
    return %arg0, %c0_i32 : i32, i32
  }
  func.func @transform_1(%arg0: i32) -> (i32, i32) {
    %c0_i32 = arith.constant 0 : i32
    %c0_i32_0 = arith.constant 0 : i32
    %c0_i32_1 = arith.constant 0 : i32
    return %c0_i32, %c0_i32_0 : i32, i32
  }
  func.func @transform_2(%arg0: i32) -> (i32, i32) {
    %c0_i32 = arith.constant 0 : i32
    %c0_i32_0 = arith.constant 0 : i32
    %c0_i32_1 = arith.constant 0 : i32
    return %c0_i32, %c0_i32_0 : i32, i32
  }
  func.func @transform_3(%arg0: i32) -> (i32, i32) {
    %c0_i32 = arith.constant 0 : i32
    %c0_i32_0 = arith.constant 0 : i32
    return %arg0, %c0_i32 : i32, i32
  }
  func.func @transform_4(%arg0: i32) -> (i32, i32) {
    %c0_i32 = arith.constant 0 : i32
    %c0_i32_0 = arith.constant 0 : i32
    %c0_i32_1 = arith.constant 0 : i32
    return %c0_i32, %c0_i32_0 : i32, i32
  }
  func.func @transform_5(%arg0: i32) -> (i32, i32) {
    %c0_i32 = arith.constant 0 : i32
    %c0_i32_0 = arith.constant 0 : i32
    %c0_i32_1 = arith.constant 0 : i32
    return %c0_i32, %c0_i32_0 : i32, i32
  }
  func.func @transform_6(%arg0: i32) -> (i32, i32) {
    %c0_i32 = arith.constant 0 : i32
    %c0_i32_0 = arith.constant 0 : i32
    return %arg0, %c0_i32 : i32, i32
  }
}

</mosaic_0001>

<llo_original>
// kernel: bottleneck_forward.5
$region0: #{bottleneck_forward.5}
  #allocation0 [shape = 'u32[]', space=smem, size = 0x4, offset = 0x4, fixed_abs, tag = 'smem constant byte address 0x4 - core index']
  #allocation1 [shape = 'u32[144,128]{1,0:T(1,128)}', space=vmem, size = 0x12000, scoped, tag = 'internal scratch']
  %s0 = inlined_call_operand.vmem [shape: f32[512,4], index: 0, kind: input, shape index: {}]
  %s1 = inlined_call_operand.vmem [shape: f32[4,8], index: 1, kind: input, shape index: {}]
  %s2 = inlined_call_operand.vmem [shape: f32[512,8], index: 2, kind: output, shape index: {0}]
  %s3 = inlined_call_operand.vmem [shape: f32[1,2,8], index: 3, kind: output, shape index: {1}]
  %4 = xla_tuple %s2, %s3
  %s5 = sld [smem:[#allocation0]]
  $region26: #{bottleneck_forward.5} parent=0
    _
  %s7 = ssub.s32 1, %s5
  %s8 = scalar_select 0, %s7, %s5
  // Predicated region
  $region2: #{bottleneck_forward.5} parent=0 // pred_check
    _
  $region3: #{bottleneck_forward.5} parent=0 // pred_check_branch
    %10 = sbr.rel (0) target = $region5
  $region4: #{bottleneck_forward.5} parent=0 // pred_region
    _
  $region5: #{bottleneck_forward.5} parent=0 // pred_fallthru
    _
  // Predicated region
  $region6: #{bottleneck_forward.5} parent=0 // pred_check
    _
  $region7: #{bottleneck_forward.5} parent=0 // pred_check_branch
    %12 = sbr.rel (0) target = $region9
  $region8: #{bottleneck_forward.5} parent=0 // pred_region
    _
  $region9: #{bottleneck_forward.5} parent=0 // pred_fallthru
    _
  %v13 = vld [vmem:[%s0] sm:$0xff]
  %v14 = vld [vmem:[%s0 + $0x8] sm:$0xff]
  %v15 = vld [vmem:[%s0 + $0x10] sm:$0xff]
  %v16 = vld [vmem:[%s0 + $0x18] sm:$0xff]
  %v17 = vld [vmem:[%s0 + $0x20] sm:$0xff]
  %v18 = vld [vmem:[%s0 + $0x28] sm:$0xff]
  %v19 = vld [vmem:[%s0 + $0x30] sm:$0xff]
  %v20 = vld [vmem:[%s0 + $0x38] sm:$0xff]
  %v21 = vld [vmem:[%s0 + $0x40] sm:$0xff]
  %v22 = vld [vmem:[%s0 + $0x48] sm:$0xff]
  %v23 = vld [vmem:[%s0 + $0x50] sm:$0xff]
  %v24 = vld [vmem:[%s0 + $0x58] sm:$0xff]
  %v25 = vld [vmem:[%s0 + $0x60] sm:$0xff]
  %v26 = vld [vmem:[%s0 + $0x68] sm:$0xff]
  %v27 = vld [vmem:[%s0 + $0x70] sm:$0xff]
  %v28 = vld [vmem:[%s0 + $0x78] sm:$0xff]
  %v29 = vld [vmem:[%s0 + $0x80] sm:$0xff]
  %v30 = vld [vmem:[%s0 + $0x88] sm:$0xff]
  %v31 = vld [vmem:[%s0 + $0x90] sm:$0xff]
  %v32 = vld [vmem:[%s0 + $0x98] sm:$0xff]
  %v33 = vld [vmem:[%s0 + $0xa0] sm:$0xff]
  %v34 = vld [vmem:[%s0 + $0xa8] sm:$0xff]
  %v35 = vld [vmem:[%s0 + $0xb0] sm:$0xff]
  %v36 = vld [vmem:[%s0 + $0xb8] sm:$0xff]
  %v37 = vld [vmem:[%s0 + $0xc0] sm:$0xff]
  %v38 = vld [vmem:[%s0 + $0xc8] sm:$0xff]
  %v39 = vld [vmem:[%s0 + $0xd0] sm:$0xff]
  %v40 = vld [vmem:[%s0 + $0xd8] sm:$0xff]
  %v41 = vld [vmem:[%s0 + $0xe0] sm:$0xff]
  %v42 = vld [vmem:[%s0 + $0xe8] sm:$0xff]
  %v43 = vld [vmem:[%s0 + $0xf0] sm:$0xff]
  %v44 = vld [vmem:[%s0 + $0xf8] sm:$0xff]
  %v45 = vld [vmem:[%s0 + $0x100] sm:$0xff]
  %v46 = vld [vmem:[%s0 + $0x108] sm:$0xff]
  %v47 = vld [vmem:[%s0 + $0x110] sm:$0xff]
  %v48 = vld [vmem:[%s0 + $0x118] sm:$0xff]
  %v49 = vld [vmem:[%s0 + $0x120] sm:$0xff]
  %v50 = vld [vmem:[%s0 + $0x128] sm:$0xff]
  %v51 = vld [vmem:[%s0 + $0x130] sm:$0xff]
  %v52 = vld [vmem:[%s0 + $0x138] sm:$0xff]
  %v53 = vld [vmem:[%s0 + $0x140] sm:$0xff]
  %v54 = vld [vmem:[%s0 + $0x148] sm:$0xff]
  %v55 = vld [vmem:[%s0 + $0x150] sm:$0xff]
  %v56 = vld [vmem:[%s0 + $0x158] sm:$0xff]
  %v57 = vld [vmem:[%s0 + $0x160] sm:$0xff]
  %v58 = vld [vmem:[%s0 + $0x168] sm:$0xff]
  %v59 = vld [vmem:[%s0 + $0x170] sm:$0xff]
  %v60 = vld [vmem:[%s0 + $0x178] sm:$0xff]
  %v61 = vld [vmem:[%s0 + $0x180] sm:$0xff]
  %v62 = vld [vmem:[%s0 + $0x188] sm:$0xff]
  %v63 = vld [vmem:[%s0 + $0x190] sm:$0xff]
  %v64 = vld [vmem:[%s0 + $0x198] sm:$0xff]
  %v65 = vld [vmem:[%s0 + $0x1a0] sm:$0xff]
  %v66 = vld [vmem:[%s0 + $0x1a8] sm:$0xff]
  %v67 = vld [vmem:[%s0 + $0x1b0] sm:$0xff]
  %v68 = vld [vmem:[%s0 + $0x1b8] sm:$0xff]
  %v69 = vld [vmem:[%s0 + $0x1c0] sm:$0xff]
  %v70 = vld [vmem:[%s0 + $0x1c8] sm:$0xff]
  %v71 = vld [vmem:[%s0 + $0x1d0] sm:$0xff]
  %v72 = vld [vmem:[%s0 + $0x1d8] sm:$0xff]
  %v73 = vld [vmem:[%s0 + $0x1e0] sm:$0xff]
  %v74 = vld [vmem:[%s0 + $0x1e8] sm:$0xff]
  %v75 = vld [vmem:[%s0 + $0x1f0] sm:$0xff]
  %v76 = vld [vmem:[%s0 + $0x1f8] sm:$0xff]
  %v77 = vld [vmem:[%s1] sm:$0xf]
  %vm78 = vcmask 31744
  %v80 = vsel %vm78, %v13, 0
  %v83 = vsel %vm78, %v14, 0
  %v86 = vsel %vm78, %v15, 0
  %v89 = vsel %vm78, %v16, 0
  %v92 = vsel %vm78, %v17, 0
  %v95 = vsel %vm78, %v18, 0
  %v98 = vsel %vm78, %v19, 0
  %v101 = vsel %vm78, %v20, 0
  %v104 = vsel %vm78, %v21, 0
  %v107 = vsel %vm78, %v22, 0
  %v110 = vsel %vm78, %v23, 0
  %v113 = vsel %vm78, %v24, 0
  %v116 = vsel %vm78, %v25, 0
  %v119 = vsel %vm78, %v26, 0
  %v122 = vsel %vm78, %v27, 0
  %v125 = vsel %vm78, %v28, 0
  %v128 = vsel %vm78, %v29, 0
  %v131 = vsel %vm78, %v30, 0
  %v134 = vsel %vm78, %v31, 0
  %v137 = vsel %vm78, %v32, 0
  %v140 = vsel %vm78, %v33, 0
  %v143 = vsel %vm78, %v34, 0
  %v146 = vsel %vm78, %v35, 0
  %v149 = vsel %vm78, %v36, 0
  %v152 = vsel %vm78, %v37, 0
  %v155 = vsel %vm78, %v38, 0
  %v158 = vsel %vm78, %v39, 0
  %v161 = vsel %vm78, %v40, 0
  %v164 = vsel %vm78, %v41, 0
  %v167 = vsel %vm78, %v42, 0
  %v170 = vsel %vm78, %v43, 0
  %v173 = vsel %vm78, %v44, 0
  %v176 = vsel %vm78, %v45, 0
  %v179 = vsel %vm78, %v46, 0
  %v182 = vsel %vm78, %v47, 0
  %v185 = vsel %vm78, %v48, 0
  %v188 = vsel %vm78, %v49, 0
  %v191 = vsel %vm78, %v50, 0
  %v194 = vsel %vm78, %v51, 0
  %v197 = vsel %vm78, %v52, 0
  %v200 = vsel %vm78, %v53, 0
  %v203 = vsel %vm78, %v54, 0
  %v206 = vsel %vm78, %v55, 0
  %v209 = vsel %vm78, %v56, 0
  %v212 = vsel %vm78, %v57, 0
  %v215 = vsel %vm78, %v58, 0
  %v218 = vsel %vm78, %v59, 0
  %v221 = vsel %vm78, %v60, 0
  %v224 = vsel %vm78, %v61, 0
  %v227 = vsel %vm78, %v62, 0
  %v230 = vsel %vm78, %v63, 0
  %v233 = vsel %vm78, %v64, 0
  %v236 = vsel %vm78, %v65, 0
  %v239 = vsel %vm78, %v66, 0
  %v242 = vsel %vm78, %v67, 0
  %v245 = vsel %vm78, %v68, 0
  %v248 = vsel %vm78, %v69, 0
  %v251 = vsel %vm78, %v70, 0
  %v254 = vsel %vm78, %v71, 0
  %v257 = vsel %vm78, %v72, 0
  %v260 = vsel %vm78, %v73, 0
  %v263 = vsel %vm78, %v74, 0
  %v266 = vsel %vm78, %v75, 0
  %v269 = vsel %vm78, %v76, 0
  %vm271 = vcmask 1043456
  %v273 = vsel %vm271, %v77, 0
  %275 = vmatprep.subr.mxu0 0.0
  %276 = vmatpush1.msra.mxu0 %v273
  %277 = vmatprep.subr.mxu0 0.0
  %278 = vmatpush1.msra.mxu0 0.0
  %279 = vmatprep.subr.mxu0 0.0
  %280 = vmatpush1.msra.mxu0 0.0
  %281 = vmatprep.subr.mxu0 0.0
  %282 = vmatpush1.msra.mxu0 0.0
  %283 = vmatprep.subr.mxu0 0.0
  %284 = vmatpush1.msra.mxu0 0.0
  %285 = vmatprep.subr.mxu0 0.0
  %286 = vmatpush1.msra.mxu0 0.0
  %287 = vmatprep.subr.mxu0 0.0
  %288 = vmatpush1.msra.mxu0 0.0
  %289 = vmatprep.subr.mxu0 0.0
  %290 = vmatpush1.msra.mxu0 0.0
  %291 = vmatprep.subr.mxu0 0.0
  %292 = vmatpush1.msra.mxu0 0.0
  %293 = vmatprep.subr.mxu0 0.0
  %294 = vmatpush1.msra.mxu0 0.0
  %295 = vmatprep.subr.mxu0 0.0
  %296 = vmatpush1.msra.mxu0 0.0
  %297 = vmatprep.subr.mxu0 0.0
  %298 = vmatpush1.msra.mxu0 0.0
  %299 = vmatprep.subr.mxu0 0.0
  %300 = vmatpush1.msra.mxu0 0.0
  %301 = vmatprep.subr.mxu0 0.0
  %302 = vmatpush1.msra.mxu0 0.0
  %303 = vmatprep.subr.mxu0 0.0
  %304 = vmatpush1.msra.mxu0 0.0
  %305 = vmatprep.subr.mxu0 0.0
  %306 = vmatpush1.msra.mxu0 0.0
  %307 = vmatprep.subr.mxu0 0.0
  %308 = vmatpush1.msra.mxu0 0.0
  %309 = vmatprep.subr.mxu0 0.0
  %310 = vmatpush1.msra.mxu0 0.0
  %311 = vmatprep.subr.mxu0 0.0
  %312 = vmatpush1.msra.mxu0 0.0
  %313 = vmatprep.subr.mxu0 0.0
  %314 = vmatpush1.msra.mxu0 0.0
  %315 = vmatprep.subr.mxu0 0.0
  %316 = vmatpush1.msra.mxu0 0.0
  %317 = vmatprep.subr.mxu0 0.0
  %318 = vmatpush1.msra.mxu0 0.0
  %319 = vmatprep.subr.mxu0 0.0
  %320 = vmatpush1.msra.mxu0 0.0
  %321 = vmatprep.subr.mxu0 0.0
  %322 = vmatpush1.msra.mxu0 0.0
  %323 = vmatprep.subr.mxu0 0.0
  %324 = vmatpush1.msra.mxu0 0.0
  %325 = vmatprep.subr.mxu0 0.0
  %326 = vmatpush1.msra.mxu0 0.0
  %327 = vmatprep.subr.mxu0 0.0
  %328 = vmatpush1.msra.mxu0 0.0
  %329 = vmatprep.subr.mxu0 0.0
  %330 = vmatpush1.msra.mxu0 0.0
  %331 = vmatprep.subr.mxu0 0.0
  %332 = vmatpush1.msra.mxu0 0.0
  %333 = vmatprep.subr.mxu0 0.0
  %334 = vmatpush1.msra.mxu0 0.0
  %335 = vmatprep.subr.mxu0 0.0
  %336 = vmatpush1.msra.mxu0 0.0
  %337 = vmatprep.subr.mxu0 0.0
  %338 = vmatpush1.msra.mxu0 0.0
  %339 = vmatprep.mubr.f32.mxu0 0.0
  %340 = vmatmul.mubr.f32.gmra.mrb[0].mxu0 %v80
  %v341 = vpop.f32.mrb[0].mxu0
  %v342 = vadd.f32 0.0, %v341
  %v343 = vpop.f32.mrb[0].mxu0
  %344 = vmatprep.mubr.f32.mxu0 0.0
  %345 = vmatmul.mubr.f32.gmra.mrb[0].mxu0 %v83
  %v346 = vpop.f32.mrb[0].mxu0
  %v347 = vadd.f32 0.0, %v346
  %v348 = vpop.f32.mrb[0].mxu0
  %349 = vmatprep.mubr.f32.mxu0 0.0
  %350 = vmatmul.mubr.f32.gmra.mrb[0].mxu0 %v86
  %v351 = vpop.f32.mrb[0].mxu0
  %v352 = vadd.f32 0.0, %v351
  %v353 = vpop.f32.mrb[0].mxu0
  %354 = vmatprep.mubr.f32.mxu0 0.0
  %355 = vmatmul.mubr.f32.gmra.mrb[0].mxu0 %v89
  %v356 = vpop.f32.mrb[0].mxu0
  %v357 = vadd.f32 0.0, %v356
  %v358 = vpop.f32.mrb[0].mxu0
  %359 = vmatprep.mubr.f32.mxu0 0.0
  %360 = vmatmul.mubr.f32.gmra.mrb[0].mxu0 %v92
  %v361 = vpop.f32.mrb[0].mxu0
  %v362 = vadd.f32 0.0, %v361
  %v363 = vpop.f32.mrb[0].mxu0
  %364 = vmatprep.mubr.f32.mxu0 0.0
  %365 = vmatmul.mubr.f32.gmra.mrb[0].mxu0 %v95
  %v366 = vpop.f32.mrb[0].mxu0
  %v367 = vadd.f32 0.0, %v366
  %v368 = vpop.f32.mrb[0].mxu0
  %369 = vmatprep.mubr.f32.mxu0 0.0
  %370 = vmatmul.mubr.f32.gmra.mrb[0].mxu0 %v98
  %v371 = vpop.f32.mrb[0].mxu0
  %v372 = vadd.f32 0.0, %v371
  %v373 = vpop.f32.mrb[0].mxu0
  %374 = vmatprep.mubr.f32.mxu0 0.0
  %375 = vmatmul.mubr.f32.gmra.mrb[0].mxu0 %v101
  %v376 = vpop.f32.mrb[0].mxu0
  %v377 = vadd.f32 0.0, %v376
  %v378 = vpop.f32.mrb[0].mxu0
  %379 = vmatprep.mubr.f32.mxu0 0.0
  %380 = vmatmul.mubr.f32.gmra.mrb[0].mxu0 %v104
  %v381 = vpop.f32.mrb[0].mxu0
  %v382 = vadd.f32 0.0, %v381
  %v383 = vpop.f32.mrb[0].mxu0
  %384 = vmatprep.mubr.f32.mxu0 0.0
  %385 = vmatmul.mubr.f32.gmra.mrb[0].mxu0 %v107
  %v386 = vpop.f32.mrb[0].mxu0
  %v387 = vadd.f32 0.0, %v386
  %v388 = vpop.f32.mrb[0].mxu0
  %389 = vmatprep.mubr.f32.mxu0 0.0
  %390 = vmatmul.mubr.f32.gmra.mrb[0].mxu0 %v110
  %v391 = vpop.f32.mrb[0].mxu0
  %v392 = vadd.f32 0.0, %v391
  %v393 = vpop.f32.mrb[0].mxu0
  %394 = vmatprep.mubr.f32.mxu0 0.0
  %395 = vmatmul.mubr.f32.gmra.mrb[0].mxu0 %v113
  %v396 = vpop.f32.mrb[0].mxu0
  %v397 = vadd.f32 0.0, %v396
  %v398 = vpop.f32.mrb[0].mxu0
  %399 = vmatprep.mubr.f32.mxu0 0.0
  %400 = vmatmul.mubr.f32.gmra.mrb[0].mxu0 %v116
  %v401 = vpop.f32.mrb[0].mxu0
  %v402 = vadd.f32 0.0, %v401
  %v403 = vpop.f32.mrb[0].mxu0
  %404 = vmatprep.mubr.f32.mxu0 0.0
  %405 = vmatmul.mubr.f32.gmra.mrb[0].mxu0 %v119
  %v406 = vpop.f32.mrb[0].mxu0
  %v407 = vadd.f32 0.0, %v406
  %v408 = vpop.f32.mrb[0].mxu0
  %409 = vmatprep.mubr.f32.mxu0 0.0
  %410 = vmatmul.mubr.f32.gmra.mrb[0].mxu0 %v122
  %v411 = vpop.f32.mrb[0].mxu0
  %v412 = vadd.f32 0.0, %v411
  %v413 = vpop.f32.mrb[0].mxu0
  %414 = vmatprep.mubr.f32.mxu0 0.0
  %415 = vmatmul.mubr.f32.gmra.mrb[0].mxu0 %v125
  %v416 = vpop.f32.mrb[0].mxu0
  %v417 = vadd.f32 0.0, %v416
  %v418 = vpop.f32.mrb[0].mxu0
  %419 = vmatprep.mubr.f32.mxu0 0.0
  %420 = vmatmul.mubr.f32.gmra.mrb[0].mxu0 %v128
  %v421 = vpop.f32.mrb[0].mxu0
  %v422 = vadd.f32 0.0, %v421
  %v423 = vpop.f32.mrb[0].mxu0
  %424 = vmatprep.mubr.f32.mxu0 0.0
  %425 = vmatmul.mubr.f32.gmra.mrb[0].mxu0 %v131
  %v426 = vpop.f32.mrb[0].mxu0
  %v427 = vadd.f32 0.0, %v426
  %v428 = vpop.f32.mrb[0].mxu0
  %429 = vmatprep.mubr.f32.mxu0 0.0
  %430 = vmatmul.mubr.f32.gmra.mrb[0].mxu0 %v134
  %v431 = vpop.f32.mrb[0].mxu0
  %v432 = vadd.f32 0.0, %v431
  %v433 = vpop.f32.mrb[0].mxu0
  %434 = vmatprep.mubr.f32.mxu0 0.0
  %435 = vmatmul.mubr.f32.gmra.mrb[0].mxu0 %v137
  %v436 = vpop.f32.mrb[0].mxu0
  %v437 = vadd.f32 0.0, %v436
  %v438 = vpop.f32.mrb[0].mxu0
  %439 = vmatprep.mubr.f32.mxu0 0.0
  %440 = vmatmul.mubr.f32.gmra.mrb[0].mxu0 %v140
  %v441 = vpop.f32.mrb[0].mxu0
  %v442 = vadd.f32 0.0, %v441
  %v443 = vpop.f32.mrb[0].mxu0
  %444 = vmatprep.mubr.f32.mxu0 0.0
  %445 = vmatmul.mubr.f32.gmra.mrb[0].mxu0 %v143
  %v446 = vpop.f32.mrb[0].mxu0
  %v447 = vadd.f32 0.0, %v446
  %v448 = vpop.f32.mrb[0].mxu0
  %449 = vmatprep.mubr.f32.mxu0 0.0
  %450 = vmatmul.mubr.f32.gmra.mrb[0].mxu0 %v146
  %v451 = vpop.f32.mrb[0].mxu0
  %v452 = vadd.f32 0.0, %v451
  %v453 = vpop.f32.mrb[0].mxu0
  %454 = vmatprep.mubr.f32.mxu0 0.0
  %455 = vmatmul.mubr.f32.gmra.mrb[0].mxu0 %v149
  %v456 = vpop.f32.mrb[0].mxu0
  %v457 = vadd.f32 0.0, %v456
  %v458 = vpop.f32.mrb[0].mxu0
  %459 = vmatprep.mubr.f32.mxu0 0.0
  %460 = vmatmul.mubr.f32.gmra.mrb[0].mxu0 %v152
  %v461 = vpop.f32.mrb[0].mxu0
  %v462 = vadd.f32 0.0, %v461
  %v463 = vpop.f32.mrb[0].mxu0
  %464 = vmatprep.mubr.f32.mxu0 0.0
  %465 = vmatmul.mubr.f32.gmra.mrb[0].mxu0 %v155
  %v466 = vpop.f32.mrb[0].mxu0
  %v467 = vadd.f32 0.0, %v466
  %v468 = vpop.f32.mrb[0].mxu0
  %469 = vmatprep.mubr.f32.mxu0 0.0
  %470 = vmatmul.mubr.f32.gmra.mrb[0].mxu0 %v158
  %v471 = vpop.f32.mrb[0].mxu0
  %v472 = vadd.f32 0.0, %v471
  %v473 = vpop.f32.mrb[0].mxu0
  %474 = vmatprep.mubr.f32.mxu0 0.0
  %475 = vmatmul.mubr.f32.gmra.mrb[0].mxu0 %v161
  %v476 = vpop.f32.mrb[0].mxu0
  %v477 = vadd.f32 0.0, %v476
  %v478 = vpop.f32.mrb[0].mxu0
  %479 = vmatprep.mubr.f32.mxu0 0.0
  %480 = vmatmul.mubr.f32.gmra.mrb[0].mxu0 %v164
  %v481 = vpop.f32.mrb[0].mxu0
  %v482 = vadd.f32 0.0, %v481
  %v483 = vpop.f32.mrb[0].mxu0
  %484 = vmatprep.mubr.f32.mxu0 0.0
  %485 = vmatmul.mubr.f32.gmra.mrb[0].mxu0 %v167
  %v486 = vpop.f32.mrb[0].mxu0
  %v487 = vadd.f32 0.0, %v486
  %v488 = vpop.f32.mrb[0].mxu0
  %489 = vmatprep.mubr.f32.mxu0 0.0
  %490 = vmatmul.mubr.f32.gmra.mrb[0].mxu0 %v170
  %v491 = vpop.f32.mrb[0].mxu0
  %v492 = vadd.f32 0.0, %v491
  %v493 = vpop.f32.mrb[0].mxu0
  %494 = vmatprep.mubr.f32.mxu0 0.0
  %495 = vmatmul.mubr.f32.gmra.mrb[0].mxu0 %v173
  %v496 = vpop.f32.mrb[0].mxu0
  %v497 = vadd.f32 0.0, %v496
  %v498 = vpop.f32.mrb[0].mxu0
  %499 = vmatprep.mubr.f32.mxu0 0.0
  %500 = vmatmul.mubr.f32.gmra.mrb[0].mxu0 %v176
  %v501 = vpop.f32.mrb[0].mxu0
  %v502 = vadd.f32 0.0, %v501
  %v503 = vpop.f32.mrb[0].mxu0
  %504 = vmatprep.mubr.f32.mxu0 0.0
  %505 = vmatmul.mubr.f32.gmra.mrb[0].mxu0 %v179
  %v506 = vpop.f32.mrb[0].mxu0
  %v507 = vadd.f32 0.0, %v506
  %v508 = vpop.f32.mrb[0].mxu0
  %509 = vmatprep.mubr.f32.mxu0 0.0
  %510 = vmatmul.mubr.f32.gmra.mrb[0].mxu0 %v182
  %v511 = vpop.f32.mrb[0].mxu0
  %v512 = vadd.f32 0.0, %v511
  %v513 = vpop.f32.mrb[0].mxu0
  %514 = vmatprep.mubr.f32.mxu0 0.0
  %515 = vmatmul.mubr.f32.gmra.mrb[0].mxu0 %v185
  %v516 = vpop.f32.mrb[0].mxu0
  %v517 = vadd.f32 0.0, %v516
  %v518 = vpop.f32.mrb[0].mxu0
  %519 = vmatprep.mubr.f32.mxu0 0.0
  %520 = vmatmul.mubr.f32.gmra.mrb[0].mxu0 %v188
  %v521 = vpop.f32.mrb[0].mxu0
  %v522 = vadd.f32 0.0, %v521
  %v523 = vpop.f32.mrb[0].mxu0
  %524 = vmatprep.mubr.f32.mxu0 0.0
  %525 = vmatmul.mubr.f32.gmra.mrb[0].mxu0 %v191
  %v526 = vpop.f32.mrb[0].mxu0
  %v527 = vadd.f32 0.0, %v526
  %v528 = vpop.f32.mrb[0].mxu0
  %529 = vmatprep.mubr.f32.mxu0 0.0
  %530 = vmatmul.mubr.f32.gmra.mrb[0].mxu0 %v194
  %v531 = vpop.f32.mrb[0].mxu0
  %v532 = vadd.f32 0.0, %v531
  %v533 = vpop.f32.mrb[0].mxu0
  %534 = vmatprep.mubr.f32.mxu0 0.0
  %535 = vmatmul.mubr.f32.gmra.mrb[0].mxu0 %v197
  %v536 = vpop.f32.mrb[0].mxu0
  %v537 = vadd.f32 0.0, %v536
  %v538 = vpop.f32.mrb[0].mxu0
  %539 = vmatprep.mubr.f32.mxu0 0.0
  %540 = vmatmul.mubr.f32.gmra.mrb[0].mxu0 %v200
  %v541 = vpop.f32.mrb[0].mxu0
  %v542 = vadd.f32 0.0, %v541
  %v543 = vpop.f32.mrb[0].mxu0
  %544 = vmatprep.mubr.f32.mxu0 0.0
  %545 = vmatmul.mubr.f32.gmra.mrb[0].mxu0 %v203
  %v546 = vpop.f32.mrb[0].mxu0
  %v547 = vadd.f32 0.0, %v546
  %v548 = vpop.f32.mrb[0].mxu0
  %549 = vmatprep.mubr.f32.mxu0 0.0
  %550 = vmatmul.mubr.f32.gmra.mrb[0].mxu0 %v206
  %v551 = vpop.f32.mrb[0].mxu0
  %v552 = vadd.f32 0.0, %v551
  %v553 = vpop.f32.mrb[0].mxu0
  %554 = vmatprep.mubr.f32.mxu0 0.0
  %555 = vmatmul.mubr.f32.gmra.mrb[0].mxu0 %v209
  %v556 = vpop.f32.mrb[0].mxu0
  %v557 = vadd.f32 0.0, %v556
  %v558 = vpop.f32.mrb[0].mxu0
  %559 = vmatprep.mubr.f32.mxu0 0.0
  %560 = vmatmul.mubr.f32.gmra.mrb[0].mxu0 %v212
  %v561 = vpop.f32.mrb[0].mxu0
  %v562 = vadd.f32 0.0, %v561
  %v563 = vpop.f32.mrb[0].mxu0
  %564 = vmatprep.mubr.f32.mxu0 0.0
  %565 = vmatmul.mubr.f32.gmra.mrb[0].mxu0 %v215
  %v566 = vpop.f32.mrb[0].mxu0
  %v567 = vadd.f32 0.0, %v566
  %v568 = vpop.f32.mrb[0].mxu0
  %569 = vmatprep.mubr.f32.mxu0 0.0
  %570 = vmatmul.mubr.f32.gmra.mrb[0].mxu0 %v218
  %v571 = vpop.f32.mrb[0].mxu0
  %v572 = vadd.f32 0.0, %v571
  %v573 = vpop.f32.mrb[0].mxu0
  %574 = vmatprep.mubr.f32.mxu0 0.0
  %575 = vmatmul.mubr.f32.gmra.mrb[0].mxu0 %v221
  %v576 = vpop.f32.mrb[0].mxu0
  %v577 = vadd.f32 0.0, %v576
  %v578 = vpop.f32.mrb[0].mxu0
  %579 = vmatprep.mubr.f32.mxu0 0.0
  %580 = vmatmul.mubr.f32.gmra.mrb[0].mxu0 %v224
  %v581 = vpop.f32.mrb[0].mxu0
  %v582 = vadd.f32 0.0, %v581
  %v583 = vpop.f32.mrb[0].mxu0
  %584 = vmatprep.mubr.f32.mxu0 0.0
  %585 = vmatmul.mubr.f32.gmra.mrb[0].mxu0 %v227
  %v586 = vpop.f32.mrb[0].mxu0
  %v587 = vadd.f32 0.0, %v586
  %v588 = vpop.f32.mrb[0].mxu0
  %589 = vmatprep.mubr.f32.mxu0 0.0
  %590 = vmatmul.mubr.f32.gmra.mrb[0].mxu0 %v230
  %v591 = vpop.f32.mrb[0].mxu0
  %v592 = vadd.f32 0.0, %v591
  %v593 = vpop.f32.mrb[0].mxu0
  %594 = vmatprep.mubr.f32.mxu0 0.0
  %595 = vmatmul.mubr.f32.gmra.mrb[0].mxu0 %v233
  %v596 = vpop.f32.mrb[0].mxu0
  %v597 = vadd.f32 0.0, %v596
  %v598 = vpop.f32.mrb[0].mxu0
  %599 = vmatprep.mubr.f32.mxu0 0.0
  %600 = vmatmul.mubr.f32.gmra.mrb[0].mxu0 %v236
  %v601 = vpop.f32.mrb[0].mxu0
  %v602 = vadd.f32 0.0, %v601
  %v603 = vpop.f32.mrb[0].mxu0
  %604 = vmatprep.mubr.f32.mxu0 0.0
  %605 = vmatmul.mubr.f32.gmra.mrb[0].mxu0 %v239
  %v606 = vpop.f32.mrb[0].mxu0
  %v607 = vadd.f32 0.0, %v606
  %v608 = vpop.f32.mrb[0].mxu0
  %609 = vmatprep.mubr.f32.mxu0 0.0
  %610 = vmatmul.mubr.f32.gmra.mrb[0].mxu0 %v242
  %v611 = vpop.f32.mrb[0].mxu0
  %v612 = vadd.f32 0.0, %v611
  %v613 = vpop.f32.mrb[0].mxu0
  %614 = vmatprep.mubr.f32.mxu0 0.0
  %615 = vmatmul.mubr.f32.gmra.mrb[0].mxu0 %v245
  %v616 = vpop.f32.mrb[0].mxu0
  %v617 = vadd.f32 0.0, %v616
  %v618 = vpop.f32.mrb[0].mxu0
  %619 = vmatprep.mubr.f32.mxu0 0.0
  %620 = vmatmul.mubr.f32.gmra.mrb[0].mxu0 %v248
  %v621 = vpop.f32.mrb[0].mxu0
  %v622 = vadd.f32 0.0, %v621
  %v623 = vpop.f32.mrb[0].mxu0
  %624 = vmatprep.mubr.f32.mxu0 0.0
  %625 = vmatmul.mubr.f32.gmra.mrb[0].mxu0 %v251
  %v626 = vpop.f32.mrb[0].mxu0
  %v627 = vadd.f32 0.0, %v626
  %v628 = vpop.f32.mrb[0].mxu0
  %629 = vmatprep.mubr.f32.mxu0 0.0
  %630 = vmatmul.mubr.f32.gmra.mrb[0].mxu0 %v254
  %v631 = vpop.f32.mrb[0].mxu0
  %v632 = vadd.f32 0.0, %v631
  %v633 = vpop.f32.mrb[0].mxu0
  %634 = vmatprep.mubr.f32.mxu0 0.0
  %635 = vmatmul.mubr.f32.gmra.mrb[0].mxu0 %v257
  %v636 = vpop.f32.mrb[0].mxu0
  %v637 = vadd.f32 0.0, %v636
  %v638 = vpop.f32.mrb[0].mxu0
  %639 = vmatprep.mubr.f32.mxu0 0.0
  %640 = vmatmul.mubr.f32.gmra.mrb[0].mxu0 %v260
  %v641 = vpop.f32.mrb[0].mxu0
  %v642 = vadd.f32 0.0, %v641
  %v643 = vpop.f32.mrb[0].mxu0
  %644 = vmatprep.mubr.f32.mxu0 0.0
  %645 = vmatmul.mubr.f32.gmra.mrb[0].mxu0 %v263
  %v646 = vpop.f32.mrb[0].mxu0
  %v647 = vadd.f32 0.0, %v646
  %v648 = vpop.f32.mrb[0].mxu0
  %649 = vmatprep.mubr.f32.mxu0 0.0
  %650 = vmatmul.mubr.f32.gmra.mrb[0].mxu0 %v266
  %v651 = vpop.f32.mrb[0].mxu0
  %v652 = vadd.f32 0.0, %v651
  %v653 = vpop.f32.mrb[0].mxu0
  %654 = vmatprep.mubr.f32.mxu0 0.0
  %655 = vmatmul.mubr.f32.gmra.mrb[0].mxu0 %v269
  %v656 = vpop.f32.mrb[0].mxu0
  %v657 = vadd.f32 0.0, %v656
  %v658 = vpop.f32.mrb[0].mxu0
  %659 = vdwg.mxu0
  %vm660 = vcmask 64512
  %661 = vst.msk [vmem:[%s2] sm:$0xff] %vm660, %v342
  %662 = vst.msk [vmem:[%s2 + $0x8] sm:$0xff] %vm660, %v347
  %663 = vst.msk [vmem:[%s2 + $0x10] sm:$0xff] %vm660, %v352
  %664 = vst.msk [vmem:[%s2 + $0x18] sm:$0xff] %vm660, %v357
  %665 = vst.msk [vmem:[%s2 + $0x20] sm:$0xff] %vm660, %v362
  %666 = vst.msk [vmem:[%s2 + $0x28] sm:$0xff] %vm660, %v367
  %667 = vst.msk [vmem:[%s2 + $0x30] sm:$0xff] %vm660, %v372
  %668 = vst.msk [vmem:[%s2 + $0x38] sm:$0xff] %vm660, %v377
  %669 = vst.msk [vmem:[%s2 + $0x40] sm:$0xff] %vm660, %v382
  %670 = vst.msk [vmem:[%s2 + $0x48] sm:$0xff] %vm660, %v387
  %671 = vst.msk [vmem:[%s2 + $0x50] sm:$0xff] %vm660, %v392
  %672 = vst.msk [vmem:[%s2 + $0x58] sm:$0xff] %vm660, %v397
  %673 = vst.msk [vmem:[%s2 + $0x60] sm:$0xff] %vm660, %v402
  %674 = vst.msk [vmem:[%s2 + $0x68] sm:$0xff] %vm660, %v407
  %675 = vst.msk [vmem:[%s2 + $0x70] sm:$0xff] %vm660, %v412
  %676 = vst.msk [vmem:[%s2 + $0x78] sm:$0xff] %vm660, %v417
  %677 = vst.msk [vmem:[%s2 + $0x80] sm:$0xff] %vm660, %v422
  %678 = vst.msk [vmem:[%s2 + $0x88] sm:$0xff] %vm660, %v427
  %679 = vst.msk [vmem:[%s2 + $0x90] sm:$0xff] %vm660, %v432
  %680 = vst.msk [vmem:[%s2 + $0x98] sm:$0xff] %vm660, %v437
  %681 = vst.msk [vmem:[%s2 + $0xa0] sm:$0xff] %vm660, %v442
  %682 = vst.msk [vmem:[%s2 + $0xa8] sm:$0xff] %vm660, %v447
  %683 = vst.msk [vmem:[%s2 + $0xb0] sm:$0xff] %vm660, %v452
  %684 = vst.msk [vmem:[%s2 + $0xb8] sm:$0xff] %vm660, %v457
  %685 = vst.msk [vmem:[%s2 + $0xc0] sm:$0xff] %vm660, %v462
  %686 = vst.msk [vmem:[%s2 + $0xc8] sm:$0xff] %vm660, %v467
  %687 = vst.msk [vmem:[%s2 + $0xd0] sm:$0xff] %vm660, %v472
  %688 = vst.msk [vmem:[%s2 + $0xd8] sm:$0xff] %vm660, %v477
  %689 = vst.msk [vmem:[%s2 + $0xe0] sm:$0xff] %vm660, %v482
  %690 = vst.msk [vmem:[%s2 + $0xe8] sm:$0xff] %vm660, %v487
  %691 = vst.msk [vmem:[%s2 + $0xf0] sm:$0xff] %vm660, %v492
  %692 = vst.msk [vmem:[%s2 + $0xf8] sm:$0xff] %vm660, %v497
  %693 = vst.msk [vmem:[%s2 + $0x100] sm:$0xff] %vm660, %v502
  %694 = vst.msk [vmem:[%s2 + $0x108] sm:$0xff] %vm660, %v507
  %695 = vst.msk [vmem:[%s2 + $0x110] sm:$0xff] %vm660, %v512
  %696 = vst.msk [vmem:[%s2 + $0x118] sm:$0xff] %vm660, %v517
  %697 = vst.msk [vmem:[%s2 + $0x120] sm:$0xff] %vm660, %v522
  %698 = vst.msk [vmem:[%s2 + $0x128] sm:$0xff] %vm660, %v527
  %699 = vst.msk [vmem:[%s2 + $0x130] sm:$0xff] %vm660, %v532
  %700 = vst.msk [vmem:[%s2 + $0x138] sm:$0xff] %vm660, %v537
  %701 = vst.msk [vmem:[%s2 + $0x140] sm:$0xff] %vm660, %v542
  %702 = vst.msk [vmem:[%s2 + $0x148] sm:$0xff] %vm660, %v547
  %703 = vst.msk [vmem:[%s2 + $0x150] sm:$0xff] %vm660, %v552
  %704 = vst.msk [vmem:[%s2 + $0x158] sm:$0xff] %vm660, %v557
  %705 = vst.msk [vmem:[%s2 + $0x160] sm:$0xff] %vm660, %v562
  %706 = vst.msk [vmem:[%s2 + $0x168] sm:$0xff] %vm660, %v567
  %707 = vst.msk [vmem:[%s2 + $0x170] sm:$0xff] %vm660, %v572
  %708 = vst.msk [vmem:[%s2 + $0x178] sm:$0xff] %vm660, %v577
  %709 = vst.msk [vmem:[%s2 + $0x180] sm:$0xff] %vm660, %v582
  %710 = vst.msk [vmem:[%s2 + $0x188] sm:$0xff] %vm660, %v587
  %711 = vst.msk [vmem:[%s2 + $0x190] sm:$0xff] %vm660, %v592
  %712 = vst.msk [vmem:[%s2 + $0x198] sm:$0xff] %vm660, %v597
  %713 = vst.msk [vmem:[%s2 + $0x1a0] sm:$0xff] %vm660, %v602
  %714 = vst.msk [vmem:[%s2 + $0x1a8] sm:$0xff] %vm660, %v607
  %715 = vst.msk [vmem:[%s2 + $0x1b0] sm:$0xff] %vm660, %v612
  %716 = vst.msk [vmem:[%s2 + $0x1b8] sm:$0xff] %vm660, %v617
  %717 = vst.msk [vmem:[%s2 + $0x1c0] sm:$0xff] %vm660, %v622
  %718 = vst.msk [vmem:[%s2 + $0x1c8] sm:$0xff] %vm660, %v627
  %719 = vst.msk [vmem:[%s2 + $0x1d0] sm:$0xff] %vm660, %v632
  %720 = vst.msk [vmem:[%s2 + $0x1d8] sm:$0xff] %vm660, %v637
  %721 = vst.msk [vmem:[%s2 + $0x1e0] sm:$0xff] %vm660, %v642
  %722 = vst.msk [vmem:[%s2 + $0x1e8] sm:$0xff] %vm660, %v647
  %723 = vst.msk [vmem:[%s2 + $0x1f0] sm:$0xff] %vm660, %v652
  %724 = vst.msk [vmem:[%s2 + $0x1f8] sm:$0xff] %vm660, %v657
  %v725 = vsel %vm660, %v342, 0.0
  %v726 = vsel %vm660, %v347, 0.0
  %v727 = vadd.f32 %v725, %v726
  %v728 = vsel %vm660, %v352, 0.0
  %v729 = vadd.f32 %v727, %v728
  %v730 = vsel %vm660, %v357, 0.0
  %v731 = vadd.f32 %v729, %v730
  %v732 = vsel %vm660, %v362, 0.0
  %v733 = vadd.f32 %v731, %v732
  %v734 = vsel %vm660, %v367, 0.0
  %v735 = vadd.f32 %v733, %v734
  %v736 = vsel %vm660, %v372, 0.0
  %v737 = vadd.f32 %v735, %v736
  %v738 = vsel %vm660, %v377, 0.0
  %v739 = vadd.f32 %v737, %v738
  %v740 = vsel %vm660, %v382, 0.0
  %v741 = vadd.f32 %v739, %v740
  %v742 = vsel %vm660, %v387, 0.0
  %v743 = vadd.f32 %v741, %v742
  %v744 = vsel %vm660, %v392, 0.0
  %v745 = vadd.f32 %v743, %v744
  %v746 = vsel %vm660, %v397, 0.0
  %v747 = vadd.f32 %v745, %v746
  %v748 = vsel %vm660, %v402, 0.0
  %v749 = vadd.f32 %v747, %v748
  %v750 = vsel %vm660, %v407, 0.0
  %v751 = vadd.f32 %v749, %v750
  %v752 = vsel %vm660, %v412, 0.0
  %v753 = vadd.f32 %v751, %v752
  %v754 = vsel %vm660, %v417, 0.0
  %v755 = vadd.f32 %v753, %v754
  %v756 = vsel %vm660, %v422, 0.0
  %v757 = vadd.f32 %v755, %v756
  %v758 = vsel %vm660, %v427, 0.0
  %v759 = vadd.f32 %v757, %v758
  %v760 = vsel %vm660, %v432, 0.0
  %v761 = vadd.f32 %v759, %v760
  %v762 = vsel %vm660, %v437, 0.0
  %v763 = vadd.f32 %v761, %v762
  %v764 = vsel %vm660, %v442, 0.0
  %v765 = vadd.f32 %v763, %v764
  %v766 = vsel %vm660, %v447, 0.0
  %v767 = vadd.f32 %v765, %v766
  %v768 = vsel %vm660, %v452, 0.0
  %v769 = vadd.f32 %v767, %v768
  %v770 = vsel %vm660, %v457, 0.0
  %v771 = vadd.f32 %v769, %v770
  %v772 = vsel %vm660, %v462, 0.0
  %v773 = vadd.f32 %v771, %v772
  %v774 = vsel %vm660, %v467, 0.0
  %v775 = vadd.f32 %v773, %v774
  %v776 = vsel %vm660, %v472, 0.0
  %v777 = vadd.f32 %v775, %v776
  %v778 = vsel %vm660, %v477, 0.0
  %v779 = vadd.f32 %v777, %v778
  %v780 = vsel %vm660, %v482, 0.0
  %v781 = vadd.f32 %v779, %v780
  %v782 = vsel %vm660, %v487, 0.0
  %v783 = vadd.f32 %v781, %v782
  %v784 = vsel %vm660, %v492, 0.0
  %v785 = vadd.f32 %v783, %v784
  %v786 = vsel %vm660, %v497, 0.0
  %v787 = vadd.f32 %v785, %v786
  %v788 = vsel %vm660, %v502, 0.0
  %v789 = vadd.f32 %v787, %v788
  %v790 = vsel %vm660, %v507, 0.0
  %v791 = vadd.f32 %v789, %v790
  %v792 = vsel %vm660, %v512, 0.0
  %v793 = vadd.f32 %v791, %v792
  %v794 = vsel %vm660, %v517, 0.0
  %v795 = vadd.f32 %v793, %v794
  %v796 = vsel %vm660, %v522, 0.0
  %v797 = vadd.f32 %v795, %v796
  %v798 = vsel %vm660, %v527, 0.0
  %v799 = vadd.f32 %v797, %v798
  %v800 = vsel %vm660, %v532, 0.0
  %v801 = vadd.f32 %v799, %v800
  %v802 = vsel %vm660, %v537, 0.0
  %v803 = vadd.f32 %v801, %v802
  %v804 = vsel %vm660, %v542, 0.0
  %v805 = vadd.f32 %v803, %v804
  %v806 = vsel %vm660, %v547, 0.0
  %v807 = vadd.f32 %v805, %v806
  %v808 = vsel %vm660, %v552, 0.0
  %v809 = vadd.f32 %v807, %v808
  %v810 = vsel %vm660, %v557, 0.0
  %v811 = vadd.f32 %v809, %v810
  %v812 = vsel %vm660, %v562, 0.0
  %v813 = vadd.f32 %v811, %v812
  %v814 = vsel %vm660, %v567, 0.0
  %v815 = vadd.f32 %v813, %v814
  %v816 = vsel %vm660, %v572, 0.0
  %v817 = vadd.f32 %v815, %v816
  %v818 = vsel %vm660, %v577, 0.0
  %v819 = vadd.f32 %v817, %v818
  %v820 = vsel %vm660, %v582, 0.0
  %v821 = vadd.f32 %v819, %v820
  %v822 = vsel %vm660, %v587, 0.0
  %v823 = vadd.f32 %v821, %v822
  %v824 = vsel %vm660, %v592, 0.0
  %v825 = vadd.f32 %v823, %v824
  %v826 = vsel %vm660, %v597, 0.0
  %v827 = vadd.f32 %v825, %v826
  %v828 = vsel %vm660, %v602, 0.0
  %v829 = vadd.f32 %v827, %v828
  %v830 = vsel %vm660, %v607, 0.0
  %v831 = vadd.f32 %v829, %v830
  %v832 = vsel %vm660, %v612, 0.0
  %v833 = vadd.f32 %v831, %v832
  %v834 = vsel %vm660, %v617, 0.0
  %v835 = vadd.f32 %v833, %v834
  %v836 = vsel %vm660, %v622, 0.0
  %v837 = vadd.f32 %v835, %v836
  %v838 = vsel %vm660, %v627, 0.0
  %v839 = vadd.f32 %v837, %v838
  %v840 = vsel %vm660, %v632, 0.0
  %v841 = vadd.f32 %v839, %v840
  %v842 = vsel %vm660, %v637, 0.0
  %v843 = vadd.f32 %v841, %v842
  %v844 = vsel %vm660, %v642, 0.0
  %v845 = vadd.f32 %v843, %v844
  %v846 = vsel %vm660, %v647, 0.0
  %v847 = vadd.f32 %v845, %v846
  %v848 = vsel %vm660, %v652, 0.0
  %v849 = vadd.f32 %v847, %v848
  %v850 = vsel %vm660, %v657, 0.0
  %v851 = vadd.f32 %v849, %v850
  %v852 = vrot.slane %v851, 4
  %v853 = vadd.f32 %v851, %v852
  %v854 = vrot.slane %v853, 2
  %v855 = vadd.f32 %v853, %v854
  %v856 = vrot.slane %v855, 1
  %v857 = vadd.f32 %v855, %v856
  %vm858 = vcmask 57344
  %859 = vst.msk [vmem:[%s3] sm:$0x1] %vm858, %v857
  %v860 = vmul.f32 %v342, %v342
  %v861 = vmul.f32 %v347, %v347
  %v862 = vmul.f32 %v352, %v352
  %v863 = vmul.f32 %v357, %v357
  %v864 = vmul.f32 %v362, %v362
  %v865 = vmul.f32 %v367, %v367
  %v866 = vmul.f32 %v372, %v372
  %v867 = vmul.f32 %v377, %v377
  %v868 = vmul.f32 %v382, %v382
  %v869 = vmul.f32 %v387, %v387
  %v870 = vmul.f32 %v392, %v392
  %v871 = vmul.f32 %v397, %v397
  %v872 = vmul.f32 %v402, %v402
  %v873 = vmul.f32 %v407, %v407
  %v874 = vmul.f32 %v412, %v412
  %v875 = vmul.f32 %v417, %v417
  %v876 = vmul.f32 %v422, %v422
  %v877 = vmul.f32 %v427, %v427
  %v878 = vmul.f32 %v432, %v432
  %v879 = vmul.f32 %v437, %v437
  %v880 = vmul.f32 %v442, %v442
  %v881 = vmul.f32 %v447, %v447
  %v882 = vmul.f32 %v452, %v452
  %v883 = vmul.f32 %v457, %v457
  %v884 = vmul.f32 %v462, %v462
  %v885 = vmul.f32 %v467, %v467
  %v886 = vmul.f32 %v472, %v472
  %v887 = vmul.f32 %v477, %v477
  %v888 = vmul.f32 %v482, %v482
  %v889 = vmul.f32 %v487, %v487
  %v890 = vmul.f32 %v492, %v492
  %v891 = vmul.f32 %v497, %v497
  %v892 = vmul.f32 %v502, %v502
  %v893 = vmul.f32 %v507, %v507
  %v894 = vmul.f32 %v512, %v512
  %v895 = vmul.f32 %v517, %v517
  %v896 = vmul.f32 %v522, %v522
  %v897 = vmul.f32 %v527, %v527
  %v898 = vmul.f32 %v532, %v532
  %v899 = vmul.f32 %v537, %v537
  %v900 = vmul.f32 %v542, %v542
  %v901 = vmul.f32 %v547, %v547
  %v902 = vmul.f32 %v552, %v552
  %v903 = vmul.f32 %v557, %v557
  %v904 = vmul.f32 %v562, %v562
  %v905 = vmul.f32 %v567, %v567
  %v906 = vmul.f32 %v572, %v572
  %v907 = vmul.f32 %v577, %v577
  %v908 = vmul.f32 %v582, %v582
  %v909 = vmul.f32 %v587, %v587
  %v910 = vmul.f32 %v592, %v592
  %v911 = vmul.f32 %v597, %v597
  %v912 = vmul.f32 %v602, %v602
  %v913 = vmul.f32 %v607, %v607
  %v914 = vmul.f32 %v612, %v612
  %v915 = vmul.f32 %v617, %v617
  %v916 = vmul.f32 %v622, %v622
  %v917 = vmul.f32 %v627, %v627
  %v918 = vmul.f32 %v632, %v632
  %v919 = vmul.f32 %v637, %v637
  %v920 = vmul.f32 %v642, %v642
  %v921 = vmul.f32 %v647, %v647
  %v922 = vmul.f32 %v652, %v652
  %v923 = vmul.f32 %v657, %v657
  %v924 = vsel %vm660, %v860, 0.0
  %v925 = vsel %vm660, %v861, 0.0
  %v926 = vadd.f32 %v924, %v925
  %v927 = vsel %vm660, %v862, 0.0
  %v928 = vadd.f32 %v926, %v927
  %v929 = vsel %vm660, %v863, 0.0
  %v930 = vadd.f32 %v928, %v929
  %v931 = vsel %vm660, %v864, 0.0
  %v932 = vadd.f32 %v930, %v931
  %v933 = vsel %vm660, %v865, 0.0
  %v934 = vadd.f32 %v932, %v933
  %v935 = vsel %vm660, %v866, 0.0
  %v936 = vadd.f32 %v934, %v935
  %v937 = vsel %vm660, %v867, 0.0
  %v938 = vadd.f32 %v936, %v937
  %v939 = vsel %vm660, %v868, 0.0
  %v940 = vadd.f32 %v938, %v939
  %v941 = vsel %vm660, %v869, 0.0
  %v942 = vadd.f32 %v940, %v941
  %v943 = vsel %vm660, %v870, 0.0
  %v944 = vadd.f32 %v942, %v943
  %v945 = vsel %vm660, %v871, 0.0
  %v946 = vadd.f32 %v944, %v945
  %v947 = vsel %vm660, %v872, 0.0
  %v948 = vadd.f32 %v946, %v947
  %v949 = vsel %vm660, %v873, 0.0
  %v950 = vadd.f32 %v948, %v949
  %v951 = vsel %vm660, %v874, 0.0
  %v952 = vadd.f32 %v950, %v951
  %v953 = vsel %vm660, %v875, 0.0
  %v954 = vadd.f32 %v952, %v953
  %v955 = vsel %vm660, %v876, 0.0
  %v956 = vadd.f32 %v954, %v955
  %v957 = vsel %vm660, %v877, 0.0
  %v958 = vadd.f32 %v956, %v957
  %v959 = vsel %vm660, %v878, 0.0
  %v960 = vadd.f32 %v958, %v959
  %v961 = vsel %vm660, %v879, 0.0
  %v962 = vadd.f32 %v960, %v961
  %v963 = vsel %vm660, %v880, 0.0
  %v964 = vadd.f32 %v962, %v963
  %v965 = vsel %vm660, %v881, 0.0
  %v966 = vadd.f32 %v964, %v965
  %v967 = vsel %vm660, %v882, 0.0
  %v968 = vadd.f32 %v966, %v967
  %v969 = vsel %vm660, %v883, 0.0
  %v970 = vadd.f32 %v968, %v969
  %v971 = vsel %vm660, %v884, 0.0
  %v972 = vadd.f32 %v970, %v971
  %v973 = vsel %vm660, %v885, 0.0
  %v974 = vadd.f32 %v972, %v973
  %v975 = vsel %vm660, %v886, 0.0
  %v976 = vadd.f32 %v974, %v975
  %v977 = vsel %vm660, %v887, 0.0
  %v978 = vadd.f32 %v976, %v977
  %v979 = vsel %vm660, %v888, 0.0
  %v980 = vadd.f32 %v978, %v979
  %v981 = vsel %vm660, %v889, 0.0
  %v982 = vadd.f32 %v980, %v981
  %v983 = vsel %vm660, %v890, 0.0
  %v984 = vadd.f32 %v982, %v983
  %v985 = vsel %vm660, %v891, 0.0
  %v986 = vadd.f32 %v984, %v985
  %v987 = vsel %vm660, %v892, 0.0
  %v988 = vadd.f32 %v986, %v987
  %v989 = vsel %vm660, %v893, 0.0
  %v990 = vadd.f32 %v988, %v989
  %v991 = vsel %vm660, %v894, 0.0
  %v992 = vadd.f32 %v990, %v991
  %v993 = vsel %vm660, %v895, 0.0
  %v994 = vadd.f32 %v992, %v993
  %v995 = vsel %vm660, %v896, 0.0
  %v996 = vadd.f32 %v994, %v995
  %v997 = vsel %vm660, %v897, 0.0
  %v998 = vadd.f32 %v996, %v997
  %v999 = vsel %vm660, %v898, 0.0
  %v1000 = vadd.f32 %v998, %v999
  %v1001 = vsel %vm660, %v899, 0.0
  %v1002 = vadd.f32 %v1000, %v1001
  %v1003 = vsel %vm660, %v900, 0.0
  %v1004 = vadd.f32 %v1002, %v1003
  %v1005 = vsel %vm660, %v901, 0.0
  %v1006 = vadd.f32 %v1004, %v1005
  %v1007 = vsel %vm660, %v902, 0.0
  %v1008 = vadd.f32 %v1006, %v1007
  %v1009 = vsel %vm660, %v903, 0.0
  %v1010 = vadd.f32 %v1008, %v1009
  %v1011 = vsel %vm660, %v904, 0.0
  %v1012 = vadd.f32 %v1010, %v1011
  %v1013 = vsel %vm660, %v905, 0.0
  %v1014 = vadd.f32 %v1012, %v1013
  %v1015 = vsel %vm660, %v906, 0.0
  %v1016 = vadd.f32 %v1014, %v1015
  %v1017 = vsel %vm660, %v907, 0.0
  %v1018 = vadd.f32 %v1016, %v1017
  %v1019 = vsel %vm660, %v908, 0.0
  %v1020 = vadd.f32 %v1018, %v1019
  %v1021 = vsel %vm660, %v909, 0.0
  %v1022 = vadd.f32 %v1020, %v1021
  %v1023 = vsel %vm660, %v910, 0.0
  %v1024 = vadd.f32 %v1022, %v1023
  %v1025 = vsel %vm660, %v911, 0.0
  %v1026 = vadd.f32 %v1024, %v1025
  %v1027 = vsel %vm660, %v912, 0.0
  %v1028 = vadd.f32 %v1026, %v1027
  %v1029 = vsel %vm660, %v913, 0.0
  %v1030 = vadd.f32 %v1028, %v1029
  %v1031 = vsel %vm660, %v914, 0.0
  %v1032 = vadd.f32 %v1030, %v1031
  %v1033 = vsel %vm660, %v915, 0.0
  %v1034 = vadd.f32 %v1032, %v1033
  %v1035 = vsel %vm660, %v916, 0.0
  %v1036 = vadd.f32 %v1034, %v1035
  %v1037 = vsel %vm660, %v917, 0.0
  %v1038 = vadd.f32 %v1036, %v1037
  %v1039 = vsel %vm660, %v918, 0.0
  %v1040 = vadd.f32 %v1038, %v1039
  %v1041 = vsel %vm660, %v919, 0.0
  %v1042 = vadd.f32 %v1040, %v1041
  %v1043 = vsel %vm660, %v920, 0.0
  %v1044 = vadd.f32 %v1042, %v1043
  %v1045 = vsel %vm660, %v921, 0.0
  %v1046 = vadd.f32 %v1044, %v1045
  %v1047 = vsel %vm660, %v922, 0.0
  %v1048 = vadd.f32 %v1046, %v1047
  %v1049 = vsel %vm660, %v923, 0.0
  %v1050 = vadd.f32 %v1048, %v1049
  %v1051 = vrot.slane %v1050, 4
  %v1052 = vadd.f32 %v1050, %v1051
  %v1053 = vrot.slane %v1052, 2
  %v1054 = vadd.f32 %v1052, %v1053
  %v1055 = vrot.slane %v1054, 1
  %v1056 = vadd.f32 %v1054, %v1055
  %1057 = vst.msk [vmem:[%s3 + $0x1] sm:$0x1] %vm858, %v1056
  // Predicated region
  $region10: #{bottleneck_forward.5} parent=0 // pred_check
    _
  $region11: #{bottleneck_forward.5} parent=0 // pred_check_branch
    %1059 = sbr.rel (0) target = $region13
  $region12: #{bottleneck_forward.5} parent=0 // pred_region
    _
  $region13: #{bottleneck_forward.5} parent=0 // pred_fallthru
    _
  // Predicated region
  $region14: #{bottleneck_forward.5} parent=0 // pred_check
    _
  $region15: #{bottleneck_forward.5} parent=0 // pred_check_branch
    %1061 = sbr.rel (0) target = $region17
  $region16: #{bottleneck_forward.5} parent=0 // pred_region
    _
  $region17: #{bottleneck_forward.5} parent=0 // pred_fallthru
    _
  // Predicated region
  $region18: #{bottleneck_forward.5} parent=0 // pred_check
    _
  $region19: #{bottleneck_forward.5} parent=0 // pred_check_branch
    %1063 = sbr.rel (0) target = $region21
  $region20: #{bottleneck_forward.5} parent=0 // pred_region
    _
  $region21: #{bottleneck_forward.5} parent=0 // pred_fallthru
    _
  // Predicated region
  $region22: #{bottleneck_forward.5} parent=0 // pred_check
    _
  $region23: #{bottleneck_forward.5} parent=0 // pred_check_branch
    %1065 = sbr.rel (0) target = $region25
  $region24: #{bottleneck_forward.5} parent=0 // pred_region
    _
  $region25: #{bottleneck_forward.5} parent=0 // pred_fallthru
    _

// kernel: bottleneck_forward.8
$region0: #{bottleneck_forward.8}
  #allocation0 [shape = 'u32[]', space=smem, size = 0x4, offset = 0x4, fixed_abs, tag = 'smem constant byte address 0x4 - core index']
  #allocation1 [shape = 'u32[144,128]{1,0:T(1,128)}', space=vmem, size = 0x12000, scoped, tag = 'internal scratch']
  %s0 = inlined_call_operand.vmem [shape: f32[512,4], index: 0, kind: input, shape index: {}]
  %s1 = inlined_call_operand.vmem [shape: f32[4,32], index: 1, kind: input, shape index: {}]
  %s2 = inlined_call_operand.vmem [shape: f32[512,32], index: 2, kind: output, shape index: {0}]
  %s3 = inlined_call_operand.vmem [shape: f32[1,2,32], index: 3, kind: output, shape index: {1}]
  %4 = xla_tuple %s2, %s3
  %s5 = sld [smem:[#allocation0]]
  $region26: #{bottleneck_forward.8} parent=0
    _
  %s7 = ssub.s32 1, %s5
  %s8 = scalar_select 0, %s7, %s5
  // Predicated region
  $region2: #{bottleneck_forward.8} parent=0 // pred_check
    _
  $region3: #{bottleneck_forward.8} parent=0 // pred_check_branch
    %10 = sbr.rel (0) target = $region5
  $region4: #{bottleneck_forward.8} parent=0 // pred_region
    _
  $region5: #{bottleneck_forward.8} parent=0 // pred_fallthru
    _
  // Predicated region
  $region6: #{bottleneck_forward.8} parent=0 // pred_check
    _
  $region7: #{bottleneck_forward.8} parent=0 // pred_check_branch
    %12 = sbr.rel (0) target = $region9
  $region8: #{bottleneck_forward.8} parent=0 // pred_region
    _
  $region9: #{bottleneck_forward.8} parent=0 // pred_fallthru
    _
  %v13 = vld [vmem:[%s0] sm:$0xff]
  %v14 = vld [vmem:[%s0 + $0x8] sm:$0xff]
  %v15 = vld [vmem:[%s0 + $0x10] sm:$0xff]
  %v16 = vld [vmem:[%s0 + $0x18] sm:$0xff]
  %v17 = vld [vmem:[%s0 + $0x20] sm:$0xff]
  %v18 = vld [vmem:[%s0 + $0x28] sm:$0xff]
  %v19 = vld [vmem:[%s0 + $0x30] sm:$0xff]
  %v20 = vld [vmem:[%s0 + $0x38] sm:$0xff]
  %v21 = vld [vmem:[%s0 + $0x40] sm:$0xff]
  %v22 = vld [vmem:[%s0 + $0x48] sm:$0xff]
  %v23 = vld [vmem:[%s0 + $0x50] sm:$0xff]
  %v24 = vld [vmem:[%s0 + $0x58] sm:$0xff]
  %v25 = vld [vmem:[%s0 + $0x60] sm:$0xff]
  %v26 = vld [vmem:[%s0 + $0x68] sm:$0xff]
  %v27 = vld [vmem:[%s0 + $0x70] sm:$0xff]
  %v28 = vld [vmem:[%s0 + $0x78] sm:$0xff]
  %v29 = vld [vmem:[%s0 + $0x80] sm:$0xff]
  %v30 = vld [vmem:[%s0 + $0x88] sm:$0xff]
  %v31 = vld [vmem:[%s0 + $0x90] sm:$0xff]
  %v32 = vld [vmem:[%s0 + $0x98] sm:$0xff]
  %v33 = vld [vmem:[%s0 + $0xa0] sm:$0xff]
  %v34 = vld [vmem:[%s0 + $0xa8] sm:$0xff]
  %v35 = vld [vmem:[%s0 + $0xb0] sm:$0xff]
  %v36 = vld [vmem:[%s0 + $0xb8] sm:$0xff]
  %v37 = vld [vmem:[%s0 + $0xc0] sm:$0xff]
  %v38 = vld [vmem:[%s0 + $0xc8] sm:$0xff]
  %v39 = vld [vmem:[%s0 + $0xd0] sm:$0xff]
  %v40 = vld [vmem:[%s0 + $0xd8] sm:$0xff]
  %v41 = vld [vmem:[%s0 + $0xe0] sm:$0xff]
  %v42 = vld [vmem:[%s0 + $0xe8] sm:$0xff]
  %v43 = vld [vmem:[%s0 + $0xf0] sm:$0xff]
  %v44 = vld [vmem:[%s0 + $0xf8] sm:$0xff]
  %v45 = vld [vmem:[%s0 + $0x100] sm:$0xff]
  %v46 = vld [vmem:[%s0 + $0x108] sm:$0xff]
  %v47 = vld [vmem:[%s0 + $0x110] sm:$0xff]
  %v48 = vld [vmem:[%s0 + $0x118] sm:$0xff]
  %v49 = vld [vmem:[%s0 + $0x120] sm:$0xff]
  %v50 = vld [vmem:[%s0 + $0x128] sm:$0xff]
  %v51 = vld [vmem:[%s0 + $0x130] sm:$0xff]
  %v52 = vld [vmem:[%s0 + $0x138] sm:$0xff]
  %v53 = vld [vmem:[%s0 + $0x140] sm:$0xff]
  %v54 = vld [vmem:[%s0 + $0x148] sm:$0xff]
  %v55 = vld [vmem:[%s0 + $0x150] sm:$0xff]
  %v56 = vld [vmem:[%s0 + $0x158] sm:$0xff]
  %v57 = vld [vmem:[%s0 + $0x160] sm:$0xff]
  %v58 = vld [vmem:[%s0 + $0x168] sm:$0xff]
  %v59 = vld [vmem:[%s0 + $0x170] sm:$0xff]
  %v60 = vld [vmem:[%s0 + $0x178] sm:$0xff]
  %v61 = vld [vmem:[%s0 + $0x180] sm:$0xff]
  %v62 = vld [vmem:[%s0 + $0x188] sm:$0xff]
  %v63 = vld [vmem:[%s0 + $0x190] sm:$0xff]
  %v64 = vld [vmem:[%s0 + $0x198] sm:$0xff]
  %v65 = vld [vmem:[%s0 + $0x1a0] sm:$0xff]
  %v66 = vld [vmem:[%s0 + $0x1a8] sm:$0xff]
  %v67 = vld [vmem:[%s0 + $0x1b0] sm:$0xff]
  %v68 = vld [vmem:[%s0 + $0x1b8] sm:$0xff]
  %v69 = vld [vmem:[%s0 + $0x1c0] sm:$0xff]
  %v70 = vld [vmem:[%s0 + $0x1c8] sm:$0xff]
  %v71 = vld [vmem:[%s0 + $0x1d0] sm:$0xff]
  %v72 = vld [vmem:[%s0 + $0x1d8] sm:$0xff]
  %v73 = vld [vmem:[%s0 + $0x1e0] sm:$0xff]
  %v74 = vld [vmem:[%s0 + $0x1e8] sm:$0xff]
  %v75 = vld [vmem:[%s0 + $0x1f0] sm:$0xff]
  %v76 = vld [vmem:[%s0 + $0x1f8] sm:$0xff]
  %v77 = vld [vmem:[%s1] sm:$0xf]
  %vm78 = vcmask 31744
  %v80 = vsel %vm78, %v13, 0
  %v83 = vsel %vm78, %v14, 0
  %v86 = vsel %vm78, %v15, 0
  %v89 = vsel %vm78, %v16, 0
  %v92 = vsel %vm78, %v17, 0
  %v95 = vsel %vm78, %v18, 0
  %v98 = vsel %vm78, %v19, 0
  %v101 = vsel %vm78, %v20, 0
  %v104 = vsel %vm78, %v21, 0
  %v107 = vsel %vm78, %v22, 0
  %v110 = vsel %vm78, %v23, 0
  %v113 = vsel %vm78, %v24, 0
  %v116 = vsel %vm78, %v25, 0
  %v119 = vsel %vm78, %v26, 0
  %v122 = vsel %vm78, %v27, 0
  %v125 = vsel %vm78, %v28, 0
  %v128 = vsel %vm78, %v29, 0
  %v131 = vsel %vm78, %v30, 0
  %v134 = vsel %vm78, %v31, 0
  %v137 = vsel %vm78, %v32, 0
  %v140 = vsel %vm78, %v33, 0
  %v143 = vsel %vm78, %v34, 0
  %v146 = vsel %vm78, %v35, 0
  %v149 = vsel %vm78, %v36, 0
  %v152 = vsel %vm78, %v37, 0
  %v155 = vsel %vm78, %v38, 0
  %v158 = vsel %vm78, %v39, 0
  %v161 = vsel %vm78, %v40, 0
  %v164 = vsel %vm78, %v41, 0
  %v167 = vsel %vm78, %v42, 0
  %v170 = vsel %vm78, %v43, 0
  %v173 = vsel %vm78, %v44, 0
  %v176 = vsel %vm78, %v45, 0
  %v179 = vsel %vm78, %v46, 0
  %v182 = vsel %vm78, %v47, 0
  %v185 = vsel %vm78, %v48, 0
  %v188 = vsel %vm78, %v49, 0
  %v191 = vsel %vm78, %v50, 0
  %v194 = vsel %vm78, %v51, 0
  %v197 = vsel %vm78, %v52, 0
  %v200 = vsel %vm78, %v53, 0
  %v203 = vsel %vm78, %v54, 0
  %v206 = vsel %vm78, %v55, 0
  %v209 = vsel %vm78, %v56, 0
  %v212 = vsel %vm78, %v57, 0
  %v215 = vsel %vm78, %v58, 0
  %v218 = vsel %vm78, %v59, 0
  %v221 = vsel %vm78, %v60, 0
  %v224 = vsel %vm78, %v61, 0
  %v227 = vsel %vm78, %v62, 0
  %v230 = vsel %vm78, %v63, 0
  %v233 = vsel %vm78, %v64, 0
  %v236 = vsel %vm78, %v65, 0
  %v239 = vsel %vm78, %v66, 0
  %v242 = vsel %vm78, %v67, 0
  %v245 = vsel %vm78, %v68, 0
  %v248 = vsel %vm78, %v69, 0
  %v251 = vsel %vm78, %v70, 0
  %v254 = vsel %vm78, %v71, 0
  %v257 = vsel %vm78, %v72, 0
  %v260 = vsel %vm78, %v73, 0
  %v263 = vsel %vm78, %v74, 0
  %v266 = vsel %vm78, %v75, 0
  %v269 = vsel %vm78, %v76, 0
  %vm271 = vcmask 1043456
  %v273 = vsel %vm271, %v77, 0
  %275 = vmatprep.subr.mxu0 0.0
  %276 = vmatpush1.msra.mxu0 %v273
  %277 = vmatprep.subr.mxu0 0.0
  %278 = vmatpush1.msra.mxu0 0.0
  %279 = vmatprep.subr.mxu0 0.0
  %280 = vmatpush1.msra.mxu0 0.0
  %281 = vmatprep.subr.mxu0 0.0
  %282 = vmatpush1.msra.mxu0 0.0
  %283 = vmatprep.subr.mxu0 0.0
  %284 = vmatpush1.msra.mxu0 0.0
  %285 = vmatprep.subr.mxu0 0.0
  %286 = vmatpush1.msra.mxu0 0.0
  %287 = vmatprep.subr.mxu0 0.0
  %288 = vmatpush1.msra.mxu0 0.0
  %289 = vmatprep.subr.mxu0 0.0
  %290 = vmatpush1.msra.mxu0 0.0
  %291 = vmatprep.subr.mxu0 0.0
  %292 = vmatpush1.msra.mxu0 0.0
  %293 = vmatprep.subr.mxu0 0.0
  %294 = vmatpush1.msra.mxu0 0.0
  %295 = vmatprep.subr.mxu0 0.0
  %296 = vmatpush1.msra.mxu0 0.0
  %297 = vmatprep.subr.mxu0 0.0
  %298 = vmatpush1.msra.mxu0 0.0
  %299 = vmatprep.subr.mxu0 0.0
  %300 = vmatpush1.msra.mxu0 0.0
  %301 = vmatprep.subr.mxu0 0.0
  %302 = vmatpush1.msra.mxu0 0.0
  %303 = vmatprep.subr.mxu0 0.0
  %304 = vmatpush1.msra.mxu0 0.0
  %305 = vmatprep.subr.mxu0 0.0
  %306 = vmatpush1.msra.mxu0 0.0
  %307 = vmatprep.subr.mxu0 0.0
  %308 = vmatpush1.msra.mxu0 0.0
  %309 = vmatprep.subr.mxu0 0.0
  %310 = vmatpush1.msra.mxu0 0.0
  %311 = vmatprep.subr.mxu0 0.0
  %312 = vmatpush1.msra.mxu0 0.0
  %313 = vmatprep.subr.mxu0 0.0
  %314 = vmatpush1.msra.mxu0 0.0
  %315 = vmatprep.subr.mxu0 0.0
  %316 = vmatpush1.msra.mxu0 0.0
  %317 = vmatprep.subr.mxu0 0.0
  %318 = vmatpush1.msra.mxu0 0.0
  %319 = vmatprep.subr.mxu0 0.0
  %320 = vmatpush1.msra.mxu0 0.0
  %321 = vmatprep.subr.mxu0 0.0
  %322 = vmatpush1.msra.mxu0 0.0
  %323 = vmatprep.subr.mxu0 0.0
  %324 = vmatpush1.msra.mxu0 0.0
  %325 = vmatprep.subr.mxu0 0.0
  %326 = vmatpush1.msra.mxu0 0.0
  %327 = vmatprep.subr.mxu0 0.0
  %328 = vmatpush1.msra.mxu0 0.0
  %329 = vmatprep.subr.mxu0 0.0
  %330 = vmatpush1.msra.mxu0 0.0
  %331 = vmatprep.subr.mxu0 0.0
  %332 = vmatpush1.msra.mxu0 0.0
  %333 = vmatprep.subr.mxu0 0.0
  %334 = vmatpush1.msra.mxu0 0.0
  %335 = vmatprep.subr.mxu0 0.0
  %336 = vmatpush1.msra.mxu0 0.0
  %337 = vmatprep.subr.mxu0 0.0
  %338 = vmatpush1.msra.mxu0 0.0
  %339 = vmatprep.mubr.f32.mxu0 0.0
  %340 = vmatmul.mubr.f32.gmra.mrb[0].mxu0 %v80
  %v341 = vpop.f32.mrb[0].mxu0
  %v342 = vadd.f32 0.0, %v341
  %v343 = vpop.f32.mrb[0].mxu0
  %344 = vmatprep.mubr.f32.mxu0 0.0
  %345 = vmatmul.mubr.f32.gmra.mrb[0].mxu0 %v83
  %v346 = vpop.f32.mrb[0].mxu0
  %v347 = vadd.f32 0.0, %v346
  %v348 = vpop.f32.mrb[0].mxu0
  %349 = vmatprep.mubr.f32.mxu0 0.0
  %350 = vmatmul.mubr.f32.gmra.mrb[0].mxu0 %v86
  %v351 = vpop.f32.mrb[0].mxu0
  %v352 = vadd.f32 0.0, %v351
  %v353 = vpop.f32.mrb[0].mxu0
  %354 = vmatprep.mubr.f32.mxu0 0.0
  %355 = vmatmul.mubr.f32.gmra.mrb[0].mxu0 %v89
  %v356 = vpop.f32.mrb[0].mxu0
  %v357 = vadd.f32 0.0, %v356
  %v358 = vpop.f32.mrb[0].mxu0
  %359 = vmatprep.mubr.f32.mxu0 0.0
  %360 = vmatmul.mubr.f32.gmra.mrb[0].mxu0 %v92
  %v361 = vpop.f32.mrb[0].mxu0
  %v362 = vadd.f32 0.0, %v361
  %v363 = vpop.f32.mrb[0].mxu0
  %364 = vmatprep.mubr.f32.mxu0 0.0
  %365 = vmatmul.mubr.f32.gmra.mrb[0].mxu0 %v95
  %v366 = vpop.f32.mrb[0].mxu0
  %v367 = vadd.f32 0.0, %v366
  %v368 = vpop.f32.mrb[0].mxu0
  %369 = vmatprep.mubr.f32.mxu0 0.0
  %370 = vmatmul.mubr.f32.gmra.mrb[0].mxu0 %v98
  %v371 = vpop.f32.mrb[0].mxu0
  %v372 = vadd.f32 0.0, %v371
  %v373 = vpop.f32.mrb[0].mxu0
  %374 = vmatprep.mubr.f32.mxu0 0.0
  %375 = vmatmul.mubr.f32.gmra.mrb[0].mxu0 %v101
  %v376 = vpop.f32.mrb[0].mxu0
  %v377 = vadd.f32 0.0, %v376
  %v378 = vpop.f32.mrb[0].mxu0
  %379 = vmatprep.mubr.f32.mxu0 0.0
  %380 = vmatmul.mubr.f32.gmra.mrb[0].mxu0 %v104
  %v381 = vpop.f32.mrb[0].mxu0
  %v382 = vadd.f32 0.0, %v381
  %v383 = vpop.f32.mrb[0].mxu0
  %384 = vmatprep.mubr.f32.mxu0 0.0
  %385 = vmatmul.mubr.f32.gmra.mrb[0].mxu0 %v107
  %v386 = vpop.f32.mrb[0].mxu0
  %v387 = vadd.f32 0.0, %v386
  %v388 = vpop.f32.mrb[0].mxu0
  %389 = vmatprep.mubr.f32.mxu0 0.0
  %390 = vmatmul.mubr.f32.gmra.mrb[0].mxu0 %v110
  %v391 = vpop.f32.mrb[0].mxu0
  %v392 = vadd.f32 0.0, %v391
  %v393 = vpop.f32.mrb[0].mxu0
  %394 = vmatprep.mubr.f32.mxu0 0.0
  %395 = vmatmul.mubr.f32.gmra.mrb[0].mxu0 %v113
  %v396 = vpop.f32.mrb[0].mxu0
  %v397 = vadd.f32 0.0, %v396
  %v398 = vpop.f32.mrb[0].mxu0
  %399 = vmatprep.mubr.f32.mxu0 0.0
  %400 = vmatmul.mubr.f32.gmra.mrb[0].mxu0 %v116
  %v401 = vpop.f32.mrb[0].mxu0
  %v402 = vadd.f32 0.0, %v401
  %v403 = vpop.f32.mrb[0].mxu0
  %404 = vmatprep.mubr.f32.mxu0 0.0
  %405 = vmatmul.mubr.f32.gmra.mrb[0].mxu0 %v119
  %v406 = vpop.f32.mrb[0].mxu0
  %v407 = vadd.f32 0.0, %v406
  %v408 = vpop.f32.mrb[0].mxu0
  %409 = vmatprep.mubr.f32.mxu0 0.0
  %410 = vmatmul.mubr.f32.gmra.mrb[0].mxu0 %v122
  %v411 = vpop.f32.mrb[0].mxu0
  %v412 = vadd.f32 0.0, %v411
  %v413 = vpop.f32.mrb[0].mxu0
  %414 = vmatprep.mubr.f32.mxu0 0.0
  %415 = vmatmul.mubr.f32.gmra.mrb[0].mxu0 %v125
  %v416 = vpop.f32.mrb[0].mxu0
  %v417 = vadd.f32 0.0, %v416
  %v418 = vpop.f32.mrb[0].mxu0
  %419 = vmatprep.mubr.f32.mxu0 0.0
  %420 = vmatmul.mubr.f32.gmra.mrb[0].mxu0 %v128
  %v421 = vpop.f32.mrb[0].mxu0
  %v422 = vadd.f32 0.0, %v421
  %v423 = vpop.f32.mrb[0].mxu0
  %424 = vmatprep.mubr.f32.mxu0 0.0
  %425 = vmatmul.mubr.f32.gmra.mrb[0].mxu0 %v131
  %v426 = vpop.f32.mrb[0].mxu0
  %v427 = vadd.f32 0.0, %v426
  %v428 = vpop.f32.mrb[0].mxu0
  %429 = vmatprep.mubr.f32.mxu0 0.0
  %430 = vmatmul.mubr.f32.gmra.mrb[0].mxu0 %v134
  %v431 = vpop.f32.mrb[0].mxu0
  %v432 = vadd.f32 0.0, %v431
  %v433 = vpop.f32.mrb[0].mxu0
  %434 = vmatprep.mubr.f32.mxu0 0.0
  %435 = vmatmul.mubr.f32.gmra.mrb[0].mxu0 %v137
  %v436 = vpop.f32.mrb[0].mxu0
  %v437 = vadd.f32 0.0, %v436
  %v438 = vpop.f32.mrb[0].mxu0
  %439 = vmatprep.mubr.f32.mxu0 0.0
  %440 = vmatmul.mubr.f32.gmra.mrb[0].mxu0 %v140
  %v441 = vpop.f32.mrb[0].mxu0
  %v442 = vadd.f32 0.0, %v441
  %v443 = vpop.f32.mrb[0].mxu0
  %444 = vmatprep.mubr.f32.mxu0 0.0
  %445 = vmatmul.mubr.f32.gmra.mrb[0].mxu0 %v143
  %v446 = vpop.f32.mrb[0].mxu0
  %v447 = vadd.f32 0.0, %v446
  %v448 = vpop.f32.mrb[0].mxu0
  %449 = vmatprep.mubr.f32.mxu0 0.0
  %450 = vmatmul.mubr.f32.gmra.mrb[0].mxu0 %v146
  %v451 = vpop.f32.mrb[0].mxu0
  %v452 = vadd.f32 0.0, %v451
  %v453 = vpop.f32.mrb[0].mxu0
  %454 = vmatprep.mubr.f32.mxu0 0.0
  %455 = vmatmul.mubr.f32.gmra.mrb[0].mxu0 %v149
  %v456 = vpop.f32.mrb[0].mxu0
  %v457 = vadd.f32 0.0, %v456
  %v458 = vpop.f32.mrb[0].mxu0
  %459 = vmatprep.mubr.f32.mxu0 0.0
  %460 = vmatmul.mubr.f32.gmra.mrb[0].mxu0 %v152
  %v461 = vpop.f32.mrb[0].mxu0
  %v462 = vadd.f32 0.0, %v461
  %v463 = vpop.f32.mrb[0].mxu0
  %464 = vmatprep.mubr.f32.mxu0 0.0
  %465 = vmatmul.mubr.f32.gmra.mrb[0].mxu0 %v155
  %v466 = vpop.f32.mrb[0].mxu0
  %v467 = vadd.f32 0.0, %v466
  %v468 = vpop.f32.mrb[0].mxu0
  %469 = vmatprep.mubr.f32.mxu0 0.0
  %470 = vmatmul.mubr.f32.gmra.mrb[0].mxu0 %v158
  %v471 = vpop.f32.mrb[0].mxu0
  %v472 = vadd.f32 0.0, %v471
  %v473 = vpop.f32.mrb[0].mxu0
  %474 = vmatprep.mubr.f32.mxu0 0.0
  %475 = vmatmul.mubr.f32.gmra.mrb[0].mxu0 %v161
  %v476 = vpop.f32.mrb[0].mxu0
  %v477 = vadd.f32 0.0, %v476
  %v478 = vpop.f32.mrb[0].mxu0
  %479 = vmatprep.mubr.f32.mxu0 0.0
  %480 = vmatmul.mubr.f32.gmra.mrb[0].mxu0 %v164
  %v481 = vpop.f32.mrb[0].mxu0
  %v482 = vadd.f32 0.0, %v481
  %v483 = vpop.f32.mrb[0].mxu0
  %484 = vmatprep.mubr.f32.mxu0 0.0
  %485 = vmatmul.mubr.f32.gmra.mrb[0].mxu0 %v167
  %v486 = vpop.f32.mrb[0].mxu0
  %v487 = vadd.f32 0.0, %v486
  %v488 = vpop.f32.mrb[0].mxu0
  %489 = vmatprep.mubr.f32.mxu0 0.0
  %490 = vmatmul.mubr.f32.gmra.mrb[0].mxu0 %v170
  %v491 = vpop.f32.mrb[0].mxu0
  %v492 = vadd.f32 0.0, %v491
  %v493 = vpop.f32.mrb[0].mxu0
  %494 = vmatprep.mubr.f32.mxu0 0.0
  %495 = vmatmul.mubr.f32.gmra.mrb[0].mxu0 %v173
  %v496 = vpop.f32.mrb[0].mxu0
  %v497 = vadd.f32 0.0, %v496
  %v498 = vpop.f32.mrb[0].mxu0
  %499 = vmatprep.mubr.f32.mxu0 0.0
  %500 = vmatmul.mubr.f32.gmra.mrb[0].mxu0 %v176
  %v501 = vpop.f32.mrb[0].mxu0
  %v502 = vadd.f32 0.0, %v501
  %v503 = vpop.f32.mrb[0].mxu0
  %504 = vmatprep.mubr.f32.mxu0 0.0
  %505 = vmatmul.mubr.f32.gmra.mrb[0].mxu0 %v179
  %v506 = vpop.f32.mrb[0].mxu0
  %v507 = vadd.f32 0.0, %v506
  %v508 = vpop.f32.mrb[0].mxu0
  %509 = vmatprep.mubr.f32.mxu0 0.0
  %510 = vmatmul.mubr.f32.gmra.mrb[0].mxu0 %v182
  %v511 = vpop.f32.mrb[0].mxu0
  %v512 = vadd.f32 0.0, %v511
  %v513 = vpop.f32.mrb[0].mxu0
  %514 = vmatprep.mubr.f32.mxu0 0.0
  %515 = vmatmul.mubr.f32.gmra.mrb[0].mxu0 %v185
  %v516 = vpop.f32.mrb[0].mxu0
  %v517 = vadd.f32 0.0, %v516
  %v518 = vpop.f32.mrb[0].mxu0
  %519 = vmatprep.mubr.f32.mxu0 0.0
  %520 = vmatmul.mubr.f32.gmra.mrb[0].mxu0 %v188
  %v521 = vpop.f32.mrb[0].mxu0
  %v522 = vadd.f32 0.0, %v521
  %v523 = vpop.f32.mrb[0].mxu0
  %524 = vmatprep.mubr.f32.mxu0 0.0
  %525 = vmatmul.mubr.f32.gmra.mrb[0].mxu0 %v191
  %v526 = vpop.f32.mrb[0].mxu0
  %v527 = vadd.f32 0.0, %v526
  %v528 = vpop.f32.mrb[0].mxu0
  %529 = vmatprep.mubr.f32.mxu0 0.0
  %530 = vmatmul.mubr.f32.gmra.mrb[0].mxu0 %v194
  %v531 = vpop.f32.mrb[0].mxu0
  %v532 = vadd.f32 0.0, %v531
  %v533 = vpop.f32.mrb[0].mxu0
  %534 = vmatprep.mubr.f32.mxu0 0.0
  %535 = vmatmul.mubr.f32.gmra.mrb[0].mxu0 %v197
  %v536 = vpop.f32.mrb[0].mxu0
  %v537 = vadd.f32 0.0, %v536
  %v538 = vpop.f32.mrb[0].mxu0
  %539 = vmatprep.mubr.f32.mxu0 0.0
  %540 = vmatmul.mubr.f32.gmra.mrb[0].mxu0 %v200
  %v541 = vpop.f32.mrb[0].mxu0
  %v542 = vadd.f32 0.0, %v541
  %v543 = vpop.f32.mrb[0].mxu0
  %544 = vmatprep.mubr.f32.mxu0 0.0
  %545 = vmatmul.mubr.f32.gmra.mrb[0].mxu0 %v203
  %v546 = vpop.f32.mrb[0].mxu0
  %v547 = vadd.f32 0.0, %v546
  %v548 = vpop.f32.mrb[0].mxu0
  %549 = vmatprep.mubr.f32.mxu0 0.0
  %550 = vmatmul.mubr.f32.gmra.mrb[0].mxu0 %v206
  %v551 = vpop.f32.mrb[0].mxu0
  %v552 = vadd.f32 0.0, %v551
  %v553 = vpop.f32.mrb[0].mxu0
  %554 = vmatprep.mubr.f32.mxu0 0.0
  %555 = vmatmul.mubr.f32.gmra.mrb[0].mxu0 %v209
  %v556 = vpop.f32.mrb[0].mxu0
  %v557 = vadd.f32 0.0, %v556
  %v558 = vpop.f32.mrb[0].mxu0
  %559 = vmatprep.mubr.f32.mxu0 0.0
  %560 = vmatmul.mubr.f32.gmra.mrb[0].mxu0 %v212
  %v561 = vpop.f32.mrb[0].mxu0
  %v562 = vadd.f32 0.0, %v561
  %v563 = vpop.f32.mrb[0].mxu0
  %564 = vmatprep.mubr.f32.mxu0 0.0
  %565 = vmatmul.mubr.f32.gmra.mrb[0].mxu0 %v215
  %v566 = vpop.f32.mrb[0].mxu0
  %v567 = vadd.f32 0.0, %v566
  %v568 = vpop.f32.mrb[0].mxu0
  %569 = vmatprep.mubr.f32.mxu0 0.0
  %570 = vmatmul.mubr.f32.gmra.mrb[0].mxu0 %v218
  %v571 = vpop.f32.mrb[0].mxu0
  %v572 = vadd.f32 0.0, %v571
  %v573 = vpop.f32.mrb[0].mxu0
  %574 = vmatprep.mubr.f32.mxu0 0.0
  %575 = vmatmul.mubr.f32.gmra.mrb[0].mxu0 %v221
  %v576 = vpop.f32.mrb[0].mxu0
  %v577 = vadd.f32 0.0, %v576
  %v578 = vpop.f32.mrb[0].mxu0
  %579 = vmatprep.mubr.f32.mxu0 0.0
  %580 = vmatmul.mubr.f32.gmra.mrb[0].mxu0 %v224
  %v581 = vpop.f32.mrb[0].mxu0
  %v582 = vadd.f32 0.0, %v581
  %v583 = vpop.f32.mrb[0].mxu0
  %584 = vmatprep.mubr.f32.mxu0 0.0
  %585 = vmatmul.mubr.f32.gmra.mrb[0].mxu0 %v227
  %v586 = vpop.f32.mrb[0].mxu0
  %v587 = vadd.f32 0.0, %v586
  %v588 = vpop.f32.mrb[0].mxu0
  %589 = vmatprep.mubr.f32.mxu0 0.0
  %590 = vmatmul.mubr.f32.gmra.mrb[0].mxu0 %v230
  %v591 = vpop.f32.mrb[0].mxu0
  %v592 = vadd.f32 0.0, %v591
  %v593 = vpop.f32.mrb[0].mxu0
  %594 = vmatprep.mubr.f32.mxu0 0.0
  %595 = vmatmul.mubr.f32.gmra.mrb[0].mxu0 %v233
  %v596 = vpop.f32.mrb[0].mxu0
  %v597 = vadd.f32 0.0, %v596
  %v598 = vpop.f32.mrb[0].mxu0
  %599 = vmatprep.mubr.f32.mxu0 0.0
  %600 = vmatmul.mubr.f32.gmra.mrb[0].mxu0 %v236
  %v601 = vpop.f32.mrb[0].mxu0
  %v602 = vadd.f32 0.0, %v601
  %v603 = vpop.f32.mrb[0].mxu0
  %604 = vmatprep.mubr.f32.mxu0 0.0
  %605 = vmatmul.mubr.f32.gmra.mrb[0].mxu0 %v239
  %v606 = vpop.f32.mrb[0].mxu0
  %v607 = vadd.f32 0.0, %v606
  %v608 = vpop.f32.mrb[0].mxu0
  %609 = vmatprep.mubr.f32.mxu0 0.0
  %610 = vmatmul.mubr.f32.gmra.mrb[0].mxu0 %v242
  %v611 = vpop.f32.mrb[0].mxu0
  %v612 = vadd.f32 0.0, %v611
  %v613 = vpop.f32.mrb[0].mxu0
  %614 = vmatprep.mubr.f32.mxu0 0.0
  %615 = vmatmul.mubr.f32.gmra.mrb[0].mxu0 %v245
  %v616 = vpop.f32.mrb[0].mxu0
  %v617 = vadd.f32 0.0, %v616
  %v618 = vpop.f32.mrb[0].mxu0
  %619 = vmatprep.mubr.f32.mxu0 0.0
  %620 = vmatmul.mubr.f32.gmra.mrb[0].mxu0 %v248
  %v621 = vpop.f32.mrb[0].mxu0
  %v622 = vadd.f32 0.0, %v621
  %v623 = vpop.f32.mrb[0].mxu0
  %624 = vmatprep.mubr.f32.mxu0 0.0
  %625 = vmatmul.mubr.f32.gmra.mrb[0].mxu0 %v251
  %v626 = vpop.f32.mrb[0].mxu0
  %v627 = vadd.f32 0.0, %v626
  %v628 = vpop.f32.mrb[0].mxu0
  %629 = vmatprep.mubr.f32.mxu0 0.0
  %630 = vmatmul.mubr.f32.gmra.mrb[0].mxu0 %v254
  %v631 = vpop.f32.mrb[0].mxu0
  %v632 = vadd.f32 0.0, %v631
  %v633 = vpop.f32.mrb[0].mxu0
  %634 = vmatprep.mubr.f32.mxu0 0.0
  %635 = vmatmul.mubr.f32.gmra.mrb[0].mxu0 %v257
  %v636 = vpop.f32.mrb[0].mxu0
  %v637 = vadd.f32 0.0, %v636
  %v638 = vpop.f32.mrb[0].mxu0
  %639 = vmatprep.mubr.f32.mxu0 0.0
  %640 = vmatmul.mubr.f32.gmra.mrb[0].mxu0 %v260
  %v641 = vpop.f32.mrb[0].mxu0
  %v642 = vadd.f32 0.0, %v641
  %v643 = vpop.f32.mrb[0].mxu0
  %644 = vmatprep.mubr.f32.mxu0 0.0
  %645 = vmatmul.mubr.f32.gmra.mrb[0].mxu0 %v263
  %v646 = vpop.f32.mrb[0].mxu0
  %v647 = vadd.f32 0.0, %v646
  %v648 = vpop.f32.mrb[0].mxu0
  %649 = vmatprep.mubr.f32.mxu0 0.0
  %650 = vmatmul.mubr.f32.gmra.mrb[0].mxu0 %v266
  %v651 = vpop.f32.mrb[0].mxu0
  %v652 = vadd.f32 0.0, %v651
  %v653 = vpop.f32.mrb[0].mxu0
  %654 = vmatprep.mubr.f32.mxu0 0.0
  %655 = vmatmul.mubr.f32.gmra.mrb[0].mxu0 %v269
  %v656 = vpop.f32.mrb[0].mxu0
  %v657 = vadd.f32 0.0, %v656
  %v658 = vpop.f32.mrb[0].mxu0
  %659 = vdwg.mxu0
  %vm660 = vcmask 261120
  %661 = vst.msk [vmem:[%s2] sm:$0xff] %vm660, %v342
  %662 = vst.msk [vmem:[%s2 + $0x8] sm:$0xff] %vm660, %v347
  %663 = vst.msk [vmem:[%s2 + $0x10] sm:$0xff] %vm660, %v352
  %664 = vst.msk [vmem:[%s2 + $0x18] sm:$0xff] %vm660, %v357
  %665 = vst.msk [vmem:[%s2 + $0x20] sm:$0xff] %vm660, %v362
  %666 = vst.msk [vmem:[%s2 + $0x28] sm:$0xff] %vm660, %v367
  %667 = vst.msk [vmem:[%s2 + $0x30] sm:$0xff] %vm660, %v372
  %668 = vst.msk [vmem:[%s2 + $0x38] sm:$0xff] %vm660, %v377
  %669 = vst.msk [vmem:[%s2 + $0x40] sm:$0xff] %vm660, %v382
  %670 = vst.msk [vmem:[%s2 + $0x48] sm:$0xff] %vm660, %v387
  %671 = vst.msk [vmem:[%s2 + $0x50] sm:$0xff] %vm660, %v392
  %672 = vst.msk [vmem:[%s2 + $0x58] sm:$0xff] %vm660, %v397
  %673 = vst.msk [vmem:[%s2 + $0x60] sm:$0xff] %vm660, %v402
  %674 = vst.msk [vmem:[%s2 + $0x68] sm:$0xff] %vm660, %v407
  %675 = vst.msk [vmem:[%s2 + $0x70] sm:$0xff] %vm660, %v412
  %676 = vst.msk [vmem:[%s2 + $0x78] sm:$0xff] %vm660, %v417
  %677 = vst.msk [vmem:[%s2 + $0x80] sm:$0xff] %vm660, %v422
  %678 = vst.msk [vmem:[%s2 + $0x88] sm:$0xff] %vm660, %v427
  %679 = vst.msk [vmem:[%s2 + $0x90] sm:$0xff] %vm660, %v432
  %680 = vst.msk [vmem:[%s2 + $0x98] sm:$0xff] %vm660, %v437
  %681 = vst.msk [vmem:[%s2 + $0xa0] sm:$0xff] %vm660, %v442
  %682 = vst.msk [vmem:[%s2 + $0xa8] sm:$0xff] %vm660, %v447
  %683 = vst.msk [vmem:[%s2 + $0xb0] sm:$0xff] %vm660, %v452
  %684 = vst.msk [vmem:[%s2 + $0xb8] sm:$0xff] %vm660, %v457
  %685 = vst.msk [vmem:[%s2 + $0xc0] sm:$0xff] %vm660, %v462
  %686 = vst.msk [vmem:[%s2 + $0xc8] sm:$0xff] %vm660, %v467
  %687 = vst.msk [vmem:[%s2 + $0xd0] sm:$0xff] %vm660, %v472
  %688 = vst.msk [vmem:[%s2 + $0xd8] sm:$0xff] %vm660, %v477
  %689 = vst.msk [vmem:[%s2 + $0xe0] sm:$0xff] %vm660, %v482
  %690 = vst.msk [vmem:[%s2 + $0xe8] sm:$0xff] %vm660, %v487
  %691 = vst.msk [vmem:[%s2 + $0xf0] sm:$0xff] %vm660, %v492
  %692 = vst.msk [vmem:[%s2 + $0xf8] sm:$0xff] %vm660, %v497
  %693 = vst.msk [vmem:[%s2 + $0x100] sm:$0xff] %vm660, %v502
  %694 = vst.msk [vmem:[%s2 + $0x108] sm:$0xff] %vm660, %v507
  %695 = vst.msk [vmem:[%s2 + $0x110] sm:$0xff] %vm660, %v512
  %696 = vst.msk [vmem:[%s2 + $0x118] sm:$0xff] %vm660, %v517
  %697 = vst.msk [vmem:[%s2 + $0x120] sm:$0xff] %vm660, %v522
  %698 = vst.msk [vmem:[%s2 + $0x128] sm:$0xff] %vm660, %v527
  %699 = vst.msk [vmem:[%s2 + $0x130] sm:$0xff] %vm660, %v532
  %700 = vst.msk [vmem:[%s2 + $0x138] sm:$0xff] %vm660, %v537
  %701 = vst.msk [vmem:[%s2 + $0x140] sm:$0xff] %vm660, %v542
  %702 = vst.msk [vmem:[%s2 + $0x148] sm:$0xff] %vm660, %v547
  %703 = vst.msk [vmem:[%s2 + $0x150] sm:$0xff] %vm660, %v552
  %704 = vst.msk [vmem:[%s2 + $0x158] sm:$0xff] %vm660, %v557
  %705 = vst.msk [vmem:[%s2 + $0x160] sm:$0xff] %vm660, %v562
  %706 = vst.msk [vmem:[%s2 + $0x168] sm:$0xff] %vm660, %v567
  %707 = vst.msk [vmem:[%s2 + $0x170] sm:$0xff] %vm660, %v572
  %708 = vst.msk [vmem:[%s2 + $0x178] sm:$0xff] %vm660, %v577
  %709 = vst.msk [vmem:[%s2 + $0x180] sm:$0xff] %vm660, %v582
  %710 = vst.msk [vmem:[%s2 + $0x188] sm:$0xff] %vm660, %v587
  %711 = vst.msk [vmem:[%s2 + $0x190] sm:$0xff] %vm660, %v592
  %712 = vst.msk [vmem:[%s2 + $0x198] sm:$0xff] %vm660, %v597
  %713 = vst.msk [vmem:[%s2 + $0x1a0] sm:$0xff] %vm660, %v602
  %714 = vst.msk [vmem:[%s2 + $0x1a8] sm:$0xff] %vm660, %v607
  %715 = vst.msk [vmem:[%s2 + $0x1b0] sm:$0xff] %vm660, %v612
  %716 = vst.msk [vmem:[%s2 + $0x1b8] sm:$0xff] %vm660, %v617
  %717 = vst.msk [vmem:[%s2 + $0x1c0] sm:$0xff] %vm660, %v622
  %718 = vst.msk [vmem:[%s2 + $0x1c8] sm:$0xff] %vm660, %v627
  %719 = vst.msk [vmem:[%s2 + $0x1d0] sm:$0xff] %vm660, %v632
  %720 = vst.msk [vmem:[%s2 + $0x1d8] sm:$0xff] %vm660, %v637
  %721 = vst.msk [vmem:[%s2 + $0x1e0] sm:$0xff] %vm660, %v642
  %722 = vst.msk [vmem:[%s2 + $0x1e8] sm:$0xff] %vm660, %v647
  %723 = vst.msk [vmem:[%s2 + $0x1f0] sm:$0xff] %vm660, %v652
  %724 = vst.msk [vmem:[%s2 + $0x1f8] sm:$0xff] %vm660, %v657
  %v725 = vsel %vm660, %v342, 0.0
  %v726 = vsel %vm660, %v347, 0.0
  %v727 = vadd.f32 %v725, %v726
  %v728 = vsel %vm660, %v352, 0.0
  %v729 = vadd.f32 %v727, %v728
  %v730 = vsel %vm660, %v357, 0.0
  %v731 = vadd.f32 %v729, %v730
  %v732 = vsel %vm660, %v362, 0.0
  %v733 = vadd.f32 %v731, %v732
  %v734 = vsel %vm660, %v367, 0.0
  %v735 = vadd.f32 %v733, %v734
  %v736 = vsel %vm660, %v372, 0.0
  %v737 = vadd.f32 %v735, %v736
  %v738 = vsel %vm660, %v377, 0.0
  %v739 = vadd.f32 %v737, %v738
  %v740 = vsel %vm660, %v382, 0.0
  %v741 = vadd.f32 %v739, %v740
  %v742 = vsel %vm660, %v387, 0.0
  %v743 = vadd.f32 %v741, %v742
  %v744 = vsel %vm660, %v392, 0.0
  %v745 = vadd.f32 %v743, %v744
  %v746 = vsel %vm660, %v397, 0.0
  %v747 = vadd.f32 %v745, %v746
  %v748 = vsel %vm660, %v402, 0.0
  %v749 = vadd.f32 %v747, %v748
  %v750 = vsel %vm660, %v407, 0.0
  %v751 = vadd.f32 %v749, %v750
  %v752 = vsel %vm660, %v412, 0.0
  %v753 = vadd.f32 %v751, %v752
  %v754 = vsel %vm660, %v417, 0.0
  %v755 = vadd.f32 %v753, %v754
  %v756 = vsel %vm660, %v422, 0.0
  %v757 = vadd.f32 %v755, %v756
  %v758 = vsel %vm660, %v427, 0.0
  %v759 = vadd.f32 %v757, %v758
  %v760 = vsel %vm660, %v432, 0.0
  %v761 = vadd.f32 %v759, %v760
  %v762 = vsel %vm660, %v437, 0.0
  %v763 = vadd.f32 %v761, %v762
  %v764 = vsel %vm660, %v442, 0.0
  %v765 = vadd.f32 %v763, %v764
  %v766 = vsel %vm660, %v447, 0.0
  %v767 = vadd.f32 %v765, %v766
  %v768 = vsel %vm660, %v452, 0.0
  %v769 = vadd.f32 %v767, %v768
  %v770 = vsel %vm660, %v457, 0.0
  %v771 = vadd.f32 %v769, %v770
  %v772 = vsel %vm660, %v462, 0.0
  %v773 = vadd.f32 %v771, %v772
  %v774 = vsel %vm660, %v467, 0.0
  %v775 = vadd.f32 %v773, %v774
  %v776 = vsel %vm660, %v472, 0.0
  %v777 = vadd.f32 %v775, %v776
  %v778 = vsel %vm660, %v477, 0.0
  %v779 = vadd.f32 %v777, %v778
  %v780 = vsel %vm660, %v482, 0.0
  %v781 = vadd.f32 %v779, %v780
  %v782 = vsel %vm660, %v487, 0.0
  %v783 = vadd.f32 %v781, %v782
  %v784 = vsel %vm660, %v492, 0.0
  %v785 = vadd.f32 %v783, %v784
  %v786 = vsel %vm660, %v497, 0.0
  %v787 = vadd.f32 %v785, %v786
  %v788 = vsel %vm660, %v502, 0.0
  %v789 = vadd.f32 %v787, %v788
  %v790 = vsel %vm660, %v507, 0.0
  %v791 = vadd.f32 %v789, %v790
  %v792 = vsel %vm660, %v512, 0.0
  %v793 = vadd.f32 %v791, %v792
  %v794 = vsel %vm660, %v517, 0.0
  %v795 = vadd.f32 %v793, %v794
  %v796 = vsel %vm660, %v522, 0.0
  %v797 = vadd.f32 %v795, %v796
  %v798 = vsel %vm660, %v527, 0.0
  %v799 = vadd.f32 %v797, %v798
  %v800 = vsel %vm660, %v532, 0.0
  %v801 = vadd.f32 %v799, %v800
  %v802 = vsel %vm660, %v537, 0.0
  %v803 = vadd.f32 %v801, %v802
  %v804 = vsel %vm660, %v542, 0.0
  %v805 = vadd.f32 %v803, %v804
  %v806 = vsel %vm660, %v547, 0.0
  %v807 = vadd.f32 %v805, %v806
  %v808 = vsel %vm660, %v552, 0.0
  %v809 = vadd.f32 %v807, %v808
  %v810 = vsel %vm660, %v557, 0.0
  %v811 = vadd.f32 %v809, %v810
  %v812 = vsel %vm660, %v562, 0.0
  %v813 = vadd.f32 %v811, %v812
  %v814 = vsel %vm660, %v567, 0.0
  %v815 = vadd.f32 %v813, %v814
  %v816 = vsel %vm660, %v572, 0.0
  %v817 = vadd.f32 %v815, %v816
  %v818 = vsel %vm660, %v577, 0.0
  %v819 = vadd.f32 %v817, %v818
  %v820 = vsel %vm660, %v582, 0.0
  %v821 = vadd.f32 %v819, %v820
  %v822 = vsel %vm660, %v587, 0.0
  %v823 = vadd.f32 %v821, %v822
  %v824 = vsel %vm660, %v592, 0.0
  %v825 = vadd.f32 %v823, %v824
  %v826 = vsel %vm660, %v597, 0.0
  %v827 = vadd.f32 %v825, %v826
  %v828 = vsel %vm660, %v602, 0.0
  %v829 = vadd.f32 %v827, %v828
  %v830 = vsel %vm660, %v607, 0.0
  %v831 = vadd.f32 %v829, %v830
  %v832 = vsel %vm660, %v612, 0.0
  %v833 = vadd.f32 %v831, %v832
  %v834 = vsel %vm660, %v617, 0.0
  %v835 = vadd.f32 %v833, %v834
  %v836 = vsel %vm660, %v622, 0.0
  %v837 = vadd.f32 %v835, %v836
  %v838 = vsel %vm660, %v627, 0.0
  %v839 = vadd.f32 %v837, %v838
  %v840 = vsel %vm660, %v632, 0.0
  %v841 = vadd.f32 %v839, %v840
  %v842 = vsel %vm660, %v637, 0.0
  %v843 = vadd.f32 %v841, %v842
  %v844 = vsel %vm660, %v642, 0.0
  %v845 = vadd.f32 %v843, %v844
  %v846 = vsel %vm660, %v647, 0.0
  %v847 = vadd.f32 %v845, %v846
  %v848 = vsel %vm660, %v652, 0.0
  %v849 = vadd.f32 %v847, %v848
  %v850 = vsel %vm660, %v657, 0.0
  %v851 = vadd.f32 %v849, %v850
  %v852 = vrot.slane %v851, 4
  %v853 = vadd.f32 %v851, %v852
  %v854 = vrot.slane %v853, 2
  %v855 = vadd.f32 %v853, %v854
  %v856 = vrot.slane %v855, 1
  %v857 = vadd.f32 %v855, %v856
  %vm858 = vcmask 253952
  %859 = vst.msk [vmem:[%s3] sm:$0x1] %vm858, %v857
  %v860 = vmul.f32 %v342, %v342
  %v861 = vmul.f32 %v347, %v347
  %v862 = vmul.f32 %v352, %v352
  %v863 = vmul.f32 %v357, %v357
  %v864 = vmul.f32 %v362, %v362
  %v865 = vmul.f32 %v367, %v367
  %v866 = vmul.f32 %v372, %v372
  %v867 = vmul.f32 %v377, %v377
  %v868 = vmul.f32 %v382, %v382
  %v869 = vmul.f32 %v387, %v387
  %v870 = vmul.f32 %v392, %v392
  %v871 = vmul.f32 %v397, %v397
  %v872 = vmul.f32 %v402, %v402
  %v873 = vmul.f32 %v407, %v407
  %v874 = vmul.f32 %v412, %v412
  %v875 = vmul.f32 %v417, %v417
  %v876 = vmul.f32 %v422, %v422
  %v877 = vmul.f32 %v427, %v427
  %v878 = vmul.f32 %v432, %v432
  %v879 = vmul.f32 %v437, %v437
  %v880 = vmul.f32 %v442, %v442
  %v881 = vmul.f32 %v447, %v447
  %v882 = vmul.f32 %v452, %v452
  %v883 = vmul.f32 %v457, %v457
  %v884 = vmul.f32 %v462, %v462
  %v885 = vmul.f32 %v467, %v467
  %v886 = vmul.f32 %v472, %v472
  %v887 = vmul.f32 %v477, %v477
  %v888 = vmul.f32 %v482, %v482
  %v889 = vmul.f32 %v487, %v487
  %v890 = vmul.f32 %v492, %v492
  %v891 = vmul.f32 %v497, %v497
  %v892 = vmul.f32 %v502, %v502
  %v893 = vmul.f32 %v507, %v507
  %v894 = vmul.f32 %v512, %v512
  %v895 = vmul.f32 %v517, %v517
  %v896 = vmul.f32 %v522, %v522
  %v897 = vmul.f32 %v527, %v527
  %v898 = vmul.f32 %v532, %v532
  %v899 = vmul.f32 %v537, %v537
  %v900 = vmul.f32 %v542, %v542
  %v901 = vmul.f32 %v547, %v547
  %v902 = vmul.f32 %v552, %v552
  %v903 = vmul.f32 %v557, %v557
  %v904 = vmul.f32 %v562, %v562
  %v905 = vmul.f32 %v567, %v567
  %v906 = vmul.f32 %v572, %v572
  %v907 = vmul.f32 %v577, %v577
  %v908 = vmul.f32 %v582, %v582
  %v909 = vmul.f32 %v587, %v587
  %v910 = vmul.f32 %v592, %v592
  %v911 = vmul.f32 %v597, %v597
  %v912 = vmul.f32 %v602, %v602
  %v913 = vmul.f32 %v607, %v607
  %v914 = vmul.f32 %v612, %v612
  %v915 = vmul.f32 %v617, %v617
  %v916 = vmul.f32 %v622, %v622
  %v917 = vmul.f32 %v627, %v627
  %v918 = vmul.f32 %v632, %v632
  %v919 = vmul.f32 %v637, %v637
  %v920 = vmul.f32 %v642, %v642
  %v921 = vmul.f32 %v647, %v647
  %v922 = vmul.f32 %v652, %v652
  %v923 = vmul.f32 %v657, %v657
  %v924 = vsel %vm660, %v860, 0.0
  %v925 = vsel %vm660, %v861, 0.0
  %v926 = vadd.f32 %v924, %v925
  %v927 = vsel %vm660, %v862, 0.0
  %v928 = vadd.f32 %v926, %v927
  %v929 = vsel %vm660, %v863, 0.0
  %v930 = vadd.f32 %v928, %v929
  %v931 = vsel %vm660, %v864, 0.0
  %v932 = vadd.f32 %v930, %v931
  %v933 = vsel %vm660, %v865, 0.0
  %v934 = vadd.f32 %v932, %v933
  %v935 = vsel %vm660, %v866, 0.0
  %v936 = vadd.f32 %v934, %v935
  %v937 = vsel %vm660, %v867, 0.0
  %v938 = vadd.f32 %v936, %v937
  %v939 = vsel %vm660, %v868, 0.0
  %v940 = vadd.f32 %v938, %v939
  %v941 = vsel %vm660, %v869, 0.0
  %v942 = vadd.f32 %v940, %v941
  %v943 = vsel %vm660, %v870, 0.0
  %v944 = vadd.f32 %v942, %v943
  %v945 = vsel %vm660, %v871, 0.0
  %v946 = vadd.f32 %v944, %v945
  %v947 = vsel %vm660, %v872, 0.0
  %v948 = vadd.f32 %v946, %v947
  %v949 = vsel %vm660, %v873, 0.0
  %v950 = vadd.f32 %v948, %v949
  %v951 = vsel %vm660, %v874, 0.0
  %v952 = vadd.f32 %v950, %v951
  %v953 = vsel %vm660, %v875, 0.0
  %v954 = vadd.f32 %v952, %v953
  %v955 = vsel %vm660, %v876, 0.0
  %v956 = vadd.f32 %v954, %v955
  %v957 = vsel %vm660, %v877, 0.0
  %v958 = vadd.f32 %v956, %v957
  %v959 = vsel %vm660, %v878, 0.0
  %v960 = vadd.f32 %v958, %v959
  %v961 = vsel %vm660, %v879, 0.0
  %v962 = vadd.f32 %v960, %v961
  %v963 = vsel %vm660, %v880, 0.0
  %v964 = vadd.f32 %v962, %v963
  %v965 = vsel %vm660, %v881, 0.0
  %v966 = vadd.f32 %v964, %v965
  %v967 = vsel %vm660, %v882, 0.0
  %v968 = vadd.f32 %v966, %v967
  %v969 = vsel %vm660, %v883, 0.0
  %v970 = vadd.f32 %v968, %v969
  %v971 = vsel %vm660, %v884, 0.0
  %v972 = vadd.f32 %v970, %v971
  %v973 = vsel %vm660, %v885, 0.0
  %v974 = vadd.f32 %v972, %v973
  %v975 = vsel %vm660, %v886, 0.0
  %v976 = vadd.f32 %v974, %v975
  %v977 = vsel %vm660, %v887, 0.0
  %v978 = vadd.f32 %v976, %v977
  %v979 = vsel %vm660, %v888, 0.0
  %v980 = vadd.f32 %v978, %v979
  %v981 = vsel %vm660, %v889, 0.0
  %v982 = vadd.f32 %v980, %v981
  %v983 = vsel %vm660, %v890, 0.0
  %v984 = vadd.f32 %v982, %v983
  %v985 = vsel %vm660, %v891, 0.0
  %v986 = vadd.f32 %v984, %v985
  %v987 = vsel %vm660, %v892, 0.0
  %v988 = vadd.f32 %v986, %v987
  %v989 = vsel %vm660, %v893, 0.0
  %v990 = vadd.f32 %v988, %v989
  %v991 = vsel %vm660, %v894, 0.0
  %v992 = vadd.f32 %v990, %v991
  %v993 = vsel %vm660, %v895, 0.0
  %v994 = vadd.f32 %v992, %v993
  %v995 = vsel %vm660, %v896, 0.0
  %v996 = vadd.f32 %v994, %v995
  %v997 = vsel %vm660, %v897, 0.0
  %v998 = vadd.f32 %v996, %v997
  %v999 = vsel %vm660, %v898, 0.0
  %v1000 = vadd.f32 %v998, %v999
  %v1001 = vsel %vm660, %v899, 0.0
  %v1002 = vadd.f32 %v1000, %v1001
  %v1003 = vsel %vm660, %v900, 0.0
  %v1004 = vadd.f32 %v1002, %v1003
  %v1005 = vsel %vm660, %v901, 0.0
  %v1006 = vadd.f32 %v1004, %v1005
  %v1007 = vsel %vm660, %v902, 0.0
  %v1008 = vadd.f32 %v1006, %v1007
  %v1009 = vsel %vm660, %v903, 0.0
  %v1010 = vadd.f32 %v1008, %v1009
  %v1011 = vsel %vm660, %v904, 0.0
  %v1012 = vadd.f32 %v1010, %v1011
  %v1013 = vsel %vm660, %v905, 0.0
  %v1014 = vadd.f32 %v1012, %v1013
  %v1015 = vsel %vm660, %v906, 0.0
  %v1016 = vadd.f32 %v1014, %v1015
  %v1017 = vsel %vm660, %v907, 0.0
  %v1018 = vadd.f32 %v1016, %v1017
  %v1019 = vsel %vm660, %v908, 0.0
  %v1020 = vadd.f32 %v1018, %v1019
  %v1021 = vsel %vm660, %v909, 0.0
  %v1022 = vadd.f32 %v1020, %v1021
  %v1023 = vsel %vm660, %v910, 0.0
  %v1024 = vadd.f32 %v1022, %v1023
  %v1025 = vsel %vm660, %v911, 0.0
  %v1026 = vadd.f32 %v1024, %v1025
  %v1027 = vsel %vm660, %v912, 0.0
  %v1028 = vadd.f32 %v1026, %v1027
  %v1029 = vsel %vm660, %v913, 0.0
  %v1030 = vadd.f32 %v1028, %v1029
  %v1031 = vsel %vm660, %v914, 0.0
  %v1032 = vadd.f32 %v1030, %v1031
  %v1033 = vsel %vm660, %v915, 0.0
  %v1034 = vadd.f32 %v1032, %v1033
  %v1035 = vsel %vm660, %v916, 0.0
  %v1036 = vadd.f32 %v1034, %v1035
  %v1037 = vsel %vm660, %v917, 0.0
  %v1038 = vadd.f32 %v1036, %v1037
  %v1039 = vsel %vm660, %v918, 0.0
  %v1040 = vadd.f32 %v1038, %v1039
  %v1041 = vsel %vm660, %v919, 0.0
  %v1042 = vadd.f32 %v1040, %v1041
  %v1043 = vsel %vm660, %v920, 0.0
  %v1044 = vadd.f32 %v1042, %v1043
  %v1045 = vsel %vm660, %v921, 0.0
  %v1046 = vadd.f32 %v1044, %v1045
  %v1047 = vsel %vm660, %v922, 0.0
  %v1048 = vadd.f32 %v1046, %v1047
  %v1049 = vsel %vm660, %v923, 0.0
  %v1050 = vadd.f32 %v1048, %v1049
  %v1051 = vrot.slane %v1050, 4
  %v1052 = vadd.f32 %v1050, %v1051
  %v1053 = vrot.slane %v1052, 2
  %v1054 = vadd.f32 %v1052, %v1053
  %v1055 = vrot.slane %v1054, 1
  %v1056 = vadd.f32 %v1054, %v1055
  %1057 = vst.msk [vmem:[%s3 + $0x1] sm:$0x1] %vm858, %v1056
  // Predicated region
  $region10: #{bottleneck_forward.8} parent=0 // pred_check
    _
  $region11: #{bottleneck_forward.8} parent=0 // pred_check_branch
    %1059 = sbr.rel (0) target = $region13
  $region12: #{bottleneck_forward.8} parent=0 // pred_region
    _
  $region13: #{bottleneck_forward.8} parent=0 // pred_fallthru
    _
  // Predicated region
  $region14: #{bottleneck_forward.8} parent=0 // pred_check
    _
  $region15: #{bottleneck_forward.8} parent=0 // pred_check_branch
    %1061 = sbr.rel (0) target = $region17
  $region16: #{bottleneck_forward.8} parent=0 // pred_region
    _
  $region17: #{bottleneck_forward.8} parent=0 // pred_fallthru
    _
  // Predicated region
  $region18: #{bottleneck_forward.8} parent=0 // pred_check
    _
  $region19: #{bottleneck_forward.8} parent=0 // pred_check_branch
    %1063 = sbr.rel (0) target = $region21
  $region20: #{bottleneck_forward.8} parent=0 // pred_region
    _
  $region21: #{bottleneck_forward.8} parent=0 // pred_fallthru
    _
  // Predicated region
  $region22: #{bottleneck_forward.8} parent=0 // pred_check
    _
  $region23: #{bottleneck_forward.8} parent=0 // pred_check_branch
    %1065 = sbr.rel (0) target = $region25
  $region24: #{bottleneck_forward.8} parent=0 // pred_region
    _
  $region25: #{bottleneck_forward.8} parent=0 // pred_fallthru
    _

// kernel: bottleneck_forward.7
$region0: #{bottleneck_forward.7}
  #allocation0 [shape = 'u32[]', space=smem, size = 0x4, offset = 0x4, fixed_abs, tag = 'smem constant byte address 0x4 - core index']
  #allocation1 [shape = 'u32[144,128]{1,0:T(1,128)}', space=vmem, size = 0x12000, scoped, tag = 'internal scratch']
  %s0 = inlined_call_operand.vmem [shape: f32[512,8], index: 0, kind: input, shape index: {}]
  %s1 = inlined_call_operand.vmem [shape: f32[8,32], index: 1, kind: input, shape index: {}]
  %s2 = inlined_call_operand.vmem [shape: f32[1,8], index: 2, kind: input, shape index: {}]
  %s3 = inlined_call_operand.vmem [shape: f32[1,8], index: 3, kind: input, shape index: {}]
  %s4 = inlined_call_operand.vmem [shape: f32[512,32], index: 4, kind: output, shape index: {0}]
  %s5 = inlined_call_operand.vmem [shape: f32[1,2,32], index: 5, kind: output, shape index: {1}]
  %6 = xla_tuple %s4, %s5
  %s7 = sld [smem:[#allocation0]]
  $region34: #{bottleneck_forward.7} parent=0
    _
  %s9 = ssub.s32 1, %s7
  %s10 = scalar_select 0, %s9, %s7
  // Predicated region
  $region2: #{bottleneck_forward.7} parent=0 // pred_check
    _
  $region3: #{bottleneck_forward.7} parent=0 // pred_check_branch
    %12 = sbr.rel (0) target = $region5
  $region4: #{bottleneck_forward.7} parent=0 // pred_region
    _
  $region5: #{bottleneck_forward.7} parent=0 // pred_fallthru
    _
  // Predicated region
  $region6: #{bottleneck_forward.7} parent=0 // pred_check
    _
  $region7: #{bottleneck_forward.7} parent=0 // pred_check_branch
    %14 = sbr.rel (0) target = $region9
  $region8: #{bottleneck_forward.7} parent=0 // pred_region
    _
  $region9: #{bottleneck_forward.7} parent=0 // pred_fallthru
    _
  // Predicated region
  $region10: #{bottleneck_forward.7} parent=0 // pred_check
    _
  $region11: #{bottleneck_forward.7} parent=0 // pred_check_branch
    %16 = sbr.rel (0) target = $region13
  $region12: #{bottleneck_forward.7} parent=0 // pred_region
    _
  $region13: #{bottleneck_forward.7} parent=0 // pred_fallthru
    _
  // Predicated region
  $region14: #{bottleneck_forward.7} parent=0 // pred_check
    _
  $region15: #{bottleneck_forward.7} parent=0 // pred_check_branch
    %18 = sbr.rel (0) target = $region17
  $region16: #{bottleneck_forward.7} parent=0 // pred_region
    _
  $region17: #{bottleneck_forward.7} parent=0 // pred_fallthru
    _
  %v19 = vld [vmem:[%s0] sm:$0xff]
  %v20 = vld [vmem:[%s0 + $0x8] sm:$0xff]
  %v21 = vld [vmem:[%s0 + $0x10] sm:$0xff]
  %v22 = vld [vmem:[%s0 + $0x18] sm:$0xff]
  %v23 = vld [vmem:[%s0 + $0x20] sm:$0xff]
  %v24 = vld [vmem:[%s0 + $0x28] sm:$0xff]
  %v25 = vld [vmem:[%s0 + $0x30] sm:$0xff]
  %v26 = vld [vmem:[%s0 + $0x38] sm:$0xff]
  %v27 = vld [vmem:[%s0 + $0x40] sm:$0xff]
  %v28 = vld [vmem:[%s0 + $0x48] sm:$0xff]
  %v29 = vld [vmem:[%s0 + $0x50] sm:$0xff]
  %v30 = vld [vmem:[%s0 + $0x58] sm:$0xff]
  %v31 = vld [vmem:[%s0 + $0x60] sm:$0xff]
  %v32 = vld [vmem:[%s0 + $0x68] sm:$0xff]
  %v33 = vld [vmem:[%s0 + $0x70] sm:$0xff]
  %v34 = vld [vmem:[%s0 + $0x78] sm:$0xff]
  %v35 = vld [vmem:[%s0 + $0x80] sm:$0xff]
  %v36 = vld [vmem:[%s0 + $0x88] sm:$0xff]
  %v37 = vld [vmem:[%s0 + $0x90] sm:$0xff]
  %v38 = vld [vmem:[%s0 + $0x98] sm:$0xff]
  %v39 = vld [vmem:[%s0 + $0xa0] sm:$0xff]
  %v40 = vld [vmem:[%s0 + $0xa8] sm:$0xff]
  %v41 = vld [vmem:[%s0 + $0xb0] sm:$0xff]
  %v42 = vld [vmem:[%s0 + $0xb8] sm:$0xff]
  %v43 = vld [vmem:[%s0 + $0xc0] sm:$0xff]
  %v44 = vld [vmem:[%s0 + $0xc8] sm:$0xff]
  %v45 = vld [vmem:[%s0 + $0xd0] sm:$0xff]
  %v46 = vld [vmem:[%s0 + $0xd8] sm:$0xff]
  %v47 = vld [vmem:[%s0 + $0xe0] sm:$0xff]
  %v48 = vld [vmem:[%s0 + $0xe8] sm:$0xff]
  %v49 = vld [vmem:[%s0 + $0xf0] sm:$0xff]
  %v50 = vld [vmem:[%s0 + $0xf8] sm:$0xff]
  %v51 = vld [vmem:[%s0 + $0x100] sm:$0xff]
  %v52 = vld [vmem:[%s0 + $0x108] sm:$0xff]
  %v53 = vld [vmem:[%s0 + $0x110] sm:$0xff]
  %v54 = vld [vmem:[%s0 + $0x118] sm:$0xff]
  %v55 = vld [vmem:[%s0 + $0x120] sm:$0xff]
  %v56 = vld [vmem:[%s0 + $0x128] sm:$0xff]
  %v57 = vld [vmem:[%s0 + $0x130] sm:$0xff]
  %v58 = vld [vmem:[%s0 + $0x138] sm:$0xff]
  %v59 = vld [vmem:[%s0 + $0x140] sm:$0xff]
  %v60 = vld [vmem:[%s0 + $0x148] sm:$0xff]
  %v61 = vld [vmem:[%s0 + $0x150] sm:$0xff]
  %v62 = vld [vmem:[%s0 + $0x158] sm:$0xff]
  %v63 = vld [vmem:[%s0 + $0x160] sm:$0xff]
  %v64 = vld [vmem:[%s0 + $0x168] sm:$0xff]
  %v65 = vld [vmem:[%s0 + $0x170] sm:$0xff]
  %v66 = vld [vmem:[%s0 + $0x178] sm:$0xff]
  %v67 = vld [vmem:[%s0 + $0x180] sm:$0xff]
  %v68 = vld [vmem:[%s0 + $0x188] sm:$0xff]
  %v69 = vld [vmem:[%s0 + $0x190] sm:$0xff]
  %v70 = vld [vmem:[%s0 + $0x198] sm:$0xff]
  %v71 = vld [vmem:[%s0 + $0x1a0] sm:$0xff]
  %v72 = vld [vmem:[%s0 + $0x1a8] sm:$0xff]
  %v73 = vld [vmem:[%s0 + $0x1b0] sm:$0xff]
  %v74 = vld [vmem:[%s0 + $0x1b8] sm:$0xff]
  %v75 = vld [vmem:[%s0 + $0x1c0] sm:$0xff]
  %v76 = vld [vmem:[%s0 + $0x1c8] sm:$0xff]
  %v77 = vld [vmem:[%s0 + $0x1d0] sm:$0xff]
  %v78 = vld [vmem:[%s0 + $0x1d8] sm:$0xff]
  %v79 = vld [vmem:[%s0 + $0x1e0] sm:$0xff]
  %v80 = vld [vmem:[%s0 + $0x1e8] sm:$0xff]
  %v81 = vld [vmem:[%s0 + $0x1f0] sm:$0xff]
  %v82 = vld [vmem:[%s0 + $0x1f8] sm:$0xff]
  %v83 = vld [vmem:[%s2] sm:$0x1]
  %v85 = vlaneseq
  %v86 = vshrl.u32 %v85, 7
  %v87 = vsub.s32 0, %v86
  %v88 = vrot.slane %v83, %v87
  %v90 = vmul.f32 %v19, %v88
  %v91 = vmul.f32 %v20, %v88
  %v92 = vmul.f32 %v21, %v88
  %v93 = vmul.f32 %v22, %v88
  %v94 = vmul.f32 %v23, %v88
  %v95 = vmul.f32 %v24, %v88
  %v96 = vmul.f32 %v25, %v88
  %v97 = vmul.f32 %v26, %v88
  %v98 = vmul.f32 %v27, %v88
  %v99 = vmul.f32 %v28, %v88
  %v100 = vmul.f32 %v29, %v88
  %v101 = vmul.f32 %v30, %v88
  %v102 = vmul.f32 %v31, %v88
  %v103 = vmul.f32 %v32, %v88
  %v104 = vmul.f32 %v33, %v88
  %v105 = vmul.f32 %v34, %v88
  %v106 = vmul.f32 %v35, %v88
  %v107 = vmul.f32 %v36, %v88
  %v108 = vmul.f32 %v37, %v88
  %v109 = vmul.f32 %v38, %v88
  %v110 = vmul.f32 %v39, %v88
  %v111 = vmul.f32 %v40, %v88
  %v112 = vmul.f32 %v41, %v88
  %v113 = vmul.f32 %v42, %v88
  %v114 = vmul.f32 %v43, %v88
  %v115 = vmul.f32 %v44, %v88
  %v116 = vmul.f32 %v45, %v88
  %v117 = vmul.f32 %v46, %v88
  %v118 = vmul.f32 %v47, %v88
  %v119 = vmul.f32 %v48, %v88
  %v120 = vmul.f32 %v49, %v88
  %v121 = vmul.f32 %v50, %v88
  %v122 = vmul.f32 %v51, %v88
  %v123 = vmul.f32 %v52, %v88
  %v124 = vmul.f32 %v53, %v88
  %v125 = vmul.f32 %v54, %v88
  %v126 = vmul.f32 %v55, %v88
  %v127 = vmul.f32 %v56, %v88
  %v128 = vmul.f32 %v57, %v88
  %v129 = vmul.f32 %v58, %v88
  %v130 = vmul.f32 %v59, %v88
  %v131 = vmul.f32 %v60, %v88
  %v132 = vmul.f32 %v61, %v88
  %v133 = vmul.f32 %v62, %v88
  %v134 = vmul.f32 %v63, %v88
  %v135 = vmul.f32 %v64, %v88
  %v136 = vmul.f32 %v65, %v88
  %v137 = vmul.f32 %v66, %v88
  %v138 = vmul.f32 %v67, %v88
  %v139 = vmul.f32 %v68, %v88
  %v140 = vmul.f32 %v69, %v88
  %v141 = vmul.f32 %v70, %v88
  %v142 = vmul.f32 %v71, %v88
  %v143 = vmul.f32 %v72, %v88
  %v144 = vmul.f32 %v73, %v88
  %v145 = vmul.f32 %v74, %v88
  %v146 = vmul.f32 %v75, %v88
  %v147 = vmul.f32 %v76, %v88
  %v148 = vmul.f32 %v77, %v88
  %v149 = vmul.f32 %v78, %v88
  %v150 = vmul.f32 %v79, %v88
  %v151 = vmul.f32 %v80, %v88
  %v152 = vmul.f32 %v81, %v88
  %v153 = vmul.f32 %v82, %v88
  %v154 = vld [vmem:[%s3] sm:$0x1]
  %v156 = vlaneseq
  %v157 = vshrl.u32 %v156, 7
  %v158 = vsub.s32 0, %v157
  %v159 = vrot.slane %v154, %v158
  %v161 = vadd.f32 %v90, %v159
  %v162 = vadd.f32 %v91, %v159
  %v163 = vadd.f32 %v92, %v159
  %v164 = vadd.f32 %v93, %v159
  %v165 = vadd.f32 %v94, %v159
  %v166 = vadd.f32 %v95, %v159
  %v167 = vadd.f32 %v96, %v159
  %v168 = vadd.f32 %v97, %v159
  %v169 = vadd.f32 %v98, %v159
  %v170 = vadd.f32 %v99, %v159
  %v171 = vadd.f32 %v100, %v159
  %v172 = vadd.f32 %v101, %v159
  %v173 = vadd.f32 %v102, %v159
  %v174 = vadd.f32 %v103, %v159
  %v175 = vadd.f32 %v104, %v159
  %v176 = vadd.f32 %v105, %v159
  %v177 = vadd.f32 %v106, %v159
  %v178 = vadd.f32 %v107, %v159
  %v179 = vadd.f32 %v108, %v159
  %v180 = vadd.f32 %v109, %v159
  %v181 = vadd.f32 %v110, %v159
  %v182 = vadd.f32 %v111, %v159
  %v183 = vadd.f32 %v112, %v159
  %v184 = vadd.f32 %v113, %v159
  %v185 = vadd.f32 %v114, %v159
  %v186 = vadd.f32 %v115, %v159
  %v187 = vadd.f32 %v116, %v159
  %v188 = vadd.f32 %v117, %v159
  %v189 = vadd.f32 %v118, %v159
  %v190 = vadd.f32 %v119, %v159
  %v191 = vadd.f32 %v120, %v159
  %v192 = vadd.f32 %v121, %v159
  %v193 = vadd.f32 %v122, %v159
  %v194 = vadd.f32 %v123, %v159
  %v195 = vadd.f32 %v124, %v159
  %v196 = vadd.f32 %v125, %v159
  %v197 = vadd.f32 %v126, %v159
  %v198 = vadd.f32 %v127, %v159
  %v199 = vadd.f32 %v128, %v159
  %v200 = vadd.f32 %v129, %v159
  %v201 = vadd.f32 %v130, %v159
  %v202 = vadd.f32 %v131, %v159
  %v203 = vadd.f32 %v132, %v159
  %v204 = vadd.f32 %v133, %v159
  %v205 = vadd.f32 %v134, %v159
  %v206 = vadd.f32 %v135, %v159
  %v207 = vadd.f32 %v136, %v159
  %v208 = vadd.f32 %v137, %v159
  %v209 = vadd.f32 %v138, %v159
  %v210 = vadd.f32 %v139, %v159
  %v211 = vadd.f32 %v140, %v159
  %v212 = vadd.f32 %v141, %v159
  %v213 = vadd.f32 %v142, %v159
  %v214 = vadd.f32 %v143, %v159
  %v215 = vadd.f32 %v144, %v159
  %v216 = vadd.f32 %v145, %v159
  %v217 = vadd.f32 %v146, %v159
  %v218 = vadd.f32 %v147, %v159
  %v219 = vadd.f32 %v148, %v159
  %v220 = vadd.f32 %v149, %v159
  %v221 = vadd.f32 %v150, %v159
  %v222 = vadd.f32 %v151, %v159
  %v223 = vadd.f32 %v152, %v159
  %v224 = vadd.f32 %v153, %v159
  %v225 = vmax.f32 %v161, 0.0
  %v226 = vmax.f32 %v162, 0.0
  %v227 = vmax.f32 %v163, 0.0
  %v228 = vmax.f32 %v164, 0.0
  %v229 = vmax.f32 %v165, 0.0
  %v230 = vmax.f32 %v166, 0.0
  %v231 = vmax.f32 %v167, 0.0
  %v232 = vmax.f32 %v168, 0.0
  %v233 = vmax.f32 %v169, 0.0
  %v234 = vmax.f32 %v170, 0.0
  %v235 = vmax.f32 %v171, 0.0
  %v236 = vmax.f32 %v172, 0.0
  %v237 = vmax.f32 %v173, 0.0
  %v238 = vmax.f32 %v174, 0.0
  %v239 = vmax.f32 %v175, 0.0
  %v240 = vmax.f32 %v176, 0.0
  %v241 = vmax.f32 %v177, 0.0
  %v242 = vmax.f32 %v178, 0.0
  %v243 = vmax.f32 %v179, 0.0
  %v244 = vmax.f32 %v180, 0.0
  %v245 = vmax.f32 %v181, 0.0
  %v246 = vmax.f32 %v182, 0.0
  %v247 = vmax.f32 %v183, 0.0
  %v248 = vmax.f32 %v184, 0.0
  %v249 = vmax.f32 %v185, 0.0
  %v250 = vmax.f32 %v186, 0.0
  %v251 = vmax.f32 %v187, 0.0
  %v252 = vmax.f32 %v188, 0.0
  %v253 = vmax.f32 %v189, 0.0
  %v254 = vmax.f32 %v190, 0.0
  %v255 = vmax.f32 %v191, 0.0
  %v256 = vmax.f32 %v192, 0.0
  %v257 = vmax.f32 %v193, 0.0
  %v258 = vmax.f32 %v194, 0.0
  %v259 = vmax.f32 %v195, 0.0
  %v260 = vmax.f32 %v196, 0.0
  %v261 = vmax.f32 %v197, 0.0
  %v262 = vmax.f32 %v198, 0.0
  %v263 = vmax.f32 %v199, 0.0
  %v264 = vmax.f32 %v200, 0.0
  %v265 = vmax.f32 %v201, 0.0
  %v266 = vmax.f32 %v202, 0.0
  %v267 = vmax.f32 %v203, 0.0
  %v268 = vmax.f32 %v204, 0.0
  %v269 = vmax.f32 %v205, 0.0
  %v270 = vmax.f32 %v206, 0.0
  %v271 = vmax.f32 %v207, 0.0
  %v272 = vmax.f32 %v208, 0.0
  %v273 = vmax.f32 %v209, 0.0
  %v274 = vmax.f32 %v210, 0.0
  %v275 = vmax.f32 %v211, 0.0
  %v276 = vmax.f32 %v212, 0.0
  %v277 = vmax.f32 %v213, 0.0
  %v278 = vmax.f32 %v214, 0.0
  %v279 = vmax.f32 %v215, 0.0
  %v280 = vmax.f32 %v216, 0.0
  %v281 = vmax.f32 %v217, 0.0
  %v282 = vmax.f32 %v218, 0.0
  %v283 = vmax.f32 %v219, 0.0
  %v284 = vmax.f32 %v220, 0.0
  %v285 = vmax.f32 %v221, 0.0
  %v286 = vmax.f32 %v222, 0.0
  %v287 = vmax.f32 %v223, 0.0
  %v288 = vmax.f32 %v224, 0.0
  %v289 = vld [vmem:[%s1] sm:$0xff]
  %vm290 = vcmask 64512
  %v292 = vsel %vm290, %v225, 0
  %v295 = vsel %vm290, %v226, 0
  %v298 = vsel %vm290, %v227, 0
  %v301 = vsel %vm290, %v228, 0
  %v304 = vsel %vm290, %v229, 0
  %v307 = vsel %vm290, %v230, 0
  %v310 = vsel %vm290, %v231, 0
  %v313 = vsel %vm290, %v232, 0
  %v316 = vsel %vm290, %v233, 0
  %v319 = vsel %vm290, %v234, 0
  %v322 = vsel %vm290, %v235, 0
  %v325 = vsel %vm290, %v236, 0
  %v328 = vsel %vm290, %v237, 0
  %v331 = vsel %vm290, %v238, 0
  %v334 = vsel %vm290, %v239, 0
  %v337 = vsel %vm290, %v240, 0
  %v340 = vsel %vm290, %v241, 0
  %v343 = vsel %vm290, %v242, 0
  %v346 = vsel %vm290, %v243, 0
  %v349 = vsel %vm290, %v244, 0
  %v352 = vsel %vm290, %v245, 0
  %v355 = vsel %vm290, %v246, 0
  %v358 = vsel %vm290, %v247, 0
  %v361 = vsel %vm290, %v248, 0
  %v364 = vsel %vm290, %v249, 0
  %v367 = vsel %vm290, %v250, 0
  %v370 = vsel %vm290, %v251, 0
  %v373 = vsel %vm290, %v252, 0
  %v376 = vsel %vm290, %v253, 0
  %v379 = vsel %vm290, %v254, 0
  %v382 = vsel %vm290, %v255, 0
  %v385 = vsel %vm290, %v256, 0
  %v388 = vsel %vm290, %v257, 0
  %v391 = vsel %vm290, %v258, 0
  %v394 = vsel %vm290, %v259, 0
  %v397 = vsel %vm290, %v260, 0
  %v400 = vsel %vm290, %v261, 0
  %v403 = vsel %vm290, %v262, 0
  %v406 = vsel %vm290, %v263, 0
  %v409 = vsel %vm290, %v264, 0
  %v412 = vsel %vm290, %v265, 0
  %v415 = vsel %vm290, %v266, 0
  %v418 = vsel %vm290, %v267, 0
  %v421 = vsel %vm290, %v268, 0
  %v424 = vsel %vm290, %v269, 0
  %v427 = vsel %vm290, %v270, 0
  %v430 = vsel %vm290, %v271, 0
  %v433 = vsel %vm290, %v272, 0
  %v436 = vsel %vm290, %v273, 0
  %v439 = vsel %vm290, %v274, 0
  %v442 = vsel %vm290, %v275, 0
  %v445 = vsel %vm290, %v276, 0
  %v448 = vsel %vm290, %v277, 0
  %v451 = vsel %vm290, %v278, 0
  %v454 = vsel %vm290, %v279, 0
  %v457 = vsel %vm290, %v280, 0
  %v460 = vsel %vm290, %v281, 0
  %v463 = vsel %vm290, %v282, 0
  %v466 = vsel %vm290, %v283, 0
  %v469 = vsel %vm290, %v284, 0
  %v472 = vsel %vm290, %v285, 0
  %v475 = vsel %vm290, %v286, 0
  %v478 = vsel %vm290, %v287, 0
  %v481 = vsel %vm290, %v288, 0
  %483 = vmatprep.subr.mxu0 0.0
  %484 = vmatpush1.msra.mxu0 %v289
  %485 = vmatprep.subr.mxu0 0.0
  %486 = vmatpush1.msra.mxu0 0.0
  %487 = vmatprep.subr.mxu0 0.0
  %488 = vmatpush1.msra.mxu0 0.0
  %489 = vmatprep.subr.mxu0 0.0
  %490 = vmatpush1.msra.mxu0 0.0
  %491 = vmatprep.subr.mxu0 0.0
  %492 = vmatpush1.msra.mxu0 0.0
  %493 = vmatprep.subr.mxu0 0.0
  %494 = vmatpush1.msra.mxu0 0.0
  %495 = vmatprep.subr.mxu0 0.0
  %496 = vmatpush1.msra.mxu0 0.0
  %497 = vmatprep.subr.mxu0 0.0
  %498 = vmatpush1.msra.mxu0 0.0
  %499 = vmatprep.subr.mxu0 0.0
  %500 = vmatpush1.msra.mxu0 0.0
  %501 = vmatprep.subr.mxu0 0.0
  %502 = vmatpush1.msra.mxu0 0.0
  %503 = vmatprep.subr.mxu0 0.0
  %504 = vmatpush1.msra.mxu0 0.0
  %505 = vmatprep.subr.mxu0 0.0
  %506 = vmatpush1.msra.mxu0 0.0
  %507 = vmatprep.subr.mxu0 0.0
  %508 = vmatpush1.msra.mxu0 0.0
  %509 = vmatprep.subr.mxu0 0.0
  %510 = vmatpush1.msra.mxu0 0.0
  %511 = vmatprep.subr.mxu0 0.0
  %512 = vmatpush1.msra.mxu0 0.0
  %513 = vmatprep.subr.mxu0 0.0
  %514 = vmatpush1.msra.mxu0 0.0
  %515 = vmatprep.subr.mxu0 0.0
  %516 = vmatpush1.msra.mxu0 0.0
  %517 = vmatprep.subr.mxu0 0.0
  %518 = vmatpush1.msra.mxu0 0.0
  %519 = vmatprep.subr.mxu0 0.0
  %520 = vmatpush1.msra.mxu0 0.0
  %521 = vmatprep.subr.mxu0 0.0
  %522 = vmatpush1.msra.mxu0 0.0
  %523 = vmatprep.subr.mxu0 0.0
  %524 = vmatpush1.msra.mxu0 0.0
  %525 = vmatprep.subr.mxu0 0.0
  %526 = vmatpush1.msra.mxu0 0.0
  %527 = vmatprep.subr.mxu0 0.0
  %528 = vmatpush1.msra.mxu0 0.0
  %529 = vmatprep.subr.mxu0 0.0
  %530 = vmatpush1.msra.mxu0 0.0
  %531 = vmatprep.subr.mxu0 0.0
  %532 = vmatpush1.msra.mxu0 0.0
  %533 = vmatprep.subr.mxu0 0.0
  %534 = vmatpush1.msra.mxu0 0.0
  %535 = vmatprep.subr.mxu0 0.0
  %536 = vmatpush1.msra.mxu0 0.0
  %537 = vmatprep.subr.mxu0 0.0
  %538 = vmatpush1.msra.mxu0 0.0
  %539 = vmatprep.subr.mxu0 0.0
  %540 = vmatpush1.msra.mxu0 0.0
  %541 = vmatprep.subr.mxu0 0.0
  %542 = vmatpush1.msra.mxu0 0.0
  %543 = vmatprep.subr.mxu0 0.0
  %544 = vmatpush1.msra.mxu0 0.0
  %545 = vmatprep.subr.mxu0 0.0
  %546 = vmatpush1.msra.mxu0 0.0
  %547 = vmatprep.mubr.f32.mxu0 0.0
  %548 = vmatmul.mubr.f32.gmra.mrb[0].mxu0 %v292
  %v549 = vpop.f32.mrb[0].mxu0
  %v550 = vadd.f32 0.0, %v549
  %v551 = vpop.f32.mrb[0].mxu0
  %552 = vmatprep.mubr.f32.mxu0 0.0
  %553 = vmatmul.mubr.f32.gmra.mrb[0].mxu0 %v295
  %v554 = vpop.f32.mrb[0].mxu0
  %v555 = vadd.f32 0.0, %v554
  %v556 = vpop.f32.mrb[0].mxu0
  %557 = vmatprep.mubr.f32.mxu0 0.0
  %558 = vmatmul.mubr.f32.gmra.mrb[0].mxu0 %v298
  %v559 = vpop.f32.mrb[0].mxu0
  %v560 = vadd.f32 0.0, %v559
  %v561 = vpop.f32.mrb[0].mxu0
  %562 = vmatprep.mubr.f32.mxu0 0.0
  %563 = vmatmul.mubr.f32.gmra.mrb[0].mxu0 %v301
  %v564 = vpop.f32.mrb[0].mxu0
  %v565 = vadd.f32 0.0, %v564
  %v566 = vpop.f32.mrb[0].mxu0
  %567 = vmatprep.mubr.f32.mxu0 0.0
  %568 = vmatmul.mubr.f32.gmra.mrb[0].mxu0 %v304
  %v569 = vpop.f32.mrb[0].mxu0
  %v570 = vadd.f32 0.0, %v569
  %v571 = vpop.f32.mrb[0].mxu0
  %572 = vmatprep.mubr.f32.mxu0 0.0
  %573 = vmatmul.mubr.f32.gmra.mrb[0].mxu0 %v307
  %v574 = vpop.f32.mrb[0].mxu0
  %v575 = vadd.f32 0.0, %v574
  %v576 = vpop.f32.mrb[0].mxu0
  %577 = vmatprep.mubr.f32.mxu0 0.0
  %578 = vmatmul.mubr.f32.gmra.mrb[0].mxu0 %v310
  %v579 = vpop.f32.mrb[0].mxu0
  %v580 = vadd.f32 0.0, %v579
  %v581 = vpop.f32.mrb[0].mxu0
  %582 = vmatprep.mubr.f32.mxu0 0.0
  %583 = vmatmul.mubr.f32.gmra.mrb[0].mxu0 %v313
  %v584 = vpop.f32.mrb[0].mxu0
  %v585 = vadd.f32 0.0, %v584
  %v586 = vpop.f32.mrb[0].mxu0
  %587 = vmatprep.mubr.f32.mxu0 0.0
  %588 = vmatmul.mubr.f32.gmra.mrb[0].mxu0 %v316
  %v589 = vpop.f32.mrb[0].mxu0
  %v590 = vadd.f32 0.0, %v589
  %v591 = vpop.f32.mrb[0].mxu0
  %592 = vmatprep.mubr.f32.mxu0 0.0
  %593 = vmatmul.mubr.f32.gmra.mrb[0].mxu0 %v319
  %v594 = vpop.f32.mrb[0].mxu0
  %v595 = vadd.f32 0.0, %v594
  %v596 = vpop.f32.mrb[0].mxu0
  %597 = vmatprep.mubr.f32.mxu0 0.0
  %598 = vmatmul.mubr.f32.gmra.mrb[0].mxu0 %v322
  %v599 = vpop.f32.mrb[0].mxu0
  %v600 = vadd.f32 0.0, %v599
  %v601 = vpop.f32.mrb[0].mxu0
  %602 = vmatprep.mubr.f32.mxu0 0.0
  %603 = vmatmul.mubr.f32.gmra.mrb[0].mxu0 %v325
  %v604 = vpop.f32.mrb[0].mxu0
  %v605 = vadd.f32 0.0, %v604
  %v606 = vpop.f32.mrb[0].mxu0
  %607 = vmatprep.mubr.f32.mxu0 0.0
  %608 = vmatmul.mubr.f32.gmra.mrb[0].mxu0 %v328
  %v609 = vpop.f32.mrb[0].mxu0
  %v610 = vadd.f32 0.0, %v609
  %v611 = vpop.f32.mrb[0].mxu0
  %612 = vmatprep.mubr.f32.mxu0 0.0
  %613 = vmatmul.mubr.f32.gmra.mrb[0].mxu0 %v331
  %v614 = vpop.f32.mrb[0].mxu0
  %v615 = vadd.f32 0.0, %v614
  %v616 = vpop.f32.mrb[0].mxu0
  %617 = vmatprep.mubr.f32.mxu0 0.0
  %618 = vmatmul.mubr.f32.gmra.mrb[0].mxu0 %v334
  %v619 = vpop.f32.mrb[0].mxu0
  %v620 = vadd.f32 0.0, %v619
  %v621 = vpop.f32.mrb[0].mxu0
  %622 = vmatprep.mubr.f32.mxu0 0.0
  %623 = vmatmul.mubr.f32.gmra.mrb[0].mxu0 %v337
  %v624 = vpop.f32.mrb[0].mxu0
  %v625 = vadd.f32 0.0, %v624
  %v626 = vpop.f32.mrb[0].mxu0
  %627 = vmatprep.mubr.f32.mxu0 0.0
  %628 = vmatmul.mubr.f32.gmra.mrb[0].mxu0 %v340
  %v629 = vpop.f32.mrb[0].mxu0
  %v630 = vadd.f32 0.0, %v629
  %v631 = vpop.f32.mrb[0].mxu0
  %632 = vmatprep.mubr.f32.mxu0 0.0
  %633 = vmatmul.mubr.f32.gmra.mrb[0].mxu0 %v343
  %v634 = vpop.f32.mrb[0].mxu0
  %v635 = vadd.f32 0.0, %v634
  %v636 = vpop.f32.mrb[0].mxu0
  %637 = vmatprep.mubr.f32.mxu0 0.0
  %638 = vmatmul.mubr.f32.gmra.mrb[0].mxu0 %v346
  %v639 = vpop.f32.mrb[0].mxu0
  %v640 = vadd.f32 0.0, %v639
  %v641 = vpop.f32.mrb[0].mxu0
  %642 = vmatprep.mubr.f32.mxu0 0.0
  %643 = vmatmul.mubr.f32.gmra.mrb[0].mxu0 %v349
  %v644 = vpop.f32.mrb[0].mxu0
  %v645 = vadd.f32 0.0, %v644
  %v646 = vpop.f32.mrb[0].mxu0
  %647 = vmatprep.mubr.f32.mxu0 0.0
  %648 = vmatmul.mubr.f32.gmra.mrb[0].mxu0 %v352
  %v649 = vpop.f32.mrb[0].mxu0
  %v650 = vadd.f32 0.0, %v649
  %v651 = vpop.f32.mrb[0].mxu0
  %652 = vmatprep.mubr.f32.mxu0 0.0
  %653 = vmatmul.mubr.f32.gmra.mrb[0].mxu0 %v355
  %v654 = vpop.f32.mrb[0].mxu0
  %v655 = vadd.f32 0.0, %v654
  %v656 = vpop.f32.mrb[0].mxu0
  %657 = vmatprep.mubr.f32.mxu0 0.0
  %658 = vmatmul.mubr.f32.gmra.mrb[0].mxu0 %v358
  %v659 = vpop.f32.mrb[0].mxu0
  %v660 = vadd.f32 0.0, %v659
  %v661 = vpop.f32.mrb[0].mxu0
  %662 = vmatprep.mubr.f32.mxu0 0.0
  %663 = vmatmul.mubr.f32.gmra.mrb[0].mxu0 %v361
  %v664 = vpop.f32.mrb[0].mxu0
  %v665 = vadd.f32 0.0, %v664
  %v666 = vpop.f32.mrb[0].mxu0
  %667 = vmatprep.mubr.f32.mxu0 0.0
  %668 = vmatmul.mubr.f32.gmra.mrb[0].mxu0 %v364
  %v669 = vpop.f32.mrb[0].mxu0
  %v670 = vadd.f32 0.0, %v669
  %v671 = vpop.f32.mrb[0].mxu0
  %672 = vmatprep.mubr.f32.mxu0 0.0
  %673 = vmatmul.mubr.f32.gmra.mrb[0].mxu0 %v367
  %v674 = vpop.f32.mrb[0].mxu0
  %v675 = vadd.f32 0.0, %v674
  %v676 = vpop.f32.mrb[0].mxu0
  %677 = vmatprep.mubr.f32.mxu0 0.0
  %678 = vmatmul.mubr.f32.gmra.mrb[0].mxu0 %v370
  %v679 = vpop.f32.mrb[0].mxu0
  %v680 = vadd.f32 0.0, %v679
  %v681 = vpop.f32.mrb[0].mxu0
  %682 = vmatprep.mubr.f32.mxu0 0.0
  %683 = vmatmul.mubr.f32.gmra.mrb[0].mxu0 %v373
  %v684 = vpop.f32.mrb[0].mxu0
  %v685 = vadd.f32 0.0, %v684
  %v686 = vpop.f32.mrb[0].mxu0
  %687 = vmatprep.mubr.f32.mxu0 0.0
  %688 = vmatmul.mubr.f32.gmra.mrb[0].mxu0 %v376
  %v689 = vpop.f32.mrb[0].mxu0
  %v690 = vadd.f32 0.0, %v689
  %v691 = vpop.f32.mrb[0].mxu0
  %692 = vmatprep.mubr.f32.mxu0 0.0
  %693 = vmatmul.mubr.f32.gmra.mrb[0].mxu0 %v379
  %v694 = vpop.f32.mrb[0].mxu0
  %v695 = vadd.f32 0.0, %v694
  %v696 = vpop.f32.mrb[0].mxu0
  %697 = vmatprep.mubr.f32.mxu0 0.0
  %698 = vmatmul.mubr.f32.gmra.mrb[0].mxu0 %v382
  %v699 = vpop.f32.mrb[0].mxu0
  %v700 = vadd.f32 0.0, %v699
  %v701 = vpop.f32.mrb[0].mxu0
  %702 = vmatprep.mubr.f32.mxu0 0.0
  %703 = vmatmul.mubr.f32.gmra.mrb[0].mxu0 %v385
  %v704 = vpop.f32.mrb[0].mxu0
  %v705 = vadd.f32 0.0, %v704
  %v706 = vpop.f32.mrb[0].mxu0
  %707 = vmatprep.mubr.f32.mxu0 0.0
  %708 = vmatmul.mubr.f32.gmra.mrb[0].mxu0 %v388
  %v709 = vpop.f32.mrb[0].mxu0
  %v710 = vadd.f32 0.0, %v709
  %v711 = vpop.f32.mrb[0].mxu0
  %712 = vmatprep.mubr.f32.mxu0 0.0
  %713 = vmatmul.mubr.f32.gmra.mrb[0].mxu0 %v391
  %v714 = vpop.f32.mrb[0].mxu0
  %v715 = vadd.f32 0.0, %v714
  %v716 = vpop.f32.mrb[0].mxu0
  %717 = vmatprep.mubr.f32.mxu0 0.0
  %718 = vmatmul.mubr.f32.gmra.mrb[0].mxu0 %v394
  %v719 = vpop.f32.mrb[0].mxu0
  %v720 = vadd.f32 0.0, %v719
  %v721 = vpop.f32.mrb[0].mxu0
  %722 = vmatprep.mubr.f32.mxu0 0.0
  %723 = vmatmul.mubr.f32.gmra.mrb[0].mxu0 %v397
  %v724 = vpop.f32.mrb[0].mxu0
  %v725 = vadd.f32 0.0, %v724
  %v726 = vpop.f32.mrb[0].mxu0
  %727 = vmatprep.mubr.f32.mxu0 0.0
  %728 = vmatmul.mubr.f32.gmra.mrb[0].mxu0 %v400
  %v729 = vpop.f32.mrb[0].mxu0
  %v730 = vadd.f32 0.0, %v729
  %v731 = vpop.f32.mrb[0].mxu0
  %732 = vmatprep.mubr.f32.mxu0 0.0
  %733 = vmatmul.mubr.f32.gmra.mrb[0].mxu0 %v403
  %v734 = vpop.f32.mrb[0].mxu0
  %v735 = vadd.f32 0.0, %v734
  %v736 = vpop.f32.mrb[0].mxu0
  %737 = vmatprep.mubr.f32.mxu0 0.0
  %738 = vmatmul.mubr.f32.gmra.mrb[0].mxu0 %v406
  %v739 = vpop.f32.mrb[0].mxu0
  %v740 = vadd.f32 0.0, %v739
  %v741 = vpop.f32.mrb[0].mxu0
  %742 = vmatprep.mubr.f32.mxu0 0.0
  %743 = vmatmul.mubr.f32.gmra.mrb[0].mxu0 %v409
  %v744 = vpop.f32.mrb[0].mxu0
  %v745 = vadd.f32 0.0, %v744
  %v746 = vpop.f32.mrb[0].mxu0
  %747 = vmatprep.mubr.f32.mxu0 0.0
  %748 = vmatmul.mubr.f32.gmra.mrb[0].mxu0 %v412
  %v749 = vpop.f32.mrb[0].mxu0
  %v750 = vadd.f32 0.0, %v749
  %v751 = vpop.f32.mrb[0].mxu0
  %752 = vmatprep.mubr.f32.mxu0 0.0
  %753 = vmatmul.mubr.f32.gmra.mrb[0].mxu0 %v415
  %v754 = vpop.f32.mrb[0].mxu0
  %v755 = vadd.f32 0.0, %v754
  %v756 = vpop.f32.mrb[0].mxu0
  %757 = vmatprep.mubr.f32.mxu0 0.0
  %758 = vmatmul.mubr.f32.gmra.mrb[0].mxu0 %v418
  %v759 = vpop.f32.mrb[0].mxu0
  %v760 = vadd.f32 0.0, %v759
  %v761 = vpop.f32.mrb[0].mxu0
  %762 = vmatprep.mubr.f32.mxu0 0.0
  %763 = vmatmul.mubr.f32.gmra.mrb[0].mxu0 %v421
  %v764 = vpop.f32.mrb[0].mxu0
  %v765 = vadd.f32 0.0, %v764
  %v766 = vpop.f32.mrb[0].mxu0
  %767 = vmatprep.mubr.f32.mxu0 0.0
  %768 = vmatmul.mubr.f32.gmra.mrb[0].mxu0 %v424
  %v769 = vpop.f32.mrb[0].mxu0
  %v770 = vadd.f32 0.0, %v769
  %v771 = vpop.f32.mrb[0].mxu0
  %772 = vmatprep.mubr.f32.mxu0 0.0
  %773 = vmatmul.mubr.f32.gmra.mrb[0].mxu0 %v427
  %v774 = vpop.f32.mrb[0].mxu0
  %v775 = vadd.f32 0.0, %v774
  %v776 = vpop.f32.mrb[0].mxu0
  %777 = vmatprep.mubr.f32.mxu0 0.0
  %778 = vmatmul.mubr.f32.gmra.mrb[0].mxu0 %v430
  %v779 = vpop.f32.mrb[0].mxu0
  %v780 = vadd.f32 0.0, %v779
  %v781 = vpop.f32.mrb[0].mxu0
  %782 = vmatprep.mubr.f32.mxu0 0.0
  %783 = vmatmul.mubr.f32.gmra.mrb[0].mxu0 %v433
  %v784 = vpop.f32.mrb[0].mxu0
  %v785 = vadd.f32 0.0, %v784
  %v786 = vpop.f32.mrb[0].mxu0
  %787 = vmatprep.mubr.f32.mxu0 0.0
  %788 = vmatmul.mubr.f32.gmra.mrb[0].mxu0 %v436
  %v789 = vpop.f32.mrb[0].mxu0
  %v790 = vadd.f32 0.0, %v789
  %v791 = vpop.f32.mrb[0].mxu0
  %792 = vmatprep.mubr.f32.mxu0 0.0
  %793 = vmatmul.mubr.f32.gmra.mrb[0].mxu0 %v439
  %v794 = vpop.f32.mrb[0].mxu0
  %v795 = vadd.f32 0.0, %v794
  %v796 = vpop.f32.mrb[0].mxu0
  %797 = vmatprep.mubr.f32.mxu0 0.0
  %798 = vmatmul.mubr.f32.gmra.mrb[0].mxu0 %v442
  %v799 = vpop.f32.mrb[0].mxu0
  %v800 = vadd.f32 0.0, %v799
  %v801 = vpop.f32.mrb[0].mxu0
  %802 = vmatprep.mubr.f32.mxu0 0.0
  %803 = vmatmul.mubr.f32.gmra.mrb[0].mxu0 %v445
  %v804 = vpop.f32.mrb[0].mxu0
  %v805 = vadd.f32 0.0, %v804
  %v806 = vpop.f32.mrb[0].mxu0
  %807 = vmatprep.mubr.f32.mxu0 0.0
  %808 = vmatmul.mubr.f32.gmra.mrb[0].mxu0 %v448
  %v809 = vpop.f32.mrb[0].mxu0
  %v810 = vadd.f32 0.0, %v809
  %v811 = vpop.f32.mrb[0].mxu0
  %812 = vmatprep.mubr.f32.mxu0 0.0
  %813 = vmatmul.mubr.f32.gmra.mrb[0].mxu0 %v451
  %v814 = vpop.f32.mrb[0].mxu0
  %v815 = vadd.f32 0.0, %v814
  %v816 = vpop.f32.mrb[0].mxu0
  %817 = vmatprep.mubr.f32.mxu0 0.0
  %818 = vmatmul.mubr.f32.gmra.mrb[0].mxu0 %v454
  %v819 = vpop.f32.mrb[0].mxu0
  %v820 = vadd.f32 0.0, %v819
  %v821 = vpop.f32.mrb[0].mxu0
  %822 = vmatprep.mubr.f32.mxu0 0.0
  %823 = vmatmul.mubr.f32.gmra.mrb[0].mxu0 %v457
  %v824 = vpop.f32.mrb[0].mxu0
  %v825 = vadd.f32 0.0, %v824
  %v826 = vpop.f32.mrb[0].mxu0
  %827 = vmatprep.mubr.f32.mxu0 0.0
  %828 = vmatmul.mubr.f32.gmra.mrb[0].mxu0 %v460
  %v829 = vpop.f32.mrb[0].mxu0
  %v830 = vadd.f32 0.0, %v829
  %v831 = vpop.f32.mrb[0].mxu0
  %832 = vmatprep.mubr.f32.mxu0 0.0
  %833 = vmatmul.mubr.f32.gmra.mrb[0].mxu0 %v463
  %v834 = vpop.f32.mrb[0].mxu0
  %v835 = vadd.f32 0.0, %v834
  %v836 = vpop.f32.mrb[0].mxu0
  %837 = vmatprep.mubr.f32.mxu0 0.0
  %838 = vmatmul.mubr.f32.gmra.mrb[0].mxu0 %v466
  %v839 = vpop.f32.mrb[0].mxu0
  %v840 = vadd.f32 0.0, %v839
  %v841 = vpop.f32.mrb[0].mxu0
  %842 = vmatprep.mubr.f32.mxu0 0.0
  %843 = vmatmul.mubr.f32.gmra.mrb[0].mxu0 %v469
  %v844 = vpop.f32.mrb[0].mxu0
  %v845 = vadd.f32 0.0, %v844
  %v846 = vpop.f32.mrb[0].mxu0
  %847 = vmatprep.mubr.f32.mxu0 0.0
  %848 = vmatmul.mubr.f32.gmra.mrb[0].mxu0 %v472
  %v849 = vpop.f32.mrb[0].mxu0
  %v850 = vadd.f32 0.0, %v849
  %v851 = vpop.f32.mrb[0].mxu0
  %852 = vmatprep.mubr.f32.mxu0 0.0
  %853 = vmatmul.mubr.f32.gmra.mrb[0].mxu0 %v475
  %v854 = vpop.f32.mrb[0].mxu0
  %v855 = vadd.f32 0.0, %v854
  %v856 = vpop.f32.mrb[0].mxu0
  %857 = vmatprep.mubr.f32.mxu0 0.0
  %858 = vmatmul.mubr.f32.gmra.mrb[0].mxu0 %v478
  %v859 = vpop.f32.mrb[0].mxu0
  %v860 = vadd.f32 0.0, %v859
  %v861 = vpop.f32.mrb[0].mxu0
  %862 = vmatprep.mubr.f32.mxu0 0.0
  %863 = vmatmul.mubr.f32.gmra.mrb[0].mxu0 %v481
  %v864 = vpop.f32.mrb[0].mxu0
  %v865 = vadd.f32 0.0, %v864
  %v866 = vpop.f32.mrb[0].mxu0
  %867 = vdwg.mxu0
  %vm868 = vcmask 261120
  %869 = vst.msk [vmem:[%s4] sm:$0xff] %vm868, %v550
  %870 = vst.msk [vmem:[%s4 + $0x8] sm:$0xff] %vm868, %v555
  %871 = vst.msk [vmem:[%s4 + $0x10] sm:$0xff] %vm868, %v560
  %872 = vst.msk [vmem:[%s4 + $0x18] sm:$0xff] %vm868, %v565
  %873 = vst.msk [vmem:[%s4 + $0x20] sm:$0xff] %vm868, %v570
  %874 = vst.msk [vmem:[%s4 + $0x28] sm:$0xff] %vm868, %v575
  %875 = vst.msk [vmem:[%s4 + $0x30] sm:$0xff] %vm868, %v580
  %876 = vst.msk [vmem:[%s4 + $0x38] sm:$0xff] %vm868, %v585
  %877 = vst.msk [vmem:[%s4 + $0x40] sm:$0xff] %vm868, %v590
  %878 = vst.msk [vmem:[%s4 + $0x48] sm:$0xff] %vm868, %v595
  %879 = vst.msk [vmem:[%s4 + $0x50] sm:$0xff] %vm868, %v600
  %880 = vst.msk [vmem:[%s4 + $0x58] sm:$0xff] %vm868, %v605
  %881 = vst.msk [vmem:[%s4 + $0x60] sm:$0xff] %vm868, %v610
  %882 = vst.msk [vmem:[%s4 + $0x68] sm:$0xff] %vm868, %v615
  %883 = vst.msk [vmem:[%s4 + $0x70] sm:$0xff] %vm868, %v620
  %884 = vst.msk [vmem:[%s4 + $0x78] sm:$0xff] %vm868, %v625
  %885 = vst.msk [vmem:[%s4 + $0x80] sm:$0xff] %vm868, %v630
  %886 = vst.msk [vmem:[%s4 + $0x88] sm:$0xff] %vm868, %v635
  %887 = vst.msk [vmem:[%s4 + $0x90] sm:$0xff] %vm868, %v640
  %888 = vst.msk [vmem:[%s4 + $0x98] sm:$0xff] %vm868, %v645
  %889 = vst.msk [vmem:[%s4 + $0xa0] sm:$0xff] %vm868, %v650
  %890 = vst.msk [vmem:[%s4 + $0xa8] sm:$0xff] %vm868, %v655
  %891 = vst.msk [vmem:[%s4 + $0xb0] sm:$0xff] %vm868, %v660
  %892 = vst.msk [vmem:[%s4 + $0xb8] sm:$0xff] %vm868, %v665
  %893 = vst.msk [vmem:[%s4 + $0xc0] sm:$0xff] %vm868, %v670
  %894 = vst.msk [vmem:[%s4 + $0xc8] sm:$0xff] %vm868, %v675
  %895 = vst.msk [vmem:[%s4 + $0xd0] sm:$0xff] %vm868, %v680
  %896 = vst.msk [vmem:[%s4 + $0xd8] sm:$0xff] %vm868, %v685
  %897 = vst.msk [vmem:[%s4 + $0xe0] sm:$0xff] %vm868, %v690
  %898 = vst.msk [vmem:[%s4 + $0xe8] sm:$0xff] %vm868, %v695
  %899 = vst.msk [vmem:[%s4 + $0xf0] sm:$0xff] %vm868, %v700
  %900 = vst.msk [vmem:[%s4 + $0xf8] sm:$0xff] %vm868, %v705
  %901 = vst.msk [vmem:[%s4 + $0x100] sm:$0xff] %vm868, %v710
  %902 = vst.msk [vmem:[%s4 + $0x108] sm:$0xff] %vm868, %v715
  %903 = vst.msk [vmem:[%s4 + $0x110] sm:$0xff] %vm868, %v720
  %904 = vst.msk [vmem:[%s4 + $0x118] sm:$0xff] %vm868, %v725
  %905 = vst.msk [vmem:[%s4 + $0x120] sm:$0xff] %vm868, %v730
  %906 = vst.msk [vmem:[%s4 + $0x128] sm:$0xff] %vm868, %v735
  %907 = vst.msk [vmem:[%s4 + $0x130] sm:$0xff] %vm868, %v740
  %908 = vst.msk [vmem:[%s4 + $0x138] sm:$0xff] %vm868, %v745
  %909 = vst.msk [vmem:[%s4 + $0x140] sm:$0xff] %vm868, %v750
  %910 = vst.msk [vmem:[%s4 + $0x148] sm:$0xff] %vm868, %v755
  %911 = vst.msk [vmem:[%s4 + $0x150] sm:$0xff] %vm868, %v760
  %912 = vst.msk [vmem:[%s4 + $0x158] sm:$0xff] %vm868, %v765
  %913 = vst.msk [vmem:[%s4 + $0x160] sm:$0xff] %vm868, %v770
  %914 = vst.msk [vmem:[%s4 + $0x168] sm:$0xff] %vm868, %v775
  %915 = vst.msk [vmem:[%s4 + $0x170] sm:$0xff] %vm868, %v780
  %916 = vst.msk [vmem:[%s4 + $0x178] sm:$0xff] %vm868, %v785
  %917 = vst.msk [vmem:[%s4 + $0x180] sm:$0xff] %vm868, %v790
  %918 = vst.msk [vmem:[%s4 + $0x188] sm:$0xff] %vm868, %v795
  %919 = vst.msk [vmem:[%s4 + $0x190] sm:$0xff] %vm868, %v800
  %920 = vst.msk [vmem:[%s4 + $0x198] sm:$0xff] %vm868, %v805
  %921 = vst.msk [vmem:[%s4 + $0x1a0] sm:$0xff] %vm868, %v810
  %922 = vst.msk [vmem:[%s4 + $0x1a8] sm:$0xff] %vm868, %v815
  %923 = vst.msk [vmem:[%s4 + $0x1b0] sm:$0xff] %vm868, %v820
  %924 = vst.msk [vmem:[%s4 + $0x1b8] sm:$0xff] %vm868, %v825
  %925 = vst.msk [vmem:[%s4 + $0x1c0] sm:$0xff] %vm868, %v830
  %926 = vst.msk [vmem:[%s4 + $0x1c8] sm:$0xff] %vm868, %v835
  %927 = vst.msk [vmem:[%s4 + $0x1d0] sm:$0xff] %vm868, %v840
  %928 = vst.msk [vmem:[%s4 + $0x1d8] sm:$0xff] %vm868, %v845
  %929 = vst.msk [vmem:[%s4 + $0x1e0] sm:$0xff] %vm868, %v850
  %930 = vst.msk [vmem:[%s4 + $0x1e8] sm:$0xff] %vm868, %v855
  %931 = vst.msk [vmem:[%s4 + $0x1f0] sm:$0xff] %vm868, %v860
  %932 = vst.msk [vmem:[%s4 + $0x1f8] sm:$0xff] %vm868, %v865
  %v933 = vsel %vm868, %v550, 0.0
  %v934 = vsel %vm868, %v555, 0.0
  %v935 = vadd.f32 %v933, %v934
  %v936 = vsel %vm868, %v560, 0.0
  %v937 = vadd.f32 %v935, %v936
  %v938 = vsel %vm868, %v565, 0.0
  %v939 = vadd.f32 %v937, %v938
  %v940 = vsel %vm868, %v570, 0.0
  %v941 = vadd.f32 %v939, %v940
  %v942 = vsel %vm868, %v575, 0.0
  %v943 = vadd.f32 %v941, %v942
  %v944 = vsel %vm868, %v580, 0.0
  %v945 = vadd.f32 %v943, %v944
  %v946 = vsel %vm868, %v585, 0.0
  %v947 = vadd.f32 %v945, %v946
  %v948 = vsel %vm868, %v590, 0.0
  %v949 = vadd.f32 %v947, %v948
  %v950 = vsel %vm868, %v595, 0.0
  %v951 = vadd.f32 %v949, %v950
  %v952 = vsel %vm868, %v600, 0.0
  %v953 = vadd.f32 %v951, %v952
  %v954 = vsel %vm868, %v605, 0.0
  %v955 = vadd.f32 %v953, %v954
  %v956 = vsel %vm868, %v610, 0.0
  %v957 = vadd.f32 %v955, %v956
  %v958 = vsel %vm868, %v615, 0.0
  %v959 = vadd.f32 %v957, %v958
  %v960 = vsel %vm868, %v620, 0.0
  %v961 = vadd.f32 %v959, %v960
  %v962 = vsel %vm868, %v625, 0.0
  %v963 = vadd.f32 %v961, %v962
  %v964 = vsel %vm868, %v630, 0.0
  %v965 = vadd.f32 %v963, %v964
  %v966 = vsel %vm868, %v635, 0.0
  %v967 = vadd.f32 %v965, %v966
  %v968 = vsel %vm868, %v640, 0.0
  %v969 = vadd.f32 %v967, %v968
  %v970 = vsel %vm868, %v645, 0.0
  %v971 = vadd.f32 %v969, %v970
  %v972 = vsel %vm868, %v650, 0.0
  %v973 = vadd.f32 %v971, %v972
  %v974 = vsel %vm868, %v655, 0.0
  %v975 = vadd.f32 %v973, %v974
  %v976 = vsel %vm868, %v660, 0.0
  %v977 = vadd.f32 %v975, %v976
  %v978 = vsel %vm868, %v665, 0.0
  %v979 = vadd.f32 %v977, %v978
  %v980 = vsel %vm868, %v670, 0.0
  %v981 = vadd.f32 %v979, %v980
  %v982 = vsel %vm868, %v675, 0.0
  %v983 = vadd.f32 %v981, %v982
  %v984 = vsel %vm868, %v680, 0.0
  %v985 = vadd.f32 %v983, %v984
  %v986 = vsel %vm868, %v685, 0.0
  %v987 = vadd.f32 %v985, %v986
  %v988 = vsel %vm868, %v690, 0.0
  %v989 = vadd.f32 %v987, %v988
  %v990 = vsel %vm868, %v695, 0.0
  %v991 = vadd.f32 %v989, %v990
  %v992 = vsel %vm868, %v700, 0.0
  %v993 = vadd.f32 %v991, %v992
  %v994 = vsel %vm868, %v705, 0.0
  %v995 = vadd.f32 %v993, %v994
  %v996 = vsel %vm868, %v710, 0.0
  %v997 = vadd.f32 %v995, %v996
  %v998 = vsel %vm868, %v715, 0.0
  %v999 = vadd.f32 %v997, %v998
  %v1000 = vsel %vm868, %v720, 0.0
  %v1001 = vadd.f32 %v999, %v1000
  %v1002 = vsel %vm868, %v725, 0.0
  %v1003 = vadd.f32 %v1001, %v1002
  %v1004 = vsel %vm868, %v730, 0.0
  %v1005 = vadd.f32 %v1003, %v1004
  %v1006 = vsel %vm868, %v735, 0.0
  %v1007 = vadd.f32 %v1005, %v1006
  %v1008 = vsel %vm868, %v740, 0.0
  %v1009 = vadd.f32 %v1007, %v1008
  %v1010 = vsel %vm868, %v745, 0.0
  %v1011 = vadd.f32 %v1009, %v1010
  %v1012 = vsel %vm868, %v750, 0.0
  %v1013 = vadd.f32 %v1011, %v1012
  %v1014 = vsel %vm868, %v755, 0.0
  %v1015 = vadd.f32 %v1013, %v1014
  %v1016 = vsel %vm868, %v760, 0.0
  %v1017 = vadd.f32 %v1015, %v1016
  %v1018 = vsel %vm868, %v765, 0.0
  %v1019 = vadd.f32 %v1017, %v1018
  %v1020 = vsel %vm868, %v770, 0.0
  %v1021 = vadd.f32 %v1019, %v1020
  %v1022 = vsel %vm868, %v775, 0.0
  %v1023 = vadd.f32 %v1021, %v1022
  %v1024 = vsel %vm868, %v780, 0.0
  %v1025 = vadd.f32 %v1023, %v1024
  %v1026 = vsel %vm868, %v785, 0.0
  %v1027 = vadd.f32 %v1025, %v1026
  %v1028 = vsel %vm868, %v790, 0.0
  %v1029 = vadd.f32 %v1027, %v1028
  %v1030 = vsel %vm868, %v795, 0.0
  %v1031 = vadd.f32 %v1029, %v1030
  %v1032 = vsel %vm868, %v800, 0.0
  %v1033 = vadd.f32 %v1031, %v1032
  %v1034 = vsel %vm868, %v805, 0.0
  %v1035 = vadd.f32 %v1033, %v1034
  %v1036 = vsel %vm868, %v810, 0.0
  %v1037 = vadd.f32 %v1035, %v1036
  %v1038 = vsel %vm868, %v815, 0.0
  %v1039 = vadd.f32 %v1037, %v1038
  %v1040 = vsel %vm868, %v820, 0.0
  %v1041 = vadd.f32 %v1039, %v1040
  %v1042 = vsel %vm868, %v825, 0.0
  %v1043 = vadd.f32 %v1041, %v1042
  %v1044 = vsel %vm868, %v830, 0.0
  %v1045 = vadd.f32 %v1043, %v1044
  %v1046 = vsel %vm868, %v835, 0.0
  %v1047 = vadd.f32 %v1045, %v1046
  %v1048 = vsel %vm868, %v840, 0.0
  %v1049 = vadd.f32 %v1047, %v1048
  %v1050 = vsel %vm868, %v845, 0.0
  %v1051 = vadd.f32 %v1049, %v1050
  %v1052 = vsel %vm868, %v850, 0.0
  %v1053 = vadd.f32 %v1051, %v1052
  %v1054 = vsel %vm868, %v855, 0.0
  %v1055 = vadd.f32 %v1053, %v1054
  %v1056 = vsel %vm868, %v860, 0.0
  %v1057 = vadd.f32 %v1055, %v1056
  %v1058 = vsel %vm868, %v865, 0.0
  %v1059 = vadd.f32 %v1057, %v1058
  %v1060 = vrot.slane %v1059, 4
  %v1061 = vadd.f32 %v1059, %v1060
  %v1062 = vrot.slane %v1061, 2
  %v1063 = vadd.f32 %v1061, %v1062
  %v1064 = vrot.slane %v1063, 1
  %v1065 = vadd.f32 %v1063, %v1064
  %vm1066 = vcmask 253952
  %1067 = vst.msk [vmem:[%s5] sm:$0x1] %vm1066, %v1065
  %v1068 = vmul.f32 %v550, %v550
  %v1069 = vmul.f32 %v555, %v555
  %v1070 = vmul.f32 %v560, %v560
  %v1071 = vmul.f32 %v565, %v565
  %v1072 = vmul.f32 %v570, %v570
  %v1073 = vmul.f32 %v575, %v575
  %v1074 = vmul.f32 %v580, %v580
  %v1075 = vmul.f32 %v585, %v585
  %v1076 = vmul.f32 %v590, %v590
  %v1077 = vmul.f32 %v595, %v595
  %v1078 = vmul.f32 %v600, %v600
  %v1079 = vmul.f32 %v605, %v605
  %v1080 = vmul.f32 %v610, %v610
  %v1081 = vmul.f32 %v615, %v615
  %v1082 = vmul.f32 %v620, %v620
  %v1083 = vmul.f32 %v625, %v625
  %v1084 = vmul.f32 %v630, %v630
  %v1085 = vmul.f32 %v635, %v635
  %v1086 = vmul.f32 %v640, %v640
  %v1087 = vmul.f32 %v645, %v645
  %v1088 = vmul.f32 %v650, %v650
  %v1089 = vmul.f32 %v655, %v655
  %v1090 = vmul.f32 %v660, %v660
  %v1091 = vmul.f32 %v665, %v665
  %v1092 = vmul.f32 %v670, %v670
  %v1093 = vmul.f32 %v675, %v675
  %v1094 = vmul.f32 %v680, %v680
  %v1095 = vmul.f32 %v685, %v685
  %v1096 = vmul.f32 %v690, %v690
  %v1097 = vmul.f32 %v695, %v695
  %v1098 = vmul.f32 %v700, %v700
  %v1099 = vmul.f32 %v705, %v705
  %v1100 = vmul.f32 %v710, %v710
  %v1101 = vmul.f32 %v715, %v715
  %v1102 = vmul.f32 %v720, %v720
  %v1103 = vmul.f32 %v725, %v725
  %v1104 = vmul.f32 %v730, %v730
  %v1105 = vmul.f32 %v735, %v735
  %v1106 = vmul.f32 %v740, %v740
  %v1107 = vmul.f32 %v745, %v745
  %v1108 = vmul.f32 %v750, %v750
  %v1109 = vmul.f32 %v755, %v755
  %v1110 = vmul.f32 %v760, %v760
  %v1111 = vmul.f32 %v765, %v765
  %v1112 = vmul.f32 %v770, %v770
  %v1113 = vmul.f32 %v775, %v775
  %v1114 = vmul.f32 %v780, %v780
  %v1115 = vmul.f32 %v785, %v785
  %v1116 = vmul.f32 %v790, %v790
  %v1117 = vmul.f32 %v795, %v795
  %v1118 = vmul.f32 %v800, %v800
  %v1119 = vmul.f32 %v805, %v805
  %v1120 = vmul.f32 %v810, %v810
  %v1121 = vmul.f32 %v815, %v815
  %v1122 = vmul.f32 %v820, %v820
  %v1123 = vmul.f32 %v825, %v825
  %v1124 = vmul.f32 %v830, %v830
  %v1125 = vmul.f32 %v835, %v835
  %v1126 = vmul.f32 %v840, %v840
  %v1127 = vmul.f32 %v845, %v845
  %v1128 = vmul.f32 %v850, %v850
  %v1129 = vmul.f32 %v855, %v855
  %v1130 = vmul.f32 %v860, %v860
  %v1131 = vmul.f32 %v865, %v865
  %v1132 = vsel %vm868, %v1068, 0.0
  %v1133 = vsel %vm868, %v1069, 0.0
  %v1134 = vadd.f32 %v1132, %v1133
  %v1135 = vsel %vm868, %v1070, 0.0
  %v1136 = vadd.f32 %v1134, %v1135
  %v1137 = vsel %vm868, %v1071, 0.0
  %v1138 = vadd.f32 %v1136, %v1137
  %v1139 = vsel %vm868, %v1072, 0.0
  %v1140 = vadd.f32 %v1138, %v1139
  %v1141 = vsel %vm868, %v1073, 0.0
  %v1142 = vadd.f32 %v1140, %v1141
  %v1143 = vsel %vm868, %v1074, 0.0
  %v1144 = vadd.f32 %v1142, %v1143
  %v1145 = vsel %vm868, %v1075, 0.0
  %v1146 = vadd.f32 %v1144, %v1145
  %v1147 = vsel %vm868, %v1076, 0.0
  %v1148 = vadd.f32 %v1146, %v1147
  %v1149 = vsel %vm868, %v1077, 0.0
  %v1150 = vadd.f32 %v1148, %v1149
  %v1151 = vsel %vm868, %v1078, 0.0
  %v1152 = vadd.f32 %v1150, %v1151
  %v1153 = vsel %vm868, %v1079, 0.0
  %v1154 = vadd.f32 %v1152, %v1153
  %v1155 = vsel %vm868, %v1080, 0.0
  %v1156 = vadd.f32 %v1154, %v1155
  %v1157 = vsel %vm868, %v1081, 0.0
  %v1158 = vadd.f32 %v1156, %v1157
  %v1159 = vsel %vm868, %v1082, 0.0
  %v1160 = vadd.f32 %v1158, %v1159
  %v1161 = vsel %vm868, %v1083, 0.0
  %v1162 = vadd.f32 %v1160, %v1161
  %v1163 = vsel %vm868, %v1084, 0.0
  %v1164 = vadd.f32 %v1162, %v1163
  %v1165 = vsel %vm868, %v1085, 0.0
  %v1166 = vadd.f32 %v1164, %v1165
  %v1167 = vsel %vm868, %v1086, 0.0
  %v1168 = vadd.f32 %v1166, %v1167
  %v1169 = vsel %vm868, %v1087, 0.0
  %v1170 = vadd.f32 %v1168, %v1169
  %v1171 = vsel %vm868, %v1088, 0.0
  %v1172 = vadd.f32 %v1170, %v1171
  %v1173 = vsel %vm868, %v1089, 0.0
  %v1174 = vadd.f32 %v1172, %v1173
  %v1175 = vsel %vm868, %v1090, 0.0
  %v1176 = vadd.f32 %v1174, %v1175
  %v1177 = vsel %vm868, %v1091, 0.0
  %v1178 = vadd.f32 %v1176, %v1177
  %v1179 = vsel %vm868, %v1092, 0.0
  %v1180 = vadd.f32 %v1178, %v1179
  %v1181 = vsel %vm868, %v1093, 0.0
  %v1182 = vadd.f32 %v1180, %v1181
  %v1183 = vsel %vm868, %v1094, 0.0
  %v1184 = vadd.f32 %v1182, %v1183
  %v1185 = vsel %vm868, %v1095, 0.0
  %v1186 = vadd.f32 %v1184, %v1185
  %v1187 = vsel %vm868, %v1096, 0.0
  %v1188 = vadd.f32 %v1186, %v1187
  %v1189 = vsel %vm868, %v1097, 0.0
  %v1190 = vadd.f32 %v1188, %v1189
  %v1191 = vsel %vm868, %v1098, 0.0
  %v1192 = vadd.f32 %v1190, %v1191
  %v1193 = vsel %vm868, %v1099, 0.0
  %v1194 = vadd.f32 %v1192, %v1193
  %v1195 = vsel %vm868, %v1100, 0.0
  %v1196 = vadd.f32 %v1194, %v1195
  %v1197 = vsel %vm868, %v1101, 0.0
  %v1198 = vadd.f32 %v1196, %v1197
  %v1199 = vsel %vm868, %v1102, 0.0
  %v1200 = vadd.f32 %v1198, %v1199
  %v1201 = vsel %vm868, %v1103, 0.0
  %v1202 = vadd.f32 %v1200, %v1201
  %v1203 = vsel %vm868, %v1104, 0.0
  %v1204 = vadd.f32 %v1202, %v1203
  %v1205 = vsel %vm868, %v1105, 0.0
  %v1206 = vadd.f32 %v1204, %v1205
  %v1207 = vsel %vm868, %v1106, 0.0
  %v1208 = vadd.f32 %v1206, %v1207
  %v1209 = vsel %vm868, %v1107, 0.0
  %v1210 = vadd.f32 %v1208, %v1209
  %v1211 = vsel %vm868, %v1108, 0.0
  %v1212 = vadd.f32 %v1210, %v1211
  %v1213 = vsel %vm868, %v1109, 0.0
  %v1214 = vadd.f32 %v1212, %v1213
  %v1215 = vsel %vm868, %v1110, 0.0
  %v1216 = vadd.f32 %v1214, %v1215
  %v1217 = vsel %vm868, %v1111, 0.0
  %v1218 = vadd.f32 %v1216, %v1217
  %v1219 = vsel %vm868, %v1112, 0.0
  %v1220 = vadd.f32 %v1218, %v1219
  %v1221 = vsel %vm868, %v1113, 0.0
  %v1222 = vadd.f32 %v1220, %v1221
  %v1223 = vsel %vm868, %v1114, 0.0
  %v1224 = vadd.f32 %v1222, %v1223
  %v1225 = vsel %vm868, %v1115, 0.0
  %v1226 = vadd.f32 %v1224, %v1225
  %v1227 = vsel %vm868, %v1116, 0.0
  %v1228 = vadd.f32 %v1226, %v1227
  %v1229 = vsel %vm868, %v1117, 0.0
  %v1230 = vadd.f32 %v1228, %v1229
  %v1231 = vsel %vm868, %v1118, 0.0
  %v1232 = vadd.f32 %v1230, %v1231
  %v1233 = vsel %vm868, %v1119, 0.0
  %v1234 = vadd.f32 %v1232, %v1233
  %v1235 = vsel %vm868, %v1120, 0.0
  %v1236 = vadd.f32 %v1234, %v1235
  %v1237 = vsel %vm868, %v1121, 0.0
  %v1238 = vadd.f32 %v1236, %v1237
  %v1239 = vsel %vm868, %v1122, 0.0
  %v1240 = vadd.f32 %v1238, %v1239
  %v1241 = vsel %vm868, %v1123, 0.0
  %v1242 = vadd.f32 %v1240, %v1241
  %v1243 = vsel %vm868, %v1124, 0.0
  %v1244 = vadd.f32 %v1242, %v1243
  %v1245 = vsel %vm868, %v1125, 0.0
  %v1246 = vadd.f32 %v1244, %v1245
  %v1247 = vsel %vm868, %v1126, 0.0
  %v1248 = vadd.f32 %v1246, %v1247
  %v1249 = vsel %vm868, %v1127, 0.0
  %v1250 = vadd.f32 %v1248, %v1249
  %v1251 = vsel %vm868, %v1128, 0.0
  %v1252 = vadd.f32 %v1250, %v1251
  %v1253 = vsel %vm868, %v1129, 0.0
  %v1254 = vadd.f32 %v1252, %v1253
  %v1255 = vsel %vm868, %v1130, 0.0
  %v1256 = vadd.f32 %v1254, %v1255
  %v1257 = vsel %vm868, %v1131, 0.0
  %v1258 = vadd.f32 %v1256, %v1257
  %v1259 = vrot.slane %v1258, 4
  %v1260 = vadd.f32 %v1258, %v1259
  %v1261 = vrot.slane %v1260, 2
  %v1262 = vadd.f32 %v1260, %v1261
  %v1263 = vrot.slane %v1262, 1
  %v1264 = vadd.f32 %v1262, %v1263
  %1265 = vst.msk [vmem:[%s5 + $0x1] sm:$0x1] %vm1066, %v1264
  // Predicated region
  $region18: #{bottleneck_forward.7} parent=0 // pred_check
    _
  $region19: #{bottleneck_forward.7} parent=0 // pred_check_branch
    %1267 = sbr.rel (0) target = $region21
  $region20: #{bottleneck_forward.7} parent=0 // pred_region
    _
  $region21: #{bottleneck_forward.7} parent=0 // pred_fallthru
    _
  // Predicated region
  $region22: #{bottleneck_forward.7} parent=0 // pred_check
    _
  $region23: #{bottleneck_forward.7} parent=0 // pred_check_branch
    %1269 = sbr.rel (0) target = $region25
  $region24: #{bottleneck_forward.7} parent=0 // pred_region
    _
  $region25: #{bottleneck_forward.7} parent=0 // pred_fallthru
    _
  // Predicated region
  $region26: #{bottleneck_forward.7} parent=0 // pred_check
    _
  $region27: #{bottleneck_forward.7} parent=0 // pred_check_branch
    %1271 = sbr.rel (0) target = $region29
  $region28: #{bottleneck_forward.7} parent=0 // pred_region
    _
  $region29: #{bottleneck_forward.7} parent=0 // pred_fallthru
    _
  // Predicated region
  $region30: #{bottleneck_forward.7} parent=0 // pred_check
    _
  $region31: #{bottleneck_forward.7} parent=0 // pred_check_branch
    %1273 = sbr.rel (0) target = $region33
  $region32: #{bottleneck_forward.7} parent=0 // pred_region
    _
  $region33: #{bottleneck_forward.7} parent=0 // pred_fallthru
    _

// kernel: bottleneck_forward.6
$region0: #{bottleneck_forward.6}
  #allocation0 [shape = 'u32[]', space=smem, size = 0x4, offset = 0x4, fixed_abs, tag = 'smem constant byte address 0x4 - core index']
  #allocation1 [shape = 'u32[144,128]{1,0:T(1,128)}', space=vmem, size = 0x12000, scoped, tag = 'internal scratch']
  #allocation2 [shape = 'f32[18,18,8]{2,1,0:T(8,128)}', space=vmem, size = 0x36000, scoped, tag = 'scratch operand']
  #allocation3 [shape = 'f32[256,8]{1,0:T(8,128)}', space=vmem, size = 0x20000, scoped, tag = 'scratch operand']
  %s0 = inlined_call_operand.vmem [shape: f32[2,16,16,8], index: 0, kind: input, shape index: {}]
  %s1 = inlined_call_operand.vmem [shape: f32[3,24,8], index: 1, kind: input, shape index: {}]
  %s2 = inlined_call_operand.vmem [shape: f32[1,8], index: 2, kind: input, shape index: {}]
  %s3 = inlined_call_operand.vmem [shape: f32[1,8], index: 3, kind: input, shape index: {}]
  %s4 = inlined_call_operand.vmem [shape: f32[2,16,16,8], index: 4, kind: output, shape index: {0}]
  %s5 = inlined_call_operand.vmem [shape: f32[2,2,8], index: 5, kind: output, shape index: {1}]
  %6 = xla_tuple %s4, %s5
  %s7 = sld [smem:[#allocation0]]
  $region57: #{bottleneck_forward.6} parent=0
    _
  %s9 = ssub.s32 1, %s7
  %s10 = scalar_select 0, %s9, %s7
  loop: start=0, step=1, limit=4
  $region2: #{bottleneck_forward.6} parent=0 // loop_pre_header
    _
  $region3: #{bottleneck_forward.6} parent=0 // loop_header
    %s12 = sphi 0, %s16
    %p13 = scmp.ge.s32.totalorder %s12, 4
    %s22 = sphi 0, %s24
    %s25 = sphi 0, %s22
    %s26 = sphi 0, %s25
    %s42 = sphi 0, %s26
    %s46 = sphi 0, %s46
    %s48 = sphi 0, %s46
    %s49 = sphi 0, %s48
    %s63 = sphi 0, %s49
    %s67 = sphi 0, %s67
    %s69 = sphi 0, %s67
    %s70 = sphi 0, %s69
    %s84 = sphi 0, %s70
    %s88 = sphi 0, %s88
    %s90 = sphi 0, %s88
    %s91 = sphi 0, %s90
    %s105 = sphi 0, %s91
    %s111 = sphi 0, %s113
    %s114 = sphi 0, %s111
    %s115 = sphi 0, %s114
    %s131 = sphi 0, %s115
    %s137 = sphi 0, %s139
    %s140 = sphi 0, %s137
    %s141 = sphi 0, %s140
    %s157 = sphi 0, %s141
  $region4: #{bottleneck_forward.6} parent=0 // loop_header_branch
    %15 = sbr.rel (%p13) target = $region8
  $region5: #{bottleneck_forward.6} parent=0 // loop_body
    %s17 = ssub.s32 %s12, 1
    %s18 = ssub.s32 %s12, 2
    %s19 = sadd.s32 %s12, 1
    %s20 = ssub.s32 %s12, %s19
    %p21 = scmp.eq.s32.totalorder %s20, 0
    %s23 = sadd.s32 %s22, 1
    %s24 = scalar_select %p21, %s22, %s23
    %p27 = pneg %p21
    %p28 = scmp.eq.s32.totalorder %s12, 1
    %p29 = por %p27, %p28
    %p30 = scmp.ne.s32.totalorder %s22, %s25
    %p31 = scmp.eq.s32.totalorder %s12, 0
    %p32 = por %p30, %p31
    %p33 = scmp.ne.s32.totalorder %s22, %s25
    %p34 = scmp.eq.s32.totalorder %s17, 1
    %p35 = por %p33, %p34
    %p36 = scmp.ne.s32.totalorder %s25, %s26
    %p37 = scmp.eq.s32.totalorder %s17, 0
    %p38 = por %p36, %p37
    %p39 = scmp.ne.s32.totalorder %s25, %s26
    %p40 = scmp.eq.s32.totalorder %s18, 1
    %p41 = por %p39, %p40
    %p43 = scmp.ne.s32.totalorder %s26, %s42
    %p44 = scmp.eq.s32.totalorder %s18, 0
    %p45 = por %p43, %p44
    %s47 = sadd.s32 %s46, 1
    %p50 = scmp.eq.s32.totalorder %s12, 1
    %p51 = scmp.ne.s32.totalorder %s46, %s48
    %p52 = scmp.eq.s32.totalorder %s12, 0
    %p53 = por %p51, %p52
    %p54 = scmp.ne.s32.totalorder %s46, %s48
    %p55 = scmp.eq.s32.totalorder %s17, 1
    %p56 = por %p54, %p55
    %p57 = scmp.ne.s32.totalorder %s48, %s49
    %p58 = scmp.eq.s32.totalorder %s17, 0
    %p59 = por %p57, %p58
    %p60 = scmp.ne.s32.totalorder %s48, %s49
    %p61 = scmp.eq.s32.totalorder %s18, 1
    %p62 = por %p60, %p61
    %p64 = scmp.ne.s32.totalorder %s49, %s63
    %p65 = scmp.eq.s32.totalorder %s18, 0
    %p66 = por %p64, %p65
    %s68 = sadd.s32 %s67, 1
    %p71 = scmp.eq.s32.totalorder %s12, 1
    %p72 = scmp.ne.s32.totalorder %s67, %s69
    %p73 = scmp.eq.s32.totalorder %s12, 0
    %p74 = por %p72, %p73
    %p75 = scmp.ne.s32.totalorder %s67, %s69
    %p76 = scmp.eq.s32.totalorder %s17, 1
    %p77 = por %p75, %p76
    %p78 = scmp.ne.s32.totalorder %s69, %s70
    %p79 = scmp.eq.s32.totalorder %s17, 0
    %p80 = por %p78, %p79
    %p81 = scmp.ne.s32.totalorder %s69, %s70
    %p82 = scmp.eq.s32.totalorder %s18, 1
    %p83 = por %p81, %p82
    %p85 = scmp.ne.s32.totalorder %s70, %s84
    %p86 = scmp.eq.s32.totalorder %s18, 0
    %p87 = por %p85, %p86
    %s89 = sadd.s32 %s88, 1
    %p92 = scmp.eq.s32.totalorder %s12, 1
    %p93 = scmp.ne.s32.totalorder %s88, %s90
    %p94 = scmp.eq.s32.totalorder %s12, 0
    %p95 = por %p93, %p94
    %p96 = scmp.ne.s32.totalorder %s88, %s90
    %p97 = scmp.eq.s32.totalorder %s17, 1
    %p98 = por %p96, %p97
    %p99 = scmp.ne.s32.totalorder %s90, %s91
    %p100 = scmp.eq.s32.totalorder %s17, 0
    %p101 = por %p99, %p100
    %p102 = scmp.ne.s32.totalorder %s90, %s91
    %p103 = scmp.eq.s32.totalorder %s18, 1
    %p104 = por %p102, %p103
    %p106 = scmp.ne.s32.totalorder %s91, %s105
    %p107 = scmp.eq.s32.totalorder %s18, 0
    %p108 = por %p106, %p107
    %s109 = ssub.s32 %s12, %s19
    %p110 = scmp.eq.s32.totalorder %s109, 0
    %s112 = sadd.s32 %s111, 1
    %s113 = scalar_select %p110, %s111, %s112
    %p116 = pneg %p110
    %p117 = scmp.eq.s32.totalorder %s12, 1
    %p118 = por %p116, %p117
    %p119 = scmp.ne.s32.totalorder %s111, %s114
    %p120 = scmp.eq.s32.totalorder %s12, 0
    %p121 = por %p119, %p120
    %p122 = scmp.ne.s32.totalorder %s111, %s114
    %p123 = scmp.eq.s32.totalorder %s17, 1
    %p124 = por %p122, %p123
    %p125 = scmp.ne.s32.totalorder %s114, %s115
    %p126 = scmp.eq.s32.totalorder %s17, 0
    %p127 = por %p125, %p126
    %p128 = scmp.ne.s32.totalorder %s114, %s115
    %p129 = scmp.eq.s32.totalorder %s18, 1
    %p130 = por %p128, %p129
    %p132 = scmp.ne.s32.totalorder %s115, %s131
    %p133 = scmp.eq.s32.totalorder %s18, 0
    %p134 = por %p132, %p133
    %s135 = ssub.s32 %s12, %s19
    %p136 = scmp.eq.s32.totalorder %s135, 0
    %s138 = sadd.s32 %s137, 1
    %s139 = scalar_select %p136, %s137, %s138
    %p142 = pneg %p136
    %p143 = scmp.eq.s32.totalorder %s12, 1
    %p144 = por %p142, %p143
    %p145 = scmp.ne.s32.totalorder %s137, %s140
    %p146 = scmp.eq.s32.totalorder %s12, 0
    %p147 = por %p145, %p146
    %p148 = scmp.ne.s32.totalorder %s137, %s140
    %p149 = scmp.eq.s32.totalorder %s17, 1
    %p150 = por %p148, %p149
    %p151 = scmp.ne.s32.totalorder %s140, %s141
    %p152 = scmp.eq.s32.totalorder %s17, 0
    %p153 = por %p151, %p152
    %p154 = scmp.ne.s32.totalorder %s140, %s141
    %p155 = scmp.eq.s32.totalorder %s18, 1
    %p156 = por %p154, %p155
    %p158 = scmp.ne.s32.totalorder %s141, %s157
    %p159 = scmp.eq.s32.totalorder %s18, 0
    %p160 = por %p158, %p159
    %p161 = scmp.le.s32.totalorder 1, %s12
    %p162 = scmp.lt.s32.totalorder %s12, 3
    %p163 = pnand %p161, %p162
    %p164 = pneg %p163
    // Predicated region
    $region9: #{bottleneck_forward.6} parent=5 // pred_check
      _
    $region10: #{bottleneck_forward.6} parent=5 // pred_check_branch
      %166 = sbr.rel (%p163) target = $region12
    $region11: #{bottleneck_forward.6} parent=5 // pred_region
      %s167 = ssub.s32 %s12, 1
      // Predicated region
      $region13: #{bottleneck_forward.6} parent=11 // pred_check
        %p168 = pneg %p59
      $region14: #{bottleneck_forward.6} parent=11 // pred_check_branch
        %170 = sbr.rel (%p168) target = $region16
      $region15: #{bottleneck_forward.6} parent=11 // pred_region
        _
      $region16: #{bottleneck_forward.6} parent=11 // pred_fallthru
        _
      // Predicated region
      $region17: #{bottleneck_forward.6} parent=11 // pred_check
        %p171 = pneg %p80
      $region18: #{bottleneck_forward.6} parent=11 // pred_check_branch
        %173 = sbr.rel (%p171) target = $region20
      $region19: #{bottleneck_forward.6} parent=11 // pred_region
        _
      $region20: #{bottleneck_forward.6} parent=11 // pred_fallthru
        _
      // Predicated region
      $region21: #{bottleneck_forward.6} parent=11 // pred_check
        %p174 = pneg %p101
      $region22: #{bottleneck_forward.6} parent=11 // pred_check_branch
        %176 = sbr.rel (%p174) target = $region24
      $region23: #{bottleneck_forward.6} parent=11 // pred_region
        _
      $region24: #{bottleneck_forward.6} parent=11 // pred_fallthru
        _
    $region12: #{bottleneck_forward.6} parent=5 // pred_fallthru
      _
    %p177 = scmp.lt.s32.totalorder %s12, 2
    // Predicated region
    $region25: #{bottleneck_forward.6} parent=5 // pred_check
      %p178 = pneg %p177
    $region26: #{bottleneck_forward.6} parent=5 // pred_check_branch
      %180 = sbr.rel (%p178) target = $region28
    $region27: #{bottleneck_forward.6} parent=5 // pred_region
      // Predicated region
      $region29: #{bottleneck_forward.6} parent=27 // pred_check
        %p181 = pneg %p32
      $region30: #{bottleneck_forward.6} parent=27 // pred_check_branch
        %183 = sbr.rel (%p181) target = $region32
      $region31: #{bottleneck_forward.6} parent=27 // pred_region
        %p184 = scmp.lt.s32.totalorder %s12, 1
        %s185 = scalar_select %p184, %s12, 1
        %s186 = smul.addr %s185, 32
        %s187 = smul.addr %s186, 8
        %s188 = scalar_lea.vmem %s0, %s187
      $region32: #{bottleneck_forward.6} parent=27 // pred_fallthru
        _
    $region28: #{bottleneck_forward.6} parent=5 // pred_fallthru
      _
    %p189 = scmp.le.s32.totalorder 1, %s12
    %p190 = scmp.lt.s32.totalorder %s12, 3
    %p191 = pnand %p189, %p190
    %p192 = pneg %p191
    // Predicated region
    $region33: #{bottleneck_forward.6} parent=5 // pred_check
      _
    $region34: #{bottleneck_forward.6} parent=5 // pred_check_branch
      %194 = sbr.rel (%p191) target = $region36
    $region35: #{bottleneck_forward.6} parent=5 // pred_region
      %s195 = ssub.s32 %s12, 1
      %p196 = scmp.lt.s32.totalorder %s17, 1
      %s197 = scalar_select %p196, %s17, 1
      %s198 = smul.addr %s197, 32
      %s199 = smul.addr %s198, 8
      %s200 = scalar_lea.vmem %s0, %s199
      %p201 = pneg %p38
      %p202 = pneg %p35
      %p203 = pneg %p59
      %p204 = pneg %p56
      %p205 = pneg %p80
      %p206 = pneg %p77
      %p207 = pneg %p101
      %p208 = pneg %p98
      %p209 = pneg %p127
      %p210 = pneg %p124
      %p211 = scmp.lt.s32.totalorder %s17, 1
      %s212 = scalar_select %p211, %s17, 1
      %s213 = smul.addr %s212, 32
      %s214 = smul.addr %s213, 8
      %s215 = scalar_lea.vmem %s4, %s214
      %p216 = pneg %p153
      %p217 = pneg %p150
      %p218 = scmp.lt.s32.totalorder %s17, 1
      %s219 = scalar_select %p218, %s17, 1
      %s220 = smul.addr %s219, 2
      %s221 = scalar_lea.vmem %s5, %s220
      %p222 = scmp.lt.s32.totalorder %s17, 1
      %s223 = scalar_select %p222, %s17, 1
      %s224 = smul.addr %s223, 32
      %s225 = smul.addr %s224, 8
      %s226 = scalar_lea.vmem %s0, %s225
      %p227 = scmp.lt.s32.totalorder %s17, 1
      %s228 = scalar_select %p227, %s17, 1
      %s229 = smul.addr %s228, 32
      %s230 = smul.addr %s229, 8
      %s231 = scalar_lea.vmem %s4, %s230
      %p232 = scmp.lt.s32.totalorder %s17, 1
      %s233 = scalar_select %p232, %s17, 1
      %s234 = smul.addr %s233, 2
      %s235 = scalar_lea.vmem %s5, %s234
      %vm236 = vcmask 64512
      %237 = vst.msk [vmem:[#allocation2] sm:$0xff] %vm236, 0.0
      %238 = vst.msk [vmem:[#allocation2 + $0x8] sm:$0xff] %vm236, 0.0
      %vm239 = vcmask 58368
      %240 = vst.msk [vmem:[#allocation2 + $0x10] sm:$0x3] %vm239, 0.0
      %241 = vst.msk [vmem:[#allocation2 + $0x18] sm:$0xff] %vm236, 0.0
      %242 = vst.msk [vmem:[#allocation2 + $0x20] sm:$0xff] %vm236, 0.0
      %243 = vst.msk [vmem:[#allocation2 + $0x28] sm:$0x3] %vm239, 0.0
      %244 = vst.msk [vmem:[#allocation2 + $0x30] sm:$0xff] %vm236, 0.0
      %245 = vst.msk [vmem:[#allocation2 + $0x38] sm:$0xff] %vm236, 0.0
      %246 = vst.msk [vmem:[#allocation2 + $0x40] sm:$0x3] %vm239, 0.0
      %247 = vst.msk [vmem:[#allocation2 + $0x48] sm:$0xff] %vm236, 0.0
      %248 = vst.msk [vmem:[#allocation2 + $0x50] sm:$0xff] %vm236, 0.0
      %249 = vst.msk [vmem:[#allocation2 + $0x58] sm:$0x3] %vm239, 0.0
      %250 = vst.msk [vmem:[#allocation2 + $0x60] sm:$0xff] %vm236, 0.0
      %251 = vst.msk [vmem:[#allocation2 + $0x68] sm:$0xff] %vm236, 0.0
      %252 = vst.msk [vmem:[#allocation2 + $0x70] sm:$0x3] %vm239, 0.0
      %253 = vst.msk [vmem:[#allocation2 + $0x78] sm:$0xff] %vm236, 0.0
      %254 = vst.msk [vmem:[#allocation2 + $0x80] sm:$0xff] %vm236, 0.0
      %255 = vst.msk [vmem:[#allocation2 + $0x88] sm:$0x3] %vm239, 0.0
      %256 = vst.msk [vmem:[#allocation2 + $0x90] sm:$0xff] %vm236, 0.0
      %257 = vst.msk [vmem:[#allocation2 + $0x98] sm:$0xff] %vm236, 0.0
      %258 = vst.msk [vmem:[#allocation2 + $0xa0] sm:$0x3] %vm239, 0.0
      %259 = vst.msk [vmem:[#allocation2 + $0xa8] sm:$0xff] %vm236, 0.0
      %260 = vst.msk [vmem:[#allocation2 + $0xb0] sm:$0xff] %vm236, 0.0
      %261 = vst.msk [vmem:[#allocation2 + $0xb8] sm:$0x3] %vm239, 0.0
      %262 = vst.msk [vmem:[#allocation2 + $0xc0] sm:$0xff] %vm236, 0.0
      %263 = vst.msk [vmem:[#allocation2 + $0xc8] sm:$0xff] %vm236, 0.0
      %264 = vst.msk [vmem:[#allocation2 + $0xd0] sm:$0x3] %vm239, 0.0
      %265 = vst.msk [vmem:[#allocation2 + $0xd8] sm:$0xff] %vm236, 0.0
      %266 = vst.msk [vmem:[#allocation2 + $0xe0] sm:$0xff] %vm236, 0.0
      %267 = vst.msk [vmem:[#allocation2 + $0xe8] sm:$0x3] %vm239, 0.0
      %268 = vst.msk [vmem:[#allocation2 + $0xf0] sm:$0xff] %vm236, 0.0
      %269 = vst.msk [vmem:[#allocation2 + $0xf8] sm:$0xff] %vm236, 0.0
      %270 = vst.msk [vmem:[#allocation2 + $0x100] sm:$0x3] %vm239, 0.0
      %271 = vst.msk [vmem:[#allocation2 + $0x108] sm:$0xff] %vm236, 0.0
      %272 = vst.msk [vmem:[#allocation2 + $0x110] sm:$0xff] %vm236, 0.0
      %273 = vst.msk [vmem:[#allocation2 + $0x118] sm:$0x3] %vm239, 0.0
      %274 = vst.msk [vmem:[#allocation2 + $0x120] sm:$0xff] %vm236, 0.0
      %275 = vst.msk [vmem:[#allocation2 + $0x128] sm:$0xff] %vm236, 0.0
      %276 = vst.msk [vmem:[#allocation2 + $0x130] sm:$0x3] %vm239, 0.0
      %277 = vst.msk [vmem:[#allocation2 + $0x138] sm:$0xff] %vm236, 0.0
      %278 = vst.msk [vmem:[#allocation2 + $0x140] sm:$0xff] %vm236, 0.0
      %279 = vst.msk [vmem:[#allocation2 + $0x148] sm:$0x3] %vm239, 0.0
      %280 = vst.msk [vmem:[#allocation2 + $0x150] sm:$0xff] %vm236, 0.0
      %281 = vst.msk [vmem:[#allocation2 + $0x158] sm:$0xff] %vm236, 0.0
      %282 = vst.msk [vmem:[#allocation2 + $0x160] sm:$0x3] %vm239, 0.0
      %283 = vst.msk [vmem:[#allocation2 + $0x168] sm:$0xff] %vm236, 0.0
      %284 = vst.msk [vmem:[#allocation2 + $0x170] sm:$0xff] %vm236, 0.0
      %285 = vst.msk [vmem:[#allocation2 + $0x178] sm:$0x3] %vm239, 0.0
      %286 = vst.msk [vmem:[#allocation2 + $0x180] sm:$0xff] %vm236, 0.0
      %287 = vst.msk [vmem:[#allocation2 + $0x188] sm:$0xff] %vm236, 0.0
      %288 = vst.msk [vmem:[#allocation2 + $0x190] sm:$0x3] %vm239, 0.0
      %289 = vst.msk [vmem:[#allocation2 + $0x198] sm:$0xff] %vm236, 0.0
      %290 = vst.msk [vmem:[#allocation2 + $0x1a0] sm:$0xff] %vm236, 0.0
      %291 = vst.msk [vmem:[#allocation2 + $0x1a8] sm:$0x3] %vm239, 0.0
      %v292 = vld [vmem:[%s226] sm:$0xff]
      %v293 = vld [vmem:[%s226 + $0x8] sm:$0xff]
      %v294 = vld [vmem:[%s226 + $0x10] sm:$0xff]
      %v295 = vld [vmem:[%s226 + $0x18] sm:$0xff]
      %v296 = vld [vmem:[%s226 + $0x20] sm:$0xff]
      %v297 = vld [vmem:[%s226 + $0x28] sm:$0xff]
      %v298 = vld [vmem:[%s226 + $0x30] sm:$0xff]
      %v299 = vld [vmem:[%s226 + $0x38] sm:$0xff]
      %v300 = vld [vmem:[%s226 + $0x40] sm:$0xff]
      %v301 = vld [vmem:[%s226 + $0x48] sm:$0xff]
      %v302 = vld [vmem:[%s226 + $0x50] sm:$0xff]
      %v303 = vld [vmem:[%s226 + $0x58] sm:$0xff]
      %v304 = vld [vmem:[%s226 + $0x60] sm:$0xff]
      %v305 = vld [vmem:[%s226 + $0x68] sm:$0xff]
      %v306 = vld [vmem:[%s226 + $0x70] sm:$0xff]
      %v307 = vld [vmem:[%s226 + $0x78] sm:$0xff]
      %v308 = vld [vmem:[%s226 + $0x80] sm:$0xff]
      %v309 = vld [vmem:[%s226 + $0x88] sm:$0xff]
      %v310 = vld [vmem:[%s226 + $0x90] sm:$0xff]
      %v311 = vld [vmem:[%s226 + $0x98] sm:$0xff]
      %v312 = vld [vmem:[%s226 + $0xa0] sm:$0xff]
      %v313 = vld [vmem:[%s226 + $0xa8] sm:$0xff]
      %v314 = vld [vmem:[%s226 + $0xb0] sm:$0xff]
      %v315 = vld [vmem:[%s226 + $0xb8] sm:$0xff]
      %v316 = vld [vmem:[%s226 + $0xc0] sm:$0xff]
      %v317 = vld [vmem:[%s226 + $0xc8] sm:$0xff]
      %v318 = vld [vmem:[%s226 + $0xd0] sm:$0xff]
      %v319 = vld [vmem:[%s226 + $0xd8] sm:$0xff]
      %v320 = vld [vmem:[%s226 + $0xe0] sm:$0xff]
      %v321 = vld [vmem:[%s226 + $0xe8] sm:$0xff]
      %v322 = vld [vmem:[%s226 + $0xf0] sm:$0xff]
      %v323 = vld [vmem:[%s226 + $0xf8] sm:$0xff]
      %v324 = vld [vmem:[%s2] sm:$0x1]
      %v326 = vlaneseq
      %v327 = vshrl.u32 %v326, 7
      %v328 = vsub.s32 0, %v327
      %v329 = vrot.slane %v324, %v328
      %v331 = vmul.f32 %v292, %v329
      %v332 = vmul.f32 %v293, %v329
      %v333 = vmul.f32 %v294, %v329
      %v334 = vmul.f32 %v295, %v329
      %v335 = vmul.f32 %v296, %v329
      %v336 = vmul.f32 %v297, %v329
      %v337 = vmul.f32 %v298, %v329
      %v338 = vmul.f32 %v299, %v329
      %v339 = vmul.f32 %v300, %v329
      %v340 = vmul.f32 %v301, %v329
      %v341 = vmul.f32 %v302, %v329
      %v342 = vmul.f32 %v303, %v329
      %v343 = vmul.f32 %v304, %v329
      %v344 = vmul.f32 %v305, %v329
      %v345 = vmul.f32 %v306, %v329
      %v346 = vmul.f32 %v307, %v329
      %v347 = vmul.f32 %v308, %v329
      %v348 = vmul.f32 %v309, %v329
      %v349 = vmul.f32 %v310, %v329
      %v350 = vmul.f32 %v311, %v329
      %v351 = vmul.f32 %v312, %v329
      %v352 = vmul.f32 %v313, %v329
      %v353 = vmul.f32 %v314, %v329
      %v354 = vmul.f32 %v315, %v329
      %v355 = vmul.f32 %v316, %v329
      %v356 = vmul.f32 %v317, %v329
      %v357 = vmul.f32 %v318, %v329
      %v358 = vmul.f32 %v319, %v329
      %v359 = vmul.f32 %v320, %v329
      %v360 = vmul.f32 %v321, %v329
      %v361 = vmul.f32 %v322, %v329
      %v362 = vmul.f32 %v323, %v329
      %v363 = vld [vmem:[%s3] sm:$0x1]
      %v365 = vlaneseq
      %v366 = vshrl.u32 %v365, 7
      %v367 = vsub.s32 0, %v366
      %v368 = vrot.slane %v363, %v367
      %v370 = vadd.f32 %v331, %v368
      %v371 = vadd.f32 %v332, %v368
      %v372 = vadd.f32 %v333, %v368
      %v373 = vadd.f32 %v334, %v368
      %v374 = vadd.f32 %v335, %v368
      %v375 = vadd.f32 %v336, %v368
      %v376 = vadd.f32 %v337, %v368
      %v377 = vadd.f32 %v338, %v368
      %v378 = vadd.f32 %v339, %v368
      %v379 = vadd.f32 %v340, %v368
      %v380 = vadd.f32 %v341, %v368
      %v381 = vadd.f32 %v342, %v368
      %v382 = vadd.f32 %v343, %v368
      %v383 = vadd.f32 %v344, %v368
      %v384 = vadd.f32 %v345, %v368
      %v385 = vadd.f32 %v346, %v368
      %v386 = vadd.f32 %v347, %v368
      %v387 = vadd.f32 %v348, %v368
      %v388 = vadd.f32 %v349, %v368
      %v389 = vadd.f32 %v350, %v368
      %v390 = vadd.f32 %v351, %v368
      %v391 = vadd.f32 %v352, %v368
      %v392 = vadd.f32 %v353, %v368
      %v393 = vadd.f32 %v354, %v368
      %v394 = vadd.f32 %v355, %v368
      %v395 = vadd.f32 %v356, %v368
      %v396 = vadd.f32 %v357, %v368
      %v397 = vadd.f32 %v358, %v368
      %v398 = vadd.f32 %v359, %v368
      %v399 = vadd.f32 %v360, %v368
      %v400 = vadd.f32 %v361, %v368
      %v401 = vadd.f32 %v362, %v368
      %v402 = vmax.f32 %v370, 0.0
      %v403 = vmax.f32 %v371, 0.0
      %v404 = vmax.f32 %v372, 0.0
      %v405 = vmax.f32 %v373, 0.0
      %v406 = vmax.f32 %v374, 0.0
      %v407 = vmax.f32 %v375, 0.0
      %v408 = vmax.f32 %v376, 0.0
      %v409 = vmax.f32 %v377, 0.0
      %v410 = vmax.f32 %v378, 0.0
      %v411 = vmax.f32 %v379, 0.0
      %v412 = vmax.f32 %v380, 0.0
      %v413 = vmax.f32 %v381, 0.0
      %v414 = vmax.f32 %v382, 0.0
      %v415 = vmax.f32 %v383, 0.0
      %v416 = vmax.f32 %v384, 0.0
      %v417 = vmax.f32 %v385, 0.0
      %v418 = vmax.f32 %v386, 0.0
      %v419 = vmax.f32 %v387, 0.0
      %v420 = vmax.f32 %v388, 0.0
      %v421 = vmax.f32 %v389, 0.0
      %v422 = vmax.f32 %v390, 0.0
      %v423 = vmax.f32 %v391, 0.0
      %v424 = vmax.f32 %v392, 0.0
      %v425 = vmax.f32 %v393, 0.0
      %v426 = vmax.f32 %v394, 0.0
      %v427 = vmax.f32 %v395, 0.0
      %v428 = vmax.f32 %v396, 0.0
      %v429 = vmax.f32 %v397, 0.0
      %v430 = vmax.f32 %v398, 0.0
      %v431 = vmax.f32 %v399, 0.0
      %v432 = vmax.f32 %v400, 0.0
      %v433 = vmax.f32 %v401, 0.0
      %s434 = scalar_lea.vmem [#allocation2], 24
      %435 = vst.msk [vmem:[%s434 + $0x1] sm:$0xff] %vm236, %v402
      %436 = vst.msk [vmem:[%s434 + $0x9] sm:$0xff] %vm236, %v403
      %437 = vst.msk [vmem:[%s434 + $0x19] sm:$0xff] %vm236, %v404
      %438 = vst.msk [vmem:[%s434 + $0x21] sm:$0xff] %vm236, %v405
      %439 = vst.msk [vmem:[%s434 + $0x31] sm:$0xff] %vm236, %v406
      %440 = vst.msk [vmem:[%s434 + $0x39] sm:$0xff] %vm236, %v407
      %441 = vst.msk [vmem:[%s434 + $0x49] sm:$0xff] %vm236, %v408
      %442 = vst.msk [vmem:[%s434 + $0x51] sm:$0xff] %vm236, %v409
      %443 = vst.msk [vmem:[%s434 + $0x61] sm:$0xff] %vm236, %v410
      %444 = vst.msk [vmem:[%s434 + $0x69] sm:$0xff] %vm236, %v411
      %445 = vst.msk [vmem:[%s434 + $0x79] sm:$0xff] %vm236, %v412
      %446 = vst.msk [vmem:[%s434 + $0x81] sm:$0xff] %vm236, %v413
      %447 = vst.msk [vmem:[%s434 + $0x91] sm:$0xff] %vm236, %v414
      %448 = vst.msk [vmem:[%s434 + $0x99] sm:$0xff] %vm236, %v415
      %449 = vst.msk [vmem:[%s434 + $0xa9] sm:$0xff] %vm236, %v416
      %450 = vst.msk [vmem:[%s434 + $0xb1] sm:$0xff] %vm236, %v417
      %451 = vst.msk [vmem:[%s434 + $0xc1] sm:$0xff] %vm236, %v418
      %452 = vst.msk [vmem:[%s434 + $0xc9] sm:$0xff] %vm236, %v419
      %453 = vst.msk [vmem:[%s434 + $0xd9] sm:$0xff] %vm236, %v420
      %454 = vst.msk [vmem:[%s434 + $0xe1] sm:$0xff] %vm236, %v421
      %455 = vst.msk [vmem:[%s434 + $0xf1] sm:$0xff] %vm236, %v422
      %456 = vst.msk [vmem:[%s434 + $0xf9] sm:$0xff] %vm236, %v423
      %457 = vst.msk [vmem:[%s434 + $0x109] sm:$0xff] %vm236, %v424
      %458 = vst.msk [vmem:[%s434 + $0x111] sm:$0xff] %vm236, %v425
      %459 = vst.msk [vmem:[%s434 + $0x121] sm:$0xff] %vm236, %v426
      %460 = vst.msk [vmem:[%s434 + $0x129] sm:$0xff] %vm236, %v427
      %461 = vst.msk [vmem:[%s434 + $0x139] sm:$0xff] %vm236, %v428
      %462 = vst.msk [vmem:[%s434 + $0x141] sm:$0xff] %vm236, %v429
      %463 = vst.msk [vmem:[%s434 + $0x151] sm:$0xff] %vm236, %v430
      %464 = vst.msk [vmem:[%s434 + $0x159] sm:$0xff] %vm236, %v431
      %465 = vst.msk [vmem:[%s434 + $0x169] sm:$0xff] %vm236, %v432
      %466 = vst.msk [vmem:[%s434 + $0x171] sm:$0xff] %vm236, %v433
      %v467 = vld [vmem:[#allocation2] sm:$0xff]
      %v468 = vld [vmem:[#allocation2 + $0x8] sm:$0xff]
      %v469 = vld [vmem:[#allocation2 + $0x10] sm:$0x3]
      %v470 = vld [vmem:[#allocation2 + $0x18] sm:$0xff]
      %v471 = vld [vmem:[#allocation2 + $0x20] sm:$0xff]
      %v472 = vld [vmem:[#allocation2 + $0x28] sm:$0x3]
      %v473 = vld [vmem:[#allocation2 + $0x30] sm:$0xff]
      %v474 = vld [vmem:[#allocation2 + $0x38] sm:$0xff]
      %v475 = vld [vmem:[#allocation2 + $0x40] sm:$0x3]
      %v476 = vld [vmem:[#allocation2 + $0x48] sm:$0xff]
      %v477 = vld [vmem:[#allocation2 + $0x50] sm:$0xff]
      %v478 = vld [vmem:[#allocation2 + $0x58] sm:$0x3]
      %v479 = vld [vmem:[#allocation2 + $0x60] sm:$0xff]
      %v480 = vld [vmem:[#allocation2 + $0x68] sm:$0xff]
      %v481 = vld [vmem:[#allocation2 + $0x70] sm:$0x3]
      %v482 = vld [vmem:[#allocation2 + $0x78] sm:$0xff]
      %v483 = vld [vmem:[#allocation2 + $0x80] sm:$0xff]
      %v484 = vld [vmem:[#allocation2 + $0x88] sm:$0x3]
      %v485 = vld [vmem:[#allocation2 + $0x90] sm:$0xff]
      %v486 = vld [vmem:[#allocation2 + $0x98] sm:$0xff]
      %v487 = vld [vmem:[#allocation2 + $0xa0] sm:$0x3]
      %v488 = vld [vmem:[#allocation2 + $0xa8] sm:$0xff]
      %v489 = vld [vmem:[#allocation2 + $0xb0] sm:$0xff]
      %v490 = vld [vmem:[#allocation2 + $0xb8] sm:$0x3]
      %v491 = vld [vmem:[#allocation2 + $0xc0] sm:$0xff]
      %v492 = vld [vmem:[#allocation2 + $0xc8] sm:$0xff]
      %v493 = vld [vmem:[#allocation2 + $0xd0] sm:$0x3]
      %v494 = vld [vmem:[#allocation2 + $0xd8] sm:$0xff]
      %v495 = vld [vmem:[#allocation2 + $0xe0] sm:$0xff]
      %v496 = vld [vmem:[#allocation2 + $0xe8] sm:$0x3]
      %v497 = vld [vmem:[#allocation2 + $0xf0] sm:$0xff]
      %v498 = vld [vmem:[#allocation2 + $0xf8] sm:$0xff]
      %v499 = vld [vmem:[#allocation2 + $0x100] sm:$0x3]
      %v500 = vld [vmem:[#allocation2 + $0x108] sm:$0xff]
      %v501 = vld [vmem:[#allocation2 + $0x110] sm:$0xff]
      %v502 = vld [vmem:[#allocation2 + $0x118] sm:$0x3]
      %v503 = vld [vmem:[#allocation2 + $0x120] sm:$0xff]
      %v504 = vld [vmem:[#allocation2 + $0x128] sm:$0xff]
      %v505 = vld [vmem:[#allocation2 + $0x130] sm:$0x3]
      %v506 = vld [vmem:[#allocation2 + $0x138] sm:$0xff]
      %v507 = vld [vmem:[#allocation2 + $0x140] sm:$0xff]
      %v508 = vld [vmem:[#allocation2 + $0x148] sm:$0x3]
      %v509 = vld [vmem:[#allocation2 + $0x150] sm:$0xff]
      %v510 = vld [vmem:[#allocation2 + $0x158] sm:$0xff]
      %v511 = vld [vmem:[#allocation2 + $0x160] sm:$0x3]
      %v512 = vld [vmem:[#allocation2 + $0x168] sm:$0xff]
      %v513 = vld [vmem:[#allocation2 + $0x170] sm:$0xff]
      %v514 = vld [vmem:[#allocation2 + $0x178] sm:$0x3]
      %vm563 = vcmask 1046528
      %v564 = vrot.slane %v467, 1
      %v565 = vrot.slane %v468, 1
      %v566 = vsel %vm563, %v564, %v565
      %v567 = vrot.slane %v469, 1
      %v568 = vsel %vm563, %v565, %v567
      %v569 = vrot.slane %v470, 1
      %v570 = vrot.slane %v471, 1
      %v571 = vsel %vm563, %v569, %v570
      %v572 = vrot.slane %v472, 1
      %v573 = vsel %vm563, %v570, %v572
      %v574 = vrot.slane %v473, 1
      %v575 = vrot.slane %v474, 1
      %v576 = vsel %vm563, %v574, %v575
      %v577 = vrot.slane %v475, 1
      %v578 = vsel %vm563, %v575, %v577
      %v579 = vrot.slane %v476, 1
      %v580 = vrot.slane %v477, 1
      %v581 = vsel %vm563, %v579, %v580
      %v582 = vrot.slane %v478, 1
      %v583 = vsel %vm563, %v580, %v582
      %v584 = vrot.slane %v479, 1
      %v585 = vrot.slane %v480, 1
      %v586 = vsel %vm563, %v584, %v585
      %v587 = vrot.slane %v481, 1
      %v588 = vsel %vm563, %v585, %v587
      %v589 = vrot.slane %v482, 1
      %v590 = vrot.slane %v483, 1
      %v591 = vsel %vm563, %v589, %v590
      %v592 = vrot.slane %v484, 1
      %v593 = vsel %vm563, %v590, %v592
      %v594 = vrot.slane %v485, 1
      %v595 = vrot.slane %v486, 1
      %v596 = vsel %vm563, %v594, %v595
      %v597 = vrot.slane %v487, 1
      %v598 = vsel %vm563, %v595, %v597
      %v599 = vrot.slane %v488, 1
      %v600 = vrot.slane %v489, 1
      %v601 = vsel %vm563, %v599, %v600
      %v602 = vrot.slane %v490, 1
      %v603 = vsel %vm563, %v600, %v602
      %v604 = vrot.slane %v491, 1
      %v605 = vrot.slane %v492, 1
      %v606 = vsel %vm563, %v604, %v605
      %v607 = vrot.slane %v493, 1
      %v608 = vsel %vm563, %v605, %v607
      %v609 = vrot.slane %v494, 1
      %v610 = vrot.slane %v495, 1
      %v611 = vsel %vm563, %v609, %v610
      %v612 = vrot.slane %v496, 1
      %v613 = vsel %vm563, %v610, %v612
      %v614 = vrot.slane %v497, 1
      %v615 = vrot.slane %v498, 1
      %v616 = vsel %vm563, %v614, %v615
      %v617 = vrot.slane %v499, 1
      %v618 = vsel %vm563, %v615, %v617
      %v619 = vrot.slane %v500, 1
      %v620 = vrot.slane %v501, 1
      %v621 = vsel %vm563, %v619, %v620
      %v622 = vrot.slane %v502, 1
      %v623 = vsel %vm563, %v620, %v622
      %v624 = vrot.slane %v503, 1
      %v625 = vrot.slane %v504, 1
      %v626 = vsel %vm563, %v624, %v625
      %v627 = vrot.slane %v505, 1
      %v628 = vsel %vm563, %v625, %v627
      %v629 = vrot.slane %v506, 1
      %v630 = vrot.slane %v507, 1
      %v631 = vsel %vm563, %v629, %v630
      %v632 = vrot.slane %v508, 1
      %v633 = vsel %vm563, %v630, %v632
      %v634 = vrot.slane %v509, 1
      %v635 = vrot.slane %v510, 1
      %v636 = vsel %vm563, %v634, %v635
      %v637 = vrot.slane %v511, 1
      %v638 = vsel %vm563, %v635, %v637
      %v639 = vrot.slane %v512, 1
      %v640 = vrot.slane %v513, 1
      %v641 = vsel %vm563, %v639, %v640
      %v642 = vrot.slane %v514, 1
      %v643 = vsel %vm563, %v640, %v642
      %644 = vrot.lane.b32.xlu0 %v566, 8
      %v645 = vpop.permute.xlu0 %644
      %646 = vrot.lane.b32.xlu0 %v568, 8
      %v647 = vpop.permute.xlu0 %646
      %648 = vrot.lane.b32.xlu0 %v571, 8
      %v649 = vpop.permute.xlu0 %648
      %650 = vrot.lane.b32.xlu0 %v573, 8
      %v651 = vpop.permute.xlu0 %650
      %652 = vrot.lane.b32.xlu0 %v576, 8
      %v653 = vpop.permute.xlu0 %652
      %654 = vrot.lane.b32.xlu0 %v578, 8
      %v655 = vpop.permute.xlu0 %654
      %656 = vrot.lane.b32.xlu0 %v581, 8
      %v657 = vpop.permute.xlu0 %656
      %658 = vrot.lane.b32.xlu0 %v583, 8
      %v659 = vpop.permute.xlu0 %658
      %660 = vrot.lane.b32.xlu0 %v586, 8
      %v661 = vpop.permute.xlu0 %660
      %662 = vrot.lane.b32.xlu0 %v588, 8
      %v663 = vpop.permute.xlu0 %662
      %664 = vrot.lane.b32.xlu0 %v591, 8
      %v665 = vpop.permute.xlu0 %664
      %666 = vrot.lane.b32.xlu0 %v593, 8
      %v667 = vpop.permute.xlu0 %666
      %668 = vrot.lane.b32.xlu0 %v596, 8
      %v669 = vpop.permute.xlu0 %668
      %670 = vrot.lane.b32.xlu0 %v598, 8
      %v671 = vpop.permute.xlu0 %670
      %672 = vrot.lane.b32.xlu0 %v601, 8
      %v673 = vpop.permute.xlu0 %672
      %674 = vrot.lane.b32.xlu0 %v603, 8
      %v675 = vpop.permute.xlu0 %674
      %676 = vrot.lane.b32.xlu0 %v606, 8
      %v677 = vpop.permute.xlu0 %676
      %678 = vrot.lane.b32.xlu0 %v608, 8
      %v679 = vpop.permute.xlu0 %678
      %680 = vrot.lane.b32.xlu0 %v611, 8
      %v681 = vpop.permute.xlu0 %680
      %682 = vrot.lane.b32.xlu0 %v613, 8
      %v683 = vpop.permute.xlu0 %682
      %684 = vrot.lane.b32.xlu0 %v616, 8
      %v685 = vpop.permute.xlu0 %684
      %686 = vrot.lane.b32.xlu0 %v618, 8
      %v687 = vpop.permute.xlu0 %686
      %688 = vrot.lane.b32.xlu0 %v621, 8
      %v689 = vpop.permute.xlu0 %688
      %690 = vrot.lane.b32.xlu0 %v623, 8
      %v691 = vpop.permute.xlu0 %690
      %692 = vrot.lane.b32.xlu0 %v626, 8
      %v693 = vpop.permute.xlu0 %692
      %694 = vrot.lane.b32.xlu0 %v628, 8
      %v695 = vpop.permute.xlu0 %694
      %696 = vrot.lane.b32.xlu0 %v631, 8
      %v697 = vpop.permute.xlu0 %696
      %698 = vrot.lane.b32.xlu0 %v633, 8
      %v699 = vpop.permute.xlu0 %698
      %700 = vrot.lane.b32.xlu0 %v636, 8
      %v701 = vpop.permute.xlu0 %700
      %702 = vrot.lane.b32.xlu0 %v638, 8
      %v703 = vpop.permute.xlu0 %702
      %704 = vrot.lane.b32.xlu0 %v641, 8
      %v705 = vpop.permute.xlu0 %704
      %706 = vrot.lane.b32.xlu0 %v643, 8
      %v707 = vpop.permute.xlu0 %706
      %vm740 = vcmask 1045504
      %v741 = vrot.slane %v467, 2
      %v742 = vrot.slane %v468, 2
      %v743 = vsel %vm740, %v741, %v742
      %v744 = vrot.slane %v469, 2
      %v745 = vsel %vm740, %v742, %v744
      %v746 = vrot.slane %v470, 2
      %v747 = vrot.slane %v471, 2
      %v748 = vsel %vm740, %v746, %v747
      %v749 = vrot.slane %v472, 2
      %v750 = vsel %vm740, %v747, %v749
      %v751 = vrot.slane %v473, 2
      %v752 = vrot.slane %v474, 2
      %v753 = vsel %vm740, %v751, %v752
      %v754 = vrot.slane %v475, 2
      %v755 = vsel %vm740, %v752, %v754
      %v756 = vrot.slane %v476, 2
      %v757 = vrot.slane %v477, 2
      %v758 = vsel %vm740, %v756, %v757
      %v759 = vrot.slane %v478, 2
      %v760 = vsel %vm740, %v757, %v759
      %v761 = vrot.slane %v479, 2
      %v762 = vrot.slane %v480, 2
      %v763 = vsel %vm740, %v761, %v762
      %v764 = vrot.slane %v481, 2
      %v765 = vsel %vm740, %v762, %v764
      %v766 = vrot.slane %v482, 2
      %v767 = vrot.slane %v483, 2
      %v768 = vsel %vm740, %v766, %v767
      %v769 = vrot.slane %v484, 2
      %v770 = vsel %vm740, %v767, %v769
      %v771 = vrot.slane %v485, 2
      %v772 = vrot.slane %v486, 2
      %v773 = vsel %vm740, %v771, %v772
      %v774 = vrot.slane %v487, 2
      %v775 = vsel %vm740, %v772, %v774
      %v776 = vrot.slane %v488, 2
      %v777 = vrot.slane %v489, 2
      %v778 = vsel %vm740, %v776, %v777
      %v779 = vrot.slane %v490, 2
      %v780 = vsel %vm740, %v777, %v779
      %v781 = vrot.slane %v491, 2
      %v782 = vrot.slane %v492, 2
      %v783 = vsel %vm740, %v781, %v782
      %v784 = vrot.slane %v493, 2
      %v785 = vsel %vm740, %v782, %v784
      %v786 = vrot.slane %v494, 2
      %v787 = vrot.slane %v495, 2
      %v788 = vsel %vm740, %v786, %v787
      %v789 = vrot.slane %v496, 2
      %v790 = vsel %vm740, %v787, %v789
      %v791 = vrot.slane %v497, 2
      %v792 = vrot.slane %v498, 2
      %v793 = vsel %vm740, %v791, %v792
      %v794 = vrot.slane %v499, 2
      %v795 = vsel %vm740, %v792, %v794
      %v796 = vrot.slane %v500, 2
      %v797 = vrot.slane %v501, 2
      %v798 = vsel %vm740, %v796, %v797
      %v799 = vrot.slane %v502, 2
      %v800 = vsel %vm740, %v797, %v799
      %v801 = vrot.slane %v503, 2
      %v802 = vrot.slane %v504, 2
      %v803 = vsel %vm740, %v801, %v802
      %v804 = vrot.slane %v505, 2
      %v805 = vsel %vm740, %v802, %v804
      %v806 = vrot.slane %v506, 2
      %v807 = vrot.slane %v507, 2
      %v808 = vsel %vm740, %v806, %v807
      %v809 = vrot.slane %v508, 2
      %v810 = vsel %vm740, %v807, %v809
      %v811 = vrot.slane %v509, 2
      %v812 = vrot.slane %v510, 2
      %v813 = vsel %vm740, %v811, %v812
      %v814 = vrot.slane %v511, 2
      %v815 = vsel %vm740, %v812, %v814
      %v816 = vrot.slane %v512, 2
      %v817 = vrot.slane %v513, 2
      %v818 = vsel %vm740, %v816, %v817
      %v819 = vrot.slane %v514, 2
      %v820 = vsel %vm740, %v817, %v819
      %821 = vrot.lane.b32.xlu0 %v743, 16
      %v822 = vpop.permute.xlu0 %821
      %823 = vrot.lane.b32.xlu0 %v745, 16
      %v824 = vpop.permute.xlu0 %823
      %825 = vrot.lane.b32.xlu0 %v748, 16
      %v826 = vpop.permute.xlu0 %825
      %827 = vrot.lane.b32.xlu0 %v750, 16
      %v828 = vpop.permute.xlu0 %827
      %829 = vrot.lane.b32.xlu0 %v753, 16
      %v830 = vpop.permute.xlu0 %829
      %831 = vrot.lane.b32.xlu0 %v755, 16
      %v832 = vpop.permute.xlu0 %831
      %833 = vrot.lane.b32.xlu0 %v758, 16
      %v834 = vpop.permute.xlu0 %833
      %835 = vrot.lane.b32.xlu0 %v760, 16
      %v836 = vpop.permute.xlu0 %835
      %837 = vrot.lane.b32.xlu0 %v763, 16
      %v838 = vpop.permute.xlu0 %837
      %839 = vrot.lane.b32.xlu0 %v765, 16
      %v840 = vpop.permute.xlu0 %839
      %841 = vrot.lane.b32.xlu0 %v768, 16
      %v842 = vpop.permute.xlu0 %841
      %843 = vrot.lane.b32.xlu0 %v770, 16
      %v844 = vpop.permute.xlu0 %843
      %845 = vrot.lane.b32.xlu0 %v773, 16
      %v846 = vpop.permute.xlu0 %845
      %847 = vrot.lane.b32.xlu0 %v775, 16
      %v848 = vpop.permute.xlu0 %847
      %849 = vrot.lane.b32.xlu0 %v778, 16
      %v850 = vpop.permute.xlu0 %849
      %851 = vrot.lane.b32.xlu0 %v780, 16
      %v852 = vpop.permute.xlu0 %851
      %853 = vrot.lane.b32.xlu0 %v783, 16
      %v854 = vpop.permute.xlu0 %853
      %855 = vrot.lane.b32.xlu0 %v785, 16
      %v856 = vpop.permute.xlu0 %855
      %857 = vrot.lane.b32.xlu0 %v788, 16
      %v858 = vpop.permute.xlu0 %857
      %859 = vrot.lane.b32.xlu0 %v790, 16
      %v860 = vpop.permute.xlu0 %859
      %861 = vrot.lane.b32.xlu0 %v793, 16
      %v862 = vpop.permute.xlu0 %861
      %863 = vrot.lane.b32.xlu0 %v795, 16
      %v864 = vpop.permute.xlu0 %863
      %865 = vrot.lane.b32.xlu0 %v798, 16
      %v866 = vpop.permute.xlu0 %865
      %867 = vrot.lane.b32.xlu0 %v800, 16
      %v868 = vpop.permute.xlu0 %867
      %869 = vrot.lane.b32.xlu0 %v803, 16
      %v870 = vpop.permute.xlu0 %869
      %871 = vrot.lane.b32.xlu0 %v805, 16
      %v872 = vpop.permute.xlu0 %871
      %873 = vrot.lane.b32.xlu0 %v808, 16
      %v874 = vpop.permute.xlu0 %873
      %875 = vrot.lane.b32.xlu0 %v810, 16
      %v876 = vpop.permute.xlu0 %875
      %877 = vrot.lane.b32.xlu0 %v813, 16
      %v878 = vpop.permute.xlu0 %877
      %879 = vrot.lane.b32.xlu0 %v815, 16
      %v880 = vpop.permute.xlu0 %879
      %881 = vrot.lane.b32.xlu0 %v818, 16
      %v882 = vpop.permute.xlu0 %881
      %883 = vrot.lane.b32.xlu0 %v820, 16
      %v884 = vpop.permute.xlu0 %883
      %v917 = vsel %vm236, %v467, %v645
      %v918 = vsel %vm236, %v468, %v647
      %v919 = vsel %vm236, %v470, %v649
      %v920 = vsel %vm236, %v471, %v651
      %v921 = vsel %vm236, %v473, %v653
      %v922 = vsel %vm236, %v474, %v655
      %v923 = vsel %vm236, %v476, %v657
      %v924 = vsel %vm236, %v477, %v659
      %v925 = vsel %vm236, %v479, %v661
      %v926 = vsel %vm236, %v480, %v663
      %v927 = vsel %vm236, %v482, %v665
      %v928 = vsel %vm236, %v483, %v667
      %v929 = vsel %vm236, %v485, %v669
      %v930 = vsel %vm236, %v486, %v671
      %v931 = vsel %vm236, %v488, %v673
      %v932 = vsel %vm236, %v489, %v675
      %v933 = vsel %vm236, %v491, %v677
      %v934 = vsel %vm236, %v492, %v679
      %v935 = vsel %vm236, %v494, %v681
      %v936 = vsel %vm236, %v495, %v683
      %v937 = vsel %vm236, %v497, %v685
      %v938 = vsel %vm236, %v498, %v687
      %v939 = vsel %vm236, %v500, %v689
      %v940 = vsel %vm236, %v501, %v691
      %v941 = vsel %vm236, %v503, %v693
      %v942 = vsel %vm236, %v504, %v695
      %v943 = vsel %vm236, %v506, %v697
      %v944 = vsel %vm236, %v507, %v699
      %v945 = vsel %vm236, %v509, %v701
      %v946 = vsel %vm236, %v510, %v703
      %v947 = vsel %vm236, %v512, %v705
      %v948 = vsel %vm236, %v513, %v707
      %vm949 = vcmask 130048
      %v950 = vsel %vm949, %v917, %v822
      %v951 = vsel %vm949, %v918, %v824
      %v952 = vsel %vm949, %v919, %v826
      %v953 = vsel %vm949, %v920, %v828
      %v954 = vsel %vm949, %v921, %v830
      %v955 = vsel %vm949, %v922, %v832
      %v956 = vsel %vm949, %v923, %v834
      %v957 = vsel %vm949, %v924, %v836
      %v958 = vsel %vm949, %v925, %v838
      %v959 = vsel %vm949, %v926, %v840
      %v960 = vsel %vm949, %v927, %v842
      %v961 = vsel %vm949, %v928, %v844
      %v962 = vsel %vm949, %v929, %v846
      %v963 = vsel %vm949, %v930, %v848
      %v964 = vsel %vm949, %v931, %v850
      %v965 = vsel %vm949, %v932, %v852
      %v966 = vsel %vm949, %v933, %v854
      %v967 = vsel %vm949, %v934, %v856
      %v968 = vsel %vm949, %v935, %v858
      %v969 = vsel %vm949, %v936, %v860
      %v970 = vsel %vm949, %v937, %v862
      %v971 = vsel %vm949, %v938, %v864
      %v972 = vsel %vm949, %v939, %v866
      %v973 = vsel %vm949, %v940, %v868
      %v974 = vsel %vm949, %v941, %v870
      %v975 = vsel %vm949, %v942, %v872
      %v976 = vsel %vm949, %v943, %v874
      %v977 = vsel %vm949, %v944, %v876
      %v978 = vsel %vm949, %v945, %v878
      %v979 = vsel %vm949, %v946, %v880
      %v980 = vsel %vm949, %v947, %v882
      %v981 = vsel %vm949, %v948, %v884
      %v982 = vld [vmem:[%s1] sm:$0xff]
      %v983 = vld [vmem:[%s1 + $0x8] sm:$0xff]
      %v984 = vld [vmem:[%s1 + $0x10] sm:$0xff]
      %vm985 = vcmask 195584
      %v987 = vsel %vm985, %v950, 0
      %v990 = vsel %vm985, %v951, 0
      %v993 = vsel %vm985, %v952, 0
      %v996 = vsel %vm985, %v953, 0
      %v999 = vsel %vm985, %v954, 0
      %v1002 = vsel %vm985, %v955, 0
      %v1005 = vsel %vm985, %v956, 0
      %v1008 = vsel %vm985, %v957, 0
      %v1011 = vsel %vm985, %v958, 0
      %v1014 = vsel %vm985, %v959, 0
      %v1017 = vsel %vm985, %v960, 0
      %v1020 = vsel %vm985, %v961, 0
      %v1023 = vsel %vm985, %v962, 0
      %v1026 = vsel %vm985, %v963, 0
      %v1029 = vsel %vm985, %v964, 0
      %v1032 = vsel %vm985, %v965, 0
      %v1035 = vsel %vm985, %v966, 0
      %v1038 = vsel %vm985, %v967, 0
      %v1041 = vsel %vm985, %v968, 0
      %v1044 = vsel %vm985, %v969, 0
      %v1047 = vsel %vm985, %v970, 0
      %v1050 = vsel %vm985, %v971, 0
      %v1053 = vsel %vm985, %v972, 0
      %v1056 = vsel %vm985, %v973, 0
      %v1059 = vsel %vm985, %v974, 0
      %v1062 = vsel %vm985, %v975, 0
      %v1065 = vsel %vm985, %v976, 0
      %v1068 = vsel %vm985, %v977, 0
      %v1071 = vsel %vm985, %v978, 0
      %v1074 = vsel %vm985, %v979, 0
      %v1077 = vsel %vm985, %v980, 0
      %v1080 = vsel %vm985, %v981, 0
      %1082 = vmatprep.subr.mxu0 0.0
      %1083 = vmatpush1.msra.mxu0 %v982
      %1084 = vmatprep.subr.mxu0 0.0
      %1085 = vmatpush1.msra.mxu0 %v983
      %1086 = vmatprep.subr.mxu0 0.0
      %1087 = vmatpush1.msra.mxu0 %v984
      %1088 = vmatprep.subr.mxu0 0.0
      %1089 = vmatpush1.msra.mxu0 0.0
      %1090 = vmatprep.subr.mxu0 0.0
      %1091 = vmatpush1.msra.mxu0 0.0
      %1092 = vmatprep.subr.mxu0 0.0
      %1093 = vmatpush1.msra.mxu0 0.0
      %1094 = vmatprep.subr.mxu0 0.0
      %1095 = vmatpush1.msra.mxu0 0.0
      %1096 = vmatprep.subr.mxu0 0.0
      %1097 = vmatpush1.msra.mxu0 0.0
      %1098 = vmatprep.subr.mxu0 0.0
      %1099 = vmatpush1.msra.mxu0 0.0
      %1100 = vmatprep.subr.mxu0 0.0
      %1101 = vmatpush1.msra.mxu0 0.0
      %1102 = vmatprep.subr.mxu0 0.0
      %1103 = vmatpush1.msra.mxu0 0.0
      %1104 = vmatprep.subr.mxu0 0.0
      %1105 = vmatpush1.msra.mxu0 0.0
      %1106 = vmatprep.subr.mxu0 0.0
      %1107 = vmatpush1.msra.mxu0 0.0
      %1108 = vmatprep.subr.mxu0 0.0
      %1109 = vmatpush1.msra.mxu0 0.0
      %1110 = vmatprep.subr.mxu0 0.0
      %1111 = vmatpush1.msra.mxu0 0.0
      %1112 = vmatprep.subr.mxu0 0.0
      %1113 = vmatpush1.msra.mxu0 0.0
      %1114 = vmatprep.subr.mxu0 0.0
      %1115 = vmatpush1.msra.mxu0 0.0
      %1116 = vmatprep.subr.mxu0 0.0
      %1117 = vmatpush1.msra.mxu0 0.0
      %1118 = vmatprep.subr.mxu0 0.0
      %1119 = vmatpush1.msra.mxu0 0.0
      %1120 = vmatprep.subr.mxu0 0.0
      %1121 = vmatpush1.msra.mxu0 0.0
      %1122 = vmatprep.subr.mxu0 0.0
      %1123 = vmatpush1.msra.mxu0 0.0
      %1124 = vmatprep.subr.mxu0 0.0
      %1125 = vmatpush1.msra.mxu0 0.0
      %1126 = vmatprep.subr.mxu0 0.0
      %1127 = vmatpush1.msra.mxu0 0.0
      %1128 = vmatprep.subr.mxu0 0.0
      %1129 = vmatpush1.msra.mxu0 0.0
      %1130 = vmatprep.subr.mxu0 0.0
      %1131 = vmatpush1.msra.mxu0 0.0
      %1132 = vmatprep.subr.mxu0 0.0
      %1133 = vmatpush1.msra.mxu0 0.0
      %1134 = vmatprep.subr.mxu0 0.0
      %1135 = vmatpush1.msra.mxu0 0.0
      %1136 = vmatprep.subr.mxu0 0.0
      %1137 = vmatpush1.msra.mxu0 0.0
      %1138 = vmatprep.subr.mxu0 0.0
      %1139 = vmatpush1.msra.mxu0 0.0
      %1140 = vmatprep.subr.mxu0 0.0
      %1141 = vmatpush1.msra.mxu0 0.0
      %1142 = vmatprep.subr.mxu0 0.0
      %1143 = vmatpush1.msra.mxu0 0.0
      %1144 = vmatprep.subr.mxu0 0.0
      %1145 = vmatpush1.msra.mxu0 0.0
      %1146 = vmatprep.mubr.f32.mxu0 0.0
      %1147 = vmatmul.mubr.f32.gmra.mrb[0].mxu0 %v987
      %v1148 = vpop.f32.mrb[0].mxu0
      %v1149 = vadd.f32 0.0, %v1148
      %v1150 = vpop.f32.mrb[0].mxu0
      %1151 = vmatprep.mubr.f32.mxu0 0.0
      %1152 = vmatmul.mubr.f32.gmra.mrb[0].mxu0 %v990
      %v1153 = vpop.f32.mrb[0].mxu0
      %v1154 = vadd.f32 0.0, %v1153
      %v1155 = vpop.f32.mrb[0].mxu0
      %1156 = vmatprep.mubr.f32.mxu0 0.0
      %1157 = vmatmul.mubr.f32.gmra.mrb[0].mxu0 %v993
      %v1158 = vpop.f32.mrb[0].mxu0
      %v1159 = vadd.f32 0.0, %v1158
      %v1160 = vpop.f32.mrb[0].mxu0
      %1161 = vmatprep.mubr.f32.mxu0 0.0
      %1162 = vmatmul.mubr.f32.gmra.mrb[0].mxu0 %v996
      %v1163 = vpop.f32.mrb[0].mxu0
      %v1164 = vadd.f32 0.0, %v1163
      %v1165 = vpop.f32.mrb[0].mxu0
      %1166 = vmatprep.mubr.f32.mxu0 0.0
      %1167 = vmatmul.mubr.f32.gmra.mrb[0].mxu0 %v999
      %v1168 = vpop.f32.mrb[0].mxu0
      %v1169 = vadd.f32 0.0, %v1168
      %v1170 = vpop.f32.mrb[0].mxu0
      %1171 = vmatprep.mubr.f32.mxu0 0.0
      %1172 = vmatmul.mubr.f32.gmra.mrb[0].mxu0 %v1002
      %v1173 = vpop.f32.mrb[0].mxu0
      %v1174 = vadd.f32 0.0, %v1173
      %v1175 = vpop.f32.mrb[0].mxu0
      %1176 = vmatprep.mubr.f32.mxu0 0.0
      %1177 = vmatmul.mubr.f32.gmra.mrb[0].mxu0 %v1005
      %v1178 = vpop.f32.mrb[0].mxu0
      %v1179 = vadd.f32 0.0, %v1178
      %v1180 = vpop.f32.mrb[0].mxu0
      %1181 = vmatprep.mubr.f32.mxu0 0.0
      %1182 = vmatmul.mubr.f32.gmra.mrb[0].mxu0 %v1008
      %v1183 = vpop.f32.mrb[0].mxu0
      %v1184 = vadd.f32 0.0, %v1183
      %v1185 = vpop.f32.mrb[0].mxu0
      %1186 = vmatprep.mubr.f32.mxu0 0.0
      %1187 = vmatmul.mubr.f32.gmra.mrb[0].mxu0 %v1011
      %v1188 = vpop.f32.mrb[0].mxu0
      %v1189 = vadd.f32 0.0, %v1188
      %v1190 = vpop.f32.mrb[0].mxu0
      %1191 = vmatprep.mubr.f32.mxu0 0.0
      %1192 = vmatmul.mubr.f32.gmra.mrb[0].mxu0 %v1014
      %v1193 = vpop.f32.mrb[0].mxu0
      %v1194 = vadd.f32 0.0, %v1193
      %v1195 = vpop.f32.mrb[0].mxu0
      %1196 = vmatprep.mubr.f32.mxu0 0.0
      %1197 = vmatmul.mubr.f32.gmra.mrb[0].mxu0 %v1017
      %v1198 = vpop.f32.mrb[0].mxu0
      %v1199 = vadd.f32 0.0, %v1198
      %v1200 = vpop.f32.mrb[0].mxu0
      %1201 = vmatprep.mubr.f32.mxu0 0.0
      %1202 = vmatmul.mubr.f32.gmra.mrb[0].mxu0 %v1020
      %v1203 = vpop.f32.mrb[0].mxu0
      %v1204 = vadd.f32 0.0, %v1203
      %v1205 = vpop.f32.mrb[0].mxu0
      %1206 = vmatprep.mubr.f32.mxu0 0.0
      %1207 = vmatmul.mubr.f32.gmra.mrb[0].mxu0 %v1023
      %v1208 = vpop.f32.mrb[0].mxu0
      %v1209 = vadd.f32 0.0, %v1208
      %v1210 = vpop.f32.mrb[0].mxu0
      %1211 = vmatprep.mubr.f32.mxu0 0.0
      %1212 = vmatmul.mubr.f32.gmra.mrb[0].mxu0 %v1026
      %v1213 = vpop.f32.mrb[0].mxu0
      %v1214 = vadd.f32 0.0, %v1213
      %v1215 = vpop.f32.mrb[0].mxu0
      %1216 = vmatprep.mubr.f32.mxu0 0.0
      %1217 = vmatmul.mubr.f32.gmra.mrb[0].mxu0 %v1029
      %v1218 = vpop.f32.mrb[0].mxu0
      %v1219 = vadd.f32 0.0, %v1218
      %v1220 = vpop.f32.mrb[0].mxu0
      %1221 = vmatprep.mubr.f32.mxu0 0.0
      %1222 = vmatmul.mubr.f32.gmra.mrb[0].mxu0 %v1032
      %v1223 = vpop.f32.mrb[0].mxu0
      %v1224 = vadd.f32 0.0, %v1223
      %v1225 = vpop.f32.mrb[0].mxu0
      %1226 = vmatprep.mubr.f32.mxu0 0.0
      %1227 = vmatmul.mubr.f32.gmra.mrb[0].mxu0 %v1035
      %v1228 = vpop.f32.mrb[0].mxu0
      %v1229 = vadd.f32 0.0, %v1228
      %v1230 = vpop.f32.mrb[0].mxu0
      %1231 = vmatprep.mubr.f32.mxu0 0.0
      %1232 = vmatmul.mubr.f32.gmra.mrb[0].mxu0 %v1038
      %v1233 = vpop.f32.mrb[0].mxu0
      %v1234 = vadd.f32 0.0, %v1233
      %v1235 = vpop.f32.mrb[0].mxu0
      %1236 = vmatprep.mubr.f32.mxu0 0.0
      %1237 = vmatmul.mubr.f32.gmra.mrb[0].mxu0 %v1041
      %v1238 = vpop.f32.mrb[0].mxu0
      %v1239 = vadd.f32 0.0, %v1238
      %v1240 = vpop.f32.mrb[0].mxu0
      %1241 = vmatprep.mubr.f32.mxu0 0.0
      %1242 = vmatmul.mubr.f32.gmra.mrb[0].mxu0 %v1044
      %v1243 = vpop.f32.mrb[0].mxu0
      %v1244 = vadd.f32 0.0, %v1243
      %v1245 = vpop.f32.mrb[0].mxu0
      %1246 = vmatprep.mubr.f32.mxu0 0.0
      %1247 = vmatmul.mubr.f32.gmra.mrb[0].mxu0 %v1047
      %v1248 = vpop.f32.mrb[0].mxu0
      %v1249 = vadd.f32 0.0, %v1248
      %v1250 = vpop.f32.mrb[0].mxu0
      %1251 = vmatprep.mubr.f32.mxu0 0.0
      %1252 = vmatmul.mubr.f32.gmra.mrb[0].mxu0 %v1050
      %v1253 = vpop.f32.mrb[0].mxu0
      %v1254 = vadd.f32 0.0, %v1253
      %v1255 = vpop.f32.mrb[0].mxu0
      %1256 = vmatprep.mubr.f32.mxu0 0.0
      %1257 = vmatmul.mubr.f32.gmra.mrb[0].mxu0 %v1053
      %v1258 = vpop.f32.mrb[0].mxu0
      %v1259 = vadd.f32 0.0, %v1258
      %v1260 = vpop.f32.mrb[0].mxu0
      %1261 = vmatprep.mubr.f32.mxu0 0.0
      %1262 = vmatmul.mubr.f32.gmra.mrb[0].mxu0 %v1056
      %v1263 = vpop.f32.mrb[0].mxu0
      %v1264 = vadd.f32 0.0, %v1263
      %v1265 = vpop.f32.mrb[0].mxu0
      %1266 = vmatprep.mubr.f32.mxu0 0.0
      %1267 = vmatmul.mubr.f32.gmra.mrb[0].mxu0 %v1059
      %v1268 = vpop.f32.mrb[0].mxu0
      %v1269 = vadd.f32 0.0, %v1268
      %v1270 = vpop.f32.mrb[0].mxu0
      %1271 = vmatprep.mubr.f32.mxu0 0.0
      %1272 = vmatmul.mubr.f32.gmra.mrb[0].mxu0 %v1062
      %v1273 = vpop.f32.mrb[0].mxu0
      %v1274 = vadd.f32 0.0, %v1273
      %v1275 = vpop.f32.mrb[0].mxu0
      %1276 = vmatprep.mubr.f32.mxu0 0.0
      %1277 = vmatmul.mubr.f32.gmra.mrb[0].mxu0 %v1065
      %v1278 = vpop.f32.mrb[0].mxu0
      %v1279 = vadd.f32 0.0, %v1278
      %v1280 = vpop.f32.mrb[0].mxu0
      %1281 = vmatprep.mubr.f32.mxu0 0.0
      %1282 = vmatmul.mubr.f32.gmra.mrb[0].mxu0 %v1068
      %v1283 = vpop.f32.mrb[0].mxu0
      %v1284 = vadd.f32 0.0, %v1283
      %v1285 = vpop.f32.mrb[0].mxu0
      %1286 = vmatprep.mubr.f32.mxu0 0.0
      %1287 = vmatmul.mubr.f32.gmra.mrb[0].mxu0 %v1071
      %v1288 = vpop.f32.mrb[0].mxu0
      %v1289 = vadd.f32 0.0, %v1288
      %v1290 = vpop.f32.mrb[0].mxu0
      %1291 = vmatprep.mubr.f32.mxu0 0.0
      %1292 = vmatmul.mubr.f32.gmra.mrb[0].mxu0 %v1074
      %v1293 = vpop.f32.mrb[0].mxu0
      %v1294 = vadd.f32 0.0, %v1293
      %v1295 = vpop.f32.mrb[0].mxu0
      %1296 = vmatprep.mubr.f32.mxu0 0.0
      %1297 = vmatmul.mubr.f32.gmra.mrb[0].mxu0 %v1077
      %v1298 = vpop.f32.mrb[0].mxu0
      %v1299 = vadd.f32 0.0, %v1298
      %v1300 = vpop.f32.mrb[0].mxu0
      %1301 = vmatprep.mubr.f32.mxu0 0.0
      %1302 = vmatmul.mubr.f32.gmra.mrb[0].mxu0 %v1080
      %v1303 = vpop.f32.mrb[0].mxu0
      %v1304 = vadd.f32 0.0, %v1303
      %v1305 = vpop.f32.mrb[0].mxu0
      %1306 = vdwg.mxu0
      %1307 = vst.msk [vmem:[#allocation3] sm:$0xff] %vm236, %v1149
      %1308 = vst.msk [vmem:[#allocation3 + $0x8] sm:$0xff] %vm236, %v1154
      %1309 = vst.msk [vmem:[#allocation3 + $0x10] sm:$0xff] %vm236, %v1159
      %1310 = vst.msk [vmem:[#allocation3 + $0x18] sm:$0xff] %vm236, %v1164
      %1311 = vst.msk [vmem:[#allocation3 + $0x20] sm:$0xff] %vm236, %v1169
      %1312 = vst.msk [vmem:[#allocation3 + $0x28] sm:$0xff] %vm236, %v1174
      %1313 = vst.msk [vmem:[#allocation3 + $0x30] sm:$0xff] %vm236, %v1179
      %1314 = vst.msk [vmem:[#allocation3 + $0x38] sm:$0xff] %vm236, %v1184
      %1315 = vst.msk [vmem:[#allocation3 + $0x40] sm:$0xff] %vm236, %v1189
      %1316 = vst.msk [vmem:[#allocation3 + $0x48] sm:$0xff] %vm236, %v1194
      %1317 = vst.msk [vmem:[#allocation3 + $0x50] sm:$0xff] %vm236, %v1199
      %1318 = vst.msk [vmem:[#allocation3 + $0x58] sm:$0xff] %vm236, %v1204
      %1319 = vst.msk [vmem:[#allocation3 + $0x60] sm:$0xff] %vm236, %v1209
      %1320 = vst.msk [vmem:[#allocation3 + $0x68] sm:$0xff] %vm236, %v1214
      %1321 = vst.msk [vmem:[#allocation3 + $0x70] sm:$0xff] %vm236, %v1219
      %1322 = vst.msk [vmem:[#allocation3 + $0x78] sm:$0xff] %vm236, %v1224
      %1323 = vst.msk [vmem:[#allocation3 + $0x80] sm:$0xff] %vm236, %v1229
      %1324 = vst.msk [vmem:[#allocation3 + $0x88] sm:$0xff] %vm236, %v1234
      %1325 = vst.msk [vmem:[#allocation3 + $0x90] sm:$0xff] %vm236, %v1239
      %1326 = vst.msk [vmem:[#allocation3 + $0x98] sm:$0xff] %vm236, %v1244
      %1327 = vst.msk [vmem:[#allocation3 + $0xa0] sm:$0xff] %vm236, %v1249
      %1328 = vst.msk [vmem:[#allocation3 + $0xa8] sm:$0xff] %vm236, %v1254
      %1329 = vst.msk [vmem:[#allocation3 + $0xb0] sm:$0xff] %vm236, %v1259
      %1330 = vst.msk [vmem:[#allocation3 + $0xb8] sm:$0xff] %vm236, %v1264
      %1331 = vst.msk [vmem:[#allocation3 + $0xc0] sm:$0xff] %vm236, %v1269
      %1332 = vst.msk [vmem:[#allocation3 + $0xc8] sm:$0xff] %vm236, %v1274
      %1333 = vst.msk [vmem:[#allocation3 + $0xd0] sm:$0xff] %vm236, %v1279
      %1334 = vst.msk [vmem:[#allocation3 + $0xd8] sm:$0xff] %vm236, %v1284
      %1335 = vst.msk [vmem:[#allocation3 + $0xe0] sm:$0xff] %vm236, %v1289
      %1336 = vst.msk [vmem:[#allocation3 + $0xe8] sm:$0xff] %vm236, %v1294
      %1337 = vst.msk [vmem:[#allocation3 + $0xf0] sm:$0xff] %vm236, %v1299
      %1338 = vst.msk [vmem:[#allocation3 + $0xf8] sm:$0xff] %vm236, %v1304
      %v1339 = vld [vmem:[%s434] sm:$0xff]
      %v1340 = vld [vmem:[%s434 + $0x8] sm:$0xff]
      %v1341 = vld [vmem:[%s434 + $0x10] sm:$0x3]
      %v1342 = vld [vmem:[%s434 + $0x18] sm:$0xff]
      %v1343 = vld [vmem:[%s434 + $0x20] sm:$0xff]
      %v1344 = vld [vmem:[%s434 + $0x28] sm:$0x3]
      %v1345 = vld [vmem:[%s434 + $0x30] sm:$0xff]
      %v1346 = vld [vmem:[%s434 + $0x38] sm:$0xff]
      %v1347 = vld [vmem:[%s434 + $0x40] sm:$0x3]
      %v1348 = vld [vmem:[%s434 + $0x48] sm:$0xff]
      %v1349 = vld [vmem:[%s434 + $0x50] sm:$0xff]
      %v1350 = vld [vmem:[%s434 + $0x58] sm:$0x3]
      %v1351 = vld [vmem:[%s434 + $0x60] sm:$0xff]
      %v1352 = vld [vmem:[%s434 + $0x68] sm:$0xff]
      %v1353 = vld [vmem:[%s434 + $0x70] sm:$0x3]
      %v1354 = vld [vmem:[%s434 + $0x78] sm:$0xff]
      %v1355 = vld [vmem:[%s434 + $0x80] sm:$0xff]
      %v1356 = vld [vmem:[%s434 + $0x88] sm:$0x3]
      %v1357 = vld [vmem:[%s434 + $0x90] sm:$0xff]
      %v1358 = vld [vmem:[%s434 + $0x98] sm:$0xff]
      %v1359 = vld [vmem:[%s434 + $0xa0] sm:$0x3]
      %v1360 = vld [vmem:[%s434 + $0xa8] sm:$0xff]
      %v1361 = vld [vmem:[%s434 + $0xb0] sm:$0xff]
      %v1362 = vld [vmem:[%s434 + $0xb8] sm:$0x3]
      %v1363 = vld [vmem:[%s434 + $0xc0] sm:$0xff]
      %v1364 = vld [vmem:[%s434 + $0xc8] sm:$0xff]
      %v1365 = vld [vmem:[%s434 + $0xd0] sm:$0x3]
      %v1366 = vld [vmem:[%s434 + $0xd8] sm:$0xff]
      %v1367 = vld [vmem:[%s434 + $0xe0] sm:$0xff]
      %v1368 = vld [vmem:[%s434 + $0xe8] sm:$0x3]
      %v1369 = vld [vmem:[%s434 + $0xf0] sm:$0xff]
      %v1370 = vld [vmem:[%s434 + $0xf8] sm:$0xff]
      %v1371 = vld [vmem:[%s434 + $0x100] sm:$0x3]
      %v1372 = vld [vmem:[%s434 + $0x108] sm:$0xff]
      %v1373 = vld [vmem:[%s434 + $0x110] sm:$0xff]
      %v1374 = vld [vmem:[%s434 + $0x118] sm:$0x3]
      %v1375 = vld [vmem:[%s434 + $0x120] sm:$0xff]
      %v1376 = vld [vmem:[%s434 + $0x128] sm:$0xff]
      %v1377 = vld [vmem:[%s434 + $0x130] sm:$0x3]
      %v1378 = vld [vmem:[%s434 + $0x138] sm:$0xff]
      %v1379 = vld [vmem:[%s434 + $0x140] sm:$0xff]
      %v1380 = vld [vmem:[%s434 + $0x148] sm:$0x3]
      %v1381 = vld [vmem:[%s434 + $0x150] sm:$0xff]
      %v1382 = vld [vmem:[%s434 + $0x158] sm:$0xff]
      %v1383 = vld [vmem:[%s434 + $0x160] sm:$0x3]
      %v1384 = vld [vmem:[%s434 + $0x168] sm:$0xff]
      %v1385 = vld [vmem:[%s434 + $0x170] sm:$0xff]
      %v1386 = vld [vmem:[%s434 + $0x178] sm:$0x3]
      %v1435 = vrot.slane %v1339, 1
      %v1436 = vrot.slane %v1340, 1
      %v1437 = vsel %vm563, %v1435, %v1436
      %v1438 = vrot.slane %v1341, 1
      %v1439 = vsel %vm563, %v1436, %v1438
      %v1440 = vrot.slane %v1342, 1
      %v1441 = vrot.slane %v1343, 1
      %v1442 = vsel %vm563, %v1440, %v1441
      %v1443 = vrot.slane %v1344, 1
      %v1444 = vsel %vm563, %v1441, %v1443
      %v1445 = vrot.slane %v1345, 1
      %v1446 = vrot.slane %v1346, 1
      %v1447 = vsel %vm563, %v1445, %v1446
      %v1448 = vrot.slane %v1347, 1
      %v1449 = vsel %vm563, %v1446, %v1448
      %v1450 = vrot.slane %v1348, 1
      %v1451 = vrot.slane %v1349, 1
      %v1452 = vsel %vm563, %v1450, %v1451
      %v1453 = vrot.slane %v1350, 1
      %v1454 = vsel %vm563, %v1451, %v1453
      %v1455 = vrot.slane %v1351, 1
      %v1456 = vrot.slane %v1352, 1
      %v1457 = vsel %vm563, %v1455, %v1456
      %v1458 = vrot.slane %v1353, 1
      %v1459 = vsel %vm563, %v1456, %v1458
      %v1460 = vrot.slane %v1354, 1
      %v1461 = vrot.slane %v1355, 1
      %v1462 = vsel %vm563, %v1460, %v1461
      %v1463 = vrot.slane %v1356, 1
      %v1464 = vsel %vm563, %v1461, %v1463
      %v1465 = vrot.slane %v1357, 1
      %v1466 = vrot.slane %v1358, 1
      %v1467 = vsel %vm563, %v1465, %v1466
      %v1468 = vrot.slane %v1359, 1
      %v1469 = vsel %vm563, %v1466, %v1468
      %v1470 = vrot.slane %v1360, 1
      %v1471 = vrot.slane %v1361, 1
      %v1472 = vsel %vm563, %v1470, %v1471
      %v1473 = vrot.slane %v1362, 1
      %v1474 = vsel %vm563, %v1471, %v1473
      %v1475 = vrot.slane %v1363, 1
      %v1476 = vrot.slane %v1364, 1
      %v1477 = vsel %vm563, %v1475, %v1476
      %v1478 = vrot.slane %v1365, 1
      %v1479 = vsel %vm563, %v1476, %v1478
      %v1480 = vrot.slane %v1366, 1
      %v1481 = vrot.slane %v1367, 1
      %v1482 = vsel %vm563, %v1480, %v1481
      %v1483 = vrot.slane %v1368, 1
      %v1484 = vsel %vm563, %v1481, %v1483
      %v1485 = vrot.slane %v1369, 1
      %v1486 = vrot.slane %v1370, 1
      %v1487 = vsel %vm563, %v1485, %v1486
      %v1488 = vrot.slane %v1371, 1
      %v1489 = vsel %vm563, %v1486, %v1488
      %v1490 = vrot.slane %v1372, 1
      %v1491 = vrot.slane %v1373, 1
      %v1492 = vsel %vm563, %v1490, %v1491
      %v1493 = vrot.slane %v1374, 1
      %v1494 = vsel %vm563, %v1491, %v1493
      %v1495 = vrot.slane %v1375, 1
      %v1496 = vrot.slane %v1376, 1
      %v1497 = vsel %vm563, %v1495, %v1496
      %v1498 = vrot.slane %v1377, 1
      %v1499 = vsel %vm563, %v1496, %v1498
      %v1500 = vrot.slane %v1378, 1
      %v1501 = vrot.slane %v1379, 1
      %v1502 = vsel %vm563, %v1500, %v1501
      %v1503 = vrot.slane %v1380, 1
      %v1504 = vsel %vm563, %v1501, %v1503
      %v1505 = vrot.slane %v1381, 1
      %v1506 = vrot.slane %v1382, 1
      %v1507 = vsel %vm563, %v1505, %v1506
      %v1508 = vrot.slane %v1383, 1
      %v1509 = vsel %vm563, %v1506, %v1508
      %v1510 = vrot.slane %v1384, 1
      %v1511 = vrot.slane %v1385, 1
      %v1512 = vsel %vm563, %v1510, %v1511
      %v1513 = vrot.slane %v1386, 1
      %v1514 = vsel %vm563, %v1511, %v1513
      %1515 = vrot.lane.b32.xlu0 %v1437, 8
      %v1516 = vpop.permute.xlu0 %1515
      %1517 = vrot.lane.b32.xlu0 %v1439, 8
      %v1518 = vpop.permute.xlu0 %1517
      %1519 = vrot.lane.b32.xlu0 %v1442, 8
      %v1520 = vpop.permute.xlu0 %1519
      %1521 = vrot.lane.b32.xlu0 %v1444, 8
      %v1522 = vpop.permute.xlu0 %1521
      %1523 = vrot.lane.b32.xlu0 %v1447, 8
      %v1524 = vpop.permute.xlu0 %1523
      %1525 = vrot.lane.b32.xlu0 %v1449, 8
      %v1526 = vpop.permute.xlu0 %1525
      %1527 = vrot.lane.b32.xlu0 %v1452, 8
      %v1528 = vpop.permute.xlu0 %1527
      %1529 = vrot.lane.b32.xlu0 %v1454, 8
      %v1530 = vpop.permute.xlu0 %1529
      %1531 = vrot.lane.b32.xlu0 %v1457, 8
      %v1532 = vpop.permute.xlu0 %1531
      %1533 = vrot.lane.b32.xlu0 %v1459, 8
      %v1534 = vpop.permute.xlu0 %1533
      %1535 = vrot.lane.b32.xlu0 %v1462, 8
      %v1536 = vpop.permute.xlu0 %1535
      %1537 = vrot.lane.b32.xlu0 %v1464, 8
      %v1538 = vpop.permute.xlu0 %1537
      %1539 = vrot.lane.b32.xlu0 %v1467, 8
      %v1540 = vpop.permute.xlu0 %1539
      %1541 = vrot.lane.b32.xlu0 %v1469, 8
      %v1542 = vpop.permute.xlu0 %1541
      %1543 = vrot.lane.b32.xlu0 %v1472, 8
      %v1544 = vpop.permute.xlu0 %1543
      %1545 = vrot.lane.b32.xlu0 %v1474, 8
      %v1546 = vpop.permute.xlu0 %1545
      %1547 = vrot.lane.b32.xlu0 %v1477, 8
      %v1548 = vpop.permute.xlu0 %1547
      %1549 = vrot.lane.b32.xlu0 %v1479, 8
      %v1550 = vpop.permute.xlu0 %1549
      %1551 = vrot.lane.b32.xlu0 %v1482, 8
      %v1552 = vpop.permute.xlu0 %1551
      %1553 = vrot.lane.b32.xlu0 %v1484, 8
      %v1554 = vpop.permute.xlu0 %1553
      %1555 = vrot.lane.b32.xlu0 %v1487, 8
      %v1556 = vpop.permute.xlu0 %1555
      %1557 = vrot.lane.b32.xlu0 %v1489, 8
      %v1558 = vpop.permute.xlu0 %1557
      %1559 = vrot.lane.b32.xlu0 %v1492, 8
      %v1560 = vpop.permute.xlu0 %1559
      %1561 = vrot.lane.b32.xlu0 %v1494, 8
      %v1562 = vpop.permute.xlu0 %1561
      %1563 = vrot.lane.b32.xlu0 %v1497, 8
      %v1564 = vpop.permute.xlu0 %1563
      %1565 = vrot.lane.b32.xlu0 %v1499, 8
      %v1566 = vpop.permute.xlu0 %1565
      %1567 = vrot.lane.b32.xlu0 %v1502, 8
      %v1568 = vpop.permute.xlu0 %1567
      %1569 = vrot.lane.b32.xlu0 %v1504, 8
      %v1570 = vpop.permute.xlu0 %1569
      %1571 = vrot.lane.b32.xlu0 %v1507, 8
      %v1572 = vpop.permute.xlu0 %1571
      %1573 = vrot.lane.b32.xlu0 %v1509, 8
      %v1574 = vpop.permute.xlu0 %1573
      %1575 = vrot.lane.b32.xlu0 %v1512, 8
      %v1576 = vpop.permute.xlu0 %1575
      %1577 = vrot.lane.b32.xlu0 %v1514, 8
      %v1578 = vpop.permute.xlu0 %1577
      %v1611 = vrot.slane %v1339, 2
      %v1612 = vrot.slane %v1340, 2
      %v1613 = vsel %vm740, %v1611, %v1612
      %v1614 = vrot.slane %v1341, 2
      %v1615 = vsel %vm740, %v1612, %v1614
      %v1616 = vrot.slane %v1342, 2
      %v1617 = vrot.slane %v1343, 2
      %v1618 = vsel %vm740, %v1616, %v1617
      %v1619 = vrot.slane %v1344, 2
      %v1620 = vsel %vm740, %v1617, %v1619
      %v1621 = vrot.slane %v1345, 2
      %v1622 = vrot.slane %v1346, 2
      %v1623 = vsel %vm740, %v1621, %v1622
      %v1624 = vrot.slane %v1347, 2
      %v1625 = vsel %vm740, %v1622, %v1624
      %v1626 = vrot.slane %v1348, 2
      %v1627 = vrot.slane %v1349, 2
      %v1628 = vsel %vm740, %v1626, %v1627
      %v1629 = vrot.slane %v1350, 2
      %v1630 = vsel %vm740, %v1627, %v1629
      %v1631 = vrot.slane %v1351, 2
      %v1632 = vrot.slane %v1352, 2
      %v1633 = vsel %vm740, %v1631, %v1632
      %v1634 = vrot.slane %v1353, 2
      %v1635 = vsel %vm740, %v1632, %v1634
      %v1636 = vrot.slane %v1354, 2
      %v1637 = vrot.slane %v1355, 2
      %v1638 = vsel %vm740, %v1636, %v1637
      %v1639 = vrot.slane %v1356, 2
      %v1640 = vsel %vm740, %v1637, %v1639
      %v1641 = vrot.slane %v1357, 2
      %v1642 = vrot.slane %v1358, 2
      %v1643 = vsel %vm740, %v1641, %v1642
      %v1644 = vrot.slane %v1359, 2
      %v1645 = vsel %vm740, %v1642, %v1644
      %v1646 = vrot.slane %v1360, 2
      %v1647 = vrot.slane %v1361, 2
      %v1648 = vsel %vm740, %v1646, %v1647
      %v1649 = vrot.slane %v1362, 2
      %v1650 = vsel %vm740, %v1647, %v1649
      %v1651 = vrot.slane %v1363, 2
      %v1652 = vrot.slane %v1364, 2
      %v1653 = vsel %vm740, %v1651, %v1652
      %v1654 = vrot.slane %v1365, 2
      %v1655 = vsel %vm740, %v1652, %v1654
      %v1656 = vrot.slane %v1366, 2
      %v1657 = vrot.slane %v1367, 2
      %v1658 = vsel %vm740, %v1656, %v1657
      %v1659 = vrot.slane %v1368, 2
      %v1660 = vsel %vm740, %v1657, %v1659
      %v1661 = vrot.slane %v1369, 2
      %v1662 = vrot.slane %v1370, 2
      %v1663 = vsel %vm740, %v1661, %v1662
      %v1664 = vrot.slane %v1371, 2
      %v1665 = vsel %vm740, %v1662, %v1664
      %v1666 = vrot.slane %v1372, 2
      %v1667 = vrot.slane %v1373, 2
      %v1668 = vsel %vm740, %v1666, %v1667
      %v1669 = vrot.slane %v1374, 2
      %v1670 = vsel %vm740, %v1667, %v1669
      %v1671 = vrot.slane %v1375, 2
      %v1672 = vrot.slane %v1376, 2
      %v1673 = vsel %vm740, %v1671, %v1672
      %v1674 = vrot.slane %v1377, 2
      %v1675 = vsel %vm740, %v1672, %v1674
      %v1676 = vrot.slane %v1378, 2
      %v1677 = vrot.slane %v1379, 2
      %v1678 = vsel %vm740, %v1676, %v1677
      %v1679 = vrot.slane %v1380, 2
      %v1680 = vsel %vm740, %v1677, %v1679
      %v1681 = vrot.slane %v1381, 2
      %v1682 = vrot.slane %v1382, 2
      %v1683 = vsel %vm740, %v1681, %v1682
      %v1684 = vrot.slane %v1383, 2
      %v1685 = vsel %vm740, %v1682, %v1684
      %v1686 = vrot.slane %v1384, 2
      %v1687 = vrot.slane %v1385, 2
      %v1688 = vsel %vm740, %v1686, %v1687
      %v1689 = vrot.slane %v1386, 2
      %v1690 = vsel %vm740, %v1687, %v1689
      %1691 = vrot.lane.b32.xlu0 %v1613, 16
      %v1692 = vpop.permute.xlu0 %1691
      %1693 = vrot.lane.b32.xlu0 %v1615, 16
      %v1694 = vpop.permute.xlu0 %1693
      %1695 = vrot.lane.b32.xlu0 %v1618, 16
      %v1696 = vpop.permute.xlu0 %1695
      %1697 = vrot.lane.b32.xlu0 %v1620, 16
      %v1698 = vpop.permute.xlu0 %1697
      %1699 = vrot.lane.b32.xlu0 %v1623, 16
      %v1700 = vpop.permute.xlu0 %1699
      %1701 = vrot.lane.b32.xlu0 %v1625, 16
      %v1702 = vpop.permute.xlu0 %1701
      %1703 = vrot.lane.b32.xlu0 %v1628, 16
      %v1704 = vpop.permute.xlu0 %1703
      %1705 = vrot.lane.b32.xlu0 %v1630, 16
      %v1706 = vpop.permute.xlu0 %1705
      %1707 = vrot.lane.b32.xlu0 %v1633, 16
      %v1708 = vpop.permute.xlu0 %1707
      %1709 = vrot.lane.b32.xlu0 %v1635, 16
      %v1710 = vpop.permute.xlu0 %1709
      %1711 = vrot.lane.b32.xlu0 %v1638, 16
      %v1712 = vpop.permute.xlu0 %1711
      %1713 = vrot.lane.b32.xlu0 %v1640, 16
      %v1714 = vpop.permute.xlu0 %1713
      %1715 = vrot.lane.b32.xlu0 %v1643, 16
      %v1716 = vpop.permute.xlu0 %1715
      %1717 = vrot.lane.b32.xlu0 %v1645, 16
      %v1718 = vpop.permute.xlu0 %1717
      %1719 = vrot.lane.b32.xlu0 %v1648, 16
      %v1720 = vpop.permute.xlu0 %1719
      %1721 = vrot.lane.b32.xlu0 %v1650, 16
      %v1722 = vpop.permute.xlu0 %1721
      %1723 = vrot.lane.b32.xlu0 %v1653, 16
      %v1724 = vpop.permute.xlu0 %1723
      %1725 = vrot.lane.b32.xlu0 %v1655, 16
      %v1726 = vpop.permute.xlu0 %1725
      %1727 = vrot.lane.b32.xlu0 %v1658, 16
      %v1728 = vpop.permute.xlu0 %1727
      %1729 = vrot.lane.b32.xlu0 %v1660, 16
      %v1730 = vpop.permute.xlu0 %1729
      %1731 = vrot.lane.b32.xlu0 %v1663, 16
      %v1732 = vpop.permute.xlu0 %1731
      %1733 = vrot.lane.b32.xlu0 %v1665, 16
      %v1734 = vpop.permute.xlu0 %1733
      %1735 = vrot.lane.b32.xlu0 %v1668, 16
      %v1736 = vpop.permute.xlu0 %1735
      %1737 = vrot.lane.b32.xlu0 %v1670, 16
      %v1738 = vpop.permute.xlu0 %1737
      %1739 = vrot.lane.b32.xlu0 %v1673, 16
      %v1740 = vpop.permute.xlu0 %1739
      %1741 = vrot.lane.b32.xlu0 %v1675, 16
      %v1742 = vpop.permute.xlu0 %1741
      %1743 = vrot.lane.b32.xlu0 %v1678, 16
      %v1744 = vpop.permute.xlu0 %1743
      %1745 = vrot.lane.b32.xlu0 %v1680, 16
      %v1746 = vpop.permute.xlu0 %1745
      %1747 = vrot.lane.b32.xlu0 %v1683, 16
      %v1748 = vpop.permute.xlu0 %1747
      %1749 = vrot.lane.b32.xlu0 %v1685, 16
      %v1750 = vpop.permute.xlu0 %1749
      %1751 = vrot.lane.b32.xlu0 %v1688, 16
      %v1752 = vpop.permute.xlu0 %1751
      %1753 = vrot.lane.b32.xlu0 %v1690, 16
      %v1754 = vpop.permute.xlu0 %1753
      %v1787 = vsel %vm236, %v1339, %v1516
      %v1788 = vsel %vm236, %v1340, %v1518
      %v1789 = vsel %vm236, %v1342, %v1520
      %v1790 = vsel %vm236, %v1343, %v1522
      %v1791 = vsel %vm236, %v1345, %v1524
      %v1792 = vsel %vm236, %v1346, %v1526
      %v1793 = vsel %vm236, %v1348, %v1528
      %v1794 = vsel %vm236, %v1349, %v1530
      %v1795 = vsel %vm236, %v1351, %v1532
      %v1796 = vsel %vm236, %v1352, %v1534
      %v1797 = vsel %vm236, %v1354, %v1536
      %v1798 = vsel %vm236, %v1355, %v1538
      %v1799 = vsel %vm236, %v1357, %v1540
      %v1800 = vsel %vm236, %v1358, %v1542
      %v1801 = vsel %vm236, %v1360, %v1544
      %v1802 = vsel %vm236, %v1361, %v1546
      %v1803 = vsel %vm236, %v1363, %v1548
      %v1804 = vsel %vm236, %v1364, %v1550
      %v1805 = vsel %vm236, %v1366, %v1552
      %v1806 = vsel %vm236, %v1367, %v1554
      %v1807 = vsel %vm236, %v1369, %v1556
      %v1808 = vsel %vm236, %v1370, %v1558
      %v1809 = vsel %vm236, %v1372, %v1560
      %v1810 = vsel %vm236, %v1373, %v1562
      %v1811 = vsel %vm236, %v1375, %v1564
      %v1812 = vsel %vm236, %v1376, %v1566
      %v1813 = vsel %vm236, %v1378, %v1568
      %v1814 = vsel %vm236, %v1379, %v1570
      %v1815 = vsel %vm236, %v1381, %v1572
      %v1816 = vsel %vm236, %v1382, %v1574
      %v1817 = vsel %vm236, %v1384, %v1576
      %v1818 = vsel %vm236, %v1385, %v1578
      %v1819 = vsel %vm949, %v1787, %v1692
      %v1820 = vsel %vm949, %v1788, %v1694
      %v1821 = vsel %vm949, %v1789, %v1696
      %v1822 = vsel %vm949, %v1790, %v1698
      %v1823 = vsel %vm949, %v1791, %v1700
      %v1824 = vsel %vm949, %v1792, %v1702
      %v1825 = vsel %vm949, %v1793, %v1704
      %v1826 = vsel %vm949, %v1794, %v1706
      %v1827 = vsel %vm949, %v1795, %v1708
      %v1828 = vsel %vm949, %v1796, %v1710
      %v1829 = vsel %vm949, %v1797, %v1712
      %v1830 = vsel %vm949, %v1798, %v1714
      %v1831 = vsel %vm949, %v1799, %v1716
      %v1832 = vsel %vm949, %v1800, %v1718
      %v1833 = vsel %vm949, %v1801, %v1720
      %v1834 = vsel %vm949, %v1802, %v1722
      %v1835 = vsel %vm949, %v1803, %v1724
      %v1836 = vsel %vm949, %v1804, %v1726
      %v1837 = vsel %vm949, %v1805, %v1728
      %v1838 = vsel %vm949, %v1806, %v1730
      %v1839 = vsel %vm949, %v1807, %v1732
      %v1840 = vsel %vm949, %v1808, %v1734
      %v1841 = vsel %vm949, %v1809, %v1736
      %v1842 = vsel %vm949, %v1810, %v1738
      %v1843 = vsel %vm949, %v1811, %v1740
      %v1844 = vsel %vm949, %v1812, %v1742
      %v1845 = vsel %vm949, %v1813, %v1744
      %v1846 = vsel %vm949, %v1814, %v1746
      %v1847 = vsel %vm949, %v1815, %v1748
      %v1848 = vsel %vm949, %v1816, %v1750
      %v1849 = vsel %vm949, %v1817, %v1752
      %v1850 = vsel %vm949, %v1818, %v1754
      %s1851 = scalar_lea.vmem %s1, 24
      %v1852 = vld [vmem:[%s1851] sm:$0xff]
      %v1853 = vld [vmem:[%s1851 + $0x8] sm:$0xff]
      %v1854 = vld [vmem:[%s1851 + $0x10] sm:$0xff]
      %v1856 = vsel %vm985, %v1819, 0
      %v1859 = vsel %vm985, %v1820, 0
      %v1862 = vsel %vm985, %v1821, 0
      %v1865 = vsel %vm985, %v1822, 0
      %v1868 = vsel %vm985, %v1823, 0
      %v1871 = vsel %vm985, %v1824, 0
      %v1874 = vsel %vm985, %v1825, 0
      %v1877 = vsel %vm985, %v1826, 0
      %v1880 = vsel %vm985, %v1827, 0
      %v1883 = vsel %vm985, %v1828, 0
      %v1886 = vsel %vm985, %v1829, 0
      %v1889 = vsel %vm985, %v1830, 0
      %v1892 = vsel %vm985, %v1831, 0
      %v1895 = vsel %vm985, %v1832, 0
      %v1898 = vsel %vm985, %v1833, 0
      %v1901 = vsel %vm985, %v1834, 0
      %v1904 = vsel %vm985, %v1835, 0
      %v1907 = vsel %vm985, %v1836, 0
      %v1910 = vsel %vm985, %v1837, 0
      %v1913 = vsel %vm985, %v1838, 0
      %v1916 = vsel %vm985, %v1839, 0
      %v1919 = vsel %vm985, %v1840, 0
      %v1922 = vsel %vm985, %v1841, 0
      %v1925 = vsel %vm985, %v1842, 0
      %v1928 = vsel %vm985, %v1843, 0
      %v1931 = vsel %vm985, %v1844, 0
      %v1934 = vsel %vm985, %v1845, 0
      %v1937 = vsel %vm985, %v1846, 0
      %v1940 = vsel %vm985, %v1847, 0
      %v1943 = vsel %vm985, %v1848, 0
      %v1946 = vsel %vm985, %v1849, 0
      %v1949 = vsel %vm985, %v1850, 0
      %1951 = vmatprep.subr.mxu0 0.0
      %1952 = vmatpush1.msra.mxu0 %v1852
      %1953 = vmatprep.subr.mxu0 0.0
      %1954 = vmatpush1.msra.mxu0 %v1853
      %1955 = vmatprep.subr.mxu0 0.0
      %1956 = vmatpush1.msra.mxu0 %v1854
      %1957 = vmatprep.subr.mxu0 0.0
      %1958 = vmatpush1.msra.mxu0 0.0
      %1959 = vmatprep.subr.mxu0 0.0
      %1960 = vmatpush1.msra.mxu0 0.0
      %1961 = vmatprep.subr.mxu0 0.0
      %1962 = vmatpush1.msra.mxu0 0.0
      %1963 = vmatprep.subr.mxu0 0.0
      %1964 = vmatpush1.msra.mxu0 0.0
      %1965 = vmatprep.subr.mxu0 0.0
      %1966 = vmatpush1.msra.mxu0 0.0
      %1967 = vmatprep.subr.mxu0 0.0
      %1968 = vmatpush1.msra.mxu0 0.0
      %1969 = vmatprep.subr.mxu0 0.0
      %1970 = vmatpush1.msra.mxu0 0.0
      %1971 = vmatprep.subr.mxu0 0.0
      %1972 = vmatpush1.msra.mxu0 0.0
      %1973 = vmatprep.subr.mxu0 0.0
      %1974 = vmatpush1.msra.mxu0 0.0
      %1975 = vmatprep.subr.mxu0 0.0
      %1976 = vmatpush1.msra.mxu0 0.0
      %1977 = vmatprep.subr.mxu0 0.0
      %1978 = vmatpush1.msra.mxu0 0.0
      %1979 = vmatprep.subr.mxu0 0.0
      %1980 = vmatpush1.msra.mxu0 0.0
      %1981 = vmatprep.subr.mxu0 0.0
      %1982 = vmatpush1.msra.mxu0 0.0
      %1983 = vmatprep.subr.mxu0 0.0
      %1984 = vmatpush1.msra.mxu0 0.0
      %1985 = vmatprep.subr.mxu0 0.0
      %1986 = vmatpush1.msra.mxu0 0.0
      %1987 = vmatprep.subr.mxu0 0.0
      %1988 = vmatpush1.msra.mxu0 0.0
      %1989 = vmatprep.subr.mxu0 0.0
      %1990 = vmatpush1.msra.mxu0 0.0
      %1991 = vmatprep.subr.mxu0 0.0
      %1992 = vmatpush1.msra.mxu0 0.0
      %1993 = vmatprep.subr.mxu0 0.0
      %1994 = vmatpush1.msra.mxu0 0.0
      %1995 = vmatprep.subr.mxu0 0.0
      %1996 = vmatpush1.msra.mxu0 0.0
      %1997 = vmatprep.subr.mxu0 0.0
      %1998 = vmatpush1.msra.mxu0 0.0
      %1999 = vmatprep.subr.mxu0 0.0
      %2000 = vmatpush1.msra.mxu0 0.0
      %2001 = vmatprep.subr.mxu0 0.0
      %2002 = vmatpush1.msra.mxu0 0.0
      %2003 = vmatprep.subr.mxu0 0.0
      %2004 = vmatpush1.msra.mxu0 0.0
      %2005 = vmatprep.subr.mxu0 0.0
      %2006 = vmatpush1.msra.mxu0 0.0
      %2007 = vmatprep.subr.mxu0 0.0
      %2008 = vmatpush1.msra.mxu0 0.0
      %2009 = vmatprep.subr.mxu0 0.0
      %2010 = vmatpush1.msra.mxu0 0.0
      %2011 = vmatprep.subr.mxu0 0.0
      %2012 = vmatpush1.msra.mxu0 0.0
      %2013 = vmatprep.subr.mxu0 0.0
      %2014 = vmatpush1.msra.mxu0 0.0
      %2015 = vmatprep.mubr.f32.mxu0 0.0
      %2016 = vmatmul.mubr.f32.gmra.mrb[0].mxu0 %v1856
      %v2017 = vpop.f32.mrb[0].mxu0
      %v2018 = vadd.f32 0.0, %v2017
      %v2019 = vpop.f32.mrb[0].mxu0
      %2020 = vmatprep.mubr.f32.mxu0 0.0
      %2021 = vmatmul.mubr.f32.gmra.mrb[0].mxu0 %v1859
      %v2022 = vpop.f32.mrb[0].mxu0
      %v2023 = vadd.f32 0.0, %v2022
      %v2024 = vpop.f32.mrb[0].mxu0
      %2025 = vmatprep.mubr.f32.mxu0 0.0
      %2026 = vmatmul.mubr.f32.gmra.mrb[0].mxu0 %v1862
      %v2027 = vpop.f32.mrb[0].mxu0
      %v2028 = vadd.f32 0.0, %v2027
      %v2029 = vpop.f32.mrb[0].mxu0
      %2030 = vmatprep.mubr.f32.mxu0 0.0
      %2031 = vmatmul.mubr.f32.gmra.mrb[0].mxu0 %v1865
      %v2032 = vpop.f32.mrb[0].mxu0
      %v2033 = vadd.f32 0.0, %v2032
      %v2034 = vpop.f32.mrb[0].mxu0
      %2035 = vmatprep.mubr.f32.mxu0 0.0
      %2036 = vmatmul.mubr.f32.gmra.mrb[0].mxu0 %v1868
      %v2037 = vpop.f32.mrb[0].mxu0
      %v2038 = vadd.f32 0.0, %v2037
      %v2039 = vpop.f32.mrb[0].mxu0
      %2040 = vmatprep.mubr.f32.mxu0 0.0
      %2041 = vmatmul.mubr.f32.gmra.mrb[0].mxu0 %v1871
      %v2042 = vpop.f32.mrb[0].mxu0
      %v2043 = vadd.f32 0.0, %v2042
      %v2044 = vpop.f32.mrb[0].mxu0
      %2045 = vmatprep.mubr.f32.mxu0 0.0
      %2046 = vmatmul.mubr.f32.gmra.mrb[0].mxu0 %v1874
      %v2047 = vpop.f32.mrb[0].mxu0
      %v2048 = vadd.f32 0.0, %v2047
      %v2049 = vpop.f32.mrb[0].mxu0
      %2050 = vmatprep.mubr.f32.mxu0 0.0
      %2051 = vmatmul.mubr.f32.gmra.mrb[0].mxu0 %v1877
      %v2052 = vpop.f32.mrb[0].mxu0
      %v2053 = vadd.f32 0.0, %v2052
      %v2054 = vpop.f32.mrb[0].mxu0
      %2055 = vmatprep.mubr.f32.mxu0 0.0
      %2056 = vmatmul.mubr.f32.gmra.mrb[0].mxu0 %v1880
      %v2057 = vpop.f32.mrb[0].mxu0
      %v2058 = vadd.f32 0.0, %v2057
      %v2059 = vpop.f32.mrb[0].mxu0
      %2060 = vmatprep.mubr.f32.mxu0 0.0
      %2061 = vmatmul.mubr.f32.gmra.mrb[0].mxu0 %v1883
      %v2062 = vpop.f32.mrb[0].mxu0
      %v2063 = vadd.f32 0.0, %v2062
      %v2064 = vpop.f32.mrb[0].mxu0
      %2065 = vmatprep.mubr.f32.mxu0 0.0
      %2066 = vmatmul.mubr.f32.gmra.mrb[0].mxu0 %v1886
      %v2067 = vpop.f32.mrb[0].mxu0
      %v2068 = vadd.f32 0.0, %v2067
      %v2069 = vpop.f32.mrb[0].mxu0
      %2070 = vmatprep.mubr.f32.mxu0 0.0
      %2071 = vmatmul.mubr.f32.gmra.mrb[0].mxu0 %v1889
      %v2072 = vpop.f32.mrb[0].mxu0
      %v2073 = vadd.f32 0.0, %v2072
      %v2074 = vpop.f32.mrb[0].mxu0
      %2075 = vmatprep.mubr.f32.mxu0 0.0
      %2076 = vmatmul.mubr.f32.gmra.mrb[0].mxu0 %v1892
      %v2077 = vpop.f32.mrb[0].mxu0
      %v2078 = vadd.f32 0.0, %v2077
      %v2079 = vpop.f32.mrb[0].mxu0
      %2080 = vmatprep.mubr.f32.mxu0 0.0
      %2081 = vmatmul.mubr.f32.gmra.mrb[0].mxu0 %v1895
      %v2082 = vpop.f32.mrb[0].mxu0
      %v2083 = vadd.f32 0.0, %v2082
      %v2084 = vpop.f32.mrb[0].mxu0
      %2085 = vmatprep.mubr.f32.mxu0 0.0
      %2086 = vmatmul.mubr.f32.gmra.mrb[0].mxu0 %v1898
      %v2087 = vpop.f32.mrb[0].mxu0
      %v2088 = vadd.f32 0.0, %v2087
      %v2089 = vpop.f32.mrb[0].mxu0
      %2090 = vmatprep.mubr.f32.mxu0 0.0
      %2091 = vmatmul.mubr.f32.gmra.mrb[0].mxu0 %v1901
      %v2092 = vpop.f32.mrb[0].mxu0
      %v2093 = vadd.f32 0.0, %v2092
      %v2094 = vpop.f32.mrb[0].mxu0
      %2095 = vmatprep.mubr.f32.mxu0 0.0
      %2096 = vmatmul.mubr.f32.gmra.mrb[0].mxu0 %v1904
      %v2097 = vpop.f32.mrb[0].mxu0
      %v2098 = vadd.f32 0.0, %v2097
      %v2099 = vpop.f32.mrb[0].mxu0
      %2100 = vmatprep.mubr.f32.mxu0 0.0
      %2101 = vmatmul.mubr.f32.gmra.mrb[0].mxu0 %v1907
      %v2102 = vpop.f32.mrb[0].mxu0
      %v2103 = vadd.f32 0.0, %v2102
      %v2104 = vpop.f32.mrb[0].mxu0
      %2105 = vmatprep.mubr.f32.mxu0 0.0
      %2106 = vmatmul.mubr.f32.gmra.mrb[0].mxu0 %v1910
      %v2107 = vpop.f32.mrb[0].mxu0
      %v2108 = vadd.f32 0.0, %v2107
      %v2109 = vpop.f32.mrb[0].mxu0
      %2110 = vmatprep.mubr.f32.mxu0 0.0
      %2111 = vmatmul.mubr.f32.gmra.mrb[0].mxu0 %v1913
      %v2112 = vpop.f32.mrb[0].mxu0
      %v2113 = vadd.f32 0.0, %v2112
      %v2114 = vpop.f32.mrb[0].mxu0
      %2115 = vmatprep.mubr.f32.mxu0 0.0
      %2116 = vmatmul.mubr.f32.gmra.mrb[0].mxu0 %v1916
      %v2117 = vpop.f32.mrb[0].mxu0
      %v2118 = vadd.f32 0.0, %v2117
      %v2119 = vpop.f32.mrb[0].mxu0
      %2120 = vmatprep.mubr.f32.mxu0 0.0
      %2121 = vmatmul.mubr.f32.gmra.mrb[0].mxu0 %v1919
      %v2122 = vpop.f32.mrb[0].mxu0
      %v2123 = vadd.f32 0.0, %v2122
      %v2124 = vpop.f32.mrb[0].mxu0
      %2125 = vmatprep.mubr.f32.mxu0 0.0
      %2126 = vmatmul.mubr.f32.gmra.mrb[0].mxu0 %v1922
      %v2127 = vpop.f32.mrb[0].mxu0
      %v2128 = vadd.f32 0.0, %v2127
      %v2129 = vpop.f32.mrb[0].mxu0
      %2130 = vmatprep.mubr.f32.mxu0 0.0
      %2131 = vmatmul.mubr.f32.gmra.mrb[0].mxu0 %v1925
      %v2132 = vpop.f32.mrb[0].mxu0
      %v2133 = vadd.f32 0.0, %v2132
      %v2134 = vpop.f32.mrb[0].mxu0
      %2135 = vmatprep.mubr.f32.mxu0 0.0
      %2136 = vmatmul.mubr.f32.gmra.mrb[0].mxu0 %v1928
      %v2137 = vpop.f32.mrb[0].mxu0
      %v2138 = vadd.f32 0.0, %v2137
      %v2139 = vpop.f32.mrb[0].mxu0
      %2140 = vmatprep.mubr.f32.mxu0 0.0
      %2141 = vmatmul.mubr.f32.gmra.mrb[0].mxu0 %v1931
      %v2142 = vpop.f32.mrb[0].mxu0
      %v2143 = vadd.f32 0.0, %v2142
      %v2144 = vpop.f32.mrb[0].mxu0
      %2145 = vmatprep.mubr.f32.mxu0 0.0
      %2146 = vmatmul.mubr.f32.gmra.mrb[0].mxu0 %v1934
      %v2147 = vpop.f32.mrb[0].mxu0
      %v2148 = vadd.f32 0.0, %v2147
      %v2149 = vpop.f32.mrb[0].mxu0
      %2150 = vmatprep.mubr.f32.mxu0 0.0
      %2151 = vmatmul.mubr.f32.gmra.mrb[0].mxu0 %v1937
      %v2152 = vpop.f32.mrb[0].mxu0
      %v2153 = vadd.f32 0.0, %v2152
      %v2154 = vpop.f32.mrb[0].mxu0
      %2155 = vmatprep.mubr.f32.mxu0 0.0
      %2156 = vmatmul.mubr.f32.gmra.mrb[0].mxu0 %v1940
      %v2157 = vpop.f32.mrb[0].mxu0
      %v2158 = vadd.f32 0.0, %v2157
      %v2159 = vpop.f32.mrb[0].mxu0
      %2160 = vmatprep.mubr.f32.mxu0 0.0
      %2161 = vmatmul.mubr.f32.gmra.mrb[0].mxu0 %v1943
      %v2162 = vpop.f32.mrb[0].mxu0
      %v2163 = vadd.f32 0.0, %v2162
      %v2164 = vpop.f32.mrb[0].mxu0
      %2165 = vmatprep.mubr.f32.mxu0 0.0
      %2166 = vmatmul.mubr.f32.gmra.mrb[0].mxu0 %v1946
      %v2167 = vpop.f32.mrb[0].mxu0
      %v2168 = vadd.f32 0.0, %v2167
      %v2169 = vpop.f32.mrb[0].mxu0
      %2170 = vmatprep.mubr.f32.mxu0 0.0
      %2171 = vmatmul.mubr.f32.gmra.mrb[0].mxu0 %v1949
      %v2172 = vpop.f32.mrb[0].mxu0
      %v2173 = vadd.f32 0.0, %v2172
      %v2174 = vpop.f32.mrb[0].mxu0
      %2175 = vdwg.mxu0
      %v2176 = vld [vmem:[#allocation3] sm:$0xff]
      %v2177 = vld [vmem:[#allocation3 + $0x8] sm:$0xff]
      %v2178 = vld [vmem:[#allocation3 + $0x10] sm:$0xff]
      %v2179 = vld [vmem:[#allocation3 + $0x18] sm:$0xff]
      %v2180 = vld [vmem:[#allocation3 + $0x20] sm:$0xff]
      %v2181 = vld [vmem:[#allocation3 + $0x28] sm:$0xff]
      %v2182 = vld [vmem:[#allocation3 + $0x30] sm:$0xff]
      %v2183 = vld [vmem:[#allocation3 + $0x38] sm:$0xff]
      %v2184 = vld [vmem:[#allocation3 + $0x40] sm:$0xff]
      %v2185 = vld [vmem:[#allocation3 + $0x48] sm:$0xff]
      %v2186 = vld [vmem:[#allocation3 + $0x50] sm:$0xff]
      %v2187 = vld [vmem:[#allocation3 + $0x58] sm:$0xff]
      %v2188 = vld [vmem:[#allocation3 + $0x60] sm:$0xff]
      %v2189 = vld [vmem:[#allocation3 + $0x68] sm:$0xff]
      %v2190 = vld [vmem:[#allocation3 + $0x70] sm:$0xff]
      %v2191 = vld [vmem:[#allocation3 + $0x78] sm:$0xff]
      %v2192 = vld [vmem:[#allocation3 + $0x80] sm:$0xff]
      %v2193 = vld [vmem:[#allocation3 + $0x88] sm:$0xff]
      %v2194 = vld [vmem:[#allocation3 + $0x90] sm:$0xff]
      %v2195 = vld [vmem:[#allocation3 + $0x98] sm:$0xff]
      %v2196 = vld [vmem:[#allocation3 + $0xa0] sm:$0xff]
      %v2197 = vld [vmem:[#allocation3 + $0xa8] sm:$0xff]
      %v2198 = vld [vmem:[#allocation3 + $0xb0] sm:$0xff]
      %v2199 = vld [vmem:[#allocation3 + $0xb8] sm:$0xff]
      %v2200 = vld [vmem:[#allocation3 + $0xc0] sm:$0xff]
      %v2201 = vld [vmem:[#allocation3 + $0xc8] sm:$0xff]
      %v2202 = vld [vmem:[#allocation3 + $0xd0] sm:$0xff]
      %v2203 = vld [vmem:[#allocation3 + $0xd8] sm:$0xff]
      %v2204 = vld [vmem:[#allocation3 + $0xe0] sm:$0xff]
      %v2205 = vld [vmem:[#allocation3 + $0xe8] sm:$0xff]
      %v2206 = vld [vmem:[#allocation3 + $0xf0] sm:$0xff]
      %v2207 = vld [vmem:[#allocation3 + $0xf8] sm:$0xff]
      %v2208 = vadd.f32 %v2176, %v2018
      %v2209 = vadd.f32 %v2177, %v2023
      %v2210 = vadd.f32 %v2178, %v2028
      %v2211 = vadd.f32 %v2179, %v2033
      %v2212 = vadd.f32 %v2180, %v2038
      %v2213 = vadd.f32 %v2181, %v2043
      %v2214 = vadd.f32 %v2182, %v2048
      %v2215 = vadd.f32 %v2183, %v2053
      %v2216 = vadd.f32 %v2184, %v2058
      %v2217 = vadd.f32 %v2185, %v2063
      %v2218 = vadd.f32 %v2186, %v2068
      %v2219 = vadd.f32 %v2187, %v2073
      %v2220 = vadd.f32 %v2188, %v2078
      %v2221 = vadd.f32 %v2189, %v2083
      %v2222 = vadd.f32 %v2190, %v2088
      %v2223 = vadd.f32 %v2191, %v2093
      %v2224 = vadd.f32 %v2192, %v2098
      %v2225 = vadd.f32 %v2193, %v2103
      %v2226 = vadd.f32 %v2194, %v2108
      %v2227 = vadd.f32 %v2195, %v2113
      %v2228 = vadd.f32 %v2196, %v2118
      %v2229 = vadd.f32 %v2197, %v2123
      %v2230 = vadd.f32 %v2198, %v2128
      %v2231 = vadd.f32 %v2199, %v2133
      %v2232 = vadd.f32 %v2200, %v2138
      %v2233 = vadd.f32 %v2201, %v2143
      %v2234 = vadd.f32 %v2202, %v2148
      %v2235 = vadd.f32 %v2203, %v2153
      %v2236 = vadd.f32 %v2204, %v2158
      %v2237 = vadd.f32 %v2205, %v2163
      %v2238 = vadd.f32 %v2206, %v2168
      %v2239 = vadd.f32 %v2207, %v2173
      %2240 = vst.msk [vmem:[#allocation3] sm:$0xff] %vm236, %v2208
      %2241 = vst.msk [vmem:[#allocation3 + $0x8] sm:$0xff] %vm236, %v2209
      %2242 = vst.msk [vmem:[#allocation3 + $0x10] sm:$0xff] %vm236, %v2210
      %2243 = vst.msk [vmem:[#allocation3 + $0x18] sm:$0xff] %vm236, %v2211
      %2244 = vst.msk [vmem:[#allocation3 + $0x20] sm:$0xff] %vm236, %v2212
      %2245 = vst.msk [vmem:[#allocation3 + $0x28] sm:$0xff] %vm236, %v2213
      %2246 = vst.msk [vmem:[#allocation3 + $0x30] sm:$0xff] %vm236, %v2214
      %2247 = vst.msk [vmem:[#allocation3 + $0x38] sm:$0xff] %vm236, %v2215
      %2248 = vst.msk [vmem:[#allocation3 + $0x40] sm:$0xff] %vm236, %v2216
      %2249 = vst.msk [vmem:[#allocation3 + $0x48] sm:$0xff] %vm236, %v2217
      %2250 = vst.msk [vmem:[#allocation3 + $0x50] sm:$0xff] %vm236, %v2218
      %2251 = vst.msk [vmem:[#allocation3 + $0x58] sm:$0xff] %vm236, %v2219
      %2252 = vst.msk [vmem:[#allocation3 + $0x60] sm:$0xff] %vm236, %v2220
      %2253 = vst.msk [vmem:[#allocation3 + $0x68] sm:$0xff] %vm236, %v2221
      %2254 = vst.msk [vmem:[#allocation3 + $0x70] sm:$0xff] %vm236, %v2222
      %2255 = vst.msk [vmem:[#allocation3 + $0x78] sm:$0xff] %vm236, %v2223
      %2256 = vst.msk [vmem:[#allocation3 + $0x80] sm:$0xff] %vm236, %v2224
      %2257 = vst.msk [vmem:[#allocation3 + $0x88] sm:$0xff] %vm236, %v2225
      %2258 = vst.msk [vmem:[#allocation3 + $0x90] sm:$0xff] %vm236, %v2226
      %2259 = vst.msk [vmem:[#allocation3 + $0x98] sm:$0xff] %vm236, %v2227
      %2260 = vst.msk [vmem:[#allocation3 + $0xa0] sm:$0xff] %vm236, %v2228
      %2261 = vst.msk [vmem:[#allocation3 + $0xa8] sm:$0xff] %vm236, %v2229
      %2262 = vst.msk [vmem:[#allocation3 + $0xb0] sm:$0xff] %vm236, %v2230
      %2263 = vst.msk [vmem:[#allocation3 + $0xb8] sm:$0xff] %vm236, %v2231
      %2264 = vst.msk [vmem:[#allocation3 + $0xc0] sm:$0xff] %vm236, %v2232
      %2265 = vst.msk [vmem:[#allocation3 + $0xc8] sm:$0xff] %vm236, %v2233
      %2266 = vst.msk [vmem:[#allocation3 + $0xd0] sm:$0xff] %vm236, %v2234
      %2267 = vst.msk [vmem:[#allocation3 + $0xd8] sm:$0xff] %vm236, %v2235
      %2268 = vst.msk [vmem:[#allocation3 + $0xe0] sm:$0xff] %vm236, %v2236
      %2269 = vst.msk [vmem:[#allocation3 + $0xe8] sm:$0xff] %vm236, %v2237
      %2270 = vst.msk [vmem:[#allocation3 + $0xf0] sm:$0xff] %vm236, %v2238
      %2271 = vst.msk [vmem:[#allocation3 + $0xf8] sm:$0xff] %vm236, %v2239
      %s2272 = scalar_lea.vmem [#allocation2], 48
      %v2273 = vld [vmem:[%s2272] sm:$0xff]
      %v2274 = vld [vmem:[%s2272 + $0x8] sm:$0xff]
      %v2275 = vld [vmem:[%s2272 + $0x10] sm:$0x3]
      %v2276 = vld [vmem:[%s2272 + $0x18] sm:$0xff]
      %v2277 = vld [vmem:[%s2272 + $0x20] sm:$0xff]
      %v2278 = vld [vmem:[%s2272 + $0x28] sm:$0x3]
      %v2279 = vld [vmem:[%s2272 + $0x30] sm:$0xff]
      %v2280 = vld [vmem:[%s2272 + $0x38] sm:$0xff]
      %v2281 = vld [vmem:[%s2272 + $0x40] sm:$0x3]
      %v2282 = vld [vmem:[%s2272 + $0x48] sm:$0xff]
      %v2283 = vld [vmem:[%s2272 + $0x50] sm:$0xff]
      %v2284 = vld [vmem:[%s2272 + $0x58] sm:$0x3]
      %v2285 = vld [vmem:[%s2272 + $0x60] sm:$0xff]
      %v2286 = vld [vmem:[%s2272 + $0x68] sm:$0xff]
      %v2287 = vld [vmem:[%s2272 + $0x70] sm:$0x3]
      %v2288 = vld [vmem:[%s2272 + $0x78] sm:$0xff]
      %v2289 = vld [vmem:[%s2272 + $0x80] sm:$0xff]
      %v2290 = vld [vmem:[%s2272 + $0x88] sm:$0x3]
      %v2291 = vld [vmem:[%s2272 + $0x90] sm:$0xff]
      %v2292 = vld [vmem:[%s2272 + $0x98] sm:$0xff]
      %v2293 = vld [vmem:[%s2272 + $0xa0] sm:$0x3]
      %v2294 = vld [vmem:[%s2272 + $0xa8] sm:$0xff]
      %v2295 = vld [vmem:[%s2272 + $0xb0] sm:$0xff]
      %v2296 = vld [vmem:[%s2272 + $0xb8] sm:$0x3]
      %v2297 = vld [vmem:[%s2272 + $0xc0] sm:$0xff]
      %v2298 = vld [vmem:[%s2272 + $0xc8] sm:$0xff]
      %v2299 = vld [vmem:[%s2272 + $0xd0] sm:$0x3]
      %v2300 = vld [vmem:[%s2272 + $0xd8] sm:$0xff]
      %v2301 = vld [vmem:[%s2272 + $0xe0] sm:$0xff]
      %v2302 = vld [vmem:[%s2272 + $0xe8] sm:$0x3]
      %v2303 = vld [vmem:[%s2272 + $0xf0] sm:$0xff]
      %v2304 = vld [vmem:[%s2272 + $0xf8] sm:$0xff]
      %v2305 = vld [vmem:[%s2272 + $0x100] sm:$0x3]
      %v2306 = vld [vmem:[%s2272 + $0x108] sm:$0xff]
      %v2307 = vld [vmem:[%s2272 + $0x110] sm:$0xff]
      %v2308 = vld [vmem:[%s2272 + $0x118] sm:$0x3]
      %v2309 = vld [vmem:[%s2272 + $0x120] sm:$0xff]
      %v2310 = vld [vmem:[%s2272 + $0x128] sm:$0xff]
      %v2311 = vld [vmem:[%s2272 + $0x130] sm:$0x3]
      %v2312 = vld [vmem:[%s2272 + $0x138] sm:$0xff]
      %v2313 = vld [vmem:[%s2272 + $0x140] sm:$0xff]
      %v2314 = vld [vmem:[%s2272 + $0x148] sm:$0x3]
      %v2315 = vld [vmem:[%s2272 + $0x150] sm:$0xff]
      %v2316 = vld [vmem:[%s2272 + $0x158] sm:$0xff]
      %v2317 = vld [vmem:[%s2272 + $0x160] sm:$0x3]
      %v2318 = vld [vmem:[%s2272 + $0x168] sm:$0xff]
      %v2319 = vld [vmem:[%s2272 + $0x170] sm:$0xff]
      %v2320 = vld [vmem:[%s2272 + $0x178] sm:$0x3]
      %v2369 = vrot.slane %v2273, 1
      %v2370 = vrot.slane %v2274, 1
      %v2371 = vsel %vm563, %v2369, %v2370
      %v2372 = vrot.slane %v2275, 1
      %v2373 = vsel %vm563, %v2370, %v2372
      %v2374 = vrot.slane %v2276, 1
      %v2375 = vrot.slane %v2277, 1
      %v2376 = vsel %vm563, %v2374, %v2375
      %v2377 = vrot.slane %v2278, 1
      %v2378 = vsel %vm563, %v2375, %v2377
      %v2379 = vrot.slane %v2279, 1
      %v2380 = vrot.slane %v2280, 1
      %v2381 = vsel %vm563, %v2379, %v2380
      %v2382 = vrot.slane %v2281, 1
      %v2383 = vsel %vm563, %v2380, %v2382
      %v2384 = vrot.slane %v2282, 1
      %v2385 = vrot.slane %v2283, 1
      %v2386 = vsel %vm563, %v2384, %v2385
      %v2387 = vrot.slane %v2284, 1
      %v2388 = vsel %vm563, %v2385, %v2387
      %v2389 = vrot.slane %v2285, 1
      %v2390 = vrot.slane %v2286, 1
      %v2391 = vsel %vm563, %v2389, %v2390
      %v2392 = vrot.slane %v2287, 1
      %v2393 = vsel %vm563, %v2390, %v2392
      %v2394 = vrot.slane %v2288, 1
      %v2395 = vrot.slane %v2289, 1
      %v2396 = vsel %vm563, %v2394, %v2395
      %v2397 = vrot.slane %v2290, 1
      %v2398 = vsel %vm563, %v2395, %v2397
      %v2399 = vrot.slane %v2291, 1
      %v2400 = vrot.slane %v2292, 1
      %v2401 = vsel %vm563, %v2399, %v2400
      %v2402 = vrot.slane %v2293, 1
      %v2403 = vsel %vm563, %v2400, %v2402
      %v2404 = vrot.slane %v2294, 1
      %v2405 = vrot.slane %v2295, 1
      %v2406 = vsel %vm563, %v2404, %v2405
      %v2407 = vrot.slane %v2296, 1
      %v2408 = vsel %vm563, %v2405, %v2407
      %v2409 = vrot.slane %v2297, 1
      %v2410 = vrot.slane %v2298, 1
      %v2411 = vsel %vm563, %v2409, %v2410
      %v2412 = vrot.slane %v2299, 1
      %v2413 = vsel %vm563, %v2410, %v2412
      %v2414 = vrot.slane %v2300, 1
      %v2415 = vrot.slane %v2301, 1
      %v2416 = vsel %vm563, %v2414, %v2415
      %v2417 = vrot.slane %v2302, 1
      %v2418 = vsel %vm563, %v2415, %v2417
      %v2419 = vrot.slane %v2303, 1
      %v2420 = vrot.slane %v2304, 1
      %v2421 = vsel %vm563, %v2419, %v2420
      %v2422 = vrot.slane %v2305, 1
      %v2423 = vsel %vm563, %v2420, %v2422
      %v2424 = vrot.slane %v2306, 1
      %v2425 = vrot.slane %v2307, 1
      %v2426 = vsel %vm563, %v2424, %v2425
      %v2427 = vrot.slane %v2308, 1
      %v2428 = vsel %vm563, %v2425, %v2427
      %v2429 = vrot.slane %v2309, 1
      %v2430 = vrot.slane %v2310, 1
      %v2431 = vsel %vm563, %v2429, %v2430
      %v2432 = vrot.slane %v2311, 1
      %v2433 = vsel %vm563, %v2430, %v2432
      %v2434 = vrot.slane %v2312, 1
      %v2435 = vrot.slane %v2313, 1
      %v2436 = vsel %vm563, %v2434, %v2435
      %v2437 = vrot.slane %v2314, 1
      %v2438 = vsel %vm563, %v2435, %v2437
      %v2439 = vrot.slane %v2315, 1
      %v2440 = vrot.slane %v2316, 1
      %v2441 = vsel %vm563, %v2439, %v2440
      %v2442 = vrot.slane %v2317, 1
      %v2443 = vsel %vm563, %v2440, %v2442
      %v2444 = vrot.slane %v2318, 1
      %v2445 = vrot.slane %v2319, 1
      %v2446 = vsel %vm563, %v2444, %v2445
      %v2447 = vrot.slane %v2320, 1
      %v2448 = vsel %vm563, %v2445, %v2447
      %2449 = vrot.lane.b32.xlu0 %v2371, 8
      %v2450 = vpop.permute.xlu0 %2449
      %2451 = vrot.lane.b32.xlu0 %v2373, 8
      %v2452 = vpop.permute.xlu0 %2451
      %2453 = vrot.lane.b32.xlu0 %v2376, 8
      %v2454 = vpop.permute.xlu0 %2453
      %2455 = vrot.lane.b32.xlu0 %v2378, 8
      %v2456 = vpop.permute.xlu0 %2455
      %2457 = vrot.lane.b32.xlu0 %v2381, 8
      %v2458 = vpop.permute.xlu0 %2457
      %2459 = vrot.lane.b32.xlu0 %v2383, 8
      %v2460 = vpop.permute.xlu0 %2459
      %2461 = vrot.lane.b32.xlu0 %v2386, 8
      %v2462 = vpop.permute.xlu0 %2461
      %2463 = vrot.lane.b32.xlu0 %v2388, 8
      %v2464 = vpop.permute.xlu0 %2463
      %2465 = vrot.lane.b32.xlu0 %v2391, 8
      %v2466 = vpop.permute.xlu0 %2465
      %2467 = vrot.lane.b32.xlu0 %v2393, 8
      %v2468 = vpop.permute.xlu0 %2467
      %2469 = vrot.lane.b32.xlu0 %v2396, 8
      %v2470 = vpop.permute.xlu0 %2469
      %2471 = vrot.lane.b32.xlu0 %v2398, 8
      %v2472 = vpop.permute.xlu0 %2471
      %2473 = vrot.lane.b32.xlu0 %v2401, 8
      %v2474 = vpop.permute.xlu0 %2473
      %2475 = vrot.lane.b32.xlu0 %v2403, 8
      %v2476 = vpop.permute.xlu0 %2475
      %2477 = vrot.lane.b32.xlu0 %v2406, 8
      %v2478 = vpop.permute.xlu0 %2477
      %2479 = vrot.lane.b32.xlu0 %v2408, 8
      %v2480 = vpop.permute.xlu0 %2479
      %2481 = vrot.lane.b32.xlu0 %v2411, 8
      %v2482 = vpop.permute.xlu0 %2481
      %2483 = vrot.lane.b32.xlu0 %v2413, 8
      %v2484 = vpop.permute.xlu0 %2483
      %2485 = vrot.lane.b32.xlu0 %v2416, 8
      %v2486 = vpop.permute.xlu0 %2485
      %2487 = vrot.lane.b32.xlu0 %v2418, 8
      %v2488 = vpop.permute.xlu0 %2487
      %2489 = vrot.lane.b32.xlu0 %v2421, 8
      %v2490 = vpop.permute.xlu0 %2489
      %2491 = vrot.lane.b32.xlu0 %v2423, 8
      %v2492 = vpop.permute.xlu0 %2491
      %2493 = vrot.lane.b32.xlu0 %v2426, 8
      %v2494 = vpop.permute.xlu0 %2493
      %2495 = vrot.lane.b32.xlu0 %v2428, 8
      %v2496 = vpop.permute.xlu0 %2495
      %2497 = vrot.lane.b32.xlu0 %v2431, 8
      %v2498 = vpop.permute.xlu0 %2497
      %2499 = vrot.lane.b32.xlu0 %v2433, 8
      %v2500 = vpop.permute.xlu0 %2499
      %2501 = vrot.lane.b32.xlu0 %v2436, 8
      %v2502 = vpop.permute.xlu0 %2501
      %2503 = vrot.lane.b32.xlu0 %v2438, 8
      %v2504 = vpop.permute.xlu0 %2503
      %2505 = vrot.lane.b32.xlu0 %v2441, 8
      %v2506 = vpop.permute.xlu0 %2505
      %2507 = vrot.lane.b32.xlu0 %v2443, 8
      %v2508 = vpop.permute.xlu0 %2507
      %2509 = vrot.lane.b32.xlu0 %v2446, 8
      %v2510 = vpop.permute.xlu0 %2509
      %2511 = vrot.lane.b32.xlu0 %v2448, 8
      %v2512 = vpop.permute.xlu0 %2511
      %v2545 = vrot.slane %v2273, 2
      %v2546 = vrot.slane %v2274, 2
      %v2547 = vsel %vm740, %v2545, %v2546
      %v2548 = vrot.slane %v2275, 2
      %v2549 = vsel %vm740, %v2546, %v2548
      %v2550 = vrot.slane %v2276, 2
      %v2551 = vrot.slane %v2277, 2
      %v2552 = vsel %vm740, %v2550, %v2551
      %v2553 = vrot.slane %v2278, 2
      %v2554 = vsel %vm740, %v2551, %v2553
      %v2555 = vrot.slane %v2279, 2
      %v2556 = vrot.slane %v2280, 2
      %v2557 = vsel %vm740, %v2555, %v2556
      %v2558 = vrot.slane %v2281, 2
      %v2559 = vsel %vm740, %v2556, %v2558
      %v2560 = vrot.slane %v2282, 2
      %v2561 = vrot.slane %v2283, 2
      %v2562 = vsel %vm740, %v2560, %v2561
      %v2563 = vrot.slane %v2284, 2
      %v2564 = vsel %vm740, %v2561, %v2563
      %v2565 = vrot.slane %v2285, 2
      %v2566 = vrot.slane %v2286, 2
      %v2567 = vsel %vm740, %v2565, %v2566
      %v2568 = vrot.slane %v2287, 2
      %v2569 = vsel %vm740, %v2566, %v2568
      %v2570 = vrot.slane %v2288, 2
      %v2571 = vrot.slane %v2289, 2
      %v2572 = vsel %vm740, %v2570, %v2571
      %v2573 = vrot.slane %v2290, 2
      %v2574 = vsel %vm740, %v2571, %v2573
      %v2575 = vrot.slane %v2291, 2
      %v2576 = vrot.slane %v2292, 2
      %v2577 = vsel %vm740, %v2575, %v2576
      %v2578 = vrot.slane %v2293, 2
      %v2579 = vsel %vm740, %v2576, %v2578
      %v2580 = vrot.slane %v2294, 2
      %v2581 = vrot.slane %v2295, 2
      %v2582 = vsel %vm740, %v2580, %v2581
      %v2583 = vrot.slane %v2296, 2
      %v2584 = vsel %vm740, %v2581, %v2583
      %v2585 = vrot.slane %v2297, 2
      %v2586 = vrot.slane %v2298, 2
      %v2587 = vsel %vm740, %v2585, %v2586
      %v2588 = vrot.slane %v2299, 2
      %v2589 = vsel %vm740, %v2586, %v2588
      %v2590 = vrot.slane %v2300, 2
      %v2591 = vrot.slane %v2301, 2
      %v2592 = vsel %vm740, %v2590, %v2591
      %v2593 = vrot.slane %v2302, 2
      %v2594 = vsel %vm740, %v2591, %v2593
      %v2595 = vrot.slane %v2303, 2
      %v2596 = vrot.slane %v2304, 2
      %v2597 = vsel %vm740, %v2595, %v2596
      %v2598 = vrot.slane %v2305, 2
      %v2599 = vsel %vm740, %v2596, %v2598
      %v2600 = vrot.slane %v2306, 2
      %v2601 = vrot.slane %v2307, 2
      %v2602 = vsel %vm740, %v2600, %v2601
      %v2603 = vrot.slane %v2308, 2
      %v2604 = vsel %vm740, %v2601, %v2603
      %v2605 = vrot.slane %v2309, 2
      %v2606 = vrot.slane %v2310, 2
      %v2607 = vsel %vm740, %v2605, %v2606
      %v2608 = vrot.slane %v2311, 2
      %v2609 = vsel %vm740, %v2606, %v2608
      %v2610 = vrot.slane %v2312, 2
      %v2611 = vrot.slane %v2313, 2
      %v2612 = vsel %vm740, %v2610, %v2611
      %v2613 = vrot.slane %v2314, 2
      %v2614 = vsel %vm740, %v2611, %v2613
      %v2615 = vrot.slane %v2315, 2
      %v2616 = vrot.slane %v2316, 2
      %v2617 = vsel %vm740, %v2615, %v2616
      %v2618 = vrot.slane %v2317, 2
      %v2619 = vsel %vm740, %v2616, %v2618
      %v2620 = vrot.slane %v2318, 2
      %v2621 = vrot.slane %v2319, 2
      %v2622 = vsel %vm740, %v2620, %v2621
      %v2623 = vrot.slane %v2320, 2
      %v2624 = vsel %vm740, %v2621, %v2623
      %2625 = vrot.lane.b32.xlu0 %v2547, 16
      %v2626 = vpop.permute.xlu0 %2625
      %2627 = vrot.lane.b32.xlu0 %v2549, 16
      %v2628 = vpop.permute.xlu0 %2627
      %2629 = vrot.lane.b32.xlu0 %v2552, 16
      %v2630 = vpop.permute.xlu0 %2629
      %2631 = vrot.lane.b32.xlu0 %v2554, 16
      %v2632 = vpop.permute.xlu0 %2631
      %2633 = vrot.lane.b32.xlu0 %v2557, 16
      %v2634 = vpop.permute.xlu0 %2633
      %2635 = vrot.lane.b32.xlu0 %v2559, 16
      %v2636 = vpop.permute.xlu0 %2635
      %2637 = vrot.lane.b32.xlu0 %v2562, 16
      %v2638 = vpop.permute.xlu0 %2637
      %2639 = vrot.lane.b32.xlu0 %v2564, 16
      %v2640 = vpop.permute.xlu0 %2639
      %2641 = vrot.lane.b32.xlu0 %v2567, 16
      %v2642 = vpop.permute.xlu0 %2641
      %2643 = vrot.lane.b32.xlu0 %v2569, 16
      %v2644 = vpop.permute.xlu0 %2643
      %2645 = vrot.lane.b32.xlu0 %v2572, 16
      %v2646 = vpop.permute.xlu0 %2645
      %2647 = vrot.lane.b32.xlu0 %v2574, 16
      %v2648 = vpop.permute.xlu0 %2647
      %2649 = vrot.lane.b32.xlu0 %v2577, 16
      %v2650 = vpop.permute.xlu0 %2649
      %2651 = vrot.lane.b32.xlu0 %v2579, 16
      %v2652 = vpop.permute.xlu0 %2651
      %2653 = vrot.lane.b32.xlu0 %v2582, 16
      %v2654 = vpop.permute.xlu0 %2653
      %2655 = vrot.lane.b32.xlu0 %v2584, 16
      %v2656 = vpop.permute.xlu0 %2655
      %2657 = vrot.lane.b32.xlu0 %v2587, 16
      %v2658 = vpop.permute.xlu0 %2657
      %2659 = vrot.lane.b32.xlu0 %v2589, 16
      %v2660 = vpop.permute.xlu0 %2659
      %2661 = vrot.lane.b32.xlu0 %v2592, 16
      %v2662 = vpop.permute.xlu0 %2661
      %2663 = vrot.lane.b32.xlu0 %v2594, 16
      %v2664 = vpop.permute.xlu0 %2663
      %2665 = vrot.lane.b32.xlu0 %v2597, 16
      %v2666 = vpop.permute.xlu0 %2665
      %2667 = vrot.lane.b32.xlu0 %v2599, 16
      %v2668 = vpop.permute.xlu0 %2667
      %2669 = vrot.lane.b32.xlu0 %v2602, 16
      %v2670 = vpop.permute.xlu0 %2669
      %2671 = vrot.lane.b32.xlu0 %v2604, 16
      %v2672 = vpop.permute.xlu0 %2671
      %2673 = vrot.lane.b32.xlu0 %v2607, 16
      %v2674 = vpop.permute.xlu0 %2673
      %2675 = vrot.lane.b32.xlu0 %v2609, 16
      %v2676 = vpop.permute.xlu0 %2675
      %2677 = vrot.lane.b32.xlu0 %v2612, 16
      %v2678 = vpop.permute.xlu0 %2677
      %2679 = vrot.lane.b32.xlu0 %v2614, 16
      %v2680 = vpop.permute.xlu0 %2679
      %2681 = vrot.lane.b32.xlu0 %v2617, 16
      %v2682 = vpop.permute.xlu0 %2681
      %2683 = vrot.lane.b32.xlu0 %v2619, 16
      %v2684 = vpop.permute.xlu0 %2683
      %2685 = vrot.lane.b32.xlu0 %v2622, 16
      %v2686 = vpop.permute.xlu0 %2685
      %2687 = vrot.lane.b32.xlu0 %v2624, 16
      %v2688 = vpop.permute.xlu0 %2687
      %v2721 = vsel %vm236, %v2273, %v2450
      %v2722 = vsel %vm236, %v2274, %v2452
      %v2723 = vsel %vm236, %v2276, %v2454
      %v2724 = vsel %vm236, %v2277, %v2456
      %v2725 = vsel %vm236, %v2279, %v2458
      %v2726 = vsel %vm236, %v2280, %v2460
      %v2727 = vsel %vm236, %v2282, %v2462
      %v2728 = vsel %vm236, %v2283, %v2464
      %v2729 = vsel %vm236, %v2285, %v2466
      %v2730 = vsel %vm236, %v2286, %v2468
      %v2731 = vsel %vm236, %v2288, %v2470
      %v2732 = vsel %vm236, %v2289, %v2472
      %v2733 = vsel %vm236, %v2291, %v2474
      %v2734 = vsel %vm236, %v2292, %v2476
      %v2735 = vsel %vm236, %v2294, %v2478
      %v2736 = vsel %vm236, %v2295, %v2480
      %v2737 = vsel %vm236, %v2297, %v2482
      %v2738 = vsel %vm236, %v2298, %v2484
      %v2739 = vsel %vm236, %v2300, %v2486
      %v2740 = vsel %vm236, %v2301, %v2488
      %v2741 = vsel %vm236, %v2303, %v2490
      %v2742 = vsel %vm236, %v2304, %v2492
      %v2743 = vsel %vm236, %v2306, %v2494
      %v2744 = vsel %vm236, %v2307, %v2496
      %v2745 = vsel %vm236, %v2309, %v2498
      %v2746 = vsel %vm236, %v2310, %v2500
      %v2747 = vsel %vm236, %v2312, %v2502
      %v2748 = vsel %vm236, %v2313, %v2504
      %v2749 = vsel %vm236, %v2315, %v2506
      %v2750 = vsel %vm236, %v2316, %v2508
      %v2751 = vsel %vm236, %v2318, %v2510
      %v2752 = vsel %vm236, %v2319, %v2512
      %v2753 = vsel %vm949, %v2721, %v2626
      %v2754 = vsel %vm949, %v2722, %v2628
      %v2755 = vsel %vm949, %v2723, %v2630
      %v2756 = vsel %vm949, %v2724, %v2632
      %v2757 = vsel %vm949, %v2725, %v2634
      %v2758 = vsel %vm949, %v2726, %v2636
      %v2759 = vsel %vm949, %v2727, %v2638
      %v2760 = vsel %vm949, %v2728, %v2640
      %v2761 = vsel %vm949, %v2729, %v2642
      %v2762 = vsel %vm949, %v2730, %v2644
      %v2763 = vsel %vm949, %v2731, %v2646
      %v2764 = vsel %vm949, %v2732, %v2648
      %v2765 = vsel %vm949, %v2733, %v2650
      %v2766 = vsel %vm949, %v2734, %v2652
      %v2767 = vsel %vm949, %v2735, %v2654
      %v2768 = vsel %vm949, %v2736, %v2656
      %v2769 = vsel %vm949, %v2737, %v2658
      %v2770 = vsel %vm949, %v2738, %v2660
      %v2771 = vsel %vm949, %v2739, %v2662
      %v2772 = vsel %vm949, %v2740, %v2664
      %v2773 = vsel %vm949, %v2741, %v2666
      %v2774 = vsel %vm949, %v2742, %v2668
      %v2775 = vsel %vm949, %v2743, %v2670
      %v2776 = vsel %vm949, %v2744, %v2672
      %v2777 = vsel %vm949, %v2745, %v2674
      %v2778 = vsel %vm949, %v2746, %v2676
      %v2779 = vsel %vm949, %v2747, %v2678
      %v2780 = vsel %vm949, %v2748, %v2680
      %v2781 = vsel %vm949, %v2749, %v2682
      %v2782 = vsel %vm949, %v2750, %v2684
      %v2783 = vsel %vm949, %v2751, %v2686
      %v2784 = vsel %vm949, %v2752, %v2688
      %s2785 = scalar_lea.vmem %s1, 48
      %v2786 = vld [vmem:[%s2785] sm:$0xff]
      %v2787 = vld [vmem:[%s2785 + $0x8] sm:$0xff]
      %v2788 = vld [vmem:[%s2785 + $0x10] sm:$0xff]
      %v2790 = vsel %vm985, %v2753, 0
      %v2793 = vsel %vm985, %v2754, 0
      %v2796 = vsel %vm985, %v2755, 0
      %v2799 = vsel %vm985, %v2756, 0
      %v2802 = vsel %vm985, %v2757, 0
      %v2805 = vsel %vm985, %v2758, 0
      %v2808 = vsel %vm985, %v2759, 0
      %v2811 = vsel %vm985, %v2760, 0
      %v2814 = vsel %vm985, %v2761, 0
      %v2817 = vsel %vm985, %v2762, 0
      %v2820 = vsel %vm985, %v2763, 0
      %v2823 = vsel %vm985, %v2764, 0
      %v2826 = vsel %vm985, %v2765, 0
      %v2829 = vsel %vm985, %v2766, 0
      %v2832 = vsel %vm985, %v2767, 0
      %v2835 = vsel %vm985, %v2768, 0
      %v2838 = vsel %vm985, %v2769, 0
      %v2841 = vsel %vm985, %v2770, 0
      %v2844 = vsel %vm985, %v2771, 0
      %v2847 = vsel %vm985, %v2772, 0
      %v2850 = vsel %vm985, %v2773, 0
      %v2853 = vsel %vm985, %v2774, 0
      %v2856 = vsel %vm985, %v2775, 0
      %v2859 = vsel %vm985, %v2776, 0
      %v2862 = vsel %vm985, %v2777, 0
      %v2865 = vsel %vm985, %v2778, 0
      %v2868 = vsel %vm985, %v2779, 0
      %v2871 = vsel %vm985, %v2780, 0
      %v2874 = vsel %vm985, %v2781, 0
      %v2877 = vsel %vm985, %v2782, 0
      %v2880 = vsel %vm985, %v2783, 0
      %v2883 = vsel %vm985, %v2784, 0
      %2885 = vmatprep.subr.mxu0 0.0
      %2886 = vmatpush1.msra.mxu0 %v2786
      %2887 = vmatprep.subr.mxu0 0.0
      %2888 = vmatpush1.msra.mxu0 %v2787
      %2889 = vmatprep.subr.mxu0 0.0
      %2890 = vmatpush1.msra.mxu0 %v2788
      %2891 = vmatprep.subr.mxu0 0.0
      %2892 = vmatpush1.msra.mxu0 0.0
      %2893 = vmatprep.subr.mxu0 0.0
      %2894 = vmatpush1.msra.mxu0 0.0
      %2895 = vmatprep.subr.mxu0 0.0
      %2896 = vmatpush1.msra.mxu0 0.0
      %2897 = vmatprep.subr.mxu0 0.0
      %2898 = vmatpush1.msra.mxu0 0.0
      %2899 = vmatprep.subr.mxu0 0.0
      %2900 = vmatpush1.msra.mxu0 0.0
      %2901 = vmatprep.subr.mxu0 0.0
      %2902 = vmatpush1.msra.mxu0 0.0
      %2903 = vmatprep.subr.mxu0 0.0
      %2904 = vmatpush1.msra.mxu0 0.0
      %2905 = vmatprep.subr.mxu0 0.0
      %2906 = vmatpush1.msra.mxu0 0.0
      %2907 = vmatprep.subr.mxu0 0.0
      %2908 = vmatpush1.msra.mxu0 0.0
      %2909 = vmatprep.subr.mxu0 0.0
      %2910 = vmatpush1.msra.mxu0 0.0
      %2911 = vmatprep.subr.mxu0 0.0
      %2912 = vmatpush1.msra.mxu0 0.0
      %2913 = vmatprep.subr.mxu0 0.0
      %2914 = vmatpush1.msra.mxu0 0.0
      %2915 = vmatprep.subr.mxu0 0.0
      %2916 = vmatpush1.msra.mxu0 0.0
      %2917 = vmatprep.subr.mxu0 0.0
      %2918 = vmatpush1.msra.mxu0 0.0
      %2919 = vmatprep.subr.mxu0 0.0
      %2920 = vmatpush1.msra.mxu0 0.0
      %2921 = vmatprep.subr.mxu0 0.0
      %2922 = vmatpush1.msra.mxu0 0.0
      %2923 = vmatprep.subr.mxu0 0.0
      %2924 = vmatpush1.msra.mxu0 0.0
      %2925 = vmatprep.subr.mxu0 0.0
      %2926 = vmatpush1.msra.mxu0 0.0
      %2927 = vmatprep.subr.mxu0 0.0
      %2928 = vmatpush1.msra.mxu0 0.0
      %2929 = vmatprep.subr.mxu0 0.0
      %2930 = vmatpush1.msra.mxu0 0.0
      %2931 = vmatprep.subr.mxu0 0.0
      %2932 = vmatpush1.msra.mxu0 0.0
      %2933 = vmatprep.subr.mxu0 0.0
      %2934 = vmatpush1.msra.mxu0 0.0
      %2935 = vmatprep.subr.mxu0 0.0
      %2936 = vmatpush1.msra.mxu0 0.0
      %2937 = vmatprep.subr.mxu0 0.0
      %2938 = vmatpush1.msra.mxu0 0.0
      %2939 = vmatprep.subr.mxu0 0.0
      %2940 = vmatpush1.msra.mxu0 0.0
      %2941 = vmatprep.subr.mxu0 0.0
      %2942 = vmatpush1.msra.mxu0 0.0
      %2943 = vmatprep.subr.mxu0 0.0
      %2944 = vmatpush1.msra.mxu0 0.0
      %2945 = vmatprep.subr.mxu0 0.0
      %2946 = vmatpush1.msra.mxu0 0.0
      %2947 = vmatprep.subr.mxu0 0.0
      %2948 = vmatpush1.msra.mxu0 0.0
      %2949 = vmatprep.mubr.f32.mxu0 0.0
      %2950 = vmatmul.mubr.f32.gmra.mrb[0].mxu0 %v2790
      %v2951 = vpop.f32.mrb[0].mxu0
      %v2952 = vadd.f32 0.0, %v2951
      %v2953 = vpop.f32.mrb[0].mxu0
      %2954 = vmatprep.mubr.f32.mxu0 0.0
      %2955 = vmatmul.mubr.f32.gmra.mrb[0].mxu0 %v2793
      %v2956 = vpop.f32.mrb[0].mxu0
      %v2957 = vadd.f32 0.0, %v2956
      %v2958 = vpop.f32.mrb[0].mxu0
      %2959 = vmatprep.mubr.f32.mxu0 0.0
      %2960 = vmatmul.mubr.f32.gmra.mrb[0].mxu0 %v2796
      %v2961 = vpop.f32.mrb[0].mxu0
      %v2962 = vadd.f32 0.0, %v2961
      %v2963 = vpop.f32.mrb[0].mxu0
      %2964 = vmatprep.mubr.f32.mxu0 0.0
      %2965 = vmatmul.mubr.f32.gmra.mrb[0].mxu0 %v2799
      %v2966 = vpop.f32.mrb[0].mxu0
      %v2967 = vadd.f32 0.0, %v2966
      %v2968 = vpop.f32.mrb[0].mxu0
      %2969 = vmatprep.mubr.f32.mxu0 0.0
      %2970 = vmatmul.mubr.f32.gmra.mrb[0].mxu0 %v2802
      %v2971 = vpop.f32.mrb[0].mxu0
      %v2972 = vadd.f32 0.0, %v2971
      %v2973 = vpop.f32.mrb[0].mxu0
      %2974 = vmatprep.mubr.f32.mxu0 0.0
      %2975 = vmatmul.mubr.f32.gmra.mrb[0].mxu0 %v2805
      %v2976 = vpop.f32.mrb[0].mxu0
      %v2977 = vadd.f32 0.0, %v2976
      %v2978 = vpop.f32.mrb[0].mxu0
      %2979 = vmatprep.mubr.f32.mxu0 0.0
      %2980 = vmatmul.mubr.f32.gmra.mrb[0].mxu0 %v2808
      %v2981 = vpop.f32.mrb[0].mxu0
      %v2982 = vadd.f32 0.0, %v2981
      %v2983 = vpop.f32.mrb[0].mxu0
      %2984 = vmatprep.mubr.f32.mxu0 0.0
      %2985 = vmatmul.mubr.f32.gmra.mrb[0].mxu0 %v2811
      %v2986 = vpop.f32.mrb[0].mxu0
      %v2987 = vadd.f32 0.0, %v2986
      %v2988 = vpop.f32.mrb[0].mxu0
      %2989 = vmatprep.mubr.f32.mxu0 0.0
      %2990 = vmatmul.mubr.f32.gmra.mrb[0].mxu0 %v2814
      %v2991 = vpop.f32.mrb[0].mxu0
      %v2992 = vadd.f32 0.0, %v2991
      %v2993 = vpop.f32.mrb[0].mxu0
      %2994 = vmatprep.mubr.f32.mxu0 0.0
      %2995 = vmatmul.mubr.f32.gmra.mrb[0].mxu0 %v2817
      %v2996 = vpop.f32.mrb[0].mxu0
      %v2997 = vadd.f32 0.0, %v2996
      %v2998 = vpop.f32.mrb[0].mxu0
      %2999 = vmatprep.mubr.f32.mxu0 0.0
      %3000 = vmatmul.mubr.f32.gmra.mrb[0].mxu0 %v2820
      %v3001 = vpop.f32.mrb[0].mxu0
      %v3002 = vadd.f32 0.0, %v3001
      %v3003 = vpop.f32.mrb[0].mxu0
      %3004 = vmatprep.mubr.f32.mxu0 0.0
      %3005 = vmatmul.mubr.f32.gmra.mrb[0].mxu0 %v2823
      %v3006 = vpop.f32.mrb[0].mxu0
      %v3007 = vadd.f32 0.0, %v3006
      %v3008 = vpop.f32.mrb[0].mxu0
      %3009 = vmatprep.mubr.f32.mxu0 0.0
      %3010 = vmatmul.mubr.f32.gmra.mrb[0].mxu0 %v2826
      %v3011 = vpop.f32.mrb[0].mxu0
      %v3012 = vadd.f32 0.0, %v3011
      %v3013 = vpop.f32.mrb[0].mxu0
      %3014 = vmatprep.mubr.f32.mxu0 0.0
      %3015 = vmatmul.mubr.f32.gmra.mrb[0].mxu0 %v2829
      %v3016 = vpop.f32.mrb[0].mxu0
      %v3017 = vadd.f32 0.0, %v3016
      %v3018 = vpop.f32.mrb[0].mxu0
      %3019 = vmatprep.mubr.f32.mxu0 0.0
      %3020 = vmatmul.mubr.f32.gmra.mrb[0].mxu0 %v2832
      %v3021 = vpop.f32.mrb[0].mxu0
      %v3022 = vadd.f32 0.0, %v3021
      %v3023 = vpop.f32.mrb[0].mxu0
      %3024 = vmatprep.mubr.f32.mxu0 0.0
      %3025 = vmatmul.mubr.f32.gmra.mrb[0].mxu0 %v2835
      %v3026 = vpop.f32.mrb[0].mxu0
      %v3027 = vadd.f32 0.0, %v3026
      %v3028 = vpop.f32.mrb[0].mxu0
      %3029 = vmatprep.mubr.f32.mxu0 0.0
      %3030 = vmatmul.mubr.f32.gmra.mrb[0].mxu0 %v2838
      %v3031 = vpop.f32.mrb[0].mxu0
      %v3032 = vadd.f32 0.0, %v3031
      %v3033 = vpop.f32.mrb[0].mxu0
      %3034 = vmatprep.mubr.f32.mxu0 0.0
      %3035 = vmatmul.mubr.f32.gmra.mrb[0].mxu0 %v2841
      %v3036 = vpop.f32.mrb[0].mxu0
      %v3037 = vadd.f32 0.0, %v3036
      %v3038 = vpop.f32.mrb[0].mxu0
      %3039 = vmatprep.mubr.f32.mxu0 0.0
      %3040 = vmatmul.mubr.f32.gmra.mrb[0].mxu0 %v2844
      %v3041 = vpop.f32.mrb[0].mxu0
      %v3042 = vadd.f32 0.0, %v3041
      %v3043 = vpop.f32.mrb[0].mxu0
      %3044 = vmatprep.mubr.f32.mxu0 0.0
      %3045 = vmatmul.mubr.f32.gmra.mrb[0].mxu0 %v2847
      %v3046 = vpop.f32.mrb[0].mxu0
      %v3047 = vadd.f32 0.0, %v3046
      %v3048 = vpop.f32.mrb[0].mxu0
      %3049 = vmatprep.mubr.f32.mxu0 0.0
      %3050 = vmatmul.mubr.f32.gmra.mrb[0].mxu0 %v2850
      %v3051 = vpop.f32.mrb[0].mxu0
      %v3052 = vadd.f32 0.0, %v3051
      %v3053 = vpop.f32.mrb[0].mxu0
      %3054 = vmatprep.mubr.f32.mxu0 0.0
      %3055 = vmatmul.mubr.f32.gmra.mrb[0].mxu0 %v2853
      %v3056 = vpop.f32.mrb[0].mxu0
      %v3057 = vadd.f32 0.0, %v3056
      %v3058 = vpop.f32.mrb[0].mxu0
      %3059 = vmatprep.mubr.f32.mxu0 0.0
      %3060 = vmatmul.mubr.f32.gmra.mrb[0].mxu0 %v2856
      %v3061 = vpop.f32.mrb[0].mxu0
      %v3062 = vadd.f32 0.0, %v3061
      %v3063 = vpop.f32.mrb[0].mxu0
      %3064 = vmatprep.mubr.f32.mxu0 0.0
      %3065 = vmatmul.mubr.f32.gmra.mrb[0].mxu0 %v2859
      %v3066 = vpop.f32.mrb[0].mxu0
      %v3067 = vadd.f32 0.0, %v3066
      %v3068 = vpop.f32.mrb[0].mxu0
      %3069 = vmatprep.mubr.f32.mxu0 0.0
      %3070 = vmatmul.mubr.f32.gmra.mrb[0].mxu0 %v2862
      %v3071 = vpop.f32.mrb[0].mxu0
      %v3072 = vadd.f32 0.0, %v3071
      %v3073 = vpop.f32.mrb[0].mxu0
      %3074 = vmatprep.mubr.f32.mxu0 0.0
      %3075 = vmatmul.mubr.f32.gmra.mrb[0].mxu0 %v2865
      %v3076 = vpop.f32.mrb[0].mxu0
      %v3077 = vadd.f32 0.0, %v3076
      %v3078 = vpop.f32.mrb[0].mxu0
      %3079 = vmatprep.mubr.f32.mxu0 0.0
      %3080 = vmatmul.mubr.f32.gmra.mrb[0].mxu0 %v2868
      %v3081 = vpop.f32.mrb[0].mxu0
      %v3082 = vadd.f32 0.0, %v3081
      %v3083 = vpop.f32.mrb[0].mxu0
      %3084 = vmatprep.mubr.f32.mxu0 0.0
      %3085 = vmatmul.mubr.f32.gmra.mrb[0].mxu0 %v2871
      %v3086 = vpop.f32.mrb[0].mxu0
      %v3087 = vadd.f32 0.0, %v3086
      %v3088 = vpop.f32.mrb[0].mxu0
      %3089 = vmatprep.mubr.f32.mxu0 0.0
      %3090 = vmatmul.mubr.f32.gmra.mrb[0].mxu0 %v2874
      %v3091 = vpop.f32.mrb[0].mxu0
      %v3092 = vadd.f32 0.0, %v3091
      %v3093 = vpop.f32.mrb[0].mxu0
      %3094 = vmatprep.mubr.f32.mxu0 0.0
      %3095 = vmatmul.mubr.f32.gmra.mrb[0].mxu0 %v2877
      %v3096 = vpop.f32.mrb[0].mxu0
      %v3097 = vadd.f32 0.0, %v3096
      %v3098 = vpop.f32.mrb[0].mxu0
      %3099 = vmatprep.mubr.f32.mxu0 0.0
      %3100 = vmatmul.mubr.f32.gmra.mrb[0].mxu0 %v2880
      %v3101 = vpop.f32.mrb[0].mxu0
      %v3102 = vadd.f32 0.0, %v3101
      %v3103 = vpop.f32.mrb[0].mxu0
      %3104 = vmatprep.mubr.f32.mxu0 0.0
      %3105 = vmatmul.mubr.f32.gmra.mrb[0].mxu0 %v2883
      %v3106 = vpop.f32.mrb[0].mxu0
      %v3107 = vadd.f32 0.0, %v3106
      %v3108 = vpop.f32.mrb[0].mxu0
      %3109 = vdwg.mxu0
      %v3110 = vld [vmem:[#allocation3] sm:$0xff]
      %v3111 = vld [vmem:[#allocation3 + $0x8] sm:$0xff]
      %v3112 = vld [vmem:[#allocation3 + $0x10] sm:$0xff]
      %v3113 = vld [vmem:[#allocation3 + $0x18] sm:$0xff]
      %v3114 = vld [vmem:[#allocation3 + $0x20] sm:$0xff]
      %v3115 = vld [vmem:[#allocation3 + $0x28] sm:$0xff]
      %v3116 = vld [vmem:[#allocation3 + $0x30] sm:$0xff]
      %v3117 = vld [vmem:[#allocation3 + $0x38] sm:$0xff]
      %v3118 = vld [vmem:[#allocation3 + $0x40] sm:$0xff]
      %v3119 = vld [vmem:[#allocation3 + $0x48] sm:$0xff]
      %v3120 = vld [vmem:[#allocation3 + $0x50] sm:$0xff]
      %v3121 = vld [vmem:[#allocation3 + $0x58] sm:$0xff]
      %v3122 = vld [vmem:[#allocation3 + $0x60] sm:$0xff]
      %v3123 = vld [vmem:[#allocation3 + $0x68] sm:$0xff]
      %v3124 = vld [vmem:[#allocation3 + $0x70] sm:$0xff]
      %v3125 = vld [vmem:[#allocation3 + $0x78] sm:$0xff]
      %v3126 = vld [vmem:[#allocation3 + $0x80] sm:$0xff]
      %v3127 = vld [vmem:[#allocation3 + $0x88] sm:$0xff]
      %v3128 = vld [vmem:[#allocation3 + $0x90] sm:$0xff]
      %v3129 = vld [vmem:[#allocation3 + $0x98] sm:$0xff]
      %v3130 = vld [vmem:[#allocation3 + $0xa0] sm:$0xff]
      %v3131 = vld [vmem:[#allocation3 + $0xa8] sm:$0xff]
      %v3132 = vld [vmem:[#allocation3 + $0xb0] sm:$0xff]
      %v3133 = vld [vmem:[#allocation3 + $0xb8] sm:$0xff]
      %v3134 = vld [vmem:[#allocation3 + $0xc0] sm:$0xff]
      %v3135 = vld [vmem:[#allocation3 + $0xc8] sm:$0xff]
      %v3136 = vld [vmem:[#allocation3 + $0xd0] sm:$0xff]
      %v3137 = vld [vmem:[#allocation3 + $0xd8] sm:$0xff]
      %v3138 = vld [vmem:[#allocation3 + $0xe0] sm:$0xff]
      %v3139 = vld [vmem:[#allocation3 + $0xe8] sm:$0xff]
      %v3140 = vld [vmem:[#allocation3 + $0xf0] sm:$0xff]
      %v3141 = vld [vmem:[#allocation3 + $0xf8] sm:$0xff]
      %v3142 = vadd.f32 %v3110, %v2952
      %v3143 = vadd.f32 %v3111, %v2957
      %v3144 = vadd.f32 %v3112, %v2962
      %v3145 = vadd.f32 %v3113, %v2967
      %v3146 = vadd.f32 %v3114, %v2972
      %v3147 = vadd.f32 %v3115, %v2977
      %v3148 = vadd.f32 %v3116, %v2982
      %v3149 = vadd.f32 %v3117, %v2987
      %v3150 = vadd.f32 %v3118, %v2992
      %v3151 = vadd.f32 %v3119, %v2997
      %v3152 = vadd.f32 %v3120, %v3002
      %v3153 = vadd.f32 %v3121, %v3007
      %v3154 = vadd.f32 %v3122, %v3012
      %v3155 = vadd.f32 %v3123, %v3017
      %v3156 = vadd.f32 %v3124, %v3022
      %v3157 = vadd.f32 %v3125, %v3027
      %v3158 = vadd.f32 %v3126, %v3032
      %v3159 = vadd.f32 %v3127, %v3037
      %v3160 = vadd.f32 %v3128, %v3042
      %v3161 = vadd.f32 %v3129, %v3047
      %v3162 = vadd.f32 %v3130, %v3052
      %v3163 = vadd.f32 %v3131, %v3057
      %v3164 = vadd.f32 %v3132, %v3062
      %v3165 = vadd.f32 %v3133, %v3067
      %v3166 = vadd.f32 %v3134, %v3072
      %v3167 = vadd.f32 %v3135, %v3077
      %v3168 = vadd.f32 %v3136, %v3082
      %v3169 = vadd.f32 %v3137, %v3087
      %v3170 = vadd.f32 %v3138, %v3092
      %v3171 = vadd.f32 %v3139, %v3097
      %v3172 = vadd.f32 %v3140, %v3102
      %v3173 = vadd.f32 %v3141, %v3107
      %3174 = vst.msk [vmem:[#allocation3] sm:$0xff] %vm236, %v3142
      %3175 = vst.msk [vmem:[#allocation3 + $0x8] sm:$0xff] %vm236, %v3143
      %3176 = vst.msk [vmem:[#allocation3 + $0x10] sm:$0xff] %vm236, %v3144
      %3177 = vst.msk [vmem:[#allocation3 + $0x18] sm:$0xff] %vm236, %v3145
      %3178 = vst.msk [vmem:[#allocation3 + $0x20] sm:$0xff] %vm236, %v3146
      %3179 = vst.msk [vmem:[#allocation3 + $0x28] sm:$0xff] %vm236, %v3147
      %3180 = vst.msk [vmem:[#allocation3 + $0x30] sm:$0xff] %vm236, %v3148
      %3181 = vst.msk [vmem:[#allocation3 + $0x38] sm:$0xff] %vm236, %v3149
      %3182 = vst.msk [vmem:[#allocation3 + $0x40] sm:$0xff] %vm236, %v3150
      %3183 = vst.msk [vmem:[#allocation3 + $0x48] sm:$0xff] %vm236, %v3151
      %3184 = vst.msk [vmem:[#allocation3 + $0x50] sm:$0xff] %vm236, %v3152
      %3185 = vst.msk [vmem:[#allocation3 + $0x58] sm:$0xff] %vm236, %v3153
      %3186 = vst.msk [vmem:[#allocation3 + $0x60] sm:$0xff] %vm236, %v3154
      %3187 = vst.msk [vmem:[#allocation3 + $0x68] sm:$0xff] %vm236, %v3155
      %3188 = vst.msk [vmem:[#allocation3 + $0x70] sm:$0xff] %vm236, %v3156
      %3189 = vst.msk [vmem:[#allocation3 + $0x78] sm:$0xff] %vm236, %v3157
      %3190 = vst.msk [vmem:[#allocation3 + $0x80] sm:$0xff] %vm236, %v3158
      %3191 = vst.msk [vmem:[#allocation3 + $0x88] sm:$0xff] %vm236, %v3159
      %3192 = vst.msk [vmem:[#allocation3 + $0x90] sm:$0xff] %vm236, %v3160
      %3193 = vst.msk [vmem:[#allocation3 + $0x98] sm:$0xff] %vm236, %v3161
      %3194 = vst.msk [vmem:[#allocation3 + $0xa0] sm:$0xff] %vm236, %v3162
      %3195 = vst.msk [vmem:[#allocation3 + $0xa8] sm:$0xff] %vm236, %v3163
      %3196 = vst.msk [vmem:[#allocation3 + $0xb0] sm:$0xff] %vm236, %v3164
      %3197 = vst.msk [vmem:[#allocation3 + $0xb8] sm:$0xff] %vm236, %v3165
      %3198 = vst.msk [vmem:[#allocation3 + $0xc0] sm:$0xff] %vm236, %v3166
      %3199 = vst.msk [vmem:[#allocation3 + $0xc8] sm:$0xff] %vm236, %v3167
      %3200 = vst.msk [vmem:[#allocation3 + $0xd0] sm:$0xff] %vm236, %v3168
      %3201 = vst.msk [vmem:[#allocation3 + $0xd8] sm:$0xff] %vm236, %v3169
      %3202 = vst.msk [vmem:[#allocation3 + $0xe0] sm:$0xff] %vm236, %v3170
      %3203 = vst.msk [vmem:[#allocation3 + $0xe8] sm:$0xff] %vm236, %v3171
      %3204 = vst.msk [vmem:[#allocation3 + $0xf0] sm:$0xff] %vm236, %v3172
      %3205 = vst.msk [vmem:[#allocation3 + $0xf8] sm:$0xff] %vm236, %v3173
      %v3206 = vld [vmem:[#allocation3] sm:$0xff]
      %v3207 = vld [vmem:[#allocation3 + $0x8] sm:$0xff]
      %v3208 = vld [vmem:[#allocation3 + $0x10] sm:$0xff]
      %v3209 = vld [vmem:[#allocation3 + $0x18] sm:$0xff]
      %v3210 = vld [vmem:[#allocation3 + $0x20] sm:$0xff]
      %v3211 = vld [vmem:[#allocation3 + $0x28] sm:$0xff]
      %v3212 = vld [vmem:[#allocation3 + $0x30] sm:$0xff]
      %v3213 = vld [vmem:[#allocation3 + $0x38] sm:$0xff]
      %v3214 = vld [vmem:[#allocation3 + $0x40] sm:$0xff]
      %v3215 = vld [vmem:[#allocation3 + $0x48] sm:$0xff]
      %v3216 = vld [vmem:[#allocation3 + $0x50] sm:$0xff]
      %v3217 = vld [vmem:[#allocation3 + $0x58] sm:$0xff]
      %v3218 = vld [vmem:[#allocation3 + $0x60] sm:$0xff]
      %v3219 = vld [vmem:[#allocation3 + $0x68] sm:$0xff]
      %v3220 = vld [vmem:[#allocation3 + $0x70] sm:$0xff]
      %v3221 = vld [vmem:[#allocation3 + $0x78] sm:$0xff]
      %v3222 = vld [vmem:[#allocation3 + $0x80] sm:$0xff]
      %v3223 = vld [vmem:[#allocation3 + $0x88] sm:$0xff]
      %v3224 = vld [vmem:[#allocation3 + $0x90] sm:$0xff]
      %v3225 = vld [vmem:[#allocation3 + $0x98] sm:$0xff]
      %v3226 = vld [vmem:[#allocation3 + $0xa0] sm:$0xff]
      %v3227 = vld [vmem:[#allocation3 + $0xa8] sm:$0xff]
      %v3228 = vld [vmem:[#allocation3 + $0xb0] sm:$0xff]
      %v3229 = vld [vmem:[#allocation3 + $0xb8] sm:$0xff]
      %v3230 = vld [vmem:[#allocation3 + $0xc0] sm:$0xff]
      %v3231 = vld [vmem:[#allocation3 + $0xc8] sm:$0xff]
      %v3232 = vld [vmem:[#allocation3 + $0xd0] sm:$0xff]
      %v3233 = vld [vmem:[#allocation3 + $0xd8] sm:$0xff]
      %v3234 = vld [vmem:[#allocation3 + $0xe0] sm:$0xff]
      %v3235 = vld [vmem:[#allocation3 + $0xe8] sm:$0xff]
      %v3236 = vld [vmem:[#allocation3 + $0xf0] sm:$0xff]
      %v3237 = vld [vmem:[#allocation3 + $0xf8] sm:$0xff]
      %3238 = vst.msk [vmem:[%s231] sm:$0xff] %vm236, %v3206
      %3239 = vst.msk [vmem:[%s231 + $0x8] sm:$0xff] %vm236, %v3207
      %3240 = vst.msk [vmem:[%s231 + $0x10] sm:$0xff] %vm236, %v3208
      %3241 = vst.msk [vmem:[%s231 + $0x18] sm:$0xff] %vm236, %v3209
      %3242 = vst.msk [vmem:[%s231 + $0x20] sm:$0xff] %vm236, %v3210
      %3243 = vst.msk [vmem:[%s231 + $0x28] sm:$0xff] %vm236, %v3211
      %3244 = vst.msk [vmem:[%s231 + $0x30] sm:$0xff] %vm236, %v3212
      %3245 = vst.msk [vmem:[%s231 + $0x38] sm:$0xff] %vm236, %v3213
      %3246 = vst.msk [vmem:[%s231 + $0x40] sm:$0xff] %vm236, %v3214
      %3247 = vst.msk [vmem:[%s231 + $0x48] sm:$0xff] %vm236, %v3215
      %3248 = vst.msk [vmem:[%s231 + $0x50] sm:$0xff] %vm236, %v3216
      %3249 = vst.msk [vmem:[%s231 + $0x58] sm:$0xff] %vm236, %v3217
      %3250 = vst.msk [vmem:[%s231 + $0x60] sm:$0xff] %vm236, %v3218
      %3251 = vst.msk [vmem:[%s231 + $0x68] sm:$0xff] %vm236, %v3219
      %3252 = vst.msk [vmem:[%s231 + $0x70] sm:$0xff] %vm236, %v3220
      %3253 = vst.msk [vmem:[%s231 + $0x78] sm:$0xff] %vm236, %v3221
      %3254 = vst.msk [vmem:[%s231 + $0x80] sm:$0xff] %vm236, %v3222
      %3255 = vst.msk [vmem:[%s231 + $0x88] sm:$0xff] %vm236, %v3223
      %3256 = vst.msk [vmem:[%s231 + $0x90] sm:$0xff] %vm236, %v3224
      %3257 = vst.msk [vmem:[%s231 + $0x98] sm:$0xff] %vm236, %v3225
      %3258 = vst.msk [vmem:[%s231 + $0xa0] sm:$0xff] %vm236, %v3226
      %3259 = vst.msk [vmem:[%s231 + $0xa8] sm:$0xff] %vm236, %v3227
      %3260 = vst.msk [vmem:[%s231 + $0xb0] sm:$0xff] %vm236, %v3228
      %3261 = vst.msk [vmem:[%s231 + $0xb8] sm:$0xff] %vm236, %v3229
      %3262 = vst.msk [vmem:[%s231 + $0xc0] sm:$0xff] %vm236, %v3230
      %3263 = vst.msk [vmem:[%s231 + $0xc8] sm:$0xff] %vm236, %v3231
      %3264 = vst.msk [vmem:[%s231 + $0xd0] sm:$0xff] %vm236, %v3232
      %3265 = vst.msk [vmem:[%s231 + $0xd8] sm:$0xff] %vm236, %v3233
      %3266 = vst.msk [vmem:[%s231 + $0xe0] sm:$0xff] %vm236, %v3234
      %3267 = vst.msk [vmem:[%s231 + $0xe8] sm:$0xff] %vm236, %v3235
      %3268 = vst.msk [vmem:[%s231 + $0xf0] sm:$0xff] %vm236, %v3236
      %3269 = vst.msk [vmem:[%s231 + $0xf8] sm:$0xff] %vm236, %v3237
      %v3270 = vsel %vm236, %v3206, 0.0
      %v3271 = vsel %vm236, %v3207, 0.0
      %v3272 = vadd.f32 %v3270, %v3271
      %v3273 = vsel %vm236, %v3208, 0.0
      %v3274 = vadd.f32 %v3272, %v3273
      %v3275 = vsel %vm236, %v3209, 0.0
      %v3276 = vadd.f32 %v3274, %v3275
      %v3277 = vsel %vm236, %v3210, 0.0
      %v3278 = vadd.f32 %v3276, %v3277
      %v3279 = vsel %vm236, %v3211, 0.0
      %v3280 = vadd.f32 %v3278, %v3279
      %v3281 = vsel %vm236, %v3212, 0.0
      %v3282 = vadd.f32 %v3280, %v3281
      %v3283 = vsel %vm236, %v3213, 0.0
      %v3284 = vadd.f32 %v3282, %v3283
      %v3285 = vsel %vm236, %v3214, 0.0
      %v3286 = vadd.f32 %v3284, %v3285
      %v3287 = vsel %vm236, %v3215, 0.0
      %v3288 = vadd.f32 %v3286, %v3287
      %v3289 = vsel %vm236, %v3216, 0.0
      %v3290 = vadd.f32 %v3288, %v3289
      %v3291 = vsel %vm236, %v3217, 0.0
      %v3292 = vadd.f32 %v3290, %v3291
      %v3293 = vsel %vm236, %v3218, 0.0
      %v3294 = vadd.f32 %v3292, %v3293
      %v3295 = vsel %vm236, %v3219, 0.0
      %v3296 = vadd.f32 %v3294, %v3295
      %v3297 = vsel %vm236, %v3220, 0.0
      %v3298 = vadd.f32 %v3296, %v3297
      %v3299 = vsel %vm236, %v3221, 0.0
      %v3300 = vadd.f32 %v3298, %v3299
      %v3301 = vsel %vm236, %v3222, 0.0
      %v3302 = vadd.f32 %v3300, %v3301
      %v3303 = vsel %vm236, %v3223, 0.0
      %v3304 = vadd.f32 %v3302, %v3303
      %v3305 = vsel %vm236, %v3224, 0.0
      %v3306 = vadd.f32 %v3304, %v3305
      %v3307 = vsel %vm236, %v3225, 0.0
      %v3308 = vadd.f32 %v3306, %v3307
      %v3309 = vsel %vm236, %v3226, 0.0
      %v3310 = vadd.f32 %v3308, %v3309
      %v3311 = vsel %vm236, %v3227, 0.0
      %v3312 = vadd.f32 %v3310, %v3311
      %v3313 = vsel %vm236, %v3228, 0.0
      %v3314 = vadd.f32 %v3312, %v3313
      %v3315 = vsel %vm236, %v3229, 0.0
      %v3316 = vadd.f32 %v3314, %v3315
      %v3317 = vsel %vm236, %v3230, 0.0
      %v3318 = vadd.f32 %v3316, %v3317
      %v3319 = vsel %vm236, %v3231, 0.0
      %v3320 = vadd.f32 %v3318, %v3319
      %v3321 = vsel %vm236, %v3232, 0.0
      %v3322 = vadd.f32 %v3320, %v3321
      %v3323 = vsel %vm236, %v3233, 0.0
      %v3324 = vadd.f32 %v3322, %v3323
      %v3325 = vsel %vm236, %v3234, 0.0
      %v3326 = vadd.f32 %v3324, %v3325
      %v3327 = vsel %vm236, %v3235, 0.0
      %v3328 = vadd.f32 %v3326, %v3327
      %v3329 = vsel %vm236, %v3236, 0.0
      %v3330 = vadd.f32 %v3328, %v3329
      %v3331 = vsel %vm236, %v3237, 0.0
      %v3332 = vadd.f32 %v3330, %v3331
      %v3333 = vrot.slane %v3332, 4
      %v3334 = vadd.f32 %v3332, %v3333
      %v3335 = vrot.slane %v3334, 2
      %v3336 = vadd.f32 %v3334, %v3335
      %v3337 = vrot.slane %v3336, 1
      %v3338 = vadd.f32 %v3336, %v3337
      %vm3339 = vcmask 57344
      %3340 = vst.msk [vmem:[%s235] sm:$0x1] %vm3339, %v3338
      %v3341 = vmul.f32 %v3206, %v3206
      %v3342 = vmul.f32 %v3207, %v3207
      %v3343 = vmul.f32 %v3208, %v3208
      %v3344 = vmul.f32 %v3209, %v3209
      %v3345 = vmul.f32 %v3210, %v3210
      %v3346 = vmul.f32 %v3211, %v3211
      %v3347 = vmul.f32 %v3212, %v3212
      %v3348 = vmul.f32 %v3213, %v3213
      %v3349 = vmul.f32 %v3214, %v3214
      %v3350 = vmul.f32 %v3215, %v3215
      %v3351 = vmul.f32 %v3216, %v3216
      %v3352 = vmul.f32 %v3217, %v3217
      %v3353 = vmul.f32 %v3218, %v3218
      %v3354 = vmul.f32 %v3219, %v3219
      %v3355 = vmul.f32 %v3220, %v3220
      %v3356 = vmul.f32 %v3221, %v3221
      %v3357 = vmul.f32 %v3222, %v3222
      %v3358 = vmul.f32 %v3223, %v3223
      %v3359 = vmul.f32 %v3224, %v3224
      %v3360 = vmul.f32 %v3225, %v3225
      %v3361 = vmul.f32 %v3226, %v3226
      %v3362 = vmul.f32 %v3227, %v3227
      %v3363 = vmul.f32 %v3228, %v3228
      %v3364 = vmul.f32 %v3229, %v3229
      %v3365 = vmul.f32 %v3230, %v3230
      %v3366 = vmul.f32 %v3231, %v3231
      %v3367 = vmul.f32 %v3232, %v3232
      %v3368 = vmul.f32 %v3233, %v3233
      %v3369 = vmul.f32 %v3234, %v3234
      %v3370 = vmul.f32 %v3235, %v3235
      %v3371 = vmul.f32 %v3236, %v3236
      %v3372 = vmul.f32 %v3237, %v3237
      %v3373 = vsel %vm236, %v3341, 0.0
      %v3374 = vsel %vm236, %v3342, 0.0
      %v3375 = vadd.f32 %v3373, %v3374
      %v3376 = vsel %vm236, %v3343, 0.0
      %v3377 = vadd.f32 %v3375, %v3376
      %v3378 = vsel %vm236, %v3344, 0.0
      %v3379 = vadd.f32 %v3377, %v3378
      %v3380 = vsel %vm236, %v3345, 0.0
      %v3381 = vadd.f32 %v3379, %v3380
      %v3382 = vsel %vm236, %v3346, 0.0
      %v3383 = vadd.f32 %v3381, %v3382
      %v3384 = vsel %vm236, %v3347, 0.0
      %v3385 = vadd.f32 %v3383, %v3384
      %v3386 = vsel %vm236, %v3348, 0.0
      %v3387 = vadd.f32 %v3385, %v3386
      %v3388 = vsel %vm236, %v3349, 0.0
      %v3389 = vadd.f32 %v3387, %v3388
      %v3390 = vsel %vm236, %v3350, 0.0
      %v3391 = vadd.f32 %v3389, %v3390
      %v3392 = vsel %vm236, %v3351, 0.0
      %v3393 = vadd.f32 %v3391, %v3392
      %v3394 = vsel %vm236, %v3352, 0.0
      %v3395 = vadd.f32 %v3393, %v3394
      %v3396 = vsel %vm236, %v3353, 0.0
      %v3397 = vadd.f32 %v3395, %v3396
      %v3398 = vsel %vm236, %v3354, 0.0
      %v3399 = vadd.f32 %v3397, %v3398
      %v3400 = vsel %vm236, %v3355, 0.0
      %v3401 = vadd.f32 %v3399, %v3400
      %v3402 = vsel %vm236, %v3356, 0.0
      %v3403 = vadd.f32 %v3401, %v3402
      %v3404 = vsel %vm236, %v3357, 0.0
      %v3405 = vadd.f32 %v3403, %v3404
      %v3406 = vsel %vm236, %v3358, 0.0
      %v3407 = vadd.f32 %v3405, %v3406
      %v3408 = vsel %vm236, %v3359, 0.0
      %v3409 = vadd.f32 %v3407, %v3408
      %v3410 = vsel %vm236, %v3360, 0.0
      %v3411 = vadd.f32 %v3409, %v3410
      %v3412 = vsel %vm236, %v3361, 0.0
      %v3413 = vadd.f32 %v3411, %v3412
      %v3414 = vsel %vm236, %v3362, 0.0
      %v3415 = vadd.f32 %v3413, %v3414
      %v3416 = vsel %vm236, %v3363, 0.0
      %v3417 = vadd.f32 %v3415, %v3416
      %v3418 = vsel %vm236, %v3364, 0.0
      %v3419 = vadd.f32 %v3417, %v3418
      %v3420 = vsel %vm236, %v3365, 0.0
      %v3421 = vadd.f32 %v3419, %v3420
      %v3422 = vsel %vm236, %v3366, 0.0
      %v3423 = vadd.f32 %v3421, %v3422
      %v3424 = vsel %vm236, %v3367, 0.0
      %v3425 = vadd.f32 %v3423, %v3424
      %v3426 = vsel %vm236, %v3368, 0.0
      %v3427 = vadd.f32 %v3425, %v3426
      %v3428 = vsel %vm236, %v3369, 0.0
      %v3429 = vadd.f32 %v3427, %v3428
      %v3430 = vsel %vm236, %v3370, 0.0
      %v3431 = vadd.f32 %v3429, %v3430
      %v3432 = vsel %vm236, %v3371, 0.0
      %v3433 = vadd.f32 %v3431, %v3432
      %v3434 = vsel %vm236, %v3372, 0.0
      %v3435 = vadd.f32 %v3433, %v3434
      %v3436 = vrot.slane %v3435, 4
      %v3437 = vadd.f32 %v3435, %v3436
      %v3438 = vrot.slane %v3437, 2
      %v3439 = vadd.f32 %v3437, %v3438
      %v3440 = vrot.slane %v3439, 1
      %v3441 = vadd.f32 %v3439, %v3440
      %3442 = vst.msk [vmem:[%s235 + $0x1] sm:$0x1] %vm3339, %v3441
      %p3443 = scmp.lt.s32.totalorder %s17, 1
      %s3444 = scalar_select %p3443, %s17, 1
      %s3445 = smul.addr %s3444, 32
      %s3446 = smul.addr %s3445, 8
      %s3447 = scalar_lea.vmem %s4, %s3446
      %p3448 = scmp.lt.s32.totalorder %s17, 1
      %s3449 = scalar_select %p3448, %s17, 1
      %s3450 = smul.addr %s3449, 2
      %s3451 = scalar_lea.vmem %s5, %s3450
      // Predicated region
      $region37: #{bottleneck_forward.6} parent=35 // pred_check
        %p3452 = pneg %p124
      $region38: #{bottleneck_forward.6} parent=35 // pred_check_branch
        %3454 = sbr.rel (%p3452) target = $region40
      $region39: #{bottleneck_forward.6} parent=35 // pred_region
        _
      $region40: #{bottleneck_forward.6} parent=35 // pred_fallthru
        _
      // Predicated region
      $region41: #{bottleneck_forward.6} parent=35 // pred_check
        %p3455 = pneg %p150
      $region42: #{bottleneck_forward.6} parent=35 // pred_check_branch
        %3457 = sbr.rel (%p3455) target = $region44
      $region43: #{bottleneck_forward.6} parent=35 // pred_region
        _
      $region44: #{bottleneck_forward.6} parent=35 // pred_fallthru
        _
    $region36: #{bottleneck_forward.6} parent=5 // pred_fallthru
      _
    %p3458 = scmp.le.s32.totalorder 2, %s12
    // Predicated region
    $region45: #{bottleneck_forward.6} parent=5 // pred_check
      %p3459 = pneg %p3458
    $region46: #{bottleneck_forward.6} parent=5 // pred_check_branch
      %3461 = sbr.rel (%p3459) target = $region48
    $region47: #{bottleneck_forward.6} parent=5 // pred_region
      %s3462 = ssub.s32 %s12, 2
      // Predicated region
      $region49: #{bottleneck_forward.6} parent=47 // pred_check
        %p3463 = pneg %p130
      $region50: #{bottleneck_forward.6} parent=47 // pred_check_branch
        %3465 = sbr.rel (%p3463) target = $region52
      $region51: #{bottleneck_forward.6} parent=47 // pred_region
        %p3466 = scmp.lt.s32.totalorder %s18, 1
        %s3467 = scalar_select %p3466, %s18, 1
        %s3468 = smul.addr %s3467, 32
        %s3469 = smul.addr %s3468, 8
        %s3470 = scalar_lea.vmem %s4, %s3469
      $region52: #{bottleneck_forward.6} parent=47 // pred_fallthru
        _
      // Predicated region
      $region53: #{bottleneck_forward.6} parent=47 // pred_check
        %p3471 = pneg %p156
      $region54: #{bottleneck_forward.6} parent=47 // pred_check_branch
        %3473 = sbr.rel (%p3471) target = $region56
      $region55: #{bottleneck_forward.6} parent=47 // pred_region
        %p3474 = scmp.lt.s32.totalorder %s18, 1
        %s3475 = scalar_select %p3474, %s18, 1
        %s3476 = smul.addr %s3475, 2
        %s3477 = scalar_lea.vmem %s5, %s3476
      $region56: #{bottleneck_forward.6} parent=47 // pred_fallthru
        _
    $region48: #{bottleneck_forward.6} parent=5 // pred_fallthru
      _
  $region6: #{bottleneck_forward.6} parent=0 // loop_footer
    %s16 = sadd.s32 1, %s12
  $region7: #{bottleneck_forward.6} parent=0 // loop_footer_branch
    %11 = sbr.rel target = $region3
  $region8: #{bottleneck_forward.6} parent=0 // loop_exit
    _

// kernel: bottleneck_forward.9
$region0: #{bottleneck_forward.9}
  #allocation0 [shape = 'u32[]', space=smem, size = 0x4, offset = 0x4, fixed_abs, tag = 'smem constant byte address 0x4 - core index']
  #allocation1 [shape = 'u32[144,128]{1,0:T(1,128)}', space=vmem, size = 0x12000, scoped, tag = 'internal scratch']
  %s0 = inlined_call_operand.vmem [shape: f32[512,32], index: 0, kind: input, shape index: {}]
  %s1 = inlined_call_operand.vmem [shape: f32[1,32], index: 1, kind: input, shape index: {}]
  %s2 = inlined_call_operand.vmem [shape: f32[1,32], index: 2, kind: input, shape index: {}]
  %s3 = inlined_call_operand.vmem [shape: f32[512,32], index: 3, kind: input, shape index: {}]
  %s4 = inlined_call_operand.vmem [shape: f32[1,32], index: 4, kind: input, shape index: {}]
  %s5 = inlined_call_operand.vmem [shape: f32[1,32], index: 5, kind: input, shape index: {}]
  %s6 = inlined_call_operand.hbm [shape: f32[512,32], index: 6, kind: output, shape index: {}]
  %s7 = sld [smem:[#allocation0]]
  $region34: #{bottleneck_forward.9} parent=0
    _
  %s9 = ssub.s32 1, %s7
  %s10 = scalar_select 0, %s9, %s7
  $region1: #{bottleneck_forward.9} parent=0
    #allocation2 [shape = 'u8[262144]{0}', space=vmem, size = 0x40000, scoped, tag = 'output window, operand 0, single buffered']
    #allocation3 [shape = 's32[1]{0}', space=sflag, size = 0x4, scoped, tag = 'scoped memory for bottleneck_forward.9']
    %11 = vsyncpa [#allocation3], 0
    // Predicated region
    $region2: #{bottleneck_forward.9} parent=1 // pred_check
      _
    $region3: #{bottleneck_forward.9} parent=1 // pred_check_branch
      %13 = sbr.rel (0) target = $region5
    $region4: #{bottleneck_forward.9} parent=1 // pred_region
      _
    $region5: #{bottleneck_forward.9} parent=1 // pred_fallthru
      _
    // Predicated region
    $region6: #{bottleneck_forward.9} parent=1 // pred_check
      _
    $region7: #{bottleneck_forward.9} parent=1 // pred_check_branch
      %15 = sbr.rel (0) target = $region9
    $region8: #{bottleneck_forward.9} parent=1 // pred_region
      _
    $region9: #{bottleneck_forward.9} parent=1 // pred_fallthru
      _
    // Predicated region
    $region10: #{bottleneck_forward.9} parent=1 // pred_check
      _
    $region11: #{bottleneck_forward.9} parent=1 // pred_check_branch
      %17 = sbr.rel (0) target = $region13
    $region12: #{bottleneck_forward.9} parent=1 // pred_region
      _
    $region13: #{bottleneck_forward.9} parent=1 // pred_fallthru
      _
    // Predicated region
    $region14: #{bottleneck_forward.9} parent=1 // pred_check
      _
    $region15: #{bottleneck_forward.9} parent=1 // pred_check_branch
      %19 = sbr.rel (0) target = $region17
    $region16: #{bottleneck_forward.9} parent=1 // pred_region
      _
    $region17: #{bottleneck_forward.9} parent=1 // pred_fallthru
      _
    // Predicated region
    $region18: #{bottleneck_forward.9} parent=1 // pred_check
      _
    $region19: #{bottleneck_forward.9} parent=1 // pred_check_branch
      %21 = sbr.rel (0) target = $region21
    $region20: #{bottleneck_forward.9} parent=1 // pred_region
      _
    $region21: #{bottleneck_forward.9} parent=1 // pred_fallthru
      _
    // Predicated region
    $region22: #{bottleneck_forward.9} parent=1 // pred_check
      _
    $region23: #{bottleneck_forward.9} parent=1 // pred_check_branch
      %23 = sbr.rel (0) target = $region25
    $region24: #{bottleneck_forward.9} parent=1 // pred_region
      _
    $region25: #{bottleneck_forward.9} parent=1 // pred_fallthru
      _
    %v24 = vld [vmem:[%s0] sm:$0xff]
    %v25 = vld [vmem:[%s0 + $0x8] sm:$0xff]
    %v26 = vld [vmem:[%s0 + $0x10] sm:$0xff]
    %v27 = vld [vmem:[%s0 + $0x18] sm:$0xff]
    %v28 = vld [vmem:[%s0 + $0x20] sm:$0xff]
    %v29 = vld [vmem:[%s0 + $0x28] sm:$0xff]
    %v30 = vld [vmem:[%s0 + $0x30] sm:$0xff]
    %v31 = vld [vmem:[%s0 + $0x38] sm:$0xff]
    %v32 = vld [vmem:[%s0 + $0x40] sm:$0xff]
    %v33 = vld [vmem:[%s0 + $0x48] sm:$0xff]
    %v34 = vld [vmem:[%s0 + $0x50] sm:$0xff]
    %v35 = vld [vmem:[%s0 + $0x58] sm:$0xff]
    %v36 = vld [vmem:[%s0 + $0x60] sm:$0xff]
    %v37 = vld [vmem:[%s0 + $0x68] sm:$0xff]
    %v38 = vld [vmem:[%s0 + $0x70] sm:$0xff]
    %v39 = vld [vmem:[%s0 + $0x78] sm:$0xff]
    %v40 = vld [vmem:[%s0 + $0x80] sm:$0xff]
    %v41 = vld [vmem:[%s0 + $0x88] sm:$0xff]
    %v42 = vld [vmem:[%s0 + $0x90] sm:$0xff]
    %v43 = vld [vmem:[%s0 + $0x98] sm:$0xff]
    %v44 = vld [vmem:[%s0 + $0xa0] sm:$0xff]
    %v45 = vld [vmem:[%s0 + $0xa8] sm:$0xff]
    %v46 = vld [vmem:[%s0 + $0xb0] sm:$0xff]
    %v47 = vld [vmem:[%s0 + $0xb8] sm:$0xff]
    %v48 = vld [vmem:[%s0 + $0xc0] sm:$0xff]
    %v49 = vld [vmem:[%s0 + $0xc8] sm:$0xff]
    %v50 = vld [vmem:[%s0 + $0xd0] sm:$0xff]
    %v51 = vld [vmem:[%s0 + $0xd8] sm:$0xff]
    %v52 = vld [vmem:[%s0 + $0xe0] sm:$0xff]
    %v53 = vld [vmem:[%s0 + $0xe8] sm:$0xff]
    %v54 = vld [vmem:[%s0 + $0xf0] sm:$0xff]
    %v55 = vld [vmem:[%s0 + $0xf8] sm:$0xff]
    %v56 = vld [vmem:[%s0 + $0x100] sm:$0xff]
    %v57 = vld [vmem:[%s0 + $0x108] sm:$0xff]
    %v58 = vld [vmem:[%s0 + $0x110] sm:$0xff]
    %v59 = vld [vmem:[%s0 + $0x118] sm:$0xff]
    %v60 = vld [vmem:[%s0 + $0x120] sm:$0xff]
    %v61 = vld [vmem:[%s0 + $0x128] sm:$0xff]
    %v62 = vld [vmem:[%s0 + $0x130] sm:$0xff]
    %v63 = vld [vmem:[%s0 + $0x138] sm:$0xff]
    %v64 = vld [vmem:[%s0 + $0x140] sm:$0xff]
    %v65 = vld [vmem:[%s0 + $0x148] sm:$0xff]
    %v66 = vld [vmem:[%s0 + $0x150] sm:$0xff]
    %v67 = vld [vmem:[%s0 + $0x158] sm:$0xff]
    %v68 = vld [vmem:[%s0 + $0x160] sm:$0xff]
    %v69 = vld [vmem:[%s0 + $0x168] sm:$0xff]
    %v70 = vld [vmem:[%s0 + $0x170] sm:$0xff]
    %v71 = vld [vmem:[%s0 + $0x178] sm:$0xff]
    %v72 = vld [vmem:[%s0 + $0x180] sm:$0xff]
    %v73 = vld [vmem:[%s0 + $0x188] sm:$0xff]
    %v74 = vld [vmem:[%s0 + $0x190] sm:$0xff]
    %v75 = vld [vmem:[%s0 + $0x198] sm:$0xff]
    %v76 = vld [vmem:[%s0 + $0x1a0] sm:$0xff]
    %v77 = vld [vmem:[%s0 + $0x1a8] sm:$0xff]
    %v78 = vld [vmem:[%s0 + $0x1b0] sm:$0xff]
    %v79 = vld [vmem:[%s0 + $0x1b8] sm:$0xff]
    %v80 = vld [vmem:[%s0 + $0x1c0] sm:$0xff]
    %v81 = vld [vmem:[%s0 + $0x1c8] sm:$0xff]
    %v82 = vld [vmem:[%s0 + $0x1d0] sm:$0xff]
    %v83 = vld [vmem:[%s0 + $0x1d8] sm:$0xff]
    %v84 = vld [vmem:[%s0 + $0x1e0] sm:$0xff]
    %v85 = vld [vmem:[%s0 + $0x1e8] sm:$0xff]
    %v86 = vld [vmem:[%s0 + $0x1f0] sm:$0xff]
    %v87 = vld [vmem:[%s0 + $0x1f8] sm:$0xff]
    %v88 = vld [vmem:[%s1] sm:$0x1]
    %v90 = vlaneseq
    %v91 = vshrl.u32 %v90, 7
    %v92 = vsub.s32 0, %v91
    %v93 = vrot.slane %v88, %v92
    %v95 = vmul.f32 %v24, %v93
    %v96 = vmul.f32 %v25, %v93
    %v97 = vmul.f32 %v26, %v93
    %v98 = vmul.f32 %v27, %v93
    %v99 = vmul.f32 %v28, %v93
    %v100 = vmul.f32 %v29, %v93
    %v101 = vmul.f32 %v30, %v93
    %v102 = vmul.f32 %v31, %v93
    %v103 = vmul.f32 %v32, %v93
    %v104 = vmul.f32 %v33, %v93
    %v105 = vmul.f32 %v34, %v93
    %v106 = vmul.f32 %v35, %v93
    %v107 = vmul.f32 %v36, %v93
    %v108 = vmul.f32 %v37, %v93
    %v109 = vmul.f32 %v38, %v93
    %v110 = vmul.f32 %v39, %v93
    %v111 = vmul.f32 %v40, %v93
    %v112 = vmul.f32 %v41, %v93
    %v113 = vmul.f32 %v42, %v93
    %v114 = vmul.f32 %v43, %v93
    %v115 = vmul.f32 %v44, %v93
    %v116 = vmul.f32 %v45, %v93
    %v117 = vmul.f32 %v46, %v93
    %v118 = vmul.f32 %v47, %v93
    %v119 = vmul.f32 %v48, %v93
    %v120 = vmul.f32 %v49, %v93
    %v121 = vmul.f32 %v50, %v93
    %v122 = vmul.f32 %v51, %v93
    %v123 = vmul.f32 %v52, %v93
    %v124 = vmul.f32 %v53, %v93
    %v125 = vmul.f32 %v54, %v93
    %v126 = vmul.f32 %v55, %v93
    %v127 = vmul.f32 %v56, %v93
    %v128 = vmul.f32 %v57, %v93
    %v129 = vmul.f32 %v58, %v93
    %v130 = vmul.f32 %v59, %v93
    %v131 = vmul.f32 %v60, %v93
    %v132 = vmul.f32 %v61, %v93
    %v133 = vmul.f32 %v62, %v93
    %v134 = vmul.f32 %v63, %v93
    %v135 = vmul.f32 %v64, %v93
    %v136 = vmul.f32 %v65, %v93
    %v137 = vmul.f32 %v66, %v93
    %v138 = vmul.f32 %v67, %v93
    %v139 = vmul.f32 %v68, %v93
    %v140 = vmul.f32 %v69, %v93
    %v141 = vmul.f32 %v70, %v93
    %v142 = vmul.f32 %v71, %v93
    %v143 = vmul.f32 %v72, %v93
    %v144 = vmul.f32 %v73, %v93
    %v145 = vmul.f32 %v74, %v93
    %v146 = vmul.f32 %v75, %v93
    %v147 = vmul.f32 %v76, %v93
    %v148 = vmul.f32 %v77, %v93
    %v149 = vmul.f32 %v78, %v93
    %v150 = vmul.f32 %v79, %v93
    %v151 = vmul.f32 %v80, %v93
    %v152 = vmul.f32 %v81, %v93
    %v153 = vmul.f32 %v82, %v93
    %v154 = vmul.f32 %v83, %v93
    %v155 = vmul.f32 %v84, %v93
    %v156 = vmul.f32 %v85, %v93
    %v157 = vmul.f32 %v86, %v93
    %v158 = vmul.f32 %v87, %v93
    %v159 = vld [vmem:[%s2] sm:$0x1]
    %v161 = vlaneseq
    %v162 = vshrl.u32 %v161, 7
    %v163 = vsub.s32 0, %v162
    %v164 = vrot.slane %v159, %v163
    %v166 = vadd.f32 %v95, %v164
    %v167 = vadd.f32 %v96, %v164
    %v168 = vadd.f32 %v97, %v164
    %v169 = vadd.f32 %v98, %v164
    %v170 = vadd.f32 %v99, %v164
    %v171 = vadd.f32 %v100, %v164
    %v172 = vadd.f32 %v101, %v164
    %v173 = vadd.f32 %v102, %v164
    %v174 = vadd.f32 %v103, %v164
    %v175 = vadd.f32 %v104, %v164
    %v176 = vadd.f32 %v105, %v164
    %v177 = vadd.f32 %v106, %v164
    %v178 = vadd.f32 %v107, %v164
    %v179 = vadd.f32 %v108, %v164
    %v180 = vadd.f32 %v109, %v164
    %v181 = vadd.f32 %v110, %v164
    %v182 = vadd.f32 %v111, %v164
    %v183 = vadd.f32 %v112, %v164
    %v184 = vadd.f32 %v113, %v164
    %v185 = vadd.f32 %v114, %v164
    %v186 = vadd.f32 %v115, %v164
    %v187 = vadd.f32 %v116, %v164
    %v188 = vadd.f32 %v117, %v164
    %v189 = vadd.f32 %v118, %v164
    %v190 = vadd.f32 %v119, %v164
    %v191 = vadd.f32 %v120, %v164
    %v192 = vadd.f32 %v121, %v164
    %v193 = vadd.f32 %v122, %v164
    %v194 = vadd.f32 %v123, %v164
    %v195 = vadd.f32 %v124, %v164
    %v196 = vadd.f32 %v125, %v164
    %v197 = vadd.f32 %v126, %v164
    %v198 = vadd.f32 %v127, %v164
    %v199 = vadd.f32 %v128, %v164
    %v200 = vadd.f32 %v129, %v164
    %v201 = vadd.f32 %v130, %v164
    %v202 = vadd.f32 %v131, %v164
    %v203 = vadd.f32 %v132, %v164
    %v204 = vadd.f32 %v133, %v164
    %v205 = vadd.f32 %v134, %v164
    %v206 = vadd.f32 %v135, %v164
    %v207 = vadd.f32 %v136, %v164
    %v208 = vadd.f32 %v137, %v164
    %v209 = vadd.f32 %v138, %v164
    %v210 = vadd.f32 %v139, %v164
    %v211 = vadd.f32 %v140, %v164
    %v212 = vadd.f32 %v141, %v164
    %v213 = vadd.f32 %v142, %v164
    %v214 = vadd.f32 %v143, %v164
    %v215 = vadd.f32 %v144, %v164
    %v216 = vadd.f32 %v145, %v164
    %v217 = vadd.f32 %v146, %v164
    %v218 = vadd.f32 %v147, %v164
    %v219 = vadd.f32 %v148, %v164
    %v220 = vadd.f32 %v149, %v164
    %v221 = vadd.f32 %v150, %v164
    %v222 = vadd.f32 %v151, %v164
    %v223 = vadd.f32 %v152, %v164
    %v224 = vadd.f32 %v153, %v164
    %v225 = vadd.f32 %v154, %v164
    %v226 = vadd.f32 %v155, %v164
    %v227 = vadd.f32 %v156, %v164
    %v228 = vadd.f32 %v157, %v164
    %v229 = vadd.f32 %v158, %v164
    %v230 = vld [vmem:[%s3] sm:$0xff]
    %v231 = vld [vmem:[%s3 + $0x8] sm:$0xff]
    %v232 = vld [vmem:[%s3 + $0x10] sm:$0xff]
    %v233 = vld [vmem:[%s3 + $0x18] sm:$0xff]
    %v234 = vld [vmem:[%s3 + $0x20] sm:$0xff]
    %v235 = vld [vmem:[%s3 + $0x28] sm:$0xff]
    %v236 = vld [vmem:[%s3 + $0x30] sm:$0xff]
    %v237 = vld [vmem:[%s3 + $0x38] sm:$0xff]
    %v238 = vld [vmem:[%s3 + $0x40] sm:$0xff]
    %v239 = vld [vmem:[%s3 + $0x48] sm:$0xff]
    %v240 = vld [vmem:[%s3 + $0x50] sm:$0xff]
    %v241 = vld [vmem:[%s3 + $0x58] sm:$0xff]
    %v242 = vld [vmem:[%s3 + $0x60] sm:$0xff]
    %v243 = vld [vmem:[%s3 + $0x68] sm:$0xff]
    %v244 = vld [vmem:[%s3 + $0x70] sm:$0xff]
    %v245 = vld [vmem:[%s3 + $0x78] sm:$0xff]
    %v246 = vld [vmem:[%s3 + $0x80] sm:$0xff]
    %v247 = vld [vmem:[%s3 + $0x88] sm:$0xff]
    %v248 = vld [vmem:[%s3 + $0x90] sm:$0xff]
    %v249 = vld [vmem:[%s3 + $0x98] sm:$0xff]
    %v250 = vld [vmem:[%s3 + $0xa0] sm:$0xff]
    %v251 = vld [vmem:[%s3 + $0xa8] sm:$0xff]
    %v252 = vld [vmem:[%s3 + $0xb0] sm:$0xff]
    %v253 = vld [vmem:[%s3 + $0xb8] sm:$0xff]
    %v254 = vld [vmem:[%s3 + $0xc0] sm:$0xff]
    %v255 = vld [vmem:[%s3 + $0xc8] sm:$0xff]
    %v256 = vld [vmem:[%s3 + $0xd0] sm:$0xff]
    %v257 = vld [vmem:[%s3 + $0xd8] sm:$0xff]
    %v258 = vld [vmem:[%s3 + $0xe0] sm:$0xff]
    %v259 = vld [vmem:[%s3 + $0xe8] sm:$0xff]
    %v260 = vld [vmem:[%s3 + $0xf0] sm:$0xff]
    %v261 = vld [vmem:[%s3 + $0xf8] sm:$0xff]
    %v262 = vld [vmem:[%s3 + $0x100] sm:$0xff]
    %v263 = vld [vmem:[%s3 + $0x108] sm:$0xff]
    %v264 = vld [vmem:[%s3 + $0x110] sm:$0xff]
    %v265 = vld [vmem:[%s3 + $0x118] sm:$0xff]
    %v266 = vld [vmem:[%s3 + $0x120] sm:$0xff]
    %v267 = vld [vmem:[%s3 + $0x128] sm:$0xff]
    %v268 = vld [vmem:[%s3 + $0x130] sm:$0xff]
    %v269 = vld [vmem:[%s3 + $0x138] sm:$0xff]
    %v270 = vld [vmem:[%s3 + $0x140] sm:$0xff]
    %v271 = vld [vmem:[%s3 + $0x148] sm:$0xff]
    %v272 = vld [vmem:[%s3 + $0x150] sm:$0xff]
    %v273 = vld [vmem:[%s3 + $0x158] sm:$0xff]
    %v274 = vld [vmem:[%s3 + $0x160] sm:$0xff]
    %v275 = vld [vmem:[%s3 + $0x168] sm:$0xff]
    %v276 = vld [vmem:[%s3 + $0x170] sm:$0xff]
    %v277 = vld [vmem:[%s3 + $0x178] sm:$0xff]
    %v278 = vld [vmem:[%s3 + $0x180] sm:$0xff]
    %v279 = vld [vmem:[%s3 + $0x188] sm:$0xff]
    %v280 = vld [vmem:[%s3 + $0x190] sm:$0xff]
    %v281 = vld [vmem:[%s3 + $0x198] sm:$0xff]
    %v282 = vld [vmem:[%s3 + $0x1a0] sm:$0xff]
    %v283 = vld [vmem:[%s3 + $0x1a8] sm:$0xff]
    %v284 = vld [vmem:[%s3 + $0x1b0] sm:$0xff]
    %v285 = vld [vmem:[%s3 + $0x1b8] sm:$0xff]
    %v286 = vld [vmem:[%s3 + $0x1c0] sm:$0xff]
    %v287 = vld [vmem:[%s3 + $0x1c8] sm:$0xff]
    %v288 = vld [vmem:[%s3 + $0x1d0] sm:$0xff]
    %v289 = vld [vmem:[%s3 + $0x1d8] sm:$0xff]
    %v290 = vld [vmem:[%s3 + $0x1e0] sm:$0xff]
    %v291 = vld [vmem:[%s3 + $0x1e8] sm:$0xff]
    %v292 = vld [vmem:[%s3 + $0x1f0] sm:$0xff]
    %v293 = vld [vmem:[%s3 + $0x1f8] sm:$0xff]
    %v294 = vld [vmem:[%s4] sm:$0x1]
    %v296 = vlaneseq
    %v297 = vshrl.u32 %v296, 7
    %v298 = vsub.s32 0, %v297
    %v299 = vrot.slane %v294, %v298
    %v301 = vmul.f32 %v230, %v299
    %v302 = vmul.f32 %v231, %v299
    %v303 = vmul.f32 %v232, %v299
    %v304 = vmul.f32 %v233, %v299
    %v305 = vmul.f32 %v234, %v299
    %v306 = vmul.f32 %v235, %v299
    %v307 = vmul.f32 %v236, %v299
    %v308 = vmul.f32 %v237, %v299
    %v309 = vmul.f32 %v238, %v299
    %v310 = vmul.f32 %v239, %v299
    %v311 = vmul.f32 %v240, %v299
    %v312 = vmul.f32 %v241, %v299
    %v313 = vmul.f32 %v242, %v299
    %v314 = vmul.f32 %v243, %v299
    %v315 = vmul.f32 %v244, %v299
    %v316 = vmul.f32 %v245, %v299
    %v317 = vmul.f32 %v246, %v299
    %v318 = vmul.f32 %v247, %v299
    %v319 = vmul.f32 %v248, %v299
    %v320 = vmul.f32 %v249, %v299
    %v321 = vmul.f32 %v250, %v299
    %v322 = vmul.f32 %v251, %v299
    %v323 = vmul.f32 %v252, %v299
    %v324 = vmul.f32 %v253, %v299
    %v325 = vmul.f32 %v254, %v299
    %v326 = vmul.f32 %v255, %v299
    %v327 = vmul.f32 %v256, %v299
    %v328 = vmul.f32 %v257, %v299
    %v329 = vmul.f32 %v258, %v299
    %v330 = vmul.f32 %v259, %v299
    %v331 = vmul.f32 %v260, %v299
    %v332 = vmul.f32 %v261, %v299
    %v333 = vmul.f32 %v262, %v299
    %v334 = vmul.f32 %v263, %v299
    %v335 = vmul.f32 %v264, %v299
    %v336 = vmul.f32 %v265, %v299
    %v337 = vmul.f32 %v266, %v299
    %v338 = vmul.f32 %v267, %v299
    %v339 = vmul.f32 %v268, %v299
    %v340 = vmul.f32 %v269, %v299
    %v341 = vmul.f32 %v270, %v299
    %v342 = vmul.f32 %v271, %v299
    %v343 = vmul.f32 %v272, %v299
    %v344 = vmul.f32 %v273, %v299
    %v345 = vmul.f32 %v274, %v299
    %v346 = vmul.f32 %v275, %v299
    %v347 = vmul.f32 %v276, %v299
    %v348 = vmul.f32 %v277, %v299
    %v349 = vmul.f32 %v278, %v299
    %v350 = vmul.f32 %v279, %v299
    %v351 = vmul.f32 %v280, %v299
    %v352 = vmul.f32 %v281, %v299
    %v353 = vmul.f32 %v282, %v299
    %v354 = vmul.f32 %v283, %v299
    %v355 = vmul.f32 %v284, %v299
    %v356 = vmul.f32 %v285, %v299
    %v357 = vmul.f32 %v286, %v299
    %v358 = vmul.f32 %v287, %v299
    %v359 = vmul.f32 %v288, %v299
    %v360 = vmul.f32 %v289, %v299
    %v361 = vmul.f32 %v290, %v299
    %v362 = vmul.f32 %v291, %v299
    %v363 = vmul.f32 %v292, %v299
    %v364 = vmul.f32 %v293, %v299
    %v365 = vld [vmem:[%s5] sm:$0x1]
    %v367 = vlaneseq
    %v368 = vshrl.u32 %v367, 7
    %v369 = vsub.s32 0, %v368
    %v370 = vrot.slane %v365, %v369
    %v372 = vadd.f32 %v301, %v370
    %v373 = vadd.f32 %v302, %v370
    %v374 = vadd.f32 %v303, %v370
    %v375 = vadd.f32 %v304, %v370
    %v376 = vadd.f32 %v305, %v370
    %v377 = vadd.f32 %v306, %v370
    %v378 = vadd.f32 %v307, %v370
    %v379 = vadd.f32 %v308, %v370
    %v380 = vadd.f32 %v309, %v370
    %v381 = vadd.f32 %v310, %v370
    %v382 = vadd.f32 %v311, %v370
    %v383 = vadd.f32 %v312, %v370
    %v384 = vadd.f32 %v313, %v370
    %v385 = vadd.f32 %v314, %v370
    %v386 = vadd.f32 %v315, %v370
    %v387 = vadd.f32 %v316, %v370
    %v388 = vadd.f32 %v317, %v370
    %v389 = vadd.f32 %v318, %v370
    %v390 = vadd.f32 %v319, %v370
    %v391 = vadd.f32 %v320, %v370
    %v392 = vadd.f32 %v321, %v370
    %v393 = vadd.f32 %v322, %v370
    %v394 = vadd.f32 %v323, %v370
    %v395 = vadd.f32 %v324, %v370
    %v396 = vadd.f32 %v325, %v370
    %v397 = vadd.f32 %v326, %v370
    %v398 = vadd.f32 %v327, %v370
    %v399 = vadd.f32 %v328, %v370
    %v400 = vadd.f32 %v329, %v370
    %v401 = vadd.f32 %v330, %v370
    %v402 = vadd.f32 %v331, %v370
    %v403 = vadd.f32 %v332, %v370
    %v404 = vadd.f32 %v333, %v370
    %v405 = vadd.f32 %v334, %v370
    %v406 = vadd.f32 %v335, %v370
    %v407 = vadd.f32 %v336, %v370
    %v408 = vadd.f32 %v337, %v370
    %v409 = vadd.f32 %v338, %v370
    %v410 = vadd.f32 %v339, %v370
    %v411 = vadd.f32 %v340, %v370
    %v412 = vadd.f32 %v341, %v370
    %v413 = vadd.f32 %v342, %v370
    %v414 = vadd.f32 %v343, %v370
    %v415 = vadd.f32 %v344, %v370
    %v416 = vadd.f32 %v345, %v370
    %v417 = vadd.f32 %v346, %v370
    %v418 = vadd.f32 %v347, %v370
    %v419 = vadd.f32 %v348, %v370
    %v420 = vadd.f32 %v349, %v370
    %v421 = vadd.f32 %v350, %v370
    %v422 = vadd.f32 %v351, %v370
    %v423 = vadd.f32 %v352, %v370
    %v424 = vadd.f32 %v353, %v370
    %v425 = vadd.f32 %v354, %v370
    %v426 = vadd.f32 %v355, %v370
    %v427 = vadd.f32 %v356, %v370
    %v428 = vadd.f32 %v357, %v370
    %v429 = vadd.f32 %v358, %v370
    %v430 = vadd.f32 %v359, %v370
    %v431 = vadd.f32 %v360, %v370
    %v432 = vadd.f32 %v361, %v370
    %v433 = vadd.f32 %v362, %v370
    %v434 = vadd.f32 %v363, %v370
    %v435 = vadd.f32 %v364, %v370
    %v436 = vadd.f32 %v166, %v372
    %v437 = vadd.f32 %v167, %v373
    %v438 = vadd.f32 %v168, %v374
    %v439 = vadd.f32 %v169, %v375
    %v440 = vadd.f32 %v170, %v376
    %v441 = vadd.f32 %v171, %v377
    %v442 = vadd.f32 %v172, %v378
    %v443 = vadd.f32 %v173, %v379
    %v444 = vadd.f32 %v174, %v380
    %v445 = vadd.f32 %v175, %v381
    %v446 = vadd.f32 %v176, %v382
    %v447 = vadd.f32 %v177, %v383
    %v448 = vadd.f32 %v178, %v384
    %v449 = vadd.f32 %v179, %v385
    %v450 = vadd.f32 %v180, %v386
    %v451 = vadd.f32 %v181, %v387
    %v452 = vadd.f32 %v182, %v388
    %v453 = vadd.f32 %v183, %v389
    %v454 = vadd.f32 %v184, %v390
    %v455 = vadd.f32 %v185, %v391
    %v456 = vadd.f32 %v186, %v392
    %v457 = vadd.f32 %v187, %v393
    %v458 = vadd.f32 %v188, %v394
    %v459 = vadd.f32 %v189, %v395
    %v460 = vadd.f32 %v190, %v396
    %v461 = vadd.f32 %v191, %v397
    %v462 = vadd.f32 %v192, %v398
    %v463 = vadd.f32 %v193, %v399
    %v464 = vadd.f32 %v194, %v400
    %v465 = vadd.f32 %v195, %v401
    %v466 = vadd.f32 %v196, %v402
    %v467 = vadd.f32 %v197, %v403
    %v468 = vadd.f32 %v198, %v404
    %v469 = vadd.f32 %v199, %v405
    %v470 = vadd.f32 %v200, %v406
    %v471 = vadd.f32 %v201, %v407
    %v472 = vadd.f32 %v202, %v408
    %v473 = vadd.f32 %v203, %v409
    %v474 = vadd.f32 %v204, %v410
    %v475 = vadd.f32 %v205, %v411
    %v476 = vadd.f32 %v206, %v412
    %v477 = vadd.f32 %v207, %v413
    %v478 = vadd.f32 %v208, %v414
    %v479 = vadd.f32 %v209, %v415
    %v480 = vadd.f32 %v210, %v416
    %v481 = vadd.f32 %v211, %v417
    %v482 = vadd.f32 %v212, %v418
    %v483 = vadd.f32 %v213, %v419
    %v484 = vadd.f32 %v214, %v420
    %v485 = vadd.f32 %v215, %v421
    %v486 = vadd.f32 %v216, %v422
    %v487 = vadd.f32 %v217, %v423
    %v488 = vadd.f32 %v218, %v424
    %v489 = vadd.f32 %v219, %v425
    %v490 = vadd.f32 %v220, %v426
    %v491 = vadd.f32 %v221, %v427
    %v492 = vadd.f32 %v222, %v428
    %v493 = vadd.f32 %v223, %v429
    %v494 = vadd.f32 %v224, %v430
    %v495 = vadd.f32 %v225, %v431
    %v496 = vadd.f32 %v226, %v432
    %v497 = vadd.f32 %v227, %v433
    %v498 = vadd.f32 %v228, %v434
    %v499 = vadd.f32 %v229, %v435
    %v500 = vmax.f32 %v436, 0.0
    %v501 = vmax.f32 %v437, 0.0
    %v502 = vmax.f32 %v438, 0.0
    %v503 = vmax.f32 %v439, 0.0
    %v504 = vmax.f32 %v440, 0.0
    %v505 = vmax.f32 %v441, 0.0
    %v506 = vmax.f32 %v442, 0.0
    %v507 = vmax.f32 %v443, 0.0
    %v508 = vmax.f32 %v444, 0.0
    %v509 = vmax.f32 %v445, 0.0
    %v510 = vmax.f32 %v446, 0.0
    %v511 = vmax.f32 %v447, 0.0
    %v512 = vmax.f32 %v448, 0.0
    %v513 = vmax.f32 %v449, 0.0
    %v514 = vmax.f32 %v450, 0.0
    %v515 = vmax.f32 %v451, 0.0
    %v516 = vmax.f32 %v452, 0.0
    %v517 = vmax.f32 %v453, 0.0
    %v518 = vmax.f32 %v454, 0.0
    %v519 = vmax.f32 %v455, 0.0
    %v520 = vmax.f32 %v456, 0.0
    %v521 = vmax.f32 %v457, 0.0
    %v522 = vmax.f32 %v458, 0.0
    %v523 = vmax.f32 %v459, 0.0
    %v524 = vmax.f32 %v460, 0.0
    %v525 = vmax.f32 %v461, 0.0
    %v526 = vmax.f32 %v462, 0.0
    %v527 = vmax.f32 %v463, 0.0
    %v528 = vmax.f32 %v464, 0.0
    %v529 = vmax.f32 %v465, 0.0
    %v530 = vmax.f32 %v466, 0.0
    %v531 = vmax.f32 %v467, 0.0
    %v532 = vmax.f32 %v468, 0.0
    %v533 = vmax.f32 %v469, 0.0
    %v534 = vmax.f32 %v470, 0.0
    %v535 = vmax.f32 %v471, 0.0
    %v536 = vmax.f32 %v472, 0.0
    %v537 = vmax.f32 %v473, 0.0
    %v538 = vmax.f32 %v474, 0.0
    %v539 = vmax.f32 %v475, 0.0
    %v540 = vmax.f32 %v476, 0.0
    %v541 = vmax.f32 %v477, 0.0
    %v542 = vmax.f32 %v478, 0.0
    %v543 = vmax.f32 %v479, 0.0
    %v544 = vmax.f32 %v480, 0.0
    %v545 = vmax.f32 %v481, 0.0
    %v546 = vmax.f32 %v482, 0.0
    %v547 = vmax.f32 %v483, 0.0
    %v548 = vmax.f32 %v484, 0.0
    %v549 = vmax.f32 %v485, 0.0
    %v550 = vmax.f32 %v486, 0.0
    %v551 = vmax.f32 %v487, 0.0
    %v552 = vmax.f32 %v488, 0.0
    %v553 = vmax.f32 %v489, 0.0
    %v554 = vmax.f32 %v490, 0.0
    %v555 = vmax.f32 %v491, 0.0
    %v556 = vmax.f32 %v492, 0.0
    %v557 = vmax.f32 %v493, 0.0
    %v558 = vmax.f32 %v494, 0.0
    %v559 = vmax.f32 %v495, 0.0
    %v560 = vmax.f32 %v496, 0.0
    %v561 = vmax.f32 %v497, 0.0
    %v562 = vmax.f32 %v498, 0.0
    %v563 = vmax.f32 %v499, 0.0
    %vm564 = vcmask 261120
    %565 = vst.msk [vmem:[#allocation2] sm:$0xff] %vm564, %v500
    %566 = vst.msk [vmem:[#allocation2 + $0x8] sm:$0xff] %vm564, %v501
    %567 = vst.msk [vmem:[#allocation2 + $0x10] sm:$0xff] %vm564, %v502
    %568 = vst.msk [vmem:[#allocation2 + $0x18] sm:$0xff] %vm564, %v503
    %569 = vst.msk [vmem:[#allocation2 + $0x20] sm:$0xff] %vm564, %v504
    %570 = vst.msk [vmem:[#allocation2 + $0x28] sm:$0xff] %vm564, %v505
    %571 = vst.msk [vmem:[#allocation2 + $0x30] sm:$0xff] %vm564, %v506
    %572 = vst.msk [vmem:[#allocation2 + $0x38] sm:$0xff] %vm564, %v507
    %573 = vst.msk [vmem:[#allocation2 + $0x40] sm:$0xff] %vm564, %v508
    %574 = vst.msk [vmem:[#allocation2 + $0x48] sm:$0xff] %vm564, %v509
    %575 = vst.msk [vmem:[#allocation2 + $0x50] sm:$0xff] %vm564, %v510
    %576 = vst.msk [vmem:[#allocation2 + $0x58] sm:$0xff] %vm564, %v511
    %577 = vst.msk [vmem:[#allocation2 + $0x60] sm:$0xff] %vm564, %v512
    %578 = vst.msk [vmem:[#allocation2 + $0x68] sm:$0xff] %vm564, %v513
    %579 = vst.msk [vmem:[#allocation2 + $0x70] sm:$0xff] %vm564, %v514
    %580 = vst.msk [vmem:[#allocation2 + $0x78] sm:$0xff] %vm564, %v515
    %581 = vst.msk [vmem:[#allocation2 + $0x80] sm:$0xff] %vm564, %v516
    %582 = vst.msk [vmem:[#allocation2 + $0x88] sm:$0xff] %vm564, %v517
    %583 = vst.msk [vmem:[#allocation2 + $0x90] sm:$0xff] %vm564, %v518
    %584 = vst.msk [vmem:[#allocation2 + $0x98] sm:$0xff] %vm564, %v519
    %585 = vst.msk [vmem:[#allocation2 + $0xa0] sm:$0xff] %vm564, %v520
    %586 = vst.msk [vmem:[#allocation2 + $0xa8] sm:$0xff] %vm564, %v521
    %587 = vst.msk [vmem:[#allocation2 + $0xb0] sm:$0xff] %vm564, %v522
    %588 = vst.msk [vmem:[#allocation2 + $0xb8] sm:$0xff] %vm564, %v523
    %589 = vst.msk [vmem:[#allocation2 + $0xc0] sm:$0xff] %vm564, %v524
    %590 = vst.msk [vmem:[#allocation2 + $0xc8] sm:$0xff] %vm564, %v525
    %591 = vst.msk [vmem:[#allocation2 + $0xd0] sm:$0xff] %vm564, %v526
    %592 = vst.msk [vmem:[#allocation2 + $0xd8] sm:$0xff] %vm564, %v527
    %593 = vst.msk [vmem:[#allocation2 + $0xe0] sm:$0xff] %vm564, %v528
    %594 = vst.msk [vmem:[#allocation2 + $0xe8] sm:$0xff] %vm564, %v529
    %595 = vst.msk [vmem:[#allocation2 + $0xf0] sm:$0xff] %vm564, %v530
    %596 = vst.msk [vmem:[#allocation2 + $0xf8] sm:$0xff] %vm564, %v531
    %597 = vst.msk [vmem:[#allocation2 + $0x100] sm:$0xff] %vm564, %v532
    %598 = vst.msk [vmem:[#allocation2 + $0x108] sm:$0xff] %vm564, %v533
    %599 = vst.msk [vmem:[#allocation2 + $0x110] sm:$0xff] %vm564, %v534
    %600 = vst.msk [vmem:[#allocation2 + $0x118] sm:$0xff] %vm564, %v535
    %601 = vst.msk [vmem:[#allocation2 + $0x120] sm:$0xff] %vm564, %v536
    %602 = vst.msk [vmem:[#allocation2 + $0x128] sm:$0xff] %vm564, %v537
    %603 = vst.msk [vmem:[#allocation2 + $0x130] sm:$0xff] %vm564, %v538
    %604 = vst.msk [vmem:[#allocation2 + $0x138] sm:$0xff] %vm564, %v539
    %605 = vst.msk [vmem:[#allocation2 + $0x140] sm:$0xff] %vm564, %v540
    %606 = vst.msk [vmem:[#allocation2 + $0x148] sm:$0xff] %vm564, %v541
    %607 = vst.msk [vmem:[#allocation2 + $0x150] sm:$0xff] %vm564, %v542
    %608 = vst.msk [vmem:[#allocation2 + $0x158] sm:$0xff] %vm564, %v543
    %609 = vst.msk [vmem:[#allocation2 + $0x160] sm:$0xff] %vm564, %v544
    %610 = vst.msk [vmem:[#allocation2 + $0x168] sm:$0xff] %vm564, %v545
    %611 = vst.msk [vmem:[#allocation2 + $0x170] sm:$0xff] %vm564, %v546
    %612 = vst.msk [vmem:[#allocation2 + $0x178] sm:$0xff] %vm564, %v547
    %613 = vst.msk [vmem:[#allocation2 + $0x180] sm:$0xff] %vm564, %v548
    %614 = vst.msk [vmem:[#allocation2 + $0x188] sm:$0xff] %vm564, %v549
    %615 = vst.msk [vmem:[#allocation2 + $0x190] sm:$0xff] %vm564, %v550
    %616 = vst.msk [vmem:[#allocation2 + $0x198] sm:$0xff] %vm564, %v551
    %617 = vst.msk [vmem:[#allocation2 + $0x1a0] sm:$0xff] %vm564, %v552
    %618 = vst.msk [vmem:[#allocation2 + $0x1a8] sm:$0xff] %vm564, %v553
    %619 = vst.msk [vmem:[#allocation2 + $0x1b0] sm:$0xff] %vm564, %v554
    %620 = vst.msk [vmem:[#allocation2 + $0x1b8] sm:$0xff] %vm564, %v555
    %621 = vst.msk [vmem:[#allocation2 + $0x1c0] sm:$0xff] %vm564, %v556
    %622 = vst.msk [vmem:[#allocation2 + $0x1c8] sm:$0xff] %vm564, %v557
    %623 = vst.msk [vmem:[#allocation2 + $0x1d0] sm:$0xff] %vm564, %v558
    %624 = vst.msk [vmem:[#allocation2 + $0x1d8] sm:$0xff] %vm564, %v559
    %625 = vst.msk [vmem:[#allocation2 + $0x1e0] sm:$0xff] %vm564, %v560
    %626 = vst.msk [vmem:[#allocation2 + $0x1e8] sm:$0xff] %vm564, %v561
    %627 = vst.msk [vmem:[#allocation2 + $0x1f0] sm:$0xff] %vm564, %v562
    %628 = vst.msk [vmem:[#allocation2 + $0x1f8] sm:$0xff] %vm564, %v563
    // Predicated region
    $region26: #{bottleneck_forward.9} parent=1 // pred_check
      _
    $region27: #{bottleneck_forward.9} parent=1 // pred_check_branch
      %630 = sbr.rel (0) target = $region29
    $region28: #{bottleneck_forward.9} parent=1 // pred_region
      %s632 = ssub.s32 8192, 8192
      %633 = vsyncadd [#allocation3], %s632
      %s634 = sshll.u32 [#allocation2], 4
      %s635 = int_to_ptr.vmem [resolvable:$true] %s634
      %640 = dma.vmem_to_hbm [thread:$0]  %s635, 8192, %s6, [#allocation3], 128, 128, 8
    $region29: #{bottleneck_forward.9} parent=1 // pred_fallthru
      _
    // Predicated region
    $region30: #{bottleneck_forward.9} parent=1 // pred_check
      _
    $region31: #{bottleneck_forward.9} parent=1 // pred_check_branch
      %642 = sbr.rel (0) target = $region33
    $region32: #{bottleneck_forward.9} parent=1 // pred_region
      %643 = dma.done [#allocation3], 8192
    $region33: #{bottleneck_forward.9} parent=1 // pred_fallthru
      _
    %644 = vsyncpa [#allocation3], 1

</llo_original>
